<compile_context>
chip_gen: v7x
topology: tpu7x:2x2x1
jax: 0.10.0
libtpu: 0.0.40
codegen_flags: <defaults>
</compile_context>

<pallas_src>
import functools

import jax
import jax.numpy as jnp
from jax import lax
from jax.experimental import pallas as pl
from jax.experimental.pallas import tpu as pltpu

_LANE = 128


def _round_up(x, m):
    return (x + m - 1) // m * m


def _bottleneck_kernel(x_ref, w1_ref, w2_ref, w3_ref,
                       b1_ref, b2_ref, b3_ref,
                       out_ref, pad_ref, col_ref,
                       *, H, W, Pp, D):
    """One batch element per grid step.

    x_ref:  (1, H*W, Cin)    bf16
    w1_ref: (Cin, Pp)        bf16  (BN1 scale folded, output lane-padded)
    w2_ref: (9*Pp, P)        bf16  (BN2 scale folded, im2col-flattened HWIO)
    w3_ref: (P, Cout)        bf16  (BN3 scale folded)
    b1_ref: (1, Pp) f32; b2_ref: (1, P) f32; b3_ref: (1, Cout) f32
    out_ref:(1, H*W, Cout)   bf16
    pad_ref:(H+2D, W+2D, Pp) bf16 scratch (zero-padded conv2 input)
    col_ref:(H, W, 9*Pp)     bf16 scratch (im2col, 128-lane-aligned tap slots)
    """
    HW = H * W
    x2d = x_ref[0]                                        # (HW, Cin) bf16

    # ---- conv1 (1x1) + folded-BN bias + relu ----
    h1 = jnp.dot(x2d, w1_ref[...], preferred_element_type=jnp.float32)
    h1 = jnp.maximum(h1 + b1_ref[...], 0.0)               # (HW, Pp) f32
    h1_bf = h1.astype(jnp.bfloat16)                       # single cast

    # ---- conv2 (3x3, padding=D, dilation=D, stride=1) via im2col ----
    # Zero only the D-wide border strips; interior is fully overwritten each
    # step.  Keep this per-step (NOT pl.when(program_id==0)): with the batch
    # axis "parallel" each TensorCore owns a private scratch and a sub-range
    # of the grid, so a first-step guard would leave garbage borders.
    zh = jnp.zeros((D, W + 2 * D, Pp), jnp.bfloat16)
    zw = jnp.zeros((H, D, Pp), jnp.bfloat16)
    pad_ref[0:D, :, :] = zh
    pad_ref[H + D:H + 2 * D, :, :] = zh
    pad_ref[D:D + H, 0:D, :] = zw
    pad_ref[D:D + H, W + D:W + 2 * D, :] = zw
    pad_ref[D:D + H, D:D + W, :] = h1_bf.reshape(H, W, Pp)

    # Pack the 9 dilated taps side by side along the 128-aligned lane dim
    # (no per-tap dtype casts: pad and col are both bf16).
    for kh in range(3):
        for kw in range(3):
            t = kh * 3 + kw
            col_ref[:, :, t * Pp:(t + 1) * Pp] = \
                pad_ref[kh * D:kh * D + H, kw * D:kw * D + W, :]

    col = col_ref[...].reshape(HW, 9 * Pp)                # (HW, 9*Pp) bf16
    h2 = jnp.dot(col, w2_ref[...], preferred_element_type=jnp.float32)
    h2 = jnp.maximum(h2 + b2_ref[...], 0.0)               # (HW, P) f32

    # ---- conv3 (1x1) + folded-BN bias + residual + relu ----
    h3 = jnp.dot(h2.astype(jnp.bfloat16), w3_ref[...],
                 preferred_element_type=jnp.float32)
    # Residual cast at point of use (short live range, no persistent f32 copy).
    out = jnp.maximum(h3 + b3_ref[...] + x2d.astype(jnp.float32), 0.0)
    out_ref[0] = out.astype(out_ref.dtype)


def _vmem_limit_bytes():
    """Generation-aware VMEM budget: ~100 MiB on 128-MiB parts, ~52 MiB on v7x."""
    try:
        cap = int(pltpu.get_tpu_info().vmem_capacity_bytes)
    except Exception:
        cap = 128 * 1024 * 1024
    if cap >= 120 * 1024 * 1024:                       # v5e / v6e (128 MiB)
        return 100 * 1024 * 1024
    return max(32 * 1024 * 1024,                       # v7x (64 MiB physical)
               min(cap - 12 * 1024 * 1024, 52 * 1024 * 1024))


def _const_spec(shape, single_buffer):
    """BlockSpec for a grid-invariant operand (weights / biases)."""
    ndim = len(shape)
    index_map = lambda n: (0,) * ndim
    if single_buffer:
        # Constant index_map -> no need to double-buffer; saves VMEM.
        return pl.BlockSpec(shape, index_map, pipeline_mode=pl.Buffered(1))
    return pl.BlockSpec(shape, index_map)


def _build_bottleneck_call(N, H, W, Cin, P, Pp, Cout, D, single_buffer_weights):
    kernel = functools.partial(_bottleneck_kernel, H=H, W=W, Pp=Pp, D=D)
    HW = H * W

    grid_spec = pltpu.PrefetchScalarGridSpec(
        num_scalar_prefetch=0,
        grid=(N,),
        in_specs=[
            pl.BlockSpec((1, HW, Cin), lambda n: (n, 0, 0)),       # x
            _const_spec((Cin, Pp), single_buffer_weights),         # w1 (bn1 folded)
            _const_spec((9 * Pp, P), single_buffer_weights),       # w2 (bn2 folded)
            _const_spec((P, Cout), single_buffer_weights),         # w3 (bn3 folded)
            _const_spec((1, Pp), single_buffer_weights),           # b1
            _const_spec((1, P), single_buffer_weights),            # b2
            _const_spec((1, Cout), single_buffer_weights),         # b3
        ],
        out_specs=pl.BlockSpec((1, HW, Cout), lambda n: (n, 0, 0)),
        scratch_shapes=[
            pltpu.VMEM((H + 2 * D, W + 2 * D, Pp), jnp.bfloat16),  # padded h1 (bf16)
            pltpu.VMEM((H, W, 9 * Pp), jnp.bfloat16),              # im2col buffer
        ],
    )

    flops = 2 * N * HW * (Cin * Pp + 9 * Pp * P + P * Cout)
    bytes_accessed = (N * HW * Cin * 2 + N * HW * Cout * 2
                      + (Cin * Pp + 9 * Pp * P + P * Cout) * 2
                      + (Pp + P + Cout) * 4)
    cost = pl.CostEstimate(flops=flops, transcendentals=0,
                           bytes_accessed=bytes_accessed)

    return pl.pallas_call(
        kernel,
        out_shape=jax.ShapeDtypeStruct((N, HW, Cout), jnp.bfloat16),
        grid_spec=grid_spec,
        compiler_params=pltpu.CompilerParams(
            dimension_semantics=("parallel",),
            vmem_limit_bytes=_vmem_limit_bytes(),
        ),
        cost_estimate=cost,
    )


def bottleneck_pallas(x_nhwc, w1, w2, w3, b1, b2, b3, *, dilation=1):
    """x_nhwc: (N, H, W, Cin) bf16, Cin == 4*planes. Returns bf16 (N, H, W, 4*planes)."""
    N, H, W, Cin = x_nhwc.shape
    Pp = w1.shape[1]                  # lane-padded planes (multiple of 128)
    P, Cout = w3.shape
    D = int(dilation)
    assert Cin == Cout, "residual add requires inplanes == 4*planes (downsample=None)"
    assert w2.shape == (9 * Pp, P)

    x_flat = x_nhwc.reshape(N, H * W, Cin)
    args = (x_flat, w1, w2, w3, b1, b2, b3)
    try:
        out_flat = _build_bottleneck_call(N, H, W, Cin, P, Pp, Cout, D, True)(*args)
    except Exception:
        # Fallback for jax versions without BlockSpec pipeline_mode / pl.Buffered(1).
        out_flat = _build_bottleneck_call(N, H, W, Cin, P, Pp, Cout, D, False)(*args)
    return out_flat.reshape(N, H, W, Cout)


# ----------------------------- parameter prep -------------------------------

def _fold_bn(gamma, beta, mean, var, eps=1e-5):
    scale = gamma / jnp.sqrt(var + eps)
    bias = beta - mean * scale
    return scale, bias


def prepare_bottleneck_params(w1_oihw, w2_oihw, w3_oihw, bn1, bn2, bn3, eps=1e-5):
    """Fold eval-mode BN into conv weights/biases, convert layouts, lane-pad, cast bf16.

    bn* = (gamma, beta, running_mean, running_var).
    Returns (w1, w2_flat, w3, b1, b2, b3) ready for bottleneck_pallas.
    """
    P, Cin = w1_oihw.shape[:2]
    Pp = _round_up(P, _LANE)

    s1, b1 = _fold_bn(*bn1, eps=eps)
    s2, b2 = _fold_bn(*bn2, eps=eps)
    s3, b3 = _fold_bn(*bn3, eps=eps)

    # 1x1 convs -> (Cin, Cout) matmuls, BN scale folded into output columns.
    w1 = jnp.transpose(w1_oihw[:, :, 0, 0], (1, 0)) * s1[None, :]          # (Cin, P)
    w3 = jnp.transpose(w3_oihw[:, :, 0, 0], (1, 0)) * s3[None, :]          # (P, 4P)
    # 3x3 conv -> HWIO, BN scale folded.
    w2 = jnp.transpose(w2_oihw, (2, 3, 1, 0)) * s2[None, None, None, :]    # (3,3,P,P)

    # Lane-pad the conv1-output / conv2-input channel dim to a multiple of 128 so
    # each im2col tap store is a full unmasked 128-lane slab (padding lanes are 0).
    w1p = jnp.zeros((Cin, Pp), jnp.float32).at[:, :P].set(w1)
    b1p = jnp.zeros((Pp,), jnp.float32).at[:P].set(b1)
    w2p = jnp.zeros((3, 3, Pp, P), jnp.float32).at[:, :, :P, :].set(w2)
    w2p = w2p.reshape(9 * Pp, P)

    return (w1p.astype(jnp.bfloat16), w2p.astype(jnp.bfloat16), w3.astype(jnp.bfloat16),
            b1p.reshape(1, -1).astype(jnp.float32),
            b2.reshape(1, -1).astype(jnp.float32),
            b3.reshape(1, -1).astype(jnp.float32))


# ------------------------------- reference ----------------------------------

def bottleneck_ref(x_nhwc, w1, w2_flat, w3, b1, b2, b3, *, dilation=1):
    """Pure-JAX reference (f32 math, mimics the kernel's bf16 rounding of h1/h2)."""
    Pp = w1.shape[1]
    P = w3.shape[0]
    xf = x_nhwc.astype(jnp.float32)
    w1f = w1.astype(jnp.float32)
    w2f = w2_flat.astype(jnp.float32).reshape(3, 3, Pp, P)
    w3f = w3.astype(jnp.float32)

    h = jnp.einsum('nhwc,cd->nhwd', xf, w1f, precision=lax.Precision.HIGHEST)
    h = jnp.maximum(h + b1, 0.0)
    h = h.astype(jnp.bfloat16).astype(jnp.float32)            # kernel casts h1 -> bf16
    h = lax.conv_general_dilated(
        h, w2f, window_strides=(1, 1),
        padding=[(dilation, dilation), (dilation, dilation)],
        rhs_dilation=(dilation, dilation),
        dimension_numbers=('NHWC', 'HWIO', 'NHWC'),
        precision=lax.Precision.HIGHEST)
    h = jnp.maximum(h + b2, 0.0)
    h = h.astype(jnp.bfloat16).astype(jnp.float32)            # kernel casts h2 -> bf16
    h = jnp.einsum('nhwc,cd->nhwd', h, w3f, precision=lax.Precision.HIGHEST)
    return jnp.maximum(h + b3 + xf, 0.0)                      # f32 (kernel rounds to bf16)


# --------------------------------- test --------------------------------------

if __name__ == "__main__":
    key = jax.random.PRNGKey(0)

    # Small shapes: batch=2, planes=4, inplanes=4*planes=16, spatial=16x16.
    N, H, W = 2, 16, 16
    planes = 4
    inplanes = 4 * planes

    ks = jax.random.split(key, 16)
    x_nchw = jax.random.normal(ks[0], (N, inplanes, H, W), jnp.float32)

    # Conv weights (PyTorch OIHW layouts).
    w1_oihw = 0.1 * jax.random.normal(ks[1], (planes, inplanes, 1, 1), jnp.float32)
    w2_oihw = 0.1 * jax.random.normal(ks[2], (planes, planes, 3, 3), jnp.float32)
    w3_oihw = 0.1 * jax.random.normal(ks[3], (planes * 4, planes, 1, 1), jnp.float32)

    # BatchNorm params (eval-mode running stats).
    def bn_params(kg, kb, km, kv, c):
        gamma = 1.0 + 0.1 * jax.random.normal(kg, (c,), jnp.float32)
        beta = 0.1 * jax.random.normal(kb, (c,), jnp.float32)
        mean = 0.1 * jax.random.normal(km, (c,), jnp.float32)
        var = jnp.abs(jax.random.normal(kv, (c,), jnp.float32)) + 0.5
        return gamma, beta, mean, var

    bn1 = bn_params(ks[4], ks[5], ks[6], ks[7], planes)
    bn2 = bn_params(ks[8], ks[9], ks[10], ks[11], planes)
    bn3 = bn_params(ks[12], ks[13], ks[14], ks[15], planes * 4)

    w1, w2f, w3, b1, b2, b3 = prepare_bottleneck_params(
        w1_oihw, w2_oihw, w3_oihw, bn1, bn2, bn3)

    # NCHW f32 -> NHWC bf16 (halves activation DMA, native MXU dtype).
    x_nhwc = jnp.transpose(x_nchw, (0, 2, 3, 1)).astype(jnp.bfloat16)

    for dilation in (1, 2):
        out = bottleneck_pallas(x_nhwc, w1, w2f, w3, b1, b2, b3,
                                dilation=dilation)
        out = jax.block_until_ready(out)

        ref = bottleneck_ref(x_nhwc, w1, w2f, w3, b1, b2, b3,
                             dilation=dilation)
        ref = jax.block_until_ready(ref)

        assert out.shape == (N, H, W, planes * 4)
        assert out.dtype == jnp.bfloat16
        err = float(jnp.max(jnp.abs(out.astype(jnp.float32) - ref)))
        # Tolerance covers the final bf16 rounding of the output (|out| <~ 4).
        assert err < 3e-2, f"dilation={dilation} max abs err {err}"

    print("KERNEL_OK")
</pallas_src>

<mosaic_0001>
module attributes {stable_mosaic.version = 11 : i64} {
  func.func @_bottleneck_kernel(%arg0: i32, %arg1: memref<1x256x16xbf16, #tpu.memory_space<vmem>>, %arg2: memref<16x128xbf16, #tpu.memory_space<vmem>>, %arg3: memref<1152x4xbf16, #tpu.memory_space<vmem>>, %arg4: memref<4x16xbf16, #tpu.memory_space<vmem>>, %arg5: memref<1x128xf32, #tpu.memory_space<vmem>>, %arg6: memref<1x4xf32, #tpu.memory_space<vmem>>, %arg7: memref<1x16xf32, #tpu.memory_space<vmem>>, %arg8: memref<1x256x16xbf16, #tpu.memory_space<vmem>>, %arg9: memref<18x18x128xbf16, #tpu.memory_space<vmem>>, %arg10: memref<16x16x1152xbf16, #tpu.memory_space<vmem>>) attributes {dimension_semantics = [#tpu.dimension_semantics<parallel>], iteration_bounds = array<i64: 2>, scalar_prefetch = 0 : i64, scratch_operands = 2 : i64, tpu.core_type = #tpu.core_type<tc>, window_params = [{transform_indices = @transform_0, window_bounds = array<i64: 1, 256, 16>}, {pipeline_mode = #tpu.pipeline_mode<synchronous>, transform_indices = @transform_1, window_bounds = array<i64: 16, 128>}, {pipeline_mode = #tpu.pipeline_mode<synchronous>, transform_indices = @transform_2, window_bounds = array<i64: 1152, 4>}, {pipeline_mode = #tpu.pipeline_mode<synchronous>, transform_indices = @transform_3, window_bounds = array<i64: 4, 16>}, {pipeline_mode = #tpu.pipeline_mode<synchronous>, transform_indices = @transform_4, window_bounds = array<i64: 1, 128>}, {pipeline_mode = #tpu.pipeline_mode<synchronous>, transform_indices = @transform_5, window_bounds = array<i64: 1, 4>}, {pipeline_mode = #tpu.pipeline_mode<synchronous>, transform_indices = @transform_6, window_bounds = array<i64: 1, 16>}, {transform_indices = @transform_7, window_bounds = array<i64: 1, 256, 16>}]} {
    %c0 = arith.constant 0 : index
    %c0_0 = arith.constant 0 : index
    %c0_1 = arith.constant 0 : index
    %0 = vector.load %arg1[%c0, %c0_0, %c0_1] : memref<1x256x16xbf16, #tpu.memory_space<vmem>>, vector<1x256x16xbf16>
    %1 = vector.shape_cast %0 : vector<1x256x16xbf16> to vector<256x16xbf16>
    %c0_2 = arith.constant 0 : index
    %c0_3 = arith.constant 0 : index
    %2 = vector.load %arg2[%c0_2, %c0_3] : memref<16x128xbf16, #tpu.memory_space<vmem>>, vector<16x128xbf16>
    %cst = arith.constant dense<0.000000e+00> : vector<256x128xf32>
    %3 = tpu.matmul %1, %2, %cst {dimension_numbers = #tpu.dot_dimension_numbers<[1], [0], [0], [1], [0, 0, 1, 1], [], []>} : vector<256x16xbf16>, vector<16x128xbf16>, vector<256x128xf32> -> vector<256x128xf32>
    %c0_4 = arith.constant 0 : index
    %c0_5 = arith.constant 0 : index
    %4 = vector.load %arg5[%c0_4, %c0_5] : memref<1x128xf32, #tpu.memory_space<vmem>>, vector<1x128xf32>
    %5 = vector.broadcast %4 : vector<1x128xf32> to vector<256x128xf32>
    %6 = arith.addf %3, %5 : vector<256x128xf32>
    %cst_6 = arith.constant 0.000000e+00 : f32
    %7 = vector.broadcast %cst_6 : f32 to vector<256x128xf32>
    %8 = arith.maximumf %6, %7 : vector<256x128xf32>
    %9 = arith.truncf %8 : vector<256x128xf32> to vector<256x128xbf16>
    %cst_7 = arith.constant 0.000000e+00 : bf16
    %10 = vector.broadcast %cst_7 : bf16 to vector<1x18x128xbf16>
    %cst_8 = arith.constant 0.000000e+00 : bf16
    %11 = vector.broadcast %cst_8 : bf16 to vector<16x1x128xbf16>
    %c0_9 = arith.constant 0 : index
    %c0_10 = arith.constant 0 : index
    %c0_11 = arith.constant 0 : index
    %12 = vector.load %arg9[%c0_9, %c0_10, %c0_11] : memref<18x18x128xbf16, #tpu.memory_space<vmem>>, vector<1x18x128xbf16>
    tpu.vector_store %arg9[%c0_9, %c0_10, %c0_11], %10 {strides = array<i32>} : memref<18x18x128xbf16, #tpu.memory_space<vmem>>, vector<1x18x128xbf16>,
    %c17 = arith.constant 17 : index
    %c0_12 = arith.constant 0 : index
    %c0_13 = arith.constant 0 : index
    %13 = vector.load %arg9[%c17, %c0_12, %c0_13] : memref<18x18x128xbf16, #tpu.memory_space<vmem>>, vector<1x18x128xbf16>
    tpu.vector_store %arg9[%c17, %c0_12, %c0_13], %10 {strides = array<i32>} : memref<18x18x128xbf16, #tpu.memory_space<vmem>>, vector<1x18x128xbf16>,
    %c1 = arith.constant 1 : index
    %c0_14 = arith.constant 0 : index
    %c0_15 = arith.constant 0 : index
    %14 = vector.load %arg9[%c1, %c0_14, %c0_15] : memref<18x18x128xbf16, #tpu.memory_space<vmem>>, vector<16x1x128xbf16>
    tpu.vector_store %arg9[%c1, %c0_14, %c0_15], %11 {strides = array<i32>} : memref<18x18x128xbf16, #tpu.memory_space<vmem>>, vector<16x1x128xbf16>,
    %c1_16 = arith.constant 1 : index
    %c17_17 = arith.constant 17 : index
    %c0_18 = arith.constant 0 : index
    %15 = vector.load %arg9[%c1_16, %c17_17, %c0_18] : memref<18x18x128xbf16, #tpu.memory_space<vmem>>, vector<16x1x128xbf16>
    tpu.vector_store %arg9[%c1_16, %c17_17, %c0_18], %11 {strides = array<i32>} : memref<18x18x128xbf16, #tpu.memory_space<vmem>>, vector<16x1x128xbf16>,
    %16 = vector.shape_cast %9 : vector<256x128xbf16> to vector<16x16x128xbf16>
    %c1_19 = arith.constant 1 : index
    %c1_20 = arith.constant 1 : index
    %c0_21 = arith.constant 0 : index
    %17 = vector.load %arg9[%c1_19, %c1_20, %c0_21] : memref<18x18x128xbf16, #tpu.memory_space<vmem>>, vector<16x16x128xbf16>
    tpu.vector_store %arg9[%c1_19, %c1_20, %c0_21], %16 {strides = array<i32>} : memref<18x18x128xbf16, #tpu.memory_space<vmem>>, vector<16x16x128xbf16>,
    %c0_22 = arith.constant 0 : index
    %c0_23 = arith.constant 0 : index
    %c0_24 = arith.constant 0 : index
    %18 = vector.load %arg9[%c0_22, %c0_23, %c0_24] : memref<18x18x128xbf16, #tpu.memory_space<vmem>>, vector<16x16x128xbf16>
    %c0_25 = arith.constant 0 : index
    %c0_26 = arith.constant 0 : index
    %c0_27 = arith.constant 0 : index
    %19 = vector.load %arg10[%c0_25, %c0_26, %c0_27] : memref<16x16x1152xbf16, #tpu.memory_space<vmem>>, vector<16x16x128xbf16>
    tpu.vector_store %arg10[%c0_25, %c0_26, %c0_27], %18 {strides = array<i32>} : memref<16x16x1152xbf16, #tpu.memory_space<vmem>>, vector<16x16x128xbf16>,
    %c0_28 = arith.constant 0 : index
    %c1_29 = arith.constant 1 : index
    %c0_30 = arith.constant 0 : index
    %20 = vector.load %arg9[%c0_28, %c1_29, %c0_30] : memref<18x18x128xbf16, #tpu.memory_space<vmem>>, vector<16x16x128xbf16>
    %c0_31 = arith.constant 0 : index
    %c0_32 = arith.constant 0 : index
    %c128 = arith.constant 128 : index
    %21 = vector.load %arg10[%c0_31, %c0_32, %c128] : memref<16x16x1152xbf16, #tpu.memory_space<vmem>>, vector<16x16x128xbf16>
    tpu.vector_store %arg10[%c0_31, %c0_32, %c128], %20 {strides = array<i32>} : memref<16x16x1152xbf16, #tpu.memory_space<vmem>>, vector<16x16x128xbf16>,
    %c0_33 = arith.constant 0 : index
    %c2 = arith.constant 2 : index
    %c0_34 = arith.constant 0 : index
    %22 = vector.load %arg9[%c0_33, %c2, %c0_34] : memref<18x18x128xbf16, #tpu.memory_space<vmem>>, vector<16x16x128xbf16>
    %c0_35 = arith.constant 0 : index
    %c0_36 = arith.constant 0 : index
    %c256 = arith.constant 256 : index
    %23 = vector.load %arg10[%c0_35, %c0_36, %c256] : memref<16x16x1152xbf16, #tpu.memory_space<vmem>>, vector<16x16x128xbf16>
    tpu.vector_store %arg10[%c0_35, %c0_36, %c256], %22 {strides = array<i32>} : memref<16x16x1152xbf16, #tpu.memory_space<vmem>>, vector<16x16x128xbf16>,
    %c1_37 = arith.constant 1 : index
    %c0_38 = arith.constant 0 : index
    %c0_39 = arith.constant 0 : index
    %24 = vector.load %arg9[%c1_37, %c0_38, %c0_39] : memref<18x18x128xbf16, #tpu.memory_space<vmem>>, vector<16x16x128xbf16>
    %c0_40 = arith.constant 0 : index
    %c0_41 = arith.constant 0 : index
    %c384 = arith.constant 384 : index
    %25 = vector.load %arg10[%c0_40, %c0_41, %c384] : memref<16x16x1152xbf16, #tpu.memory_space<vmem>>, vector<16x16x128xbf16>
    tpu.vector_store %arg10[%c0_40, %c0_41, %c384], %24 {strides = array<i32>} : memref<16x16x1152xbf16, #tpu.memory_space<vmem>>, vector<16x16x128xbf16>,
    %c1_42 = arith.constant 1 : index
    %c1_43 = arith.constant 1 : index
    %c0_44 = arith.constant 0 : index
    %26 = vector.load %arg9[%c1_42, %c1_43, %c0_44] : memref<18x18x128xbf16, #tpu.memory_space<vmem>>, vector<16x16x128xbf16>
    %c0_45 = arith.constant 0 : index
    %c0_46 = arith.constant 0 : index
    %c512 = arith.constant 512 : index
    %27 = vector.load %arg10[%c0_45, %c0_46, %c512] : memref<16x16x1152xbf16, #tpu.memory_space<vmem>>, vector<16x16x128xbf16>
    tpu.vector_store %arg10[%c0_45, %c0_46, %c512], %26 {strides = array<i32>} : memref<16x16x1152xbf16, #tpu.memory_space<vmem>>, vector<16x16x128xbf16>,
    %c1_47 = arith.constant 1 : index
    %c2_48 = arith.constant 2 : index
    %c0_49 = arith.constant 0 : index
    %28 = vector.load %arg9[%c1_47, %c2_48, %c0_49] : memref<18x18x128xbf16, #tpu.memory_space<vmem>>, vector<16x16x128xbf16>
    %c0_50 = arith.constant 0 : index
    %c0_51 = arith.constant 0 : index
    %c640 = arith.constant 640 : index
    %29 = vector.load %arg10[%c0_50, %c0_51, %c640] : memref<16x16x1152xbf16, #tpu.memory_space<vmem>>, vector<16x16x128xbf16>
    tpu.vector_store %arg10[%c0_50, %c0_51, %c640], %28 {strides = array<i32>} : memref<16x16x1152xbf16, #tpu.memory_space<vmem>>, vector<16x16x128xbf16>,
    %c2_52 = arith.constant 2 : index
    %c0_53 = arith.constant 0 : index
    %c0_54 = arith.constant 0 : index
    %30 = vector.load %arg9[%c2_52, %c0_53, %c0_54] : memref<18x18x128xbf16, #tpu.memory_space<vmem>>, vector<16x16x128xbf16>
    %c0_55 = arith.constant 0 : index
    %c0_56 = arith.constant 0 : index
    %c768 = arith.constant 768 : index
    %31 = vector.load %arg10[%c0_55, %c0_56, %c768] : memref<16x16x1152xbf16, #tpu.memory_space<vmem>>, vector<16x16x128xbf16>
    tpu.vector_store %arg10[%c0_55, %c0_56, %c768], %30 {strides = array<i32>} : memref<16x16x1152xbf16, #tpu.memory_space<vmem>>, vector<16x16x128xbf16>,
    %c2_57 = arith.constant 2 : index
    %c1_58 = arith.constant 1 : index
    %c0_59 = arith.constant 0 : index
    %32 = vector.load %arg9[%c2_57, %c1_58, %c0_59] : memref<18x18x128xbf16, #tpu.memory_space<vmem>>, vector<16x16x128xbf16>
    %c0_60 = arith.constant 0 : index
    %c0_61 = arith.constant 0 : index
    %c896 = arith.constant 896 : index
    %33 = vector.load %arg10[%c0_60, %c0_61, %c896] : memref<16x16x1152xbf16, #tpu.memory_space<vmem>>, vector<16x16x128xbf16>
    tpu.vector_store %arg10[%c0_60, %c0_61, %c896], %32 {strides = array<i32>} : memref<16x16x1152xbf16, #tpu.memory_space<vmem>>, vector<16x16x128xbf16>,
    %c2_62 = arith.constant 2 : index
    %c2_63 = arith.constant 2 : index
    %c0_64 = arith.constant 0 : index
    %34 = vector.load %arg9[%c2_62, %c2_63, %c0_64] : memref<18x18x128xbf16, #tpu.memory_space<vmem>>, vector<16x16x128xbf16>
    %c0_65 = arith.constant 0 : index
    %c0_66 = arith.constant 0 : index
    %c1024 = arith.constant 1024 : index
    %35 = vector.load %arg10[%c0_65, %c0_66, %c1024] : memref<16x16x1152xbf16, #tpu.memory_space<vmem>>, vector<16x16x128xbf16>
    tpu.vector_store %arg10[%c0_65, %c0_66, %c1024], %34 {strides = array<i32>} : memref<16x16x1152xbf16, #tpu.memory_space<vmem>>, vector<16x16x128xbf16>,
    %c0_67 = arith.constant 0 : index
    %c0_68 = arith.constant 0 : index
    %c0_69 = arith.constant 0 : index
    %36 = vector.load %arg10[%c0_67, %c0_68, %c0_69] : memref<16x16x1152xbf16, #tpu.memory_space<vmem>>, vector<16x16x1152xbf16>
    %37 = vector.shape_cast %36 : vector<16x16x1152xbf16> to vector<256x1152xbf16>
    %c0_70 = arith.constant 0 : index
    %c0_71 = arith.constant 0 : index
    %38 = vector.load %arg3[%c0_70, %c0_71] : memref<1152x4xbf16, #tpu.memory_space<vmem>>, vector<1152x4xbf16>
    %cst_72 = arith.constant dense<0.000000e+00> : vector<256x4xf32>
    %39 = tpu.matmul %37, %38, %cst_72 {dimension_numbers = #tpu.dot_dimension_numbers<[1], [0], [0], [1], [0, 0, 1, 1], [], []>} : vector<256x1152xbf16>, vector<1152x4xbf16>, vector<256x4xf32> -> vector<256x4xf32>
    %c0_73 = arith.constant 0 : index
    %c0_74 = arith.constant 0 : index
    %40 = vector.load %arg6[%c0_73, %c0_74] : memref<1x4xf32, #tpu.memory_space<vmem>>, vector<1x4xf32>
    %41 = vector.broadcast %40 : vector<1x4xf32> to vector<256x4xf32>
    %42 = arith.addf %39, %41 : vector<256x4xf32>
    %cst_75 = arith.constant 0.000000e+00 : f32
    %43 = vector.broadcast %cst_75 : f32 to vector<256x4xf32>
    %44 = arith.maximumf %42, %43 : vector<256x4xf32>
    %45 = arith.truncf %44 : vector<256x4xf32> to vector<256x4xbf16>
    %c0_76 = arith.constant 0 : index
    %c0_77 = arith.constant 0 : index
    %46 = vector.load %arg4[%c0_76, %c0_77] : memref<4x16xbf16, #tpu.memory_space<vmem>>, vector<4x16xbf16>
    %cst_78 = arith.constant dense<0.000000e+00> : vector<256x16xf32>
    %47 = tpu.matmul %45, %46, %cst_78 {dimension_numbers = #tpu.dot_dimension_numbers<[1], [0], [0], [1], [0, 0, 1, 1], [], []>} : vector<256x4xbf16>, vector<4x16xbf16>, vector<256x16xf32> -> vector<256x16xf32>
    %c0_79 = arith.constant 0 : index
    %c0_80 = arith.constant 0 : index
    %48 = vector.load %arg7[%c0_79, %c0_80] : memref<1x16xf32, #tpu.memory_space<vmem>>, vector<1x16xf32>
    %49 = vector.broadcast %48 : vector<1x16xf32> to vector<256x16xf32>
    %50 = arith.addf %47, %49 : vector<256x16xf32>
    %51 = arith.extf %1 : vector<256x16xbf16> to vector<256x16xf32>
    %52 = arith.addf %50, %51 : vector<256x16xf32>
    %cst_81 = arith.constant 0.000000e+00 : f32
    %53 = vector.broadcast %cst_81 : f32 to vector<256x16xf32>
    %54 = arith.maximumf %52, %53 : vector<256x16xf32>
    %55 = arith.truncf %54 : vector<256x16xf32> to vector<256x16xbf16>
    %c0_82 = arith.constant 0 : index
    %c0_83 = arith.constant 0 : index
    %c0_84 = arith.constant 0 : index
    %56 = vector.load %arg8[%c0_82, %c0_83, %c0_84] : memref<1x256x16xbf16, #tpu.memory_space<vmem>>, vector<1x256x16xbf16>
    %57 = vector.shape_cast %56 : vector<1x256x16xbf16> to vector<256x16xbf16>
    %58 = vector.shape_cast %55 : vector<256x16xbf16> to vector<1x256x16xbf16>
    tpu.vector_store %arg8[%c0_82, %c0_83, %c0_84], %58 {strides = array<i32>} : memref<1x256x16xbf16, #tpu.memory_space<vmem>>, vector<1x256x16xbf16>,
    return
  }
  func.func @transform_0(%arg0: i32) -> (i32, i32, i32) {
    %c0_i32 = arith.constant 0 : i32
    %c0_i32_0 = arith.constant 0 : i32
    %c0_i32_1 = arith.constant 0 : i32
    return %arg0, %c0_i32, %c0_i32_0 : i32, i32, i32
  }
  func.func @transform_1(%arg0: i32) -> (i32, i32) {
    %c0_i32 = arith.constant 0 : i32
    %c0_i32_0 = arith.constant 0 : i32
    %c0_i32_1 = arith.constant 0 : i32
    return %c0_i32, %c0_i32_0 : i32, i32
  }
  func.func @transform_2(%arg0: i32) -> (i32, i32) {
    %c0_i32 = arith.constant 0 : i32
    %c0_i32_0 = arith.constant 0 : i32
    %c0_i32_1 = arith.constant 0 : i32
    return %c0_i32, %c0_i32_0 : i32, i32
  }
  func.func @transform_3(%arg0: i32) -> (i32, i32) {
    %c0_i32 = arith.constant 0 : i32
    %c0_i32_0 = arith.constant 0 : i32
    %c0_i32_1 = arith.constant 0 : i32
    return %c0_i32, %c0_i32_0 : i32, i32
  }
  func.func @transform_4(%arg0: i32) -> (i32, i32) {
    %c0_i32 = arith.constant 0 : i32
    %c0_i32_0 = arith.constant 0 : i32
    %c0_i32_1 = arith.constant 0 : i32
    return %c0_i32, %c0_i32_0 : i32, i32
  }
  func.func @transform_5(%arg0: i32) -> (i32, i32) {
    %c0_i32 = arith.constant 0 : i32
    %c0_i32_0 = arith.constant 0 : i32
    %c0_i32_1 = arith.constant 0 : i32
    return %c0_i32, %c0_i32_0 : i32, i32
  }
  func.func @transform_6(%arg0: i32) -> (i32, i32) {
    %c0_i32 = arith.constant 0 : i32
    %c0_i32_0 = arith.constant 0 : i32
    %c0_i32_1 = arith.constant 0 : i32
    return %c0_i32, %c0_i32_0 : i32, i32
  }
  func.func @transform_7(%arg0: i32) -> (i32, i32, i32) {
    %c0_i32 = arith.constant 0 : i32
    %c0_i32_0 = arith.constant 0 : i32
    %c0_i32_1 = arith.constant 0 : i32
    return %arg0, %c0_i32, %c0_i32_0 : i32, i32, i32
  }
}

module attributes {stable_mosaic.version = 11 : i64} {
  func.func @_bottleneck_kernel(%arg0: i32, %arg1: memref<1x256x16xbf16, #tpu.memory_space<vmem>>, %arg2: memref<16x128xbf16, #tpu.memory_space<vmem>>, %arg3: memref<1152x4xbf16, #tpu.memory_space<vmem>>, %arg4: memref<4x16xbf16, #tpu.memory_space<vmem>>, %arg5: memref<1x128xf32, #tpu.memory_space<vmem>>, %arg6: memref<1x4xf32, #tpu.memory_space<vmem>>, %arg7: memref<1x16xf32, #tpu.memory_space<vmem>>, %arg8: memref<1x256x16xbf16, #tpu.memory_space<vmem>>, %arg9: memref<18x18x128xbf16, #tpu.memory_space<vmem>>, %arg10: memref<16x16x1152xbf16, #tpu.memory_space<vmem>>) attributes {dimension_semantics = [#tpu.dimension_semantics<parallel>], iteration_bounds = array<i64: 2>, scalar_prefetch = 0 : i64, scratch_operands = 2 : i64, tpu.core_type = #tpu.core_type<tc>, window_params = [{transform_indices = @transform_0, window_bounds = array<i64: 1, 256, 16>}, {pipeline_mode = #tpu.pipeline_mode<synchronous>, transform_indices = @transform_1, window_bounds = array<i64: 16, 128>}, {pipeline_mode = #tpu.pipeline_mode<synchronous>, transform_indices = @transform_2, window_bounds = array<i64: 1152, 4>}, {pipeline_mode = #tpu.pipeline_mode<synchronous>, transform_indices = @transform_3, window_bounds = array<i64: 4, 16>}, {pipeline_mode = #tpu.pipeline_mode<synchronous>, transform_indices = @transform_4, window_bounds = array<i64: 1, 128>}, {pipeline_mode = #tpu.pipeline_mode<synchronous>, transform_indices = @transform_5, window_bounds = array<i64: 1, 4>}, {pipeline_mode = #tpu.pipeline_mode<synchronous>, transform_indices = @transform_6, window_bounds = array<i64: 1, 16>}, {transform_indices = @transform_7, window_bounds = array<i64: 1, 256, 16>}]} {
    %c0 = arith.constant 0 : index
    %c0_0 = arith.constant 0 : index
    %c0_1 = arith.constant 0 : index
    %0 = vector.load %arg1[%c0, %c0_0, %c0_1] : memref<1x256x16xbf16, #tpu.memory_space<vmem>>, vector<1x256x16xbf16>
    %1 = vector.shape_cast %0 : vector<1x256x16xbf16> to vector<256x16xbf16>
    %c0_2 = arith.constant 0 : index
    %c0_3 = arith.constant 0 : index
    %2 = vector.load %arg2[%c0_2, %c0_3] : memref<16x128xbf16, #tpu.memory_space<vmem>>, vector<16x128xbf16>
    %cst = arith.constant dense<0.000000e+00> : vector<256x128xf32>
    %3 = tpu.matmul %1, %2, %cst {dimension_numbers = #tpu.dot_dimension_numbers<[1], [0], [0], [1], [0, 0, 1, 1], [], []>} : vector<256x16xbf16>, vector<16x128xbf16>, vector<256x128xf32> -> vector<256x128xf32>
    %c0_4 = arith.constant 0 : index
    %c0_5 = arith.constant 0 : index
    %4 = vector.load %arg5[%c0_4, %c0_5] : memref<1x128xf32, #tpu.memory_space<vmem>>, vector<1x128xf32>
    %5 = vector.broadcast %4 : vector<1x128xf32> to vector<256x128xf32>
    %6 = arith.addf %3, %5 : vector<256x128xf32>
    %cst_6 = arith.constant 0.000000e+00 : f32
    %7 = vector.broadcast %cst_6 : f32 to vector<256x128xf32>
    %8 = arith.maximumf %6, %7 : vector<256x128xf32>
    %9 = arith.truncf %8 : vector<256x128xf32> to vector<256x128xbf16>
    %cst_7 = arith.constant 0.000000e+00 : bf16
    %10 = vector.broadcast %cst_7 : bf16 to vector<1x18x128xbf16>
    %cst_8 = arith.constant 0.000000e+00 : bf16
    %11 = vector.broadcast %cst_8 : bf16 to vector<16x1x128xbf16>
    %c0_9 = arith.constant 0 : index
    %c0_10 = arith.constant 0 : index
    %c0_11 = arith.constant 0 : index
    %12 = vector.load %arg9[%c0_9, %c0_10, %c0_11] : memref<18x18x128xbf16, #tpu.memory_space<vmem>>, vector<1x18x128xbf16>
    tpu.vector_store %arg9[%c0_9, %c0_10, %c0_11], %10 {strides = array<i32>} : memref<18x18x128xbf16, #tpu.memory_space<vmem>>, vector<1x18x128xbf16>,
    %c17 = arith.constant 17 : index
    %c0_12 = arith.constant 0 : index
    %c0_13 = arith.constant 0 : index
    %13 = vector.load %arg9[%c17, %c0_12, %c0_13] : memref<18x18x128xbf16, #tpu.memory_space<vmem>>, vector<1x18x128xbf16>
    tpu.vector_store %arg9[%c17, %c0_12, %c0_13], %10 {strides = array<i32>} : memref<18x18x128xbf16, #tpu.memory_space<vmem>>, vector<1x18x128xbf16>,
    %c1 = arith.constant 1 : index
    %c0_14 = arith.constant 0 : index
    %c0_15 = arith.constant 0 : index
    %14 = vector.load %arg9[%c1, %c0_14, %c0_15] : memref<18x18x128xbf16, #tpu.memory_space<vmem>>, vector<16x1x128xbf16>
    tpu.vector_store %arg9[%c1, %c0_14, %c0_15], %11 {strides = array<i32>} : memref<18x18x128xbf16, #tpu.memory_space<vmem>>, vector<16x1x128xbf16>,
    %c1_16 = arith.constant 1 : index
    %c17_17 = arith.constant 17 : index
    %c0_18 = arith.constant 0 : index
    %15 = vector.load %arg9[%c1_16, %c17_17, %c0_18] : memref<18x18x128xbf16, #tpu.memory_space<vmem>>, vector<16x1x128xbf16>
    tpu.vector_store %arg9[%c1_16, %c17_17, %c0_18], %11 {strides = array<i32>} : memref<18x18x128xbf16, #tpu.memory_space<vmem>>, vector<16x1x128xbf16>,
    %16 = vector.shape_cast %9 : vector<256x128xbf16> to vector<16x16x128xbf16>
    %c1_19 = arith.constant 1 : index
    %c1_20 = arith.constant 1 : index
    %c0_21 = arith.constant 0 : index
    %17 = vector.load %arg9[%c1_19, %c1_20, %c0_21] : memref<18x18x128xbf16, #tpu.memory_space<vmem>>, vector<16x16x128xbf16>
    tpu.vector_store %arg9[%c1_19, %c1_20, %c0_21], %16 {strides = array<i32>} : memref<18x18x128xbf16, #tpu.memory_space<vmem>>, vector<16x16x128xbf16>,
    %c0_22 = arith.constant 0 : index
    %c0_23 = arith.constant 0 : index
    %c0_24 = arith.constant 0 : index
    %18 = vector.load %arg9[%c0_22, %c0_23, %c0_24] : memref<18x18x128xbf16, #tpu.memory_space<vmem>>, vector<16x16x128xbf16>
    %c0_25 = arith.constant 0 : index
    %c0_26 = arith.constant 0 : index
    %c0_27 = arith.constant 0 : index
    %19 = vector.load %arg10[%c0_25, %c0_26, %c0_27] : memref<16x16x1152xbf16, #tpu.memory_space<vmem>>, vector<16x16x128xbf16>
    tpu.vector_store %arg10[%c0_25, %c0_26, %c0_27], %18 {strides = array<i32>} : memref<16x16x1152xbf16, #tpu.memory_space<vmem>>, vector<16x16x128xbf16>,
    %c0_28 = arith.constant 0 : index
    %c1_29 = arith.constant 1 : index
    %c0_30 = arith.constant 0 : index
    %20 = vector.load %arg9[%c0_28, %c1_29, %c0_30] : memref<18x18x128xbf16, #tpu.memory_space<vmem>>, vector<16x16x128xbf16>
    %c0_31 = arith.constant 0 : index
    %c0_32 = arith.constant 0 : index
    %c128 = arith.constant 128 : index
    %21 = vector.load %arg10[%c0_31, %c0_32, %c128] : memref<16x16x1152xbf16, #tpu.memory_space<vmem>>, vector<16x16x128xbf16>
    tpu.vector_store %arg10[%c0_31, %c0_32, %c128], %20 {strides = array<i32>} : memref<16x16x1152xbf16, #tpu.memory_space<vmem>>, vector<16x16x128xbf16>,
    %c0_33 = arith.constant 0 : index
    %c2 = arith.constant 2 : index
    %c0_34 = arith.constant 0 : index
    %22 = vector.load %arg9[%c0_33, %c2, %c0_34] : memref<18x18x128xbf16, #tpu.memory_space<vmem>>, vector<16x16x128xbf16>
    %c0_35 = arith.constant 0 : index
    %c0_36 = arith.constant 0 : index
    %c256 = arith.constant 256 : index
    %23 = vector.load %arg10[%c0_35, %c0_36, %c256] : memref<16x16x1152xbf16, #tpu.memory_space<vmem>>, vector<16x16x128xbf16>
    tpu.vector_store %arg10[%c0_35, %c0_36, %c256], %22 {strides = array<i32>} : memref<16x16x1152xbf16, #tpu.memory_space<vmem>>, vector<16x16x128xbf16>,
    %c1_37 = arith.constant 1 : index
    %c0_38 = arith.constant 0 : index
    %c0_39 = arith.constant 0 : index
    %24 = vector.load %arg9[%c1_37, %c0_38, %c0_39] : memref<18x18x128xbf16, #tpu.memory_space<vmem>>, vector<16x16x128xbf16>
    %c0_40 = arith.constant 0 : index
    %c0_41 = arith.constant 0 : index
    %c384 = arith.constant 384 : index
    %25 = vector.load %arg10[%c0_40, %c0_41, %c384] : memref<16x16x1152xbf16, #tpu.memory_space<vmem>>, vector<16x16x128xbf16>
    tpu.vector_store %arg10[%c0_40, %c0_41, %c384], %24 {strides = array<i32>} : memref<16x16x1152xbf16, #tpu.memory_space<vmem>>, vector<16x16x128xbf16>,
    %c1_42 = arith.constant 1 : index
    %c1_43 = arith.constant 1 : index
    %c0_44 = arith.constant 0 : index
    %26 = vector.load %arg9[%c1_42, %c1_43, %c0_44] : memref<18x18x128xbf16, #tpu.memory_space<vmem>>, vector<16x16x128xbf16>
    %c0_45 = arith.constant 0 : index
    %c0_46 = arith.constant 0 : index
    %c512 = arith.constant 512 : index
    %27 = vector.load %arg10[%c0_45, %c0_46, %c512] : memref<16x16x1152xbf16, #tpu.memory_space<vmem>>, vector<16x16x128xbf16>
    tpu.vector_store %arg10[%c0_45, %c0_46, %c512], %26 {strides = array<i32>} : memref<16x16x1152xbf16, #tpu.memory_space<vmem>>, vector<16x16x128xbf16>,
    %c1_47 = arith.constant 1 : index
    %c2_48 = arith.constant 2 : index
    %c0_49 = arith.constant 0 : index
    %28 = vector.load %arg9[%c1_47, %c2_48, %c0_49] : memref<18x18x128xbf16, #tpu.memory_space<vmem>>, vector<16x16x128xbf16>
    %c0_50 = arith.constant 0 : index
    %c0_51 = arith.constant 0 : index
    %c640 = arith.constant 640 : index
    %29 = vector.load %arg10[%c0_50, %c0_51, %c640] : memref<16x16x1152xbf16, #tpu.memory_space<vmem>>, vector<16x16x128xbf16>
    tpu.vector_store %arg10[%c0_50, %c0_51, %c640], %28 {strides = array<i32>} : memref<16x16x1152xbf16, #tpu.memory_space<vmem>>, vector<16x16x128xbf16>,
    %c2_52 = arith.constant 2 : index
    %c0_53 = arith.constant 0 : index
    %c0_54 = arith.constant 0 : index
    %30 = vector.load %arg9[%c2_52, %c0_53, %c0_54] : memref<18x18x128xbf16, #tpu.memory_space<vmem>>, vector<16x16x128xbf16>
    %c0_55 = arith.constant 0 : index
    %c0_56 = arith.constant 0 : index
    %c768 = arith.constant 768 : index
    %31 = vector.load %arg10[%c0_55, %c0_56, %c768] : memref<16x16x1152xbf16, #tpu.memory_space<vmem>>, vector<16x16x128xbf16>
    tpu.vector_store %arg10[%c0_55, %c0_56, %c768], %30 {strides = array<i32>} : memref<16x16x1152xbf16, #tpu.memory_space<vmem>>, vector<16x16x128xbf16>,
    %c2_57 = arith.constant 2 : index
    %c1_58 = arith.constant 1 : index
    %c0_59 = arith.constant 0 : index
    %32 = vector.load %arg9[%c2_57, %c1_58, %c0_59] : memref<18x18x128xbf16, #tpu.memory_space<vmem>>, vector<16x16x128xbf16>
    %c0_60 = arith.constant 0 : index
    %c0_61 = arith.constant 0 : index
    %c896 = arith.constant 896 : index
    %33 = vector.load %arg10[%c0_60, %c0_61, %c896] : memref<16x16x1152xbf16, #tpu.memory_space<vmem>>, vector<16x16x128xbf16>
    tpu.vector_store %arg10[%c0_60, %c0_61, %c896], %32 {strides = array<i32>} : memref<16x16x1152xbf16, #tpu.memory_space<vmem>>, vector<16x16x128xbf16>,
    %c2_62 = arith.constant 2 : index
    %c2_63 = arith.constant 2 : index
    %c0_64 = arith.constant 0 : index
    %34 = vector.load %arg9[%c2_62, %c2_63, %c0_64] : memref<18x18x128xbf16, #tpu.memory_space<vmem>>, vector<16x16x128xbf16>
    %c0_65 = arith.constant 0 : index
    %c0_66 = arith.constant 0 : index
    %c1024 = arith.constant 1024 : index
    %35 = vector.load %arg10[%c0_65, %c0_66, %c1024] : memref<16x16x1152xbf16, #tpu.memory_space<vmem>>, vector<16x16x128xbf16>
    tpu.vector_store %arg10[%c0_65, %c0_66, %c1024], %34 {strides = array<i32>} : memref<16x16x1152xbf16, #tpu.memory_space<vmem>>, vector<16x16x128xbf16>,
    %c0_67 = arith.constant 0 : index
    %c0_68 = arith.constant 0 : index
    %c0_69 = arith.constant 0 : index
    %36 = vector.load %arg10[%c0_67, %c0_68, %c0_69] : memref<16x16x1152xbf16, #tpu.memory_space<vmem>>, vector<16x16x1152xbf16>
    %37 = vector.shape_cast %36 : vector<16x16x1152xbf16> to vector<256x1152xbf16>
    %c0_70 = arith.constant 0 : index
    %c0_71 = arith.constant 0 : index
    %38 = vector.load %arg3[%c0_70, %c0_71] : memref<1152x4xbf16, #tpu.memory_space<vmem>>, vector<1152x4xbf16>
    %cst_72 = arith.constant dense<0.000000e+00> : vector<256x4xf32>
    %39 = tpu.matmul %37, %38, %cst_72 {dimension_numbers = #tpu.dot_dimension_numbers<[1], [0], [0], [1], [0, 0, 1, 1], [], []>} : vector<256x1152xbf16>, vector<1152x4xbf16>, vector<256x4xf32> -> vector<256x4xf32>
    %c0_73 = arith.constant 0 : index
    %c0_74 = arith.constant 0 : index
    %40 = vector.load %arg6[%c0_73, %c0_74] : memref<1x4xf32, #tpu.memory_space<vmem>>, vector<1x4xf32>
    %41 = vector.broadcast %40 : vector<1x4xf32> to vector<256x4xf32>
    %42 = arith.addf %39, %41 : vector<256x4xf32>
    %cst_75 = arith.constant 0.000000e+00 : f32
    %43 = vector.broadcast %cst_75 : f32 to vector<256x4xf32>
    %44 = arith.maximumf %42, %43 : vector<256x4xf32>
    %45 = arith.truncf %44 : vector<256x4xf32> to vector<256x4xbf16>
    %c0_76 = arith.constant 0 : index
    %c0_77 = arith.constant 0 : index
    %46 = vector.load %arg4[%c0_76, %c0_77] : memref<4x16xbf16, #tpu.memory_space<vmem>>, vector<4x16xbf16>
    %cst_78 = arith.constant dense<0.000000e+00> : vector<256x16xf32>
    %47 = tpu.matmul %45, %46, %cst_78 {dimension_numbers = #tpu.dot_dimension_numbers<[1], [0], [0], [1], [0, 0, 1, 1], [], []>} : vector<256x4xbf16>, vector<4x16xbf16>, vector<256x16xf32> -> vector<256x16xf32>
    %c0_79 = arith.constant 0 : index
    %c0_80 = arith.constant 0 : index
    %48 = vector.load %arg7[%c0_79, %c0_80] : memref<1x16xf32, #tpu.memory_space<vmem>>, vector<1x16xf32>
    %49 = vector.broadcast %48 : vector<1x16xf32> to vector<256x16xf32>
    %50 = arith.addf %47, %49 : vector<256x16xf32>
    %51 = arith.extf %1 : vector<256x16xbf16> to vector<256x16xf32>
    %52 = arith.addf %50, %51 : vector<256x16xf32>
    %cst_81 = arith.constant 0.000000e+00 : f32
    %53 = vector.broadcast %cst_81 : f32 to vector<256x16xf32>
    %54 = arith.maximumf %52, %53 : vector<256x16xf32>
    %55 = arith.truncf %54 : vector<256x16xf32> to vector<256x16xbf16>
    %c0_82 = arith.constant 0 : index
    %c0_83 = arith.constant 0 : index
    %c0_84 = arith.constant 0 : index
    %56 = vector.load %arg8[%c0_82, %c0_83, %c0_84] : memref<1x256x16xbf16, #tpu.memory_space<vmem>>, vector<1x256x16xbf16>
    %57 = vector.shape_cast %56 : vector<1x256x16xbf16> to vector<256x16xbf16>
    %58 = vector.shape_cast %55 : vector<256x16xbf16> to vector<1x256x16xbf16>
    tpu.vector_store %arg8[%c0_82, %c0_83, %c0_84], %58 {strides = array<i32>} : memref<1x256x16xbf16, #tpu.memory_space<vmem>>, vector<1x256x16xbf16>,
    return
  }
  func.func @transform_0(%arg0: i32) -> (i32, i32, i32) {
    %c0_i32 = arith.constant 0 : i32
    %c0_i32_0 = arith.constant 0 : i32
    %c0_i32_1 = arith.constant 0 : i32
    return %arg0, %c0_i32, %c0_i32_0 : i32, i32, i32
  }
  func.func @transform_1(%arg0: i32) -> (i32, i32) {
    %c0_i32 = arith.constant 0 : i32
    %c0_i32_0 = arith.constant 0 : i32
    %c0_i32_1 = arith.constant 0 : i32
    return %c0_i32, %c0_i32_0 : i32, i32
  }
  func.func @transform_2(%arg0: i32) -> (i32, i32) {
    %c0_i32 = arith.constant 0 : i32
    %c0_i32_0 = arith.constant 0 : i32
    %c0_i32_1 = arith.constant 0 : i32
    return %c0_i32, %c0_i32_0 : i32, i32
  }
  func.func @transform_3(%arg0: i32) -> (i32, i32) {
    %c0_i32 = arith.constant 0 : i32
    %c0_i32_0 = arith.constant 0 : i32
    %c0_i32_1 = arith.constant 0 : i32
    return %c0_i32, %c0_i32_0 : i32, i32
  }
  func.func @transform_4(%arg0: i32) -> (i32, i32) {
    %c0_i32 = arith.constant 0 : i32
    %c0_i32_0 = arith.constant 0 : i32
    %c0_i32_1 = arith.constant 0 : i32
    return %c0_i32, %c0_i32_0 : i32, i32
  }
  func.func @transform_5(%arg0: i32) -> (i32, i32) {
    %c0_i32 = arith.constant 0 : i32
    %c0_i32_0 = arith.constant 0 : i32
    %c0_i32_1 = arith.constant 0 : i32
    return %c0_i32, %c0_i32_0 : i32, i32
  }
  func.func @transform_6(%arg0: i32) -> (i32, i32) {
    %c0_i32 = arith.constant 0 : i32
    %c0_i32_0 = arith.constant 0 : i32
    %c0_i32_1 = arith.constant 0 : i32
    return %c0_i32, %c0_i32_0 : i32, i32
  }
  func.func @transform_7(%arg0: i32) -> (i32, i32, i32) {
    %c0_i32 = arith.constant 0 : i32
    %c0_i32_0 = arith.constant 0 : i32
    %c0_i32_1 = arith.constant 0 : i32
    return %arg0, %c0_i32, %c0_i32_0 : i32, i32, i32
  }
}

</mosaic_0001>

<llo_original>
// kernel: tpu_custom_call.1
$region0: #{tpu_custom_call.1}
  #allocation0 [shape = 'u32[]', space=smem, size = 0x4, offset = 0x4, fixed_abs, tag = 'smem constant byte address 0x4 - core index']
  #allocation1 [shape = 'u32[144,128]{1,0:T(1,128)}', space=vmem, size = 0x12000, scoped, tag = 'internal scratch']
  #allocation2 [shape = 'bf16[18,18,128]{2,1,0:T(8,128)(2,1)}', space=vmem, size = 0x1b000, scoped, tag = 'scratch operand']
  #allocation3 [shape = 'bf16[16,16,1152]{2,1,0:T(16,128)(2,1)}', space=vmem, size = 0x90000, scoped, tag = 'scratch operand']
  %s0 = inlined_call_operand.hbm [shape: bf16[2,256,16], index: 0, kind: input, shape index: {}]
  %s1 = inlined_call_operand.hbm [shape: bf16[16,128], index: 1, kind: input, shape index: {}]
  %s2 = inlined_call_operand.hbm [shape: bf16[1152,4], index: 2, kind: input, shape index: {}]
  %s3 = inlined_call_operand.hbm [shape: bf16[4,16], index: 3, kind: input, shape index: {}]
  %s4 = inlined_call_operand.hbm [shape: f32[1,128], index: 4, kind: input, shape index: {}]
  %s5 = inlined_call_operand.hbm [shape: f32[1,4], index: 5, kind: input, shape index: {}]
  %s6 = inlined_call_operand.hbm [shape: f32[1,16], index: 6, kind: input, shape index: {}]
  %s7 = inlined_call_operand.hbm [shape: bf16[2,256,16], index: 7, kind: output, shape index: {}]
  %s8 = sld [smem:[#allocation0]]
  $region89: #{tpu_custom_call.1} parent=0
    _
  %s10 = ssub.s32 1, %s8
  %s11 = scalar_select 0, %s10, %s8
  $region1: #{tpu_custom_call.1} parent=0
    #allocation4 [shape = 'u8[131072]{0}', space=vmem, size = 0x20000, scoped, tag = 'input window, operand 0']
    #allocation5 [shape = 's32[2]{0}', space=sflag, size = 0x8, scoped, tag = 'scoped memory for tpu_custom_call.1']
    #allocation6 [shape = 's32[2]{0}', space=sflag, size = 0x8, scoped, tag = 'scoped memory for tpu_custom_call.1']
    #allocation7 [shape = 'u8[4096]{0}', space=vmem, size = 0x1000, scoped, tag = 'input window, operand 1, single buffered']
    #allocation8 [shape = 's32[1]{0}', space=sflag, size = 0x4, scoped, tag = 'scoped memory for tpu_custom_call.1']
    #allocation9 [shape = 'u8[294912]{0}', space=vmem, size = 0x48000, scoped, tag = 'input window, operand 2, single buffered']
    #allocation10 [shape = 'u8[1024]{0}', space=vmem, size = 0x400, scoped, tag = 'input window, operand 3, single buffered']
    #allocation11 [shape = 's32[1]{0}', space=sflag, size = 0x4, scoped, tag = 'scoped memory for tpu_custom_call.1']
    #allocation12 [shape = 'u8[512]{0}', space=vmem, size = 0x400, scoped, tag = 'input window, operand 4, single buffered']
    #allocation13 [shape = 'u8[512]{0}', space=vmem, size = 0x400, scoped, tag = 'input window, operand 5, single buffered']
    #allocation14 [shape = 's32[1]{0}', space=sflag, size = 0x4, scoped, tag = 'scoped memory for tpu_custom_call.1']
    #allocation15 [shape = 'u8[512]{0}', space=vmem, size = 0x400, scoped, tag = 'input window, operand 6, single buffered']
    #allocation16 [shape = 'u8[131072]{0}', space=vmem, size = 0x20000, scoped, tag = 'output window, operand 0']
    %12 = vsyncpa [#allocation5], 0
    %s13 = scalar_lea.sflag [#allocation5], 1
    %14 = vsyncpa %s13, 0
    %15 = vsyncpa [#allocation8], 0
    %16 = vsyncpa [#allocation11], 0
    %17 = vsyncpa [#allocation14], 0
    %18 = vsyncpa [#allocation6], 0
    %s19 = scalar_lea.sflag [#allocation6], 1
    %20 = vsyncpa %s19, 0
    loop: start=0, step=1, limit=4
    $region2: #{tpu_custom_call.1} parent=1 // loop_pre_header
      _
    $region3: #{tpu_custom_call.1} parent=1 // loop_header
      %s22 = sphi 0, %s26
      %p23 = scmp.ge.s32.totalorder %s22, 4
      %s32 = sphi 0, %s34
      %s35 = sphi 0, %s32
      %s36 = sphi 0, %s35
      %s52 = sphi 0, %s36
      %s56 = sphi 0, %s56
      %s58 = sphi 0, %s56
      %s59 = sphi 0, %s58
      %s73 = sphi 0, %s59
      %s77 = sphi 0, %s77
      %s79 = sphi 0, %s77
      %s80 = sphi 0, %s79
      %s94 = sphi 0, %s80
      %s98 = sphi 0, %s98
      %s100 = sphi 0, %s98
      %s101 = sphi 0, %s100
      %s115 = sphi 0, %s101
      %s119 = sphi 0, %s119
      %s121 = sphi 0, %s119
      %s122 = sphi 0, %s121
      %s136 = sphi 0, %s122
      %s140 = sphi 0, %s140
      %s142 = sphi 0, %s140
      %s143 = sphi 0, %s142
      %s157 = sphi 0, %s143
      %s161 = sphi 0, %s161
      %s163 = sphi 0, %s161
      %s164 = sphi 0, %s163
      %s178 = sphi 0, %s164
      %s184 = sphi 0, %s186
      %s187 = sphi 0, %s184
      %s188 = sphi 0, %s187
      %s204 = sphi 0, %s188
    $region4: #{tpu_custom_call.1} parent=1 // loop_header_branch
      %25 = sbr.rel (%p23) target = $region8
    $region5: #{tpu_custom_call.1} parent=1 // loop_body
      %s27 = ssub.s32 %s22, 1
      %s28 = ssub.s32 %s22, 2
      %s29 = sadd.s32 %s22, 1
      %s30 = ssub.s32 %s22, %s29
      %p31 = scmp.eq.s32.totalorder %s30, 0
      %s33 = sadd.s32 %s32, 1
      %s34 = scalar_select %p31, %s32, %s33
      %p37 = pneg %p31
      %p38 = scmp.eq.s32.totalorder %s22, 1
      %p39 = por %p37, %p38
      %p40 = scmp.ne.s32.totalorder %s32, %s35
      %p41 = scmp.eq.s32.totalorder %s22, 0
      %p42 = por %p40, %p41
      %p43 = scmp.ne.s32.totalorder %s32, %s35
      %p44 = scmp.eq.s32.totalorder %s27, 1
      %p45 = por %p43, %p44
      %p46 = scmp.ne.s32.totalorder %s35, %s36
      %p47 = scmp.eq.s32.totalorder %s27, 0
      %p48 = por %p46, %p47
      %p49 = scmp.ne.s32.totalorder %s35, %s36
      %p50 = scmp.eq.s32.totalorder %s28, 1
      %p51 = por %p49, %p50
      %p53 = scmp.ne.s32.totalorder %s36, %s52
      %p54 = scmp.eq.s32.totalorder %s28, 0
      %p55 = por %p53, %p54
      %s57 = sadd.s32 %s56, 1
      %p60 = scmp.eq.s32.totalorder %s22, 1
      %p61 = scmp.ne.s32.totalorder %s56, %s58
      %p62 = scmp.eq.s32.totalorder %s22, 0
      %p63 = por %p61, %p62
      %p64 = scmp.ne.s32.totalorder %s56, %s58
      %p65 = scmp.eq.s32.totalorder %s27, 1
      %p66 = por %p64, %p65
      %p67 = scmp.ne.s32.totalorder %s58, %s59
      %p68 = scmp.eq.s32.totalorder %s27, 0
      %p69 = por %p67, %p68
      %p70 = scmp.ne.s32.totalorder %s58, %s59
      %p71 = scmp.eq.s32.totalorder %s28, 1
      %p72 = por %p70, %p71
      %p74 = scmp.ne.s32.totalorder %s59, %s73
      %p75 = scmp.eq.s32.totalorder %s28, 0
      %p76 = por %p74, %p75
      %s78 = sadd.s32 %s77, 1
      %p81 = scmp.eq.s32.totalorder %s22, 1
      %p82 = scmp.ne.s32.totalorder %s77, %s79
      %p83 = scmp.eq.s32.totalorder %s22, 0
      %p84 = por %p82, %p83
      %p85 = scmp.ne.s32.totalorder %s77, %s79
      %p86 = scmp.eq.s32.totalorder %s27, 1
      %p87 = por %p85, %p86
      %p88 = scmp.ne.s32.totalorder %s79, %s80
      %p89 = scmp.eq.s32.totalorder %s27, 0
      %p90 = por %p88, %p89
      %p91 = scmp.ne.s32.totalorder %s79, %s80
      %p92 = scmp.eq.s32.totalorder %s28, 1
      %p93 = por %p91, %p92
      %p95 = scmp.ne.s32.totalorder %s80, %s94
      %p96 = scmp.eq.s32.totalorder %s28, 0
      %p97 = por %p95, %p96
      %s99 = sadd.s32 %s98, 1
      %p102 = scmp.eq.s32.totalorder %s22, 1
      %p103 = scmp.ne.s32.totalorder %s98, %s100
      %p104 = scmp.eq.s32.totalorder %s22, 0
      %p105 = por %p103, %p104
      %p106 = scmp.ne.s32.totalorder %s98, %s100
      %p107 = scmp.eq.s32.totalorder %s27, 1
      %p108 = por %p106, %p107
      %p109 = scmp.ne.s32.totalorder %s100, %s101
      %p110 = scmp.eq.s32.totalorder %s27, 0
      %p111 = por %p109, %p110
      %p112 = scmp.ne.s32.totalorder %s100, %s101
      %p113 = scmp.eq.s32.totalorder %s28, 1
      %p114 = por %p112, %p113
      %p116 = scmp.ne.s32.totalorder %s101, %s115
      %p117 = scmp.eq.s32.totalorder %s28, 0
      %p118 = por %p116, %p117
      %s120 = sadd.s32 %s119, 1
      %p123 = scmp.eq.s32.totalorder %s22, 1
      %p124 = scmp.ne.s32.totalorder %s119, %s121
      %p125 = scmp.eq.s32.totalorder %s22, 0
      %p126 = por %p124, %p125
      %p127 = scmp.ne.s32.totalorder %s119, %s121
      %p128 = scmp.eq.s32.totalorder %s27, 1
      %p129 = por %p127, %p128
      %p130 = scmp.ne.s32.totalorder %s121, %s122
      %p131 = scmp.eq.s32.totalorder %s27, 0
      %p132 = por %p130, %p131
      %p133 = scmp.ne.s32.totalorder %s121, %s122
      %p134 = scmp.eq.s32.totalorder %s28, 1
      %p135 = por %p133, %p134
      %p137 = scmp.ne.s32.totalorder %s122, %s136
      %p138 = scmp.eq.s32.totalorder %s28, 0
      %p139 = por %p137, %p138
      %s141 = sadd.s32 %s140, 1
      %p144 = scmp.eq.s32.totalorder %s22, 1
      %p145 = scmp.ne.s32.totalorder %s140, %s142
      %p146 = scmp.eq.s32.totalorder %s22, 0
      %p147 = por %p145, %p146
      %p148 = scmp.ne.s32.totalorder %s140, %s142
      %p149 = scmp.eq.s32.totalorder %s27, 1
      %p150 = por %p148, %p149
      %p151 = scmp.ne.s32.totalorder %s142, %s143
      %p152 = scmp.eq.s32.totalorder %s27, 0
      %p153 = por %p151, %p152
      %p154 = scmp.ne.s32.totalorder %s142, %s143
      %p155 = scmp.eq.s32.totalorder %s28, 1
      %p156 = por %p154, %p155
      %p158 = scmp.ne.s32.totalorder %s143, %s157
      %p159 = scmp.eq.s32.totalorder %s28, 0
      %p160 = por %p158, %p159
      %s162 = sadd.s32 %s161, 1
      %p165 = scmp.eq.s32.totalorder %s22, 1
      %p166 = scmp.ne.s32.totalorder %s161, %s163
      %p167 = scmp.eq.s32.totalorder %s22, 0
      %p168 = por %p166, %p167
      %p169 = scmp.ne.s32.totalorder %s161, %s163
      %p170 = scmp.eq.s32.totalorder %s27, 1
      %p171 = por %p169, %p170
      %p172 = scmp.ne.s32.totalorder %s163, %s164
      %p173 = scmp.eq.s32.totalorder %s27, 0
      %p174 = por %p172, %p173
      %p175 = scmp.ne.s32.totalorder %s163, %s164
      %p176 = scmp.eq.s32.totalorder %s28, 1
      %p177 = por %p175, %p176
      %p179 = scmp.ne.s32.totalorder %s164, %s178
      %p180 = scmp.eq.s32.totalorder %s28, 0
      %p181 = por %p179, %p180
      %s182 = ssub.s32 %s22, %s29
      %p183 = scmp.eq.s32.totalorder %s182, 0
      %s185 = sadd.s32 %s184, 1
      %s186 = scalar_select %p183, %s184, %s185
      %p189 = pneg %p183
      %p190 = scmp.eq.s32.totalorder %s22, 1
      %p191 = por %p189, %p190
      %p192 = scmp.ne.s32.totalorder %s184, %s187
      %p193 = scmp.eq.s32.totalorder %s22, 0
      %p194 = por %p192, %p193
      %p195 = scmp.ne.s32.totalorder %s184, %s187
      %p196 = scmp.eq.s32.totalorder %s27, 1
      %p197 = por %p195, %p196
      %p198 = scmp.ne.s32.totalorder %s187, %s188
      %p199 = scmp.eq.s32.totalorder %s27, 0
      %p200 = por %p198, %p199
      %p201 = scmp.ne.s32.totalorder %s187, %s188
      %p202 = scmp.eq.s32.totalorder %s28, 1
      %p203 = por %p201, %p202
      %p205 = scmp.ne.s32.totalorder %s188, %s204
      %p206 = scmp.eq.s32.totalorder %s28, 0
      %p207 = por %p205, %p206
      %p208 = scmp.le.s32.totalorder 1, %s22
      %p209 = scmp.lt.s32.totalorder %s22, 3
      %p210 = pnand %p208, %p209
      %p211 = pneg %p210
      // Predicated region
      $region9: #{tpu_custom_call.1} parent=5 // pred_check
        _
      $region10: #{tpu_custom_call.1} parent=5 // pred_check_branch
        %213 = sbr.rel (%p210) target = $region12
      $region11: #{tpu_custom_call.1} parent=5 // pred_region
        %s214 = ssub.s32 %s22, 1
        // Predicated region
        $region13: #{tpu_custom_call.1} parent=11 // pred_check
          %p215 = pneg %p69
        $region14: #{tpu_custom_call.1} parent=11 // pred_check_branch
          %217 = sbr.rel (%p215) target = $region16
        $region15: #{tpu_custom_call.1} parent=11 // pred_region
          %s219 = ssub.s32 128, 128
          %220 = vsyncadd [#allocation8], %s219
          %s221 = sshll.u32 [#allocation7], 4
          %s222 = int_to_ptr.vmem [resolvable:$true] %s221
          %227 = dma.hbm_to_vmem [thread:$0]  %s1, 128, %s222, [#allocation8], 64, 64, 4
        $region16: #{tpu_custom_call.1} parent=11 // pred_fallthru
          _
        // Predicated region
        $region17: #{tpu_custom_call.1} parent=11 // pred_check
          %p228 = pneg %p90
        $region18: #{tpu_custom_call.1} parent=11 // pred_check_branch
          %230 = sbr.rel (%p228) target = $region20
        $region19: #{tpu_custom_call.1} parent=11 // pred_region
          %s232 = ssub.s32 9216, 9216
          %233 = vsyncadd [#allocation8], %s232
          %s234 = sshll.u32 [#allocation9], 4
          %s235 = int_to_ptr.vmem [resolvable:$true] %s234
          %240 = dma.hbm_to_vmem [thread:$0]  %s2, 9216, %s235, [#allocation8], 64, 64, 4
        $region20: #{tpu_custom_call.1} parent=11 // pred_fallthru
          _
        // Predicated region
        $region21: #{tpu_custom_call.1} parent=11 // pred_check
          %p241 = pneg %p111
        $region22: #{tpu_custom_call.1} parent=11 // pred_check_branch
          %243 = sbr.rel (%p241) target = $region24
        $region23: #{tpu_custom_call.1} parent=11 // pred_region
          %s245 = ssub.s32 32, 32
          %246 = vsyncadd [#allocation11], %s245
          %s248 = sshll.u32 [#allocation10], 4
          %s249 = int_to_ptr.vmem [resolvable:$true] %s248
          %251 = dma.hbm_to_vmem [thread:$0]  %s3, 32, %s249, [#allocation11]
        $region24: #{tpu_custom_call.1} parent=11 // pred_fallthru
          _
        // Predicated region
        $region25: #{tpu_custom_call.1} parent=11 // pred_check
          %p252 = pneg %p132
        $region26: #{tpu_custom_call.1} parent=11 // pred_check_branch
          %254 = sbr.rel (%p252) target = $region28
        $region27: #{tpu_custom_call.1} parent=11 // pred_region
          %s256 = ssub.s32 16, 16
          %257 = vsyncadd [#allocation11], %s256
          %s259 = sshll.u32 [#allocation12], 4
          %s260 = int_to_ptr.vmem [resolvable:$true] %s259
          %262 = dma.hbm_to_vmem [thread:$0]  %s4, 16, %s260, [#allocation11]
        $region28: #{tpu_custom_call.1} parent=11 // pred_fallthru
          _
        // Predicated region
        $region29: #{tpu_custom_call.1} parent=11 // pred_check
          %p263 = pneg %p153
        $region30: #{tpu_custom_call.1} parent=11 // pred_check_branch
          %265 = sbr.rel (%p263) target = $region32
        $region31: #{tpu_custom_call.1} parent=11 // pred_region
          %s267 = ssub.s32 16, 16
          %268 = vsyncadd [#allocation14], %s267
          %s270 = sshll.u32 [#allocation13], 4
          %s271 = int_to_ptr.vmem [resolvable:$true] %s270
          %273 = dma.hbm_to_vmem [thread:$0]  %s5, 16, %s271, [#allocation14]
        $region32: #{tpu_custom_call.1} parent=11 // pred_fallthru
          _
        // Predicated region
        $region33: #{tpu_custom_call.1} parent=11 // pred_check
          %p274 = pneg %p174
        $region34: #{tpu_custom_call.1} parent=11 // pred_check_branch
          %276 = sbr.rel (%p274) target = $region36
        $region35: #{tpu_custom_call.1} parent=11 // pred_region
          %s278 = ssub.s32 16, 16
          %279 = vsyncadd [#allocation14], %s278
          %s281 = sshll.u32 [#allocation15], 4
          %s282 = int_to_ptr.vmem [resolvable:$true] %s281
          %284 = dma.hbm_to_vmem [thread:$0]  %s6, 16, %s282, [#allocation14]
        $region36: #{tpu_custom_call.1} parent=11 // pred_fallthru
          _
      $region12: #{tpu_custom_call.1} parent=5 // pred_fallthru
        _
      %p285 = scmp.lt.s32.totalorder %s22, 2
      // Predicated region
      $region37: #{tpu_custom_call.1} parent=5 // pred_check
        %p286 = pneg %p285
      $region38: #{tpu_custom_call.1} parent=5 // pred_check_branch
        %288 = sbr.rel (%p286) target = $region40
      $region39: #{tpu_custom_call.1} parent=5 // pred_region
        // Predicated region
        $region41: #{tpu_custom_call.1} parent=39 // pred_check
          %p289 = pneg %p42
        $region42: #{tpu_custom_call.1} parent=39 // pred_check_branch
          %291 = sbr.rel (%p289) target = $region44
        $region43: #{tpu_custom_call.1} parent=39 // pred_region
          %s292 = sand.u32 %s32, 1
          %s293 = scalar_lea.sflag [#allocation5], %s292
          %s294 = sand.u32 %s32, 1
          %s295 = smul.addr %s294, 128
          %s296 = scalar_lea.vmem [#allocation4], %s295
          %s298 = ssub.s32 2048, 2048
          %299 = vsyncadd %s293, %s298
          %s300 = smul.addr %s22, 32
          %s301 = smul.addr %s300, 64
          %s302 = scalar_lea.hbm %s0, %s301
          %s303 = sshll.u32 %s296, 4
          %s304 = int_to_ptr.vmem [resolvable:$true] %s303
          %309 = dma.hbm_to_vmem [thread:$0]  %s302, 2048, %s304, %s293, 64, 64, 4
        $region44: #{tpu_custom_call.1} parent=39 // pred_fallthru
          _
      $region40: #{tpu_custom_call.1} parent=5 // pred_fallthru
        _
      %p310 = scmp.le.s32.totalorder 1, %s22
      %p311 = scmp.lt.s32.totalorder %s22, 3
      %p312 = pnand %p310, %p311
      %p313 = pneg %p312
      // Predicated region
      $region45: #{tpu_custom_call.1} parent=5 // pred_check
        _
      $region46: #{tpu_custom_call.1} parent=5 // pred_check_branch
        %315 = sbr.rel (%p312) target = $region48
      $region47: #{tpu_custom_call.1} parent=5 // pred_region
        %s316 = ssub.s32 %s22, 1
        %s317 = sand.u32 %s35, 1
        %s318 = scalar_lea.sflag [#allocation5], %s317
        %s319 = sand.u32 %s35, 1
        %s320 = smul.addr %s319, 128
        %s321 = scalar_lea.vmem [#allocation4], %s320
        // Predicated region
        $region49: #{tpu_custom_call.1} parent=47 // pred_check
          %p322 = pneg %p48
        $region50: #{tpu_custom_call.1} parent=47 // pred_check_branch
          %324 = sbr.rel (%p322) target = $region52
        $region51: #{tpu_custom_call.1} parent=47 // pred_region
          %325 = dma.done %s318, 2048
        $region52: #{tpu_custom_call.1} parent=47 // pred_fallthru
          _
        // Predicated region
        $region53: #{tpu_custom_call.1} parent=47 // pred_check
          %p326 = pneg %p69
        $region54: #{tpu_custom_call.1} parent=47 // pred_check_branch
          %328 = sbr.rel (%p326) target = $region56
        $region55: #{tpu_custom_call.1} parent=47 // pred_region
          %329 = dma.done [#allocation8], 128
        $region56: #{tpu_custom_call.1} parent=47 // pred_fallthru
          _
        // Predicated region
        $region57: #{tpu_custom_call.1} parent=47 // pred_check
          %p330 = pneg %p90
        $region58: #{tpu_custom_call.1} parent=47 // pred_check_branch
          %332 = sbr.rel (%p330) target = $region60
        $region59: #{tpu_custom_call.1} parent=47 // pred_region
          %333 = dma.done [#allocation8], 9216
        $region60: #{tpu_custom_call.1} parent=47 // pred_fallthru
          _
        // Predicated region
        $region61: #{tpu_custom_call.1} parent=47 // pred_check
          %p334 = pneg %p111
        $region62: #{tpu_custom_call.1} parent=47 // pred_check_branch
          %336 = sbr.rel (%p334) target = $region64
        $region63: #{tpu_custom_call.1} parent=47 // pred_region
          %337 = dma.done [#allocation11], 32
        $region64: #{tpu_custom_call.1} parent=47 // pred_fallthru
          _
        // Predicated region
        $region65: #{tpu_custom_call.1} parent=47 // pred_check
          %p338 = pneg %p132
        $region66: #{tpu_custom_call.1} parent=47 // pred_check_branch
          %340 = sbr.rel (%p338) target = $region68
        $region67: #{tpu_custom_call.1} parent=47 // pred_region
          %341 = dma.done [#allocation11], 16
        $region68: #{tpu_custom_call.1} parent=47 // pred_fallthru
          _
        // Predicated region
        $region69: #{tpu_custom_call.1} parent=47 // pred_check
          %p342 = pneg %p153
        $region70: #{tpu_custom_call.1} parent=47 // pred_check_branch
          %344 = sbr.rel (%p342) target = $region72
        $region71: #{tpu_custom_call.1} parent=47 // pred_region
          %345 = dma.done [#allocation14], 16
        $region72: #{tpu_custom_call.1} parent=47 // pred_fallthru
          _
        // Predicated region
        $region73: #{tpu_custom_call.1} parent=47 // pred_check
          %p346 = pneg %p174
        $region74: #{tpu_custom_call.1} parent=47 // pred_check_branch
          %348 = sbr.rel (%p346) target = $region76
        $region75: #{tpu_custom_call.1} parent=47 // pred_region
          %349 = dma.done [#allocation14], 16
        $region76: #{tpu_custom_call.1} parent=47 // pred_fallthru
          _
        %s350 = sand.u32 %s35, 1
        %s351 = scalar_lea.sflag [#allocation5], %s350
        %s352 = sand.u32 %s35, 1
        %s353 = smul.addr %s352, 128
        %s354 = scalar_lea.vmem [#allocation4], %s353
        %p355 = pneg %p48
        %p356 = pneg %p45
        %p357 = pneg %p69
        %p358 = pneg %p66
        %p359 = pneg %p90
        %p360 = pneg %p87
        %p361 = pneg %p111
        %p362 = pneg %p108
        %p363 = pneg %p132
        %p364 = pneg %p129
        %p365 = pneg %p153
        %p366 = pneg %p150
        %p367 = pneg %p174
        %p368 = pneg %p171
        %p369 = pneg %p200
        %p370 = pneg %p197
        %s371 = sand.u32 %s187, 1
        %s372 = scalar_lea.sflag [#allocation6], %s371
        %s373 = sand.u32 %s187, 1
        %s374 = smul.addr %s373, 128
        %s375 = scalar_lea.vmem [#allocation16], %s374
        %v377 = vld [vmem:[%s321] sm:$0xf]
        %v378 = vld [vmem:[%s321 + $0x4] sm:$0xf]
        %v379 = vld [vmem:[%s321 + $0x8] sm:$0xf]
        %v380 = vld [vmem:[%s321 + $0xc] sm:$0xf]
        %v381 = vld [vmem:[%s321 + $0x10] sm:$0xf]
        %v382 = vld [vmem:[%s321 + $0x14] sm:$0xf]
        %v383 = vld [vmem:[%s321 + $0x18] sm:$0xf]
        %v384 = vld [vmem:[%s321 + $0x1c] sm:$0xf]
        %v385 = vld [vmem:[%s321 + $0x20] sm:$0xf]
        %v386 = vld [vmem:[%s321 + $0x24] sm:$0xf]
        %v387 = vld [vmem:[%s321 + $0x28] sm:$0xf]
        %v388 = vld [vmem:[%s321 + $0x2c] sm:$0xf]
        %v389 = vld [vmem:[%s321 + $0x30] sm:$0xf]
        %v390 = vld [vmem:[%s321 + $0x34] sm:$0xf]
        %v391 = vld [vmem:[%s321 + $0x38] sm:$0xf]
        %v392 = vld [vmem:[%s321 + $0x3c] sm:$0xf]
        %v393 = vld [vmem:[%s321 + $0x40] sm:$0xf]
        %v394 = vld [vmem:[%s321 + $0x44] sm:$0xf]
        %v395 = vld [vmem:[%s321 + $0x48] sm:$0xf]
        %v396 = vld [vmem:[%s321 + $0x4c] sm:$0xf]
        %v397 = vld [vmem:[%s321 + $0x50] sm:$0xf]
        %v398 = vld [vmem:[%s321 + $0x54] sm:$0xf]
        %v399 = vld [vmem:[%s321 + $0x58] sm:$0xf]
        %v400 = vld [vmem:[%s321 + $0x5c] sm:$0xf]
        %v401 = vld [vmem:[%s321 + $0x60] sm:$0xf]
        %v402 = vld [vmem:[%s321 + $0x64] sm:$0xf]
        %v403 = vld [vmem:[%s321 + $0x68] sm:$0xf]
        %v404 = vld [vmem:[%s321 + $0x6c] sm:$0xf]
        %v405 = vld [vmem:[%s321 + $0x70] sm:$0xf]
        %v406 = vld [vmem:[%s321 + $0x74] sm:$0xf]
        %v407 = vld [vmem:[%s321 + $0x78] sm:$0xf]
        %v408 = vld [vmem:[%s321 + $0x7c] sm:$0xf]
        %v409 = vld [vmem:[#allocation7] sm:$0xf]
        %v410 = vld [vmem:[#allocation7 + $0x4] sm:$0xf]
        %v411 = vld [vmem:[#allocation12] sm:$0x1]
        %v413 = vlaneseq
        %v414 = vshrl.u32 %v413, 7
        %v415 = vsub.s32 0, %v414
        %v416 = vrot.slane %v411, %v415
        %v450 = vunpack.c.l.b16 %v377
        %v451 = vunpack.c.l.b16 %v378
        %v452 = vunpack.c.l.b16 %v379
        %v453 = vunpack.c.l.b16 %v380
        %v454 = vunpack.c.l.b16 %v381
        %v455 = vunpack.c.l.b16 %v382
        %v456 = vunpack.c.l.b16 %v383
        %v457 = vunpack.c.l.b16 %v384
        %v458 = vunpack.c.l.b16 %v385
        %v459 = vunpack.c.l.b16 %v386
        %v460 = vunpack.c.l.b16 %v387
        %v461 = vunpack.c.l.b16 %v388
        %v462 = vunpack.c.l.b16 %v389
        %v463 = vunpack.c.l.b16 %v390
        %v464 = vunpack.c.l.b16 %v391
        %v465 = vunpack.c.l.b16 %v392
        %v466 = vunpack.c.l.b16 %v393
        %v467 = vunpack.c.l.b16 %v394
        %v468 = vunpack.c.l.b16 %v395
        %v469 = vunpack.c.l.b16 %v396
        %v470 = vunpack.c.l.b16 %v397
        %v471 = vunpack.c.l.b16 %v398
        %v472 = vunpack.c.l.b16 %v399
        %v473 = vunpack.c.l.b16 %v400
        %v474 = vunpack.c.l.b16 %v401
        %v475 = vunpack.c.l.b16 %v402
        %v476 = vunpack.c.l.b16 %v403
        %v477 = vunpack.c.l.b16 %v404
        %v478 = vunpack.c.l.b16 %v405
        %v479 = vunpack.c.l.b16 %v406
        %v480 = vunpack.c.l.b16 %v407
        %v481 = vunpack.c.l.b16 %v408
        %v482 = vpack.c.b16 %v451, %v450
        %v483 = vpack.c.b16 %v453, %v452
        %v484 = vpack.c.b16 %v455, %v454
        %v485 = vpack.c.b16 %v457, %v456
        %v486 = vpack.c.b16 %v459, %v458
        %v487 = vpack.c.b16 %v461, %v460
        %v488 = vpack.c.b16 %v463, %v462
        %v489 = vpack.c.b16 %v465, %v464
        %v490 = vpack.c.b16 %v467, %v466
        %v491 = vpack.c.b16 %v469, %v468
        %v492 = vpack.c.b16 %v471, %v470
        %v493 = vpack.c.b16 %v473, %v472
        %v494 = vpack.c.b16 %v475, %v474
        %v495 = vpack.c.b16 %v477, %v476
        %v496 = vpack.c.b16 %v479, %v478
        %v497 = vpack.c.b16 %v481, %v480
        %v500 = vunpack.c.l.b16 %v409
        %v501 = vunpack.c.l.b16 %v410
        %v502 = vpack.c.b16 %v501, %v500
        %vm504 = vcmask 130048
        %v506 = vsel %vm504, %v482, 0
        %v509 = vsel %vm504, %v483, 0
        %v512 = vsel %vm504, %v484, 0
        %v515 = vsel %vm504, %v485, 0
        %v518 = vsel %vm504, %v486, 0
        %v521 = vsel %vm504, %v487, 0
        %v524 = vsel %vm504, %v488, 0
        %v527 = vsel %vm504, %v489, 0
        %v530 = vsel %vm504, %v490, 0
        %v533 = vsel %vm504, %v491, 0
        %v536 = vsel %vm504, %v492, 0
        %v539 = vsel %vm504, %v493, 0
        %v542 = vsel %vm504, %v494, 0
        %v545 = vsel %vm504, %v495, 0
        %v548 = vsel %vm504, %v496, 0
        %v551 = vsel %vm504, %v497, 0
        %553 = vmatprep.subr.bf16.mxu0 0
        %554 = vmatpush1.bf16.msra.mxu0 %v502
        %555 = vmatprep.subr.bf16.mxu0 0
        %556 = vmatpush1.bf16.msra.mxu0 0
        %557 = vmatprep.subr.bf16.mxu0 0
        %558 = vmatpush1.bf16.msra.mxu0 0
        %559 = vmatprep.subr.bf16.mxu0 0
        %560 = vmatpush1.bf16.msra.mxu0 0
        %561 = vmatprep.subr.bf16.mxu0 0
        %562 = vmatpush1.bf16.msra.mxu0 0
        %563 = vmatprep.subr.bf16.mxu0 0
        %564 = vmatpush1.bf16.msra.mxu0 0
        %565 = vmatprep.subr.bf16.mxu0 0
        %566 = vmatpush1.bf16.msra.mxu0 0
        %567 = vmatprep.subr.bf16.mxu0 0
        %568 = vmatpush1.bf16.msra.mxu0 0
        %569 = vmatprep.subr.bf16.mxu0 0
        %570 = vmatpush1.bf16.msra.mxu0 0
        %571 = vmatprep.subr.bf16.mxu0 0
        %572 = vmatpush1.bf16.msra.mxu0 0
        %573 = vmatprep.subr.bf16.mxu0 0
        %574 = vmatpush1.bf16.msra.mxu0 0
        %575 = vmatprep.subr.bf16.mxu0 0
        %576 = vmatpush1.bf16.msra.mxu0 0
        %577 = vmatprep.subr.bf16.mxu0 0
        %578 = vmatpush1.bf16.msra.mxu0 0
        %579 = vmatprep.subr.bf16.mxu0 0
        %580 = vmatpush1.bf16.msra.mxu0 0
        %581 = vmatprep.subr.bf16.mxu0 0
        %582 = vmatpush1.bf16.msra.mxu0 0
        %583 = vmatprep.subr.bf16.mxu0 0
        %584 = vmatpush1.bf16.msra.mxu0 0
        %585 = vmatprep.mubr.bf16.mxu0 0
        %586 = vmatmul.mubr.bf16.gmra.mrb[0].mxu0 %v506
        %v587 = vpop.f32.mrb[0].mxu0
        %v588 = vadd.f32 %v416, %v587
        %v589 = vpop.f32.mrb[0].mxu0
        %v590 = vpop.f32.mrb[0].mxu0
        %v591 = vadd.f32 %v416, %v590
        %v592 = vpop.f32.mrb[0].mxu0
        %593 = vmatprep.mubr.bf16.mxu0 0
        %594 = vmatmul.mubr.bf16.gmra.mrb[0].mxu0 %v509
        %v595 = vpop.f32.mrb[0].mxu0
        %v596 = vadd.f32 %v416, %v595
        %v597 = vpop.f32.mrb[0].mxu0
        %v598 = vpop.f32.mrb[0].mxu0
        %v599 = vadd.f32 %v416, %v598
        %v600 = vpop.f32.mrb[0].mxu0
        %601 = vmatprep.mubr.bf16.mxu0 0
        %602 = vmatmul.mubr.bf16.gmra.mrb[0].mxu0 %v512
        %v603 = vpop.f32.mrb[0].mxu0
        %v604 = vadd.f32 %v416, %v603
        %v605 = vpop.f32.mrb[0].mxu0
        %v606 = vpop.f32.mrb[0].mxu0
        %v607 = vadd.f32 %v416, %v606
        %v608 = vpop.f32.mrb[0].mxu0
        %609 = vmatprep.mubr.bf16.mxu0 0
        %610 = vmatmul.mubr.bf16.gmra.mrb[0].mxu0 %v515
        %v611 = vpop.f32.mrb[0].mxu0
        %v612 = vadd.f32 %v416, %v611
        %v613 = vpop.f32.mrb[0].mxu0
        %v614 = vpop.f32.mrb[0].mxu0
        %v615 = vadd.f32 %v416, %v614
        %v616 = vpop.f32.mrb[0].mxu0
        %617 = vmatprep.mubr.bf16.mxu0 0
        %618 = vmatmul.mubr.bf16.gmra.mrb[0].mxu0 %v518
        %v619 = vpop.f32.mrb[0].mxu0
        %v620 = vadd.f32 %v416, %v619
        %v621 = vpop.f32.mrb[0].mxu0
        %v622 = vpop.f32.mrb[0].mxu0
        %v623 = vadd.f32 %v416, %v622
        %v624 = vpop.f32.mrb[0].mxu0
        %625 = vmatprep.mubr.bf16.mxu0 0
        %626 = vmatmul.mubr.bf16.gmra.mrb[0].mxu0 %v521
        %v627 = vpop.f32.mrb[0].mxu0
        %v628 = vadd.f32 %v416, %v627
        %v629 = vpop.f32.mrb[0].mxu0
        %v630 = vpop.f32.mrb[0].mxu0
        %v631 = vadd.f32 %v416, %v630
        %v632 = vpop.f32.mrb[0].mxu0
        %633 = vmatprep.mubr.bf16.mxu0 0
        %634 = vmatmul.mubr.bf16.gmra.mrb[0].mxu0 %v524
        %v635 = vpop.f32.mrb[0].mxu0
        %v636 = vadd.f32 %v416, %v635
        %v637 = vpop.f32.mrb[0].mxu0
        %v638 = vpop.f32.mrb[0].mxu0
        %v639 = vadd.f32 %v416, %v638
        %v640 = vpop.f32.mrb[0].mxu0
        %641 = vmatprep.mubr.bf16.mxu0 0
        %642 = vmatmul.mubr.bf16.gmra.mrb[0].mxu0 %v527
        %v643 = vpop.f32.mrb[0].mxu0
        %v644 = vadd.f32 %v416, %v643
        %v645 = vpop.f32.mrb[0].mxu0
        %v646 = vpop.f32.mrb[0].mxu0
        %v647 = vadd.f32 %v416, %v646
        %v648 = vpop.f32.mrb[0].mxu0
        %649 = vmatprep.mubr.bf16.mxu0 0
        %650 = vmatmul.mubr.bf16.gmra.mrb[0].mxu0 %v530
        %v651 = vpop.f32.mrb[0].mxu0
        %v652 = vadd.f32 %v416, %v651
        %v653 = vpop.f32.mrb[0].mxu0
        %v654 = vpop.f32.mrb[0].mxu0
        %v655 = vadd.f32 %v416, %v654
        %v656 = vpop.f32.mrb[0].mxu0
        %657 = vmatprep.mubr.bf16.mxu0 0
        %658 = vmatmul.mubr.bf16.gmra.mrb[0].mxu0 %v533
        %v659 = vpop.f32.mrb[0].mxu0
        %v660 = vadd.f32 %v416, %v659
        %v661 = vpop.f32.mrb[0].mxu0
        %v662 = vpop.f32.mrb[0].mxu0
        %v663 = vadd.f32 %v416, %v662
        %v664 = vpop.f32.mrb[0].mxu0
        %665 = vmatprep.mubr.bf16.mxu0 0
        %666 = vmatmul.mubr.bf16.gmra.mrb[0].mxu0 %v536
        %v667 = vpop.f32.mrb[0].mxu0
        %v668 = vadd.f32 %v416, %v667
        %v669 = vpop.f32.mrb[0].mxu0
        %v670 = vpop.f32.mrb[0].mxu0
        %v671 = vadd.f32 %v416, %v670
        %v672 = vpop.f32.mrb[0].mxu0
        %673 = vmatprep.mubr.bf16.mxu0 0
        %674 = vmatmul.mubr.bf16.gmra.mrb[0].mxu0 %v539
        %v675 = vpop.f32.mrb[0].mxu0
        %v676 = vadd.f32 %v416, %v675
        %v677 = vpop.f32.mrb[0].mxu0
        %v678 = vpop.f32.mrb[0].mxu0
        %v679 = vadd.f32 %v416, %v678
        %v680 = vpop.f32.mrb[0].mxu0
        %681 = vmatprep.mubr.bf16.mxu0 0
        %682 = vmatmul.mubr.bf16.gmra.mrb[0].mxu0 %v542
        %v683 = vpop.f32.mrb[0].mxu0
        %v684 = vadd.f32 %v416, %v683
        %v685 = vpop.f32.mrb[0].mxu0
        %v686 = vpop.f32.mrb[0].mxu0
        %v687 = vadd.f32 %v416, %v686
        %v688 = vpop.f32.mrb[0].mxu0
        %689 = vmatprep.mubr.bf16.mxu0 0
        %690 = vmatmul.mubr.bf16.gmra.mrb[0].mxu0 %v545
        %v691 = vpop.f32.mrb[0].mxu0
        %v692 = vadd.f32 %v416, %v691
        %v693 = vpop.f32.mrb[0].mxu0
        %v694 = vpop.f32.mrb[0].mxu0
        %v695 = vadd.f32 %v416, %v694
        %v696 = vpop.f32.mrb[0].mxu0
        %697 = vmatprep.mubr.bf16.mxu0 0
        %698 = vmatmul.mubr.bf16.gmra.mrb[0].mxu0 %v548
        %v699 = vpop.f32.mrb[0].mxu0
        %v700 = vadd.f32 %v416, %v699
        %v701 = vpop.f32.mrb[0].mxu0
        %v702 = vpop.f32.mrb[0].mxu0
        %v703 = vadd.f32 %v416, %v702
        %v704 = vpop.f32.mrb[0].mxu0
        %705 = vmatprep.mubr.bf16.mxu0 0
        %706 = vmatmul.mubr.bf16.gmra.mrb[0].mxu0 %v551
        %v707 = vpop.f32.mrb[0].mxu0
        %v708 = vadd.f32 %v416, %v707
        %v709 = vpop.f32.mrb[0].mxu0
        %v710 = vpop.f32.mrb[0].mxu0
        %v711 = vadd.f32 %v416, %v710
        %v712 = vpop.f32.mrb[0].mxu0
        %713 = vdwg.mxu0
        %v714 = vmax.f32 %v588, 0.0
        %v715 = vmax.f32 %v591, 0.0
        %v716 = vmax.f32 %v596, 0.0
        %v717 = vmax.f32 %v599, 0.0
        %v718 = vmax.f32 %v604, 0.0
        %v719 = vmax.f32 %v607, 0.0
        %v720 = vmax.f32 %v612, 0.0
        %v721 = vmax.f32 %v615, 0.0
        %v722 = vmax.f32 %v620, 0.0
        %v723 = vmax.f32 %v623, 0.0
        %v724 = vmax.f32 %v628, 0.0
        %v725 = vmax.f32 %v631, 0.0
        %v726 = vmax.f32 %v636, 0.0
        %v727 = vmax.f32 %v639, 0.0
        %v728 = vmax.f32 %v644, 0.0
        %v729 = vmax.f32 %v647, 0.0
        %v730 = vmax.f32 %v652, 0.0
        %v731 = vmax.f32 %v655, 0.0
        %v732 = vmax.f32 %v660, 0.0
        %v733 = vmax.f32 %v663, 0.0
        %v734 = vmax.f32 %v668, 0.0
        %v735 = vmax.f32 %v671, 0.0
        %v736 = vmax.f32 %v676, 0.0
        %v737 = vmax.f32 %v679, 0.0
        %v738 = vmax.f32 %v684, 0.0
        %v739 = vmax.f32 %v687, 0.0
        %v740 = vmax.f32 %v692, 0.0
        %v741 = vmax.f32 %v695, 0.0
        %v742 = vmax.f32 %v700, 0.0
        %v743 = vmax.f32 %v703, 0.0
        %v744 = vmax.f32 %v708, 0.0
        %v745 = vmax.f32 %v711, 0.0
        %v746 = vpack.c.bf16 %v715, %v714
        %v747 = vpack.c.bf16 %v717, %v716
        %v748 = vpack.c.bf16 %v719, %v718
        %v749 = vpack.c.bf16 %v721, %v720
        %v750 = vpack.c.bf16 %v723, %v722
        %v751 = vpack.c.bf16 %v725, %v724
        %v752 = vpack.c.bf16 %v727, %v726
        %v753 = vpack.c.bf16 %v729, %v728
        %v754 = vpack.c.bf16 %v731, %v730
        %v755 = vpack.c.bf16 %v733, %v732
        %v756 = vpack.c.bf16 %v735, %v734
        %v757 = vpack.c.bf16 %v737, %v736
        %v758 = vpack.c.bf16 %v739, %v738
        %v759 = vpack.c.bf16 %v741, %v740
        %v760 = vpack.c.bf16 %v743, %v742
        %v761 = vpack.c.bf16 %v745, %v744
        %762 = vst [vmem:[#allocation2] sm:$0xf] 0
        %763 = vst [vmem:[#allocation2 + $0x4] sm:$0xf] 0
        %764 = vst [vmem:[#allocation2 + $0x8] sm:$0x1] 0
        %s765 = scalar_lea.vmem [#allocation2], 204
        %766 = vst [vmem:[%s765] sm:$0xf] 0
        %767 = vst [vmem:[%s765 + $0x4] sm:$0xf] 0
        %768 = vst [vmem:[%s765 + $0x8] sm:$0x1] 0
        %s769 = scalar_lea.vmem [#allocation2], 12
        %vm770 = vcmask 1040384
        %vm771 = vsmask.f32 256
        %vm772 = vmand %vm770, %vm771
        %v773 = vld [vmem:[%s769] sm:$0x1]
        %v774 = vsel %vm772, 0, %v773
        %775 = vst [vmem:[%s769] sm:$0x1] %v774
        %v776 = vld [vmem:[%s769 + $0xc] sm:$0x1]
        %v777 = vsel %vm772, 0, %v776
        %778 = vst [vmem:[%s769 + $0xc] sm:$0x1] %v777
        %v779 = vld [vmem:[%s769 + $0x18] sm:$0x1]
        %v780 = vsel %vm772, 0, %v779
        %781 = vst [vmem:[%s769 + $0x18] sm:$0x1] %v780
        %v782 = vld [vmem:[%s769 + $0x24] sm:$0x1]
        %v783 = vsel %vm772, 0, %v782
        %784 = vst [vmem:[%s769 + $0x24] sm:$0x1] %v783
        %v785 = vld [vmem:[%s769 + $0x30] sm:$0x1]
        %v786 = vsel %vm772, 0, %v785
        %787 = vst [vmem:[%s769 + $0x30] sm:$0x1] %v786
        %v788 = vld [vmem:[%s769 + $0x3c] sm:$0x1]
        %v789 = vsel %vm772, 0, %v788
        %790 = vst [vmem:[%s769 + $0x3c] sm:$0x1] %v789
        %v791 = vld [vmem:[%s769 + $0x48] sm:$0x1]
        %v792 = vsel %vm772, 0, %v791
        %793 = vst [vmem:[%s769 + $0x48] sm:$0x1] %v792
        %v794 = vld [vmem:[%s769 + $0x54] sm:$0x1]
        %v795 = vsel %vm772, 0, %v794
        %796 = vst [vmem:[%s769 + $0x54] sm:$0x1] %v795
        %v797 = vld [vmem:[%s769 + $0x60] sm:$0x1]
        %v798 = vsel %vm772, 0, %v797
        %799 = vst [vmem:[%s769 + $0x60] sm:$0x1] %v798
        %v800 = vld [vmem:[%s769 + $0x6c] sm:$0x1]
        %v801 = vsel %vm772, 0, %v800
        %802 = vst [vmem:[%s769 + $0x6c] sm:$0x1] %v801
        %v803 = vld [vmem:[%s769 + $0x78] sm:$0x1]
        %v804 = vsel %vm772, 0, %v803
        %805 = vst [vmem:[%s769 + $0x78] sm:$0x1] %v804
        %v806 = vld [vmem:[%s769 + $0x84] sm:$0x1]
        %v807 = vsel %vm772, 0, %v806
        %808 = vst [vmem:[%s769 + $0x84] sm:$0x1] %v807
        %v809 = vld [vmem:[%s769 + $0x90] sm:$0x1]
        %v810 = vsel %vm772, 0, %v809
        %811 = vst [vmem:[%s769 + $0x90] sm:$0x1] %v810
        %v812 = vld [vmem:[%s769 + $0x9c] sm:$0x1]
        %v813 = vsel %vm772, 0, %v812
        %814 = vst [vmem:[%s769 + $0x9c] sm:$0x1] %v813
        %v815 = vld [vmem:[%s769 + $0xa8] sm:$0x1]
        %v816 = vsel %vm772, 0, %v815
        %817 = vst [vmem:[%s769 + $0xa8] sm:$0x1] %v816
        %v818 = vld [vmem:[%s769 + $0xb4] sm:$0x1]
        %v819 = vsel %vm772, 0, %v818
        %820 = vst [vmem:[%s769 + $0xb4] sm:$0x1] %v819
        %vm821 = vsmask.f32 7938
        %vm822 = vmand %vm770, %vm821
        %v823 = vld [vmem:[%s769 + $0x8] sm:$0x1]
        %v824 = vsel %vm822, 0, %v823
        %825 = vst [vmem:[%s769 + $0x8] sm:$0x1] %v824
        %v826 = vld [vmem:[%s769 + $0x14] sm:$0x1]
        %v827 = vsel %vm822, 0, %v826
        %828 = vst [vmem:[%s769 + $0x14] sm:$0x1] %v827
        %v829 = vld [vmem:[%s769 + $0x20] sm:$0x1]
        %v830 = vsel %vm822, 0, %v829
        %831 = vst [vmem:[%s769 + $0x20] sm:$0x1] %v830
        %v832 = vld [vmem:[%s769 + $0x2c] sm:$0x1]
        %v833 = vsel %vm822, 0, %v832
        %834 = vst [vmem:[%s769 + $0x2c] sm:$0x1] %v833
        %v835 = vld [vmem:[%s769 + $0x38] sm:$0x1]
        %v836 = vsel %vm822, 0, %v835
        %837 = vst [vmem:[%s769 + $0x38] sm:$0x1] %v836
        %v838 = vld [vmem:[%s769 + $0x44] sm:$0x1]
        %v839 = vsel %vm822, 0, %v838
        %840 = vst [vmem:[%s769 + $0x44] sm:$0x1] %v839
        %v841 = vld [vmem:[%s769 + $0x50] sm:$0x1]
        %v842 = vsel %vm822, 0, %v841
        %843 = vst [vmem:[%s769 + $0x50] sm:$0x1] %v842
        %v844 = vld [vmem:[%s769 + $0x5c] sm:$0x1]
        %v845 = vsel %vm822, 0, %v844
        %846 = vst [vmem:[%s769 + $0x5c] sm:$0x1] %v845
        %v847 = vld [vmem:[%s769 + $0x68] sm:$0x1]
        %v848 = vsel %vm822, 0, %v847
        %849 = vst [vmem:[%s769 + $0x68] sm:$0x1] %v848
        %v850 = vld [vmem:[%s769 + $0x74] sm:$0x1]
        %v851 = vsel %vm822, 0, %v850
        %852 = vst [vmem:[%s769 + $0x74] sm:$0x1] %v851
        %v853 = vld [vmem:[%s769 + $0x80] sm:$0x1]
        %v854 = vsel %vm822, 0, %v853
        %855 = vst [vmem:[%s769 + $0x80] sm:$0x1] %v854
        %v856 = vld [vmem:[%s769 + $0x8c] sm:$0x1]
        %v857 = vsel %vm822, 0, %v856
        %858 = vst [vmem:[%s769 + $0x8c] sm:$0x1] %v857
        %v859 = vld [vmem:[%s769 + $0x98] sm:$0x1]
        %v860 = vsel %vm822, 0, %v859
        %861 = vst [vmem:[%s769 + $0x98] sm:$0x1] %v860
        %v862 = vld [vmem:[%s769 + $0xa4] sm:$0x1]
        %v863 = vsel %vm822, 0, %v862
        %864 = vst [vmem:[%s769 + $0xa4] sm:$0x1] %v863
        %v865 = vld [vmem:[%s769 + $0xb0] sm:$0x1]
        %v866 = vsel %vm822, 0, %v865
        %867 = vst [vmem:[%s769 + $0xb0] sm:$0x1] %v866
        %v868 = vld [vmem:[%s769 + $0xbc] sm:$0x1]
        %v869 = vsel %vm822, 0, %v868
        %870 = vst [vmem:[%s769 + $0xbc] sm:$0x1] %v869
        %v887 = vunpack.c.l.b16 %v746
        %v888 = vunpack.c.h.b16 %v746
        %v889 = vunpack.c.l.b16 %v747
        %v890 = vunpack.c.h.b16 %v747
        %v891 = vunpack.c.l.b16 %v748
        %v892 = vunpack.c.h.b16 %v748
        %v893 = vunpack.c.l.b16 %v749
        %v894 = vunpack.c.h.b16 %v749
        %v895 = vunpack.c.l.b16 %v750
        %v896 = vunpack.c.h.b16 %v750
        %v897 = vunpack.c.l.b16 %v751
        %v898 = vunpack.c.h.b16 %v751
        %v899 = vunpack.c.l.b16 %v752
        %v900 = vunpack.c.h.b16 %v752
        %v901 = vunpack.c.l.b16 %v753
        %v902 = vunpack.c.h.b16 %v753
        %v903 = vunpack.c.l.b16 %v754
        %v904 = vunpack.c.h.b16 %v754
        %v905 = vunpack.c.l.b16 %v755
        %v906 = vunpack.c.h.b16 %v755
        %v907 = vunpack.c.l.b16 %v756
        %v908 = vunpack.c.h.b16 %v756
        %v909 = vunpack.c.l.b16 %v757
        %v910 = vunpack.c.h.b16 %v757
        %v911 = vunpack.c.l.b16 %v758
        %v912 = vunpack.c.h.b16 %v758
        %v913 = vunpack.c.l.b16 %v759
        %v914 = vunpack.c.h.b16 %v759
        %v915 = vunpack.c.l.b16 %v760
        %v916 = vunpack.c.h.b16 %v760
        %v917 = vunpack.c.l.b16 %v761
        %v918 = vunpack.c.h.b16 %v761
        %v919 = vpack.c.b16 %v887, %v887
        %v920 = vpack.c.b16 %v888, %v888
        %v921 = vpack.c.b16 %v889, %v889
        %v922 = vpack.c.b16 %v890, %v890
        %v923 = vpack.c.b16 %v891, %v891
        %v924 = vpack.c.b16 %v892, %v892
        %v925 = vpack.c.b16 %v893, %v893
        %v926 = vpack.c.b16 %v894, %v894
        %v927 = vpack.c.b16 %v895, %v895
        %v928 = vpack.c.b16 %v896, %v896
        %v929 = vpack.c.b16 %v897, %v897
        %v930 = vpack.c.b16 %v898, %v898
        %v931 = vpack.c.b16 %v899, %v899
        %v932 = vpack.c.b16 %v900, %v900
        %v933 = vpack.c.b16 %v901, %v901
        %v934 = vpack.c.b16 %v902, %v902
        %v935 = vpack.c.b16 %v903, %v903
        %v936 = vpack.c.b16 %v904, %v904
        %v937 = vpack.c.b16 %v905, %v905
        %v938 = vpack.c.b16 %v906, %v906
        %v939 = vpack.c.b16 %v907, %v907
        %v940 = vpack.c.b16 %v908, %v908
        %v941 = vpack.c.b16 %v909, %v909
        %v942 = vpack.c.b16 %v910, %v910
        %v943 = vpack.c.b16 %v911, %v911
        %v944 = vpack.c.b16 %v912, %v912
        %v945 = vpack.c.b16 %v913, %v913
        %v946 = vpack.c.b16 %v914, %v914
        %v947 = vpack.c.b16 %v915, %v915
        %v948 = vpack.c.b16 %v916, %v916
        %v949 = vpack.c.b16 %v917, %v917
        %v950 = vpack.c.b16 %v918, %v918
        %vm951 = vsmask.f32 4368
        %vm952 = vmor %vm771, %vm951
        %v954 = vshrl.u32 %v919, 16
        %v956 = vrot.slane %v954, 7
        %v957 = vshll.u32 %v919, 16
        %v959 = vor.u32 %v956, %v957
        %v960 = vrot.slane %v956, 4
        %v962 = vshrl.u32 %v920, 16
        %v964 = vrot.slane %v962, 7
        %v965 = vshll.u32 %v920, 16
        %v967 = vor.u32 %v964, %v965
        %v968 = vsel %vm952, %v960, %v967
        %v969 = vrot.slane %v964, 4
        %v971 = vshrl.u32 %v921, 16
        %v973 = vrot.slane %v971, 7
        %v974 = vshll.u32 %v921, 16
        %v976 = vor.u32 %v973, %v974
        %v977 = vrot.slane %v973, 4
        %v979 = vshrl.u32 %v922, 16
        %v981 = vrot.slane %v979, 7
        %v982 = vshll.u32 %v922, 16
        %v984 = vor.u32 %v981, %v982
        %v985 = vsel %vm952, %v977, %v984
        %v986 = vrot.slane %v981, 4
        %v988 = vshrl.u32 %v923, 16
        %v990 = vrot.slane %v988, 7
        %v991 = vshll.u32 %v923, 16
        %v993 = vor.u32 %v990, %v991
        %v994 = vrot.slane %v990, 4
        %v996 = vshrl.u32 %v924, 16
        %v998 = vrot.slane %v996, 7
        %v999 = vshll.u32 %v924, 16
        %v1001 = vor.u32 %v998, %v999
        %v1002 = vsel %vm952, %v994, %v1001
        %v1003 = vrot.slane %v998, 4
        %v1005 = vshrl.u32 %v925, 16
        %v1007 = vrot.slane %v1005, 7
        %v1008 = vshll.u32 %v925, 16
        %v1010 = vor.u32 %v1007, %v1008
        %v1011 = vrot.slane %v1007, 4
        %v1013 = vshrl.u32 %v926, 16
        %v1015 = vrot.slane %v1013, 7
        %v1016 = vshll.u32 %v926, 16
        %v1018 = vor.u32 %v1015, %v1016
        %v1019 = vsel %vm952, %v1011, %v1018
        %v1020 = vrot.slane %v1015, 4
        %v1022 = vshrl.u32 %v927, 16
        %v1024 = vrot.slane %v1022, 7
        %v1025 = vshll.u32 %v927, 16
        %v1027 = vor.u32 %v1024, %v1025
        %v1028 = vrot.slane %v1024, 4
        %v1030 = vshrl.u32 %v928, 16
        %v1032 = vrot.slane %v1030, 7
        %v1033 = vshll.u32 %v928, 16
        %v1035 = vor.u32 %v1032, %v1033
        %v1036 = vsel %vm952, %v1028, %v1035
        %v1037 = vrot.slane %v1032, 4
        %v1039 = vshrl.u32 %v929, 16
        %v1041 = vrot.slane %v1039, 7
        %v1042 = vshll.u32 %v929, 16
        %v1044 = vor.u32 %v1041, %v1042
        %v1045 = vrot.slane %v1041, 4
        %v1047 = vshrl.u32 %v930, 16
        %v1049 = vrot.slane %v1047, 7
        %v1050 = vshll.u32 %v930, 16
        %v1052 = vor.u32 %v1049, %v1050
        %v1053 = vsel %vm952, %v1045, %v1052
        %v1054 = vrot.slane %v1049, 4
        %v1056 = vshrl.u32 %v931, 16
        %v1058 = vrot.slane %v1056, 7
        %v1059 = vshll.u32 %v931, 16
        %v1061 = vor.u32 %v1058, %v1059
        %v1062 = vrot.slane %v1058, 4
        %v1064 = vshrl.u32 %v932, 16
        %v1066 = vrot.slane %v1064, 7
        %v1067 = vshll.u32 %v932, 16
        %v1069 = vor.u32 %v1066, %v1067
        %v1070 = vsel %vm952, %v1062, %v1069
        %v1071 = vrot.slane %v1066, 4
        %v1073 = vshrl.u32 %v933, 16
        %v1075 = vrot.slane %v1073, 7
        %v1076 = vshll.u32 %v933, 16
        %v1078 = vor.u32 %v1075, %v1076
        %v1079 = vrot.slane %v1075, 4
        %v1081 = vshrl.u32 %v934, 16
        %v1083 = vrot.slane %v1081, 7
        %v1084 = vshll.u32 %v934, 16
        %v1086 = vor.u32 %v1083, %v1084
        %v1087 = vsel %vm952, %v1079, %v1086
        %v1088 = vrot.slane %v1083, 4
        %v1090 = vshrl.u32 %v935, 16
        %v1092 = vrot.slane %v1090, 7
        %v1093 = vshll.u32 %v935, 16
        %v1095 = vor.u32 %v1092, %v1093
        %v1096 = vrot.slane %v1092, 4
        %v1098 = vshrl.u32 %v936, 16
        %v1100 = vrot.slane %v1098, 7
        %v1101 = vshll.u32 %v936, 16
        %v1103 = vor.u32 %v1100, %v1101
        %v1104 = vsel %vm952, %v1096, %v1103
        %v1105 = vrot.slane %v1100, 4
        %v1107 = vshrl.u32 %v937, 16
        %v1109 = vrot.slane %v1107, 7
        %v1110 = vshll.u32 %v937, 16
        %v1112 = vor.u32 %v1109, %v1110
        %v1113 = vrot.slane %v1109, 4
        %v1115 = vshrl.u32 %v938, 16
        %v1117 = vrot.slane %v1115, 7
        %v1118 = vshll.u32 %v938, 16
        %v1120 = vor.u32 %v1117, %v1118
        %v1121 = vsel %vm952, %v1113, %v1120
        %v1122 = vrot.slane %v1117, 4
        %v1124 = vshrl.u32 %v939, 16
        %v1126 = vrot.slane %v1124, 7
        %v1127 = vshll.u32 %v939, 16
        %v1129 = vor.u32 %v1126, %v1127
        %v1130 = vrot.slane %v1126, 4
        %v1132 = vshrl.u32 %v940, 16
        %v1134 = vrot.slane %v1132, 7
        %v1135 = vshll.u32 %v940, 16
        %v1137 = vor.u32 %v1134, %v1135
        %v1138 = vsel %vm952, %v1130, %v1137
        %v1139 = vrot.slane %v1134, 4
        %v1141 = vshrl.u32 %v941, 16
        %v1143 = vrot.slane %v1141, 7
        %v1144 = vshll.u32 %v941, 16
        %v1146 = vor.u32 %v1143, %v1144
        %v1147 = vrot.slane %v1143, 4
        %v1149 = vshrl.u32 %v942, 16
        %v1151 = vrot.slane %v1149, 7
        %v1152 = vshll.u32 %v942, 16
        %v1154 = vor.u32 %v1151, %v1152
        %v1155 = vsel %vm952, %v1147, %v1154
        %v1156 = vrot.slane %v1151, 4
        %v1158 = vshrl.u32 %v943, 16
        %v1160 = vrot.slane %v1158, 7
        %v1161 = vshll.u32 %v943, 16
        %v1163 = vor.u32 %v1160, %v1161
        %v1164 = vrot.slane %v1160, 4
        %v1166 = vshrl.u32 %v944, 16
        %v1168 = vrot.slane %v1166, 7
        %v1169 = vshll.u32 %v944, 16
        %v1171 = vor.u32 %v1168, %v1169
        %v1172 = vsel %vm952, %v1164, %v1171
        %v1173 = vrot.slane %v1168, 4
        %v1175 = vshrl.u32 %v945, 16
        %v1177 = vrot.slane %v1175, 7
        %v1178 = vshll.u32 %v945, 16
        %v1180 = vor.u32 %v1177, %v1178
        %v1181 = vrot.slane %v1177, 4
        %v1183 = vshrl.u32 %v946, 16
        %v1185 = vrot.slane %v1183, 7
        %v1186 = vshll.u32 %v946, 16
        %v1188 = vor.u32 %v1185, %v1186
        %v1189 = vsel %vm952, %v1181, %v1188
        %v1190 = vrot.slane %v1185, 4
        %v1192 = vshrl.u32 %v947, 16
        %v1194 = vrot.slane %v1192, 7
        %v1195 = vshll.u32 %v947, 16
        %v1197 = vor.u32 %v1194, %v1195
        %v1198 = vrot.slane %v1194, 4
        %v1200 = vshrl.u32 %v948, 16
        %v1202 = vrot.slane %v1200, 7
        %v1203 = vshll.u32 %v948, 16
        %v1205 = vor.u32 %v1202, %v1203
        %v1206 = vsel %vm952, %v1198, %v1205
        %v1207 = vrot.slane %v1202, 4
        %v1209 = vshrl.u32 %v949, 16
        %v1211 = vrot.slane %v1209, 7
        %v1212 = vshll.u32 %v949, 16
        %v1214 = vor.u32 %v1211, %v1212
        %v1215 = vrot.slane %v1211, 4
        %v1217 = vshrl.u32 %v950, 16
        %v1219 = vrot.slane %v1217, 7
        %v1220 = vshll.u32 %v950, 16
        %v1222 = vor.u32 %v1219, %v1220
        %v1223 = vsel %vm952, %v1215, %v1222
        %v1224 = vrot.slane %v1219, 4
        %vm1273 = vcmask 1043456
        %vm1274 = vmand %vm1273, %vm821
        %v1275 = vld [vmem:[%s769] sm:$0xf]
        %v1276 = vsel %vm1274, %v959, %v1275
        %1277 = vst [vmem:[%s769] sm:$0xf] %v1276
        %1278 = vst [vmem:[%s769 + $0x4] sm:$0xf] %v968
        %v1279 = vld [vmem:[%s769 + $0x8] sm:$0x1]
        %v1280 = vsel %vm772, %v969, %v1279
        %1281 = vst [vmem:[%s769 + $0x8] sm:$0x1] %v1280
        %v1282 = vld [vmem:[%s769 + $0xc] sm:$0xf]
        %v1283 = vsel %vm1274, %v976, %v1282
        %1284 = vst [vmem:[%s769 + $0xc] sm:$0xf] %v1283
        %1285 = vst [vmem:[%s769 + $0x10] sm:$0xf] %v985
        %v1286 = vld [vmem:[%s769 + $0x14] sm:$0x1]
        %v1287 = vsel %vm772, %v986, %v1286
        %1288 = vst [vmem:[%s769 + $0x14] sm:$0x1] %v1287
        %v1289 = vld [vmem:[%s769 + $0x18] sm:$0xf]
        %v1290 = vsel %vm1274, %v993, %v1289
        %1291 = vst [vmem:[%s769 + $0x18] sm:$0xf] %v1290
        %1292 = vst [vmem:[%s769 + $0x1c] sm:$0xf] %v1002
        %v1293 = vld [vmem:[%s769 + $0x20] sm:$0x1]
        %v1294 = vsel %vm772, %v1003, %v1293
        %1295 = vst [vmem:[%s769 + $0x20] sm:$0x1] %v1294
        %v1296 = vld [vmem:[%s769 + $0x24] sm:$0xf]
        %v1297 = vsel %vm1274, %v1010, %v1296
        %1298 = vst [vmem:[%s769 + $0x24] sm:$0xf] %v1297
        %1299 = vst [vmem:[%s769 + $0x28] sm:$0xf] %v1019
        %v1300 = vld [vmem:[%s769 + $0x2c] sm:$0x1]
        %v1301 = vsel %vm772, %v1020, %v1300
        %1302 = vst [vmem:[%s769 + $0x2c] sm:$0x1] %v1301
        %v1303 = vld [vmem:[%s769 + $0x30] sm:$0xf]
        %v1304 = vsel %vm1274, %v1027, %v1303
        %1305 = vst [vmem:[%s769 + $0x30] sm:$0xf] %v1304
        %1306 = vst [vmem:[%s769 + $0x34] sm:$0xf] %v1036
        %v1307 = vld [vmem:[%s769 + $0x38] sm:$0x1]
        %v1308 = vsel %vm772, %v1037, %v1307
        %1309 = vst [vmem:[%s769 + $0x38] sm:$0x1] %v1308
        %v1310 = vld [vmem:[%s769 + $0x3c] sm:$0xf]
        %v1311 = vsel %vm1274, %v1044, %v1310
        %1312 = vst [vmem:[%s769 + $0x3c] sm:$0xf] %v1311
        %1313 = vst [vmem:[%s769 + $0x40] sm:$0xf] %v1053
        %v1314 = vld [vmem:[%s769 + $0x44] sm:$0x1]
        %v1315 = vsel %vm772, %v1054, %v1314
        %1316 = vst [vmem:[%s769 + $0x44] sm:$0x1] %v1315
        %v1317 = vld [vmem:[%s769 + $0x48] sm:$0xf]
        %v1318 = vsel %vm1274, %v1061, %v1317
        %1319 = vst [vmem:[%s769 + $0x48] sm:$0xf] %v1318
        %1320 = vst [vmem:[%s769 + $0x4c] sm:$0xf] %v1070
        %v1321 = vld [vmem:[%s769 + $0x50] sm:$0x1]
        %v1322 = vsel %vm772, %v1071, %v1321
        %1323 = vst [vmem:[%s769 + $0x50] sm:$0x1] %v1322
        %v1324 = vld [vmem:[%s769 + $0x54] sm:$0xf]
        %v1325 = vsel %vm1274, %v1078, %v1324
        %1326 = vst [vmem:[%s769 + $0x54] sm:$0xf] %v1325
        %1327 = vst [vmem:[%s769 + $0x58] sm:$0xf] %v1087
        %v1328 = vld [vmem:[%s769 + $0x5c] sm:$0x1]
        %v1329 = vsel %vm772, %v1088, %v1328
        %1330 = vst [vmem:[%s769 + $0x5c] sm:$0x1] %v1329
        %v1331 = vld [vmem:[%s769 + $0x60] sm:$0xf]
        %v1332 = vsel %vm1274, %v1095, %v1331
        %1333 = vst [vmem:[%s769 + $0x60] sm:$0xf] %v1332
        %1334 = vst [vmem:[%s769 + $0x64] sm:$0xf] %v1104
        %v1335 = vld [vmem:[%s769 + $0x68] sm:$0x1]
        %v1336 = vsel %vm772, %v1105, %v1335
        %1337 = vst [vmem:[%s769 + $0x68] sm:$0x1] %v1336
        %v1338 = vld [vmem:[%s769 + $0x6c] sm:$0xf]
        %v1339 = vsel %vm1274, %v1112, %v1338
        %1340 = vst [vmem:[%s769 + $0x6c] sm:$0xf] %v1339
        %1341 = vst [vmem:[%s769 + $0x70] sm:$0xf] %v1121
        %v1342 = vld [vmem:[%s769 + $0x74] sm:$0x1]
        %v1343 = vsel %vm772, %v1122, %v1342
        %1344 = vst [vmem:[%s769 + $0x74] sm:$0x1] %v1343
        %v1345 = vld [vmem:[%s769 + $0x78] sm:$0xf]
        %v1346 = vsel %vm1274, %v1129, %v1345
        %1347 = vst [vmem:[%s769 + $0x78] sm:$0xf] %v1346
        %1348 = vst [vmem:[%s769 + $0x7c] sm:$0xf] %v1138
        %v1349 = vld [vmem:[%s769 + $0x80] sm:$0x1]
        %v1350 = vsel %vm772, %v1139, %v1349
        %1351 = vst [vmem:[%s769 + $0x80] sm:$0x1] %v1350
        %v1352 = vld [vmem:[%s769 + $0x84] sm:$0xf]
        %v1353 = vsel %vm1274, %v1146, %v1352
        %1354 = vst [vmem:[%s769 + $0x84] sm:$0xf] %v1353
        %1355 = vst [vmem:[%s769 + $0x88] sm:$0xf] %v1155
        %v1356 = vld [vmem:[%s769 + $0x8c] sm:$0x1]
        %v1357 = vsel %vm772, %v1156, %v1356
        %1358 = vst [vmem:[%s769 + $0x8c] sm:$0x1] %v1357
        %v1359 = vld [vmem:[%s769 + $0x90] sm:$0xf]
        %v1360 = vsel %vm1274, %v1163, %v1359
        %1361 = vst [vmem:[%s769 + $0x90] sm:$0xf] %v1360
        %1362 = vst [vmem:[%s769 + $0x94] sm:$0xf] %v1172
        %v1363 = vld [vmem:[%s769 + $0x98] sm:$0x1]
        %v1364 = vsel %vm772, %v1173, %v1363
        %1365 = vst [vmem:[%s769 + $0x98] sm:$0x1] %v1364
        %v1366 = vld [vmem:[%s769 + $0x9c] sm:$0xf]
        %v1367 = vsel %vm1274, %v1180, %v1366
        %1368 = vst [vmem:[%s769 + $0x9c] sm:$0xf] %v1367
        %1369 = vst [vmem:[%s769 + $0xa0] sm:$0xf] %v1189
        %v1370 = vld [vmem:[%s769 + $0xa4] sm:$0x1]
        %v1371 = vsel %vm772, %v1190, %v1370
        %1372 = vst [vmem:[%s769 + $0xa4] sm:$0x1] %v1371
        %v1373 = vld [vmem:[%s769 + $0xa8] sm:$0xf]
        %v1374 = vsel %vm1274, %v1197, %v1373
        %1375 = vst [vmem:[%s769 + $0xa8] sm:$0xf] %v1374
        %1376 = vst [vmem:[%s769 + $0xac] sm:$0xf] %v1206
        %v1377 = vld [vmem:[%s769 + $0xb0] sm:$0x1]
        %v1378 = vsel %vm772, %v1207, %v1377
        %1379 = vst [vmem:[%s769 + $0xb0] sm:$0x1] %v1378
        %v1380 = vld [vmem:[%s769 + $0xb4] sm:$0xf]
        %v1381 = vsel %vm1274, %v1214, %v1380
        %1382 = vst [vmem:[%s769 + $0xb4] sm:$0xf] %v1381
        %1383 = vst [vmem:[%s769 + $0xb8] sm:$0xf] %v1223
        %v1384 = vld [vmem:[%s769 + $0xbc] sm:$0x1]
        %v1385 = vsel %vm772, %v1224, %v1384
        %1386 = vst [vmem:[%s769 + $0xbc] sm:$0x1] %v1385
        %v1387 = vld [vmem:[#allocation2] sm:$0xf]
        %v1388 = vld [vmem:[#allocation2 + $0x4] sm:$0xf]
        %v1389 = vld [vmem:[#allocation2 + $0xc] sm:$0xf]
        %v1390 = vld [vmem:[#allocation2 + $0x10] sm:$0xf]
        %v1391 = vld [vmem:[#allocation2 + $0x18] sm:$0xf]
        %v1392 = vld [vmem:[#allocation2 + $0x1c] sm:$0xf]
        %v1393 = vld [vmem:[#allocation2 + $0x24] sm:$0xf]
        %v1394 = vld [vmem:[#allocation2 + $0x28] sm:$0xf]
        %v1395 = vld [vmem:[#allocation2 + $0x30] sm:$0xf]
        %v1396 = vld [vmem:[#allocation2 + $0x34] sm:$0xf]
        %v1397 = vld [vmem:[#allocation2 + $0x3c] sm:$0xf]
        %v1398 = vld [vmem:[#allocation2 + $0x40] sm:$0xf]
        %v1399 = vld [vmem:[#allocation2 + $0x48] sm:$0xf]
        %v1400 = vld [vmem:[#allocation2 + $0x4c] sm:$0xf]
        %v1401 = vld [vmem:[#allocation2 + $0x54] sm:$0xf]
        %v1402 = vld [vmem:[#allocation2 + $0x58] sm:$0xf]
        %v1403 = vld [vmem:[#allocation2 + $0x60] sm:$0xf]
        %v1404 = vld [vmem:[#allocation2 + $0x64] sm:$0xf]
        %v1405 = vld [vmem:[#allocation2 + $0x6c] sm:$0xf]
        %v1406 = vld [vmem:[#allocation2 + $0x70] sm:$0xf]
        %v1407 = vld [vmem:[#allocation2 + $0x78] sm:$0xf]
        %v1408 = vld [vmem:[#allocation2 + $0x7c] sm:$0xf]
        %v1409 = vld [vmem:[#allocation2 + $0x84] sm:$0xf]
        %v1410 = vld [vmem:[#allocation2 + $0x88] sm:$0xf]
        %v1411 = vld [vmem:[#allocation2 + $0x90] sm:$0xf]
        %v1412 = vld [vmem:[#allocation2 + $0x94] sm:$0xf]
        %v1413 = vld [vmem:[#allocation2 + $0x9c] sm:$0xf]
        %v1414 = vld [vmem:[#allocation2 + $0xa0] sm:$0xf]
        %v1415 = vld [vmem:[#allocation2 + $0xa8] sm:$0xf]
        %v1416 = vld [vmem:[#allocation2 + $0xac] sm:$0xf]
        %v1417 = vld [vmem:[#allocation2 + $0xb4] sm:$0xf]
        %v1418 = vld [vmem:[#allocation2 + $0xb8] sm:$0xf]
        %v1451 = vunpack.c.l.b16 %v1387
        %v1452 = vunpack.c.l.b16 %v1388
        %v1453 = vunpack.c.l.b16 %v1389
        %v1454 = vunpack.c.l.b16 %v1390
        %v1455 = vunpack.c.l.b16 %v1391
        %v1456 = vunpack.c.l.b16 %v1392
        %v1457 = vunpack.c.l.b16 %v1393
        %v1458 = vunpack.c.l.b16 %v1394
        %v1459 = vunpack.c.l.b16 %v1395
        %v1460 = vunpack.c.l.b16 %v1396
        %v1461 = vunpack.c.l.b16 %v1397
        %v1462 = vunpack.c.l.b16 %v1398
        %v1463 = vunpack.c.l.b16 %v1399
        %v1464 = vunpack.c.l.b16 %v1400
        %v1465 = vunpack.c.l.b16 %v1401
        %v1466 = vunpack.c.l.b16 %v1402
        %v1467 = vunpack.c.l.b16 %v1403
        %v1468 = vunpack.c.l.b16 %v1404
        %v1469 = vunpack.c.l.b16 %v1405
        %v1470 = vunpack.c.l.b16 %v1406
        %v1471 = vunpack.c.l.b16 %v1407
        %v1472 = vunpack.c.l.b16 %v1408
        %v1473 = vunpack.c.l.b16 %v1409
        %v1474 = vunpack.c.l.b16 %v1410
        %v1475 = vunpack.c.l.b16 %v1411
        %v1476 = vunpack.c.l.b16 %v1412
        %v1477 = vunpack.c.l.b16 %v1413
        %v1478 = vunpack.c.l.b16 %v1414
        %v1479 = vunpack.c.l.b16 %v1415
        %v1480 = vunpack.c.l.b16 %v1416
        %v1481 = vunpack.c.l.b16 %v1417
        %v1482 = vunpack.c.l.b16 %v1418
        %v1483 = vpack.c.b16 %v1452, %v1451
        %v1484 = vpack.c.b16 %v1454, %v1453
        %v1485 = vpack.c.b16 %v1456, %v1455
        %v1486 = vpack.c.b16 %v1458, %v1457
        %v1487 = vpack.c.b16 %v1460, %v1459
        %v1488 = vpack.c.b16 %v1462, %v1461
        %v1489 = vpack.c.b16 %v1464, %v1463
        %v1490 = vpack.c.b16 %v1466, %v1465
        %v1491 = vpack.c.b16 %v1468, %v1467
        %v1492 = vpack.c.b16 %v1470, %v1469
        %v1493 = vpack.c.b16 %v1472, %v1471
        %v1494 = vpack.c.b16 %v1474, %v1473
        %v1495 = vpack.c.b16 %v1476, %v1475
        %v1496 = vpack.c.b16 %v1478, %v1477
        %v1497 = vpack.c.b16 %v1480, %v1479
        %v1498 = vpack.c.b16 %v1482, %v1481
        %1515 = vst [vmem:[#allocation3] sm:$0xff] %v1483
        %1516 = vst [vmem:[#allocation3 + $0x48] sm:$0xff] %v1484
        %1517 = vst [vmem:[#allocation3 + $0x90] sm:$0xff] %v1485
        %1518 = vst [vmem:[#allocation3 + $0xd8] sm:$0xff] %v1486
        %1519 = vst [vmem:[#allocation3 + $0x120] sm:$0xff] %v1487
        %1520 = vst [vmem:[#allocation3 + $0x168] sm:$0xff] %v1488
        %1521 = vst [vmem:[#allocation3 + $0x1b0] sm:$0xff] %v1489
        %1522 = vst [vmem:[#allocation3 + $0x1f8] sm:$0xff] %v1490
        %1523 = vst [vmem:[#allocation3 + $0x240] sm:$0xff] %v1491
        %1524 = vst [vmem:[#allocation3 + $0x288] sm:$0xff] %v1492
        %1525 = vst [vmem:[#allocation3 + $0x2d0] sm:$0xff] %v1493
        %1526 = vst [vmem:[#allocation3 + $0x318] sm:$0xff] %v1494
        %1527 = vst [vmem:[#allocation3 + $0x360] sm:$0xff] %v1495
        %1528 = vst [vmem:[#allocation3 + $0x3a8] sm:$0xff] %v1496
        %1529 = vst [vmem:[#allocation3 + $0x3f0] sm:$0xff] %v1497
        %1530 = vst [vmem:[#allocation3 + $0x438] sm:$0xff] %v1498
        %v1531 = vld [vmem:[#allocation2] sm:$0xf]
        %v1532 = vld [vmem:[#allocation2 + $0x4] sm:$0xf]
        %v1533 = vld [vmem:[#allocation2 + $0x8] sm:$0x1]
        %v1534 = vld [vmem:[#allocation2 + $0xc] sm:$0xf]
        %v1535 = vld [vmem:[#allocation2 + $0x10] sm:$0xf]
        %v1536 = vld [vmem:[#allocation2 + $0x14] sm:$0x1]
        %v1537 = vld [vmem:[#allocation2 + $0x18] sm:$0xf]
        %v1538 = vld [vmem:[#allocation2 + $0x1c] sm:$0xf]
        %v1539 = vld [vmem:[#allocation2 + $0x20] sm:$0x1]
        %v1540 = vld [vmem:[#allocation2 + $0x24] sm:$0xf]
        %v1541 = vld [vmem:[#allocation2 + $0x28] sm:$0xf]
        %v1542 = vld [vmem:[#allocation2 + $0x2c] sm:$0x1]
        %v1543 = vld [vmem:[#allocation2 + $0x30] sm:$0xf]
        %v1544 = vld [vmem:[#allocation2 + $0x34] sm:$0xf]
        %v1545 = vld [vmem:[#allocation2 + $0x38] sm:$0x1]
        %v1546 = vld [vmem:[#allocation2 + $0x3c] sm:$0xf]
        %v1547 = vld [vmem:[#allocation2 + $0x40] sm:$0xf]
        %v1548 = vld [vmem:[#allocation2 + $0x44] sm:$0x1]
        %v1549 = vld [vmem:[#allocation2 + $0x48] sm:$0xf]
        %v1550 = vld [vmem:[#allocation2 + $0x4c] sm:$0xf]
        %v1551 = vld [vmem:[#allocation2 + $0x50] sm:$0x1]
        %v1552 = vld [vmem:[#allocation2 + $0x54] sm:$0xf]
        %v1553 = vld [vmem:[#allocation2 + $0x58] sm:$0xf]
        %v1554 = vld [vmem:[#allocation2 + $0x5c] sm:$0x1]
        %v1555 = vld [vmem:[#allocation2 + $0x60] sm:$0xf]
        %v1556 = vld [vmem:[#allocation2 + $0x64] sm:$0xf]
        %v1557 = vld [vmem:[#allocation2 + $0x68] sm:$0x1]
        %v1558 = vld [vmem:[#allocation2 + $0x6c] sm:$0xf]
        %v1559 = vld [vmem:[#allocation2 + $0x70] sm:$0xf]
        %v1560 = vld [vmem:[#allocation2 + $0x74] sm:$0x1]
        %v1561 = vld [vmem:[#allocation2 + $0x78] sm:$0xf]
        %v1562 = vld [vmem:[#allocation2 + $0x7c] sm:$0xf]
        %v1563 = vld [vmem:[#allocation2 + $0x80] sm:$0x1]
        %v1564 = vld [vmem:[#allocation2 + $0x84] sm:$0xf]
        %v1565 = vld [vmem:[#allocation2 + $0x88] sm:$0xf]
        %v1566 = vld [vmem:[#allocation2 + $0x8c] sm:$0x1]
        %v1567 = vld [vmem:[#allocation2 + $0x90] sm:$0xf]
        %v1568 = vld [vmem:[#allocation2 + $0x94] sm:$0xf]
        %v1569 = vld [vmem:[#allocation2 + $0x98] sm:$0x1]
        %v1570 = vld [vmem:[#allocation2 + $0x9c] sm:$0xf]
        %v1571 = vld [vmem:[#allocation2 + $0xa0] sm:$0xf]
        %v1572 = vld [vmem:[#allocation2 + $0xa4] sm:$0x1]
        %v1573 = vld [vmem:[#allocation2 + $0xa8] sm:$0xf]
        %v1574 = vld [vmem:[#allocation2 + $0xac] sm:$0xf]
        %v1575 = vld [vmem:[#allocation2 + $0xb0] sm:$0x1]
        %v1576 = vld [vmem:[#allocation2 + $0xb4] sm:$0xf]
        %v1577 = vld [vmem:[#allocation2 + $0xb8] sm:$0xf]
        %v1578 = vld [vmem:[#allocation2 + $0xbc] sm:$0x1]
        %v1627 = vunpack.c.l.b16 %v1531
        %v1628 = vunpack.c.l.b16 %v1532
        %v1629 = vunpack.c.l.b16 %v1533
        %v1630 = vunpack.c.l.b16 %v1534
        %v1631 = vunpack.c.l.b16 %v1535
        %v1632 = vunpack.c.l.b16 %v1536
        %v1633 = vunpack.c.l.b16 %v1537
        %v1634 = vunpack.c.l.b16 %v1538
        %v1635 = vunpack.c.l.b16 %v1539
        %v1636 = vunpack.c.l.b16 %v1540
        %v1637 = vunpack.c.l.b16 %v1541
        %v1638 = vunpack.c.l.b16 %v1542
        %v1639 = vunpack.c.l.b16 %v1543
        %v1640 = vunpack.c.l.b16 %v1544
        %v1641 = vunpack.c.l.b16 %v1545
        %v1642 = vunpack.c.l.b16 %v1546
        %v1643 = vunpack.c.l.b16 %v1547
        %v1644 = vunpack.c.l.b16 %v1548
        %v1645 = vunpack.c.l.b16 %v1549
        %v1646 = vunpack.c.l.b16 %v1550
        %v1647 = vunpack.c.l.b16 %v1551
        %v1648 = vunpack.c.l.b16 %v1552
        %v1649 = vunpack.c.l.b16 %v1553
        %v1650 = vunpack.c.l.b16 %v1554
        %v1651 = vunpack.c.l.b16 %v1555
        %v1652 = vunpack.c.l.b16 %v1556
        %v1653 = vunpack.c.l.b16 %v1557
        %v1654 = vunpack.c.l.b16 %v1558
        %v1655 = vunpack.c.l.b16 %v1559
        %v1656 = vunpack.c.l.b16 %v1560
        %v1657 = vunpack.c.l.b16 %v1561
        %v1658 = vunpack.c.l.b16 %v1562
        %v1659 = vunpack.c.l.b16 %v1563
        %v1660 = vunpack.c.l.b16 %v1564
        %v1661 = vunpack.c.l.b16 %v1565
        %v1662 = vunpack.c.l.b16 %v1566
        %v1663 = vunpack.c.l.b16 %v1567
        %v1664 = vunpack.c.l.b16 %v1568
        %v1665 = vunpack.c.l.b16 %v1569
        %v1666 = vunpack.c.l.b16 %v1570
        %v1667 = vunpack.c.l.b16 %v1571
        %v1668 = vunpack.c.l.b16 %v1572
        %v1669 = vunpack.c.l.b16 %v1573
        %v1670 = vunpack.c.l.b16 %v1574
        %v1671 = vunpack.c.l.b16 %v1575
        %v1672 = vunpack.c.l.b16 %v1576
        %v1673 = vunpack.c.l.b16 %v1577
        %v1674 = vunpack.c.l.b16 %v1578
        %v1675 = vpack.c.b16 %v1628, %v1627
        %v1676 = vpack.c.b16 %v1629, %v1629
        %v1677 = vpack.c.b16 %v1631, %v1630
        %v1678 = vpack.c.b16 %v1632, %v1632
        %v1679 = vpack.c.b16 %v1634, %v1633
        %v1680 = vpack.c.b16 %v1635, %v1635
        %v1681 = vpack.c.b16 %v1637, %v1636
        %v1682 = vpack.c.b16 %v1638, %v1638
        %v1683 = vpack.c.b16 %v1640, %v1639
        %v1684 = vpack.c.b16 %v1641, %v1641
        %v1685 = vpack.c.b16 %v1643, %v1642
        %v1686 = vpack.c.b16 %v1644, %v1644
        %v1687 = vpack.c.b16 %v1646, %v1645
        %v1688 = vpack.c.b16 %v1647, %v1647
        %v1689 = vpack.c.b16 %v1649, %v1648
        %v1690 = vpack.c.b16 %v1650, %v1650
        %v1691 = vpack.c.b16 %v1652, %v1651
        %v1692 = vpack.c.b16 %v1653, %v1653
        %v1693 = vpack.c.b16 %v1655, %v1654
        %v1694 = vpack.c.b16 %v1656, %v1656
        %v1695 = vpack.c.b16 %v1658, %v1657
        %v1696 = vpack.c.b16 %v1659, %v1659
        %v1697 = vpack.c.b16 %v1661, %v1660
        %v1698 = vpack.c.b16 %v1662, %v1662
        %v1699 = vpack.c.b16 %v1664, %v1663
        %v1700 = vpack.c.b16 %v1665, %v1665
        %v1701 = vpack.c.b16 %v1667, %v1666
        %v1702 = vpack.c.b16 %v1668, %v1668
        %v1703 = vpack.c.b16 %v1670, %v1669
        %v1704 = vpack.c.b16 %v1671, %v1671
        %v1705 = vpack.c.b16 %v1673, %v1672
        %v1706 = vpack.c.b16 %v1674, %v1674
        %vm1707 = vsmask.f32 7424
        %v1709 = vshrl.u32 %v1675, 16
        %v1711 = vshll.u32 %v1675, 16
        %v1713 = vrot.slane %v1711, 1
        %v1714 = vor.u32 %v1709, %v1713
        %v1716 = vshll.u32 %v1676, 16
        %v1718 = vrot.slane %v1716, 1
        %v1719 = vsel %vm1707, %v1714, %v1718
        %v1721 = vshrl.u32 %v1677, 16
        %v1723 = vshll.u32 %v1677, 16
        %v1725 = vrot.slane %v1723, 1
        %v1726 = vor.u32 %v1721, %v1725
        %v1728 = vshll.u32 %v1678, 16
        %v1730 = vrot.slane %v1728, 1
        %v1731 = vsel %vm1707, %v1726, %v1730
        %v1733 = vshrl.u32 %v1679, 16
        %v1735 = vshll.u32 %v1679, 16
        %v1737 = vrot.slane %v1735, 1
        %v1738 = vor.u32 %v1733, %v1737
        %v1740 = vshll.u32 %v1680, 16
        %v1742 = vrot.slane %v1740, 1
        %v1743 = vsel %vm1707, %v1738, %v1742
        %v1745 = vshrl.u32 %v1681, 16
        %v1747 = vshll.u32 %v1681, 16
        %v1749 = vrot.slane %v1747, 1
        %v1750 = vor.u32 %v1745, %v1749
        %v1752 = vshll.u32 %v1682, 16
        %v1754 = vrot.slane %v1752, 1
        %v1755 = vsel %vm1707, %v1750, %v1754
        %v1757 = vshrl.u32 %v1683, 16
        %v1759 = vshll.u32 %v1683, 16
        %v1761 = vrot.slane %v1759, 1
        %v1762 = vor.u32 %v1757, %v1761
        %v1764 = vshll.u32 %v1684, 16
        %v1766 = vrot.slane %v1764, 1
        %v1767 = vsel %vm1707, %v1762, %v1766
        %v1769 = vshrl.u32 %v1685, 16
        %v1771 = vshll.u32 %v1685, 16
        %v1773 = vrot.slane %v1771, 1
        %v1774 = vor.u32 %v1769, %v1773
        %v1776 = vshll.u32 %v1686, 16
        %v1778 = vrot.slane %v1776, 1
        %v1779 = vsel %vm1707, %v1774, %v1778
        %v1781 = vshrl.u32 %v1687, 16
        %v1783 = vshll.u32 %v1687, 16
        %v1785 = vrot.slane %v1783, 1
        %v1786 = vor.u32 %v1781, %v1785
        %v1788 = vshll.u32 %v1688, 16
        %v1790 = vrot.slane %v1788, 1
        %v1791 = vsel %vm1707, %v1786, %v1790
        %v1793 = vshrl.u32 %v1689, 16
        %v1795 = vshll.u32 %v1689, 16
        %v1797 = vrot.slane %v1795, 1
        %v1798 = vor.u32 %v1793, %v1797
        %v1800 = vshll.u32 %v1690, 16
        %v1802 = vrot.slane %v1800, 1
        %v1803 = vsel %vm1707, %v1798, %v1802
        %v1805 = vshrl.u32 %v1691, 16
        %v1807 = vshll.u32 %v1691, 16
        %v1809 = vrot.slane %v1807, 1
        %v1810 = vor.u32 %v1805, %v1809
        %v1812 = vshll.u32 %v1692, 16
        %v1814 = vrot.slane %v1812, 1
        %v1815 = vsel %vm1707, %v1810, %v1814
        %v1817 = vshrl.u32 %v1693, 16
        %v1819 = vshll.u32 %v1693, 16
        %v1821 = vrot.slane %v1819, 1
        %v1822 = vor.u32 %v1817, %v1821
        %v1824 = vshll.u32 %v1694, 16
        %v1826 = vrot.slane %v1824, 1
        %v1827 = vsel %vm1707, %v1822, %v1826
        %v1829 = vshrl.u32 %v1695, 16
        %v1831 = vshll.u32 %v1695, 16
        %v1833 = vrot.slane %v1831, 1
        %v1834 = vor.u32 %v1829, %v1833
        %v1836 = vshll.u32 %v1696, 16
        %v1838 = vrot.slane %v1836, 1
        %v1839 = vsel %vm1707, %v1834, %v1838
        %v1841 = vshrl.u32 %v1697, 16
        %v1843 = vshll.u32 %v1697, 16
        %v1845 = vrot.slane %v1843, 1
        %v1846 = vor.u32 %v1841, %v1845
        %v1848 = vshll.u32 %v1698, 16
        %v1850 = vrot.slane %v1848, 1
        %v1851 = vsel %vm1707, %v1846, %v1850
        %v1853 = vshrl.u32 %v1699, 16
        %v1855 = vshll.u32 %v1699, 16
        %v1857 = vrot.slane %v1855, 1
        %v1858 = vor.u32 %v1853, %v1857
        %v1860 = vshll.u32 %v1700, 16
        %v1862 = vrot.slane %v1860, 1
        %v1863 = vsel %vm1707, %v1858, %v1862
        %v1865 = vshrl.u32 %v1701, 16
        %v1867 = vshll.u32 %v1701, 16
        %v1869 = vrot.slane %v1867, 1
        %v1870 = vor.u32 %v1865, %v1869
        %v1872 = vshll.u32 %v1702, 16
        %v1874 = vrot.slane %v1872, 1
        %v1875 = vsel %vm1707, %v1870, %v1874
        %v1877 = vshrl.u32 %v1703, 16
        %v1879 = vshll.u32 %v1703, 16
        %v1881 = vrot.slane %v1879, 1
        %v1882 = vor.u32 %v1877, %v1881
        %v1884 = vshll.u32 %v1704, 16
        %v1886 = vrot.slane %v1884, 1
        %v1887 = vsel %vm1707, %v1882, %v1886
        %v1889 = vshrl.u32 %v1705, 16
        %v1891 = vshll.u32 %v1705, 16
        %v1893 = vrot.slane %v1891, 1
        %v1894 = vor.u32 %v1889, %v1893
        %v1896 = vshll.u32 %v1706, 16
        %v1898 = vrot.slane %v1896, 1
        %v1899 = vsel %vm1707, %v1894, %v1898
        %1916 = vst [vmem:[#allocation3 + $0x8] sm:$0xff] %v1719
        %1917 = vst [vmem:[#allocation3 + $0x50] sm:$0xff] %v1731
        %1918 = vst [vmem:[#allocation3 + $0x98] sm:$0xff] %v1743
        %1919 = vst [vmem:[#allocation3 + $0xe0] sm:$0xff] %v1755
        %1920 = vst [vmem:[#allocation3 + $0x128] sm:$0xff] %v1767
        %1921 = vst [vmem:[#allocation3 + $0x170] sm:$0xff] %v1779
        %1922 = vst [vmem:[#allocation3 + $0x1b8] sm:$0xff] %v1791
        %1923 = vst [vmem:[#allocation3 + $0x200] sm:$0xff] %v1803
        %1924 = vst [vmem:[#allocation3 + $0x248] sm:$0xff] %v1815
        %1925 = vst [vmem:[#allocation3 + $0x290] sm:$0xff] %v1827
        %1926 = vst [vmem:[#allocation3 + $0x2d8] sm:$0xff] %v1839
        %1927 = vst [vmem:[#allocation3 + $0x320] sm:$0xff] %v1851
        %1928 = vst [vmem:[#allocation3 + $0x368] sm:$0xff] %v1863
        %1929 = vst [vmem:[#allocation3 + $0x3b0] sm:$0xff] %v1875
        %1930 = vst [vmem:[#allocation3 + $0x3f8] sm:$0xff] %v1887
        %1931 = vst [vmem:[#allocation3 + $0x440] sm:$0xff] %v1899
        %v1932 = vld [vmem:[#allocation2] sm:$0xe]
        %v1933 = vld [vmem:[#allocation2 + $0x4] sm:$0xf]
        %v1934 = vld [vmem:[#allocation2 + $0x8] sm:$0x1]
        %v1935 = vld [vmem:[#allocation2 + $0xc] sm:$0xe]
        %v1936 = vld [vmem:[#allocation2 + $0x10] sm:$0xf]
        %v1937 = vld [vmem:[#allocation2 + $0x14] sm:$0x1]
        %v1938 = vld [vmem:[#allocation2 + $0x18] sm:$0xe]
        %v1939 = vld [vmem:[#allocation2 + $0x1c] sm:$0xf]
        %v1940 = vld [vmem:[#allocation2 + $0x20] sm:$0x1]
        %v1941 = vld [vmem:[#allocation2 + $0x24] sm:$0xe]
        %v1942 = vld [vmem:[#allocation2 + $0x28] sm:$0xf]
        %v1943 = vld [vmem:[#allocation2 + $0x2c] sm:$0x1]
        %v1944 = vld [vmem:[#allocation2 + $0x30] sm:$0xe]
        %v1945 = vld [vmem:[#allocation2 + $0x34] sm:$0xf]
        %v1946 = vld [vmem:[#allocation2 + $0x38] sm:$0x1]
        %v1947 = vld [vmem:[#allocation2 + $0x3c] sm:$0xe]
        %v1948 = vld [vmem:[#allocation2 + $0x40] sm:$0xf]
        %v1949 = vld [vmem:[#allocation2 + $0x44] sm:$0x1]
        %v1950 = vld [vmem:[#allocation2 + $0x48] sm:$0xe]
        %v1951 = vld [vmem:[#allocation2 + $0x4c] sm:$0xf]
        %v1952 = vld [vmem:[#allocation2 + $0x50] sm:$0x1]
        %v1953 = vld [vmem:[#allocation2 + $0x54] sm:$0xe]
        %v1954 = vld [vmem:[#allocation2 + $0x58] sm:$0xf]
        %v1955 = vld [vmem:[#allocation2 + $0x5c] sm:$0x1]
        %v1956 = vld [vmem:[#allocation2 + $0x60] sm:$0xe]
        %v1957 = vld [vmem:[#allocation2 + $0x64] sm:$0xf]
        %v1958 = vld [vmem:[#allocation2 + $0x68] sm:$0x1]
        %v1959 = vld [vmem:[#allocation2 + $0x6c] sm:$0xe]
        %v1960 = vld [vmem:[#allocation2 + $0x70] sm:$0xf]
        %v1961 = vld [vmem:[#allocation2 + $0x74] sm:$0x1]
        %v1962 = vld [vmem:[#allocation2 + $0x78] sm:$0xe]
        %v1963 = vld [vmem:[#allocation2 + $0x7c] sm:$0xf]
        %v1964 = vld [vmem:[#allocation2 + $0x80] sm:$0x1]
        %v1965 = vld [vmem:[#allocation2 + $0x84] sm:$0xe]
        %v1966 = vld [vmem:[#allocation2 + $0x88] sm:$0xf]
        %v1967 = vld [vmem:[#allocation2 + $0x8c] sm:$0x1]
        %v1968 = vld [vmem:[#allocation2 + $0x90] sm:$0xe]
        %v1969 = vld [vmem:[#allocation2 + $0x94] sm:$0xf]
        %v1970 = vld [vmem:[#allocation2 + $0x98] sm:$0x1]
        %v1971 = vld [vmem:[#allocation2 + $0x9c] sm:$0xe]
        %v1972 = vld [vmem:[#allocation2 + $0xa0] sm:$0xf]
        %v1973 = vld [vmem:[#allocation2 + $0xa4] sm:$0x1]
        %v1974 = vld [vmem:[#allocation2 + $0xa8] sm:$0xe]
        %v1975 = vld [vmem:[#allocation2 + $0xac] sm:$0xf]
        %v1976 = vld [vmem:[#allocation2 + $0xb0] sm:$0x1]
        %v1977 = vld [vmem:[#allocation2 + $0xb4] sm:$0xe]
        %v1978 = vld [vmem:[#allocation2 + $0xb8] sm:$0xf]
        %v1979 = vld [vmem:[#allocation2 + $0xbc] sm:$0x1]
        %v2028 = vunpack.c.l.b16 %v1932
        %v2029 = vunpack.c.l.b16 %v1933
        %v2030 = vunpack.c.l.b16 %v1934
        %v2031 = vunpack.c.l.b16 %v1935
        %v2032 = vunpack.c.l.b16 %v1936
        %v2033 = vunpack.c.l.b16 %v1937
        %v2034 = vunpack.c.l.b16 %v1938
        %v2035 = vunpack.c.l.b16 %v1939
        %v2036 = vunpack.c.l.b16 %v1940
        %v2037 = vunpack.c.l.b16 %v1941
        %v2038 = vunpack.c.l.b16 %v1942
        %v2039 = vunpack.c.l.b16 %v1943
        %v2040 = vunpack.c.l.b16 %v1944
        %v2041 = vunpack.c.l.b16 %v1945
        %v2042 = vunpack.c.l.b16 %v1946
        %v2043 = vunpack.c.l.b16 %v1947
        %v2044 = vunpack.c.l.b16 %v1948
        %v2045 = vunpack.c.l.b16 %v1949
        %v2046 = vunpack.c.l.b16 %v1950
        %v2047 = vunpack.c.l.b16 %v1951
        %v2048 = vunpack.c.l.b16 %v1952
        %v2049 = vunpack.c.l.b16 %v1953
        %v2050 = vunpack.c.l.b16 %v1954
        %v2051 = vunpack.c.l.b16 %v1955
        %v2052 = vunpack.c.l.b16 %v1956
        %v2053 = vunpack.c.l.b16 %v1957
        %v2054 = vunpack.c.l.b16 %v1958
        %v2055 = vunpack.c.l.b16 %v1959
        %v2056 = vunpack.c.l.b16 %v1960
        %v2057 = vunpack.c.l.b16 %v1961
        %v2058 = vunpack.c.l.b16 %v1962
        %v2059 = vunpack.c.l.b16 %v1963
        %v2060 = vunpack.c.l.b16 %v1964
        %v2061 = vunpack.c.l.b16 %v1965
        %v2062 = vunpack.c.l.b16 %v1966
        %v2063 = vunpack.c.l.b16 %v1967
        %v2064 = vunpack.c.l.b16 %v1968
        %v2065 = vunpack.c.l.b16 %v1969
        %v2066 = vunpack.c.l.b16 %v1970
        %v2067 = vunpack.c.l.b16 %v1971
        %v2068 = vunpack.c.l.b16 %v1972
        %v2069 = vunpack.c.l.b16 %v1973
        %v2070 = vunpack.c.l.b16 %v1974
        %v2071 = vunpack.c.l.b16 %v1975
        %v2072 = vunpack.c.l.b16 %v1976
        %v2073 = vunpack.c.l.b16 %v1977
        %v2074 = vunpack.c.l.b16 %v1978
        %v2075 = vunpack.c.l.b16 %v1979
        %v2076 = vpack.c.b16 %v2029, %v2028
        %v2077 = vpack.c.b16 %v2030, %v2030
        %v2078 = vpack.c.b16 %v2032, %v2031
        %v2079 = vpack.c.b16 %v2033, %v2033
        %v2080 = vpack.c.b16 %v2035, %v2034
        %v2081 = vpack.c.b16 %v2036, %v2036
        %v2082 = vpack.c.b16 %v2038, %v2037
        %v2083 = vpack.c.b16 %v2039, %v2039
        %v2084 = vpack.c.b16 %v2041, %v2040
        %v2085 = vpack.c.b16 %v2042, %v2042
        %v2086 = vpack.c.b16 %v2044, %v2043
        %v2087 = vpack.c.b16 %v2045, %v2045
        %v2088 = vpack.c.b16 %v2047, %v2046
        %v2089 = vpack.c.b16 %v2048, %v2048
        %v2090 = vpack.c.b16 %v2050, %v2049
        %v2091 = vpack.c.b16 %v2051, %v2051
        %v2092 = vpack.c.b16 %v2053, %v2052
        %v2093 = vpack.c.b16 %v2054, %v2054
        %v2094 = vpack.c.b16 %v2056, %v2055
        %v2095 = vpack.c.b16 %v2057, %v2057
        %v2096 = vpack.c.b16 %v2059, %v2058
        %v2097 = vpack.c.b16 %v2060, %v2060
        %v2098 = vpack.c.b16 %v2062, %v2061
        %v2099 = vpack.c.b16 %v2063, %v2063
        %v2100 = vpack.c.b16 %v2065, %v2064
        %v2101 = vpack.c.b16 %v2066, %v2066
        %v2102 = vpack.c.b16 %v2068, %v2067
        %v2103 = vpack.c.b16 %v2069, %v2069
        %v2104 = vpack.c.b16 %v2071, %v2070
        %v2105 = vpack.c.b16 %v2072, %v2072
        %v2106 = vpack.c.b16 %v2074, %v2073
        %v2107 = vpack.c.b16 %v2075, %v2075
        %vm2108 = vcmask 1046528
        %v2109 = vrot.slane %v2076, 1
        %v2110 = vrot.slane %v2077, 1
        %v2111 = vsel %vm2108, %v2109, %v2110
        %v2112 = vrot.slane %v2078, 1
        %v2113 = vrot.slane %v2079, 1
        %v2114 = vsel %vm2108, %v2112, %v2113
        %v2115 = vrot.slane %v2080, 1
        %v2116 = vrot.slane %v2081, 1
        %v2117 = vsel %vm2108, %v2115, %v2116
        %v2118 = vrot.slane %v2082, 1
        %v2119 = vrot.slane %v2083, 1
        %v2120 = vsel %vm2108, %v2118, %v2119
        %v2121 = vrot.slane %v2084, 1
        %v2122 = vrot.slane %v2085, 1
        %v2123 = vsel %vm2108, %v2121, %v2122
        %v2124 = vrot.slane %v2086, 1
        %v2125 = vrot.slane %v2087, 1
        %v2126 = vsel %vm2108, %v2124, %v2125
        %v2127 = vrot.slane %v2088, 1
        %v2128 = vrot.slane %v2089, 1
        %v2129 = vsel %vm2108, %v2127, %v2128
        %v2130 = vrot.slane %v2090, 1
        %v2131 = vrot.slane %v2091, 1
        %v2132 = vsel %vm2108, %v2130, %v2131
        %v2133 = vrot.slane %v2092, 1
        %v2134 = vrot.slane %v2093, 1
        %v2135 = vsel %vm2108, %v2133, %v2134
        %v2136 = vrot.slane %v2094, 1
        %v2137 = vrot.slane %v2095, 1
        %v2138 = vsel %vm2108, %v2136, %v2137
        %v2139 = vrot.slane %v2096, 1
        %v2140 = vrot.slane %v2097, 1
        %v2141 = vsel %vm2108, %v2139, %v2140
        %v2142 = vrot.slane %v2098, 1
        %v2143 = vrot.slane %v2099, 1
        %v2144 = vsel %vm2108, %v2142, %v2143
        %v2145 = vrot.slane %v2100, 1
        %v2146 = vrot.slane %v2101, 1
        %v2147 = vsel %vm2108, %v2145, %v2146
        %v2148 = vrot.slane %v2102, 1
        %v2149 = vrot.slane %v2103, 1
        %v2150 = vsel %vm2108, %v2148, %v2149
        %v2151 = vrot.slane %v2104, 1
        %v2152 = vrot.slane %v2105, 1
        %v2153 = vsel %vm2108, %v2151, %v2152
        %v2154 = vrot.slane %v2106, 1
        %v2155 = vrot.slane %v2107, 1
        %v2156 = vsel %vm2108, %v2154, %v2155
        %2173 = vst [vmem:[#allocation3 + $0x10] sm:$0xff] %v2111
        %2174 = vst [vmem:[#allocation3 + $0x58] sm:$0xff] %v2114
        %2175 = vst [vmem:[#allocation3 + $0xa0] sm:$0xff] %v2117
        %2176 = vst [vmem:[#allocation3 + $0xe8] sm:$0xff] %v2120
        %2177 = vst [vmem:[#allocation3 + $0x130] sm:$0xff] %v2123
        %2178 = vst [vmem:[#allocation3 + $0x178] sm:$0xff] %v2126
        %2179 = vst [vmem:[#allocation3 + $0x1c0] sm:$0xff] %v2129
        %2180 = vst [vmem:[#allocation3 + $0x208] sm:$0xff] %v2132
        %2181 = vst [vmem:[#allocation3 + $0x250] sm:$0xff] %v2135
        %2182 = vst [vmem:[#allocation3 + $0x298] sm:$0xff] %v2138
        %2183 = vst [vmem:[#allocation3 + $0x2e0] sm:$0xff] %v2141
        %2184 = vst [vmem:[#allocation3 + $0x328] sm:$0xff] %v2144
        %2185 = vst [vmem:[#allocation3 + $0x370] sm:$0xff] %v2147
        %2186 = vst [vmem:[#allocation3 + $0x3b8] sm:$0xff] %v2150
        %2187 = vst [vmem:[#allocation3 + $0x400] sm:$0xff] %v2153
        %2188 = vst [vmem:[#allocation3 + $0x448] sm:$0xff] %v2156
        %v2189 = vld [vmem:[%s769] sm:$0xf]
        %v2190 = vld [vmem:[%s769 + $0x4] sm:$0xf]
        %v2191 = vld [vmem:[%s769 + $0xc] sm:$0xf]
        %v2192 = vld [vmem:[%s769 + $0x10] sm:$0xf]
        %v2193 = vld [vmem:[%s769 + $0x18] sm:$0xf]
        %v2194 = vld [vmem:[%s769 + $0x1c] sm:$0xf]
        %v2195 = vld [vmem:[%s769 + $0x24] sm:$0xf]
        %v2196 = vld [vmem:[%s769 + $0x28] sm:$0xf]
        %v2197 = vld [vmem:[%s769 + $0x30] sm:$0xf]
        %v2198 = vld [vmem:[%s769 + $0x34] sm:$0xf]
        %v2199 = vld [vmem:[%s769 + $0x3c] sm:$0xf]
        %v2200 = vld [vmem:[%s769 + $0x40] sm:$0xf]
        %v2201 = vld [vmem:[%s769 + $0x48] sm:$0xf]
        %v2202 = vld [vmem:[%s769 + $0x4c] sm:$0xf]
        %v2203 = vld [vmem:[%s769 + $0x54] sm:$0xf]
        %v2204 = vld [vmem:[%s769 + $0x58] sm:$0xf]
        %v2205 = vld [vmem:[%s769 + $0x60] sm:$0xf]
        %v2206 = vld [vmem:[%s769 + $0x64] sm:$0xf]
        %v2207 = vld [vmem:[%s769 + $0x6c] sm:$0xf]
        %v2208 = vld [vmem:[%s769 + $0x70] sm:$0xf]
        %v2209 = vld [vmem:[%s769 + $0x78] sm:$0xf]
        %v2210 = vld [vmem:[%s769 + $0x7c] sm:$0xf]
        %v2211 = vld [vmem:[%s769 + $0x84] sm:$0xf]
        %v2212 = vld [vmem:[%s769 + $0x88] sm:$0xf]
        %v2213 = vld [vmem:[%s769 + $0x90] sm:$0xf]
        %v2214 = vld [vmem:[%s769 + $0x94] sm:$0xf]
        %v2215 = vld [vmem:[%s769 + $0x9c] sm:$0xf]
        %v2216 = vld [vmem:[%s769 + $0xa0] sm:$0xf]
        %v2217 = vld [vmem:[%s769 + $0xa8] sm:$0xf]
        %v2218 = vld [vmem:[%s769 + $0xac] sm:$0xf]
        %v2219 = vld [vmem:[%s769 + $0xb4] sm:$0xf]
        %v2220 = vld [vmem:[%s769 + $0xb8] sm:$0xf]
        %v2253 = vunpack.c.l.b16 %v2189
        %v2254 = vunpack.c.l.b16 %v2190
        %v2255 = vunpack.c.l.b16 %v2191
        %v2256 = vunpack.c.l.b16 %v2192
        %v2257 = vunpack.c.l.b16 %v2193
        %v2258 = vunpack.c.l.b16 %v2194
        %v2259 = vunpack.c.l.b16 %v2195
        %v2260 = vunpack.c.l.b16 %v2196
        %v2261 = vunpack.c.l.b16 %v2197
        %v2262 = vunpack.c.l.b16 %v2198
        %v2263 = vunpack.c.l.b16 %v2199
        %v2264 = vunpack.c.l.b16 %v2200
        %v2265 = vunpack.c.l.b16 %v2201
        %v2266 = vunpack.c.l.b16 %v2202
        %v2267 = vunpack.c.l.b16 %v2203
        %v2268 = vunpack.c.l.b16 %v2204
        %v2269 = vunpack.c.l.b16 %v2205
        %v2270 = vunpack.c.l.b16 %v2206
        %v2271 = vunpack.c.l.b16 %v2207
        %v2272 = vunpack.c.l.b16 %v2208
        %v2273 = vunpack.c.l.b16 %v2209
        %v2274 = vunpack.c.l.b16 %v2210
        %v2275 = vunpack.c.l.b16 %v2211
        %v2276 = vunpack.c.l.b16 %v2212
        %v2277 = vunpack.c.l.b16 %v2213
        %v2278 = vunpack.c.l.b16 %v2214
        %v2279 = vunpack.c.l.b16 %v2215
        %v2280 = vunpack.c.l.b16 %v2216
        %v2281 = vunpack.c.l.b16 %v2217
        %v2282 = vunpack.c.l.b16 %v2218
        %v2283 = vunpack.c.l.b16 %v2219
        %v2284 = vunpack.c.l.b16 %v2220
        %v2285 = vpack.c.b16 %v2254, %v2253
        %v2286 = vpack.c.b16 %v2256, %v2255
        %v2287 = vpack.c.b16 %v2258, %v2257
        %v2288 = vpack.c.b16 %v2260, %v2259
        %v2289 = vpack.c.b16 %v2262, %v2261
        %v2290 = vpack.c.b16 %v2264, %v2263
        %v2291 = vpack.c.b16 %v2266, %v2265
        %v2292 = vpack.c.b16 %v2268, %v2267
        %v2293 = vpack.c.b16 %v2270, %v2269
        %v2294 = vpack.c.b16 %v2272, %v2271
        %v2295 = vpack.c.b16 %v2274, %v2273
        %v2296 = vpack.c.b16 %v2276, %v2275
        %v2297 = vpack.c.b16 %v2278, %v2277
        %v2298 = vpack.c.b16 %v2280, %v2279
        %v2299 = vpack.c.b16 %v2282, %v2281
        %v2300 = vpack.c.b16 %v2284, %v2283
        %2317 = vst [vmem:[#allocation3 + $0x18] sm:$0xff] %v2285
        %2318 = vst [vmem:[#allocation3 + $0x60] sm:$0xff] %v2286
        %2319 = vst [vmem:[#allocation3 + $0xa8] sm:$0xff] %v2287
        %2320 = vst [vmem:[#allocation3 + $0xf0] sm:$0xff] %v2288
        %2321 = vst [vmem:[#allocation3 + $0x138] sm:$0xff] %v2289
        %2322 = vst [vmem:[#allocation3 + $0x180] sm:$0xff] %v2290
        %2323 = vst [vmem:[#allocation3 + $0x1c8] sm:$0xff] %v2291
        %2324 = vst [vmem:[#allocation3 + $0x210] sm:$0xff] %v2292
        %2325 = vst [vmem:[#allocation3 + $0x258] sm:$0xff] %v2293
        %2326 = vst [vmem:[#allocation3 + $0x2a0] sm:$0xff] %v2294
        %2327 = vst [vmem:[#allocation3 + $0x2e8] sm:$0xff] %v2295
        %2328 = vst [vmem:[#allocation3 + $0x330] sm:$0xff] %v2296
        %2329 = vst [vmem:[#allocation3 + $0x378] sm:$0xff] %v2297
        %2330 = vst [vmem:[#allocation3 + $0x3c0] sm:$0xff] %v2298
        %2331 = vst [vmem:[#allocation3 + $0x408] sm:$0xff] %v2299
        %2332 = vst [vmem:[#allocation3 + $0x450] sm:$0xff] %v2300
        %v2333 = vld [vmem:[%s769] sm:$0xf]
        %v2334 = vld [vmem:[%s769 + $0x4] sm:$0xf]
        %v2335 = vld [vmem:[%s769 + $0x8] sm:$0x1]
        %v2336 = vld [vmem:[%s769 + $0xc] sm:$0xf]
        %v2337 = vld [vmem:[%s769 + $0x10] sm:$0xf]
        %v2338 = vld [vmem:[%s769 + $0x14] sm:$0x1]
        %v2339 = vld [vmem:[%s769 + $0x18] sm:$0xf]
        %v2340 = vld [vmem:[%s769 + $0x1c] sm:$0xf]
        %v2341 = vld [vmem:[%s769 + $0x20] sm:$0x1]
        %v2342 = vld [vmem:[%s769 + $0x24] sm:$0xf]
        %v2343 = vld [vmem:[%s769 + $0x28] sm:$0xf]
        %v2344 = vld [vmem:[%s769 + $0x2c] sm:$0x1]
        %v2345 = vld [vmem:[%s769 + $0x30] sm:$0xf]
        %v2346 = vld [vmem:[%s769 + $0x34] sm:$0xf]
        %v2347 = vld [vmem:[%s769 + $0x38] sm:$0x1]
        %v2348 = vld [vmem:[%s769 + $0x3c] sm:$0xf]
        %v2349 = vld [vmem:[%s769 + $0x40] sm:$0xf]
        %v2350 = vld [vmem:[%s769 + $0x44] sm:$0x1]
        %v2351 = vld [vmem:[%s769 + $0x48] sm:$0xf]
        %v2352 = vld [vmem:[%s769 + $0x4c] sm:$0xf]
        %v2353 = vld [vmem:[%s769 + $0x50] sm:$0x1]
        %v2354 = vld [vmem:[%s769 + $0x54] sm:$0xf]
        %v2355 = vld [vmem:[%s769 + $0x58] sm:$0xf]
        %v2356 = vld [vmem:[%s769 + $0x5c] sm:$0x1]
        %v2357 = vld [vmem:[%s769 + $0x60] sm:$0xf]
        %v2358 = vld [vmem:[%s769 + $0x64] sm:$0xf]
        %v2359 = vld [vmem:[%s769 + $0x68] sm:$0x1]
        %v2360 = vld [vmem:[%s769 + $0x6c] sm:$0xf]
        %v2361 = vld [vmem:[%s769 + $0x70] sm:$0xf]
        %v2362 = vld [vmem:[%s769 + $0x74] sm:$0x1]
        %v2363 = vld [vmem:[%s769 + $0x78] sm:$0xf]
        %v2364 = vld [vmem:[%s769 + $0x7c] sm:$0xf]
        %v2365 = vld [vmem:[%s769 + $0x80] sm:$0x1]
        %v2366 = vld [vmem:[%s769 + $0x84] sm:$0xf]
        %v2367 = vld [vmem:[%s769 + $0x88] sm:$0xf]
        %v2368 = vld [vmem:[%s769 + $0x8c] sm:$0x1]
        %v2369 = vld [vmem:[%s769 + $0x90] sm:$0xf]
        %v2370 = vld [vmem:[%s769 + $0x94] sm:$0xf]
        %v2371 = vld [vmem:[%s769 + $0x98] sm:$0x1]
        %v2372 = vld [vmem:[%s769 + $0x9c] sm:$0xf]
        %v2373 = vld [vmem:[%s769 + $0xa0] sm:$0xf]
        %v2374 = vld [vmem:[%s769 + $0xa4] sm:$0x1]
        %v2375 = vld [vmem:[%s769 + $0xa8] sm:$0xf]
        %v2376 = vld [vmem:[%s769 + $0xac] sm:$0xf]
        %v2377 = vld [vmem:[%s769 + $0xb0] sm:$0x1]
        %v2378 = vld [vmem:[%s769 + $0xb4] sm:$0xf]
        %v2379 = vld [vmem:[%s769 + $0xb8] sm:$0xf]
        %v2380 = vld [vmem:[%s769 + $0xbc] sm:$0x1]
        %v2429 = vunpack.c.l.b16 %v2333
        %v2430 = vunpack.c.l.b16 %v2334
        %v2431 = vunpack.c.l.b16 %v2335
        %v2432 = vunpack.c.l.b16 %v2336
        %v2433 = vunpack.c.l.b16 %v2337
        %v2434 = vunpack.c.l.b16 %v2338
        %v2435 = vunpack.c.l.b16 %v2339
        %v2436 = vunpack.c.l.b16 %v2340
        %v2437 = vunpack.c.l.b16 %v2341
        %v2438 = vunpack.c.l.b16 %v2342
        %v2439 = vunpack.c.l.b16 %v2343
        %v2440 = vunpack.c.l.b16 %v2344
        %v2441 = vunpack.c.l.b16 %v2345
        %v2442 = vunpack.c.l.b16 %v2346
        %v2443 = vunpack.c.l.b16 %v2347
        %v2444 = vunpack.c.l.b16 %v2348
        %v2445 = vunpack.c.l.b16 %v2349
        %v2446 = vunpack.c.l.b16 %v2350
        %v2447 = vunpack.c.l.b16 %v2351
        %v2448 = vunpack.c.l.b16 %v2352
        %v2449 = vunpack.c.l.b16 %v2353
        %v2450 = vunpack.c.l.b16 %v2354
        %v2451 = vunpack.c.l.b16 %v2355
        %v2452 = vunpack.c.l.b16 %v2356
        %v2453 = vunpack.c.l.b16 %v2357
        %v2454 = vunpack.c.l.b16 %v2358
        %v2455 = vunpack.c.l.b16 %v2359
        %v2456 = vunpack.c.l.b16 %v2360
        %v2457 = vunpack.c.l.b16 %v2361
        %v2458 = vunpack.c.l.b16 %v2362
        %v2459 = vunpack.c.l.b16 %v2363
        %v2460 = vunpack.c.l.b16 %v2364
        %v2461 = vunpack.c.l.b16 %v2365
        %v2462 = vunpack.c.l.b16 %v2366
        %v2463 = vunpack.c.l.b16 %v2367
        %v2464 = vunpack.c.l.b16 %v2368
        %v2465 = vunpack.c.l.b16 %v2369
        %v2466 = vunpack.c.l.b16 %v2370
        %v2467 = vunpack.c.l.b16 %v2371
        %v2468 = vunpack.c.l.b16 %v2372
        %v2469 = vunpack.c.l.b16 %v2373
        %v2470 = vunpack.c.l.b16 %v2374
        %v2471 = vunpack.c.l.b16 %v2375
        %v2472 = vunpack.c.l.b16 %v2376
        %v2473 = vunpack.c.l.b16 %v2377
        %v2474 = vunpack.c.l.b16 %v2378
        %v2475 = vunpack.c.l.b16 %v2379
        %v2476 = vunpack.c.l.b16 %v2380
        %v2477 = vpack.c.b16 %v2430, %v2429
        %v2478 = vpack.c.b16 %v2431, %v2431
        %v2479 = vpack.c.b16 %v2433, %v2432
        %v2480 = vpack.c.b16 %v2434, %v2434
        %v2481 = vpack.c.b16 %v2436, %v2435
        %v2482 = vpack.c.b16 %v2437, %v2437
        %v2483 = vpack.c.b16 %v2439, %v2438
        %v2484 = vpack.c.b16 %v2440, %v2440
        %v2485 = vpack.c.b16 %v2442, %v2441
        %v2486 = vpack.c.b16 %v2443, %v2443
        %v2487 = vpack.c.b16 %v2445, %v2444
        %v2488 = vpack.c.b16 %v2446, %v2446
        %v2489 = vpack.c.b16 %v2448, %v2447
        %v2490 = vpack.c.b16 %v2449, %v2449
        %v2491 = vpack.c.b16 %v2451, %v2450
        %v2492 = vpack.c.b16 %v2452, %v2452
        %v2493 = vpack.c.b16 %v2454, %v2453
        %v2494 = vpack.c.b16 %v2455, %v2455
        %v2495 = vpack.c.b16 %v2457, %v2456
        %v2496 = vpack.c.b16 %v2458, %v2458
        %v2497 = vpack.c.b16 %v2460, %v2459
        %v2498 = vpack.c.b16 %v2461, %v2461
        %v2499 = vpack.c.b16 %v2463, %v2462
        %v2500 = vpack.c.b16 %v2464, %v2464
        %v2501 = vpack.c.b16 %v2466, %v2465
        %v2502 = vpack.c.b16 %v2467, %v2467
        %v2503 = vpack.c.b16 %v2469, %v2468
        %v2504 = vpack.c.b16 %v2470, %v2470
        %v2505 = vpack.c.b16 %v2472, %v2471
        %v2506 = vpack.c.b16 %v2473, %v2473
        %v2507 = vpack.c.b16 %v2475, %v2474
        %v2508 = vpack.c.b16 %v2476, %v2476
        %v2510 = vshrl.u32 %v2477, 16
        %v2512 = vshll.u32 %v2477, 16
        %v2514 = vrot.slane %v2512, 1
        %v2515 = vor.u32 %v2510, %v2514
        %v2517 = vshll.u32 %v2478, 16
        %v2519 = vrot.slane %v2517, 1
        %v2520 = vsel %vm1707, %v2515, %v2519
        %v2522 = vshrl.u32 %v2479, 16
        %v2524 = vshll.u32 %v2479, 16
        %v2526 = vrot.slane %v2524, 1
        %v2527 = vor.u32 %v2522, %v2526
        %v2529 = vshll.u32 %v2480, 16
        %v2531 = vrot.slane %v2529, 1
        %v2532 = vsel %vm1707, %v2527, %v2531
        %v2534 = vshrl.u32 %v2481, 16
        %v2536 = vshll.u32 %v2481, 16
        %v2538 = vrot.slane %v2536, 1
        %v2539 = vor.u32 %v2534, %v2538
        %v2541 = vshll.u32 %v2482, 16
        %v2543 = vrot.slane %v2541, 1
        %v2544 = vsel %vm1707, %v2539, %v2543
        %v2546 = vshrl.u32 %v2483, 16
        %v2548 = vshll.u32 %v2483, 16
        %v2550 = vrot.slane %v2548, 1
        %v2551 = vor.u32 %v2546, %v2550
        %v2553 = vshll.u32 %v2484, 16
        %v2555 = vrot.slane %v2553, 1
        %v2556 = vsel %vm1707, %v2551, %v2555
        %v2558 = vshrl.u32 %v2485, 16
        %v2560 = vshll.u32 %v2485, 16
        %v2562 = vrot.slane %v2560, 1
        %v2563 = vor.u32 %v2558, %v2562
        %v2565 = vshll.u32 %v2486, 16
        %v2567 = vrot.slane %v2565, 1
        %v2568 = vsel %vm1707, %v2563, %v2567
        %v2570 = vshrl.u32 %v2487, 16
        %v2572 = vshll.u32 %v2487, 16
        %v2574 = vrot.slane %v2572, 1
        %v2575 = vor.u32 %v2570, %v2574
        %v2577 = vshll.u32 %v2488, 16
        %v2579 = vrot.slane %v2577, 1
        %v2580 = vsel %vm1707, %v2575, %v2579
        %v2582 = vshrl.u32 %v2489, 16
        %v2584 = vshll.u32 %v2489, 16
        %v2586 = vrot.slane %v2584, 1
        %v2587 = vor.u32 %v2582, %v2586
        %v2589 = vshll.u32 %v2490, 16
        %v2591 = vrot.slane %v2589, 1
        %v2592 = vsel %vm1707, %v2587, %v2591
        %v2594 = vshrl.u32 %v2491, 16
        %v2596 = vshll.u32 %v2491, 16
        %v2598 = vrot.slane %v2596, 1
        %v2599 = vor.u32 %v2594, %v2598
        %v2601 = vshll.u32 %v2492, 16
        %v2603 = vrot.slane %v2601, 1
        %v2604 = vsel %vm1707, %v2599, %v2603
        %v2606 = vshrl.u32 %v2493, 16
        %v2608 = vshll.u32 %v2493, 16
        %v2610 = vrot.slane %v2608, 1
        %v2611 = vor.u32 %v2606, %v2610
        %v2613 = vshll.u32 %v2494, 16
        %v2615 = vrot.slane %v2613, 1
        %v2616 = vsel %vm1707, %v2611, %v2615
        %v2618 = vshrl.u32 %v2495, 16
        %v2620 = vshll.u32 %v2495, 16
        %v2622 = vrot.slane %v2620, 1
        %v2623 = vor.u32 %v2618, %v2622
        %v2625 = vshll.u32 %v2496, 16
        %v2627 = vrot.slane %v2625, 1
        %v2628 = vsel %vm1707, %v2623, %v2627
        %v2630 = vshrl.u32 %v2497, 16
        %v2632 = vshll.u32 %v2497, 16
        %v2634 = vrot.slane %v2632, 1
        %v2635 = vor.u32 %v2630, %v2634
        %v2637 = vshll.u32 %v2498, 16
        %v2639 = vrot.slane %v2637, 1
        %v2640 = vsel %vm1707, %v2635, %v2639
        %v2642 = vshrl.u32 %v2499, 16
        %v2644 = vshll.u32 %v2499, 16
        %v2646 = vrot.slane %v2644, 1
        %v2647 = vor.u32 %v2642, %v2646
        %v2649 = vshll.u32 %v2500, 16
        %v2651 = vrot.slane %v2649, 1
        %v2652 = vsel %vm1707, %v2647, %v2651
        %v2654 = vshrl.u32 %v2501, 16
        %v2656 = vshll.u32 %v2501, 16
        %v2658 = vrot.slane %v2656, 1
        %v2659 = vor.u32 %v2654, %v2658
        %v2661 = vshll.u32 %v2502, 16
        %v2663 = vrot.slane %v2661, 1
        %v2664 = vsel %vm1707, %v2659, %v2663
        %v2666 = vshrl.u32 %v2503, 16
        %v2668 = vshll.u32 %v2503, 16
        %v2670 = vrot.slane %v2668, 1
        %v2671 = vor.u32 %v2666, %v2670
        %v2673 = vshll.u32 %v2504, 16
        %v2675 = vrot.slane %v2673, 1
        %v2676 = vsel %vm1707, %v2671, %v2675
        %v2678 = vshrl.u32 %v2505, 16
        %v2680 = vshll.u32 %v2505, 16
        %v2682 = vrot.slane %v2680, 1
        %v2683 = vor.u32 %v2678, %v2682
        %v2685 = vshll.u32 %v2506, 16
        %v2687 = vrot.slane %v2685, 1
        %v2688 = vsel %vm1707, %v2683, %v2687
        %v2690 = vshrl.u32 %v2507, 16
        %v2692 = vshll.u32 %v2507, 16
        %v2694 = vrot.slane %v2692, 1
        %v2695 = vor.u32 %v2690, %v2694
        %v2697 = vshll.u32 %v2508, 16
        %v2699 = vrot.slane %v2697, 1
        %v2700 = vsel %vm1707, %v2695, %v2699
        %2717 = vst [vmem:[#allocation3 + $0x20] sm:$0xff] %v2520
        %2718 = vst [vmem:[#allocation3 + $0x68] sm:$0xff] %v2532
        %2719 = vst [vmem:[#allocation3 + $0xb0] sm:$0xff] %v2544
        %2720 = vst [vmem:[#allocation3 + $0xf8] sm:$0xff] %v2556
        %2721 = vst [vmem:[#allocation3 + $0x140] sm:$0xff] %v2568
        %2722 = vst [vmem:[#allocation3 + $0x188] sm:$0xff] %v2580
        %2723 = vst [vmem:[#allocation3 + $0x1d0] sm:$0xff] %v2592
        %2724 = vst [vmem:[#allocation3 + $0x218] sm:$0xff] %v2604
        %2725 = vst [vmem:[#allocation3 + $0x260] sm:$0xff] %v2616
        %2726 = vst [vmem:[#allocation3 + $0x2a8] sm:$0xff] %v2628
        %2727 = vst [vmem:[#allocation3 + $0x2f0] sm:$0xff] %v2640
        %2728 = vst [vmem:[#allocation3 + $0x338] sm:$0xff] %v2652
        %2729 = vst [vmem:[#allocation3 + $0x380] sm:$0xff] %v2664
        %2730 = vst [vmem:[#allocation3 + $0x3c8] sm:$0xff] %v2676
        %2731 = vst [vmem:[#allocation3 + $0x410] sm:$0xff] %v2688
        %2732 = vst [vmem:[#allocation3 + $0x458] sm:$0xff] %v2700
        %v2733 = vld [vmem:[%s769] sm:$0xe]
        %v2734 = vld [vmem:[%s769 + $0x4] sm:$0xf]
        %v2735 = vld [vmem:[%s769 + $0x8] sm:$0x1]
        %v2736 = vld [vmem:[%s769 + $0xc] sm:$0xe]
        %v2737 = vld [vmem:[%s769 + $0x10] sm:$0xf]
        %v2738 = vld [vmem:[%s769 + $0x14] sm:$0x1]
        %v2739 = vld [vmem:[%s769 + $0x18] sm:$0xe]
        %v2740 = vld [vmem:[%s769 + $0x1c] sm:$0xf]
        %v2741 = vld [vmem:[%s769 + $0x20] sm:$0x1]
        %v2742 = vld [vmem:[%s769 + $0x24] sm:$0xe]
        %v2743 = vld [vmem:[%s769 + $0x28] sm:$0xf]
        %v2744 = vld [vmem:[%s769 + $0x2c] sm:$0x1]
        %v2745 = vld [vmem:[%s769 + $0x30] sm:$0xe]
        %v2746 = vld [vmem:[%s769 + $0x34] sm:$0xf]
        %v2747 = vld [vmem:[%s769 + $0x38] sm:$0x1]
        %v2748 = vld [vmem:[%s769 + $0x3c] sm:$0xe]
        %v2749 = vld [vmem:[%s769 + $0x40] sm:$0xf]
        %v2750 = vld [vmem:[%s769 + $0x44] sm:$0x1]
        %v2751 = vld [vmem:[%s769 + $0x48] sm:$0xe]
        %v2752 = vld [vmem:[%s769 + $0x4c] sm:$0xf]
        %v2753 = vld [vmem:[%s769 + $0x50] sm:$0x1]
        %v2754 = vld [vmem:[%s769 + $0x54] sm:$0xe]
        %v2755 = vld [vmem:[%s769 + $0x58] sm:$0xf]
        %v2756 = vld [vmem:[%s769 + $0x5c] sm:$0x1]
        %v2757 = vld [vmem:[%s769 + $0x60] sm:$0xe]
        %v2758 = vld [vmem:[%s769 + $0x64] sm:$0xf]
        %v2759 = vld [vmem:[%s769 + $0x68] sm:$0x1]
        %v2760 = vld [vmem:[%s769 + $0x6c] sm:$0xe]
        %v2761 = vld [vmem:[%s769 + $0x70] sm:$0xf]
        %v2762 = vld [vmem:[%s769 + $0x74] sm:$0x1]
        %v2763 = vld [vmem:[%s769 + $0x78] sm:$0xe]
        %v2764 = vld [vmem:[%s769 + $0x7c] sm:$0xf]
        %v2765 = vld [vmem:[%s769 + $0x80] sm:$0x1]
        %v2766 = vld [vmem:[%s769 + $0x84] sm:$0xe]
        %v2767 = vld [vmem:[%s769 + $0x88] sm:$0xf]
        %v2768 = vld [vmem:[%s769 + $0x8c] sm:$0x1]
        %v2769 = vld [vmem:[%s769 + $0x90] sm:$0xe]
        %v2770 = vld [vmem:[%s769 + $0x94] sm:$0xf]
        %v2771 = vld [vmem:[%s769 + $0x98] sm:$0x1]
        %v2772 = vld [vmem:[%s769 + $0x9c] sm:$0xe]
        %v2773 = vld [vmem:[%s769 + $0xa0] sm:$0xf]
        %v2774 = vld [vmem:[%s769 + $0xa4] sm:$0x1]
        %v2775 = vld [vmem:[%s769 + $0xa8] sm:$0xe]
        %v2776 = vld [vmem:[%s769 + $0xac] sm:$0xf]
        %v2777 = vld [vmem:[%s769 + $0xb0] sm:$0x1]
        %v2778 = vld [vmem:[%s769 + $0xb4] sm:$0xe]
        %v2779 = vld [vmem:[%s769 + $0xb8] sm:$0xf]
        %v2780 = vld [vmem:[%s769 + $0xbc] sm:$0x1]
        %v2829 = vunpack.c.l.b16 %v2733
        %v2830 = vunpack.c.l.b16 %v2734
        %v2831 = vunpack.c.l.b16 %v2735
        %v2832 = vunpack.c.l.b16 %v2736
        %v2833 = vunpack.c.l.b16 %v2737
        %v2834 = vunpack.c.l.b16 %v2738
        %v2835 = vunpack.c.l.b16 %v2739
        %v2836 = vunpack.c.l.b16 %v2740
        %v2837 = vunpack.c.l.b16 %v2741
        %v2838 = vunpack.c.l.b16 %v2742
        %v2839 = vunpack.c.l.b16 %v2743
        %v2840 = vunpack.c.l.b16 %v2744
        %v2841 = vunpack.c.l.b16 %v2745
        %v2842 = vunpack.c.l.b16 %v2746
        %v2843 = vunpack.c.l.b16 %v2747
        %v2844 = vunpack.c.l.b16 %v2748
        %v2845 = vunpack.c.l.b16 %v2749
        %v2846 = vunpack.c.l.b16 %v2750
        %v2847 = vunpack.c.l.b16 %v2751
        %v2848 = vunpack.c.l.b16 %v2752
        %v2849 = vunpack.c.l.b16 %v2753
        %v2850 = vunpack.c.l.b16 %v2754
        %v2851 = vunpack.c.l.b16 %v2755
        %v2852 = vunpack.c.l.b16 %v2756
        %v2853 = vunpack.c.l.b16 %v2757
        %v2854 = vunpack.c.l.b16 %v2758
        %v2855 = vunpack.c.l.b16 %v2759
        %v2856 = vunpack.c.l.b16 %v2760
        %v2857 = vunpack.c.l.b16 %v2761
        %v2858 = vunpack.c.l.b16 %v2762
        %v2859 = vunpack.c.l.b16 %v2763
        %v2860 = vunpack.c.l.b16 %v2764
        %v2861 = vunpack.c.l.b16 %v2765
        %v2862 = vunpack.c.l.b16 %v2766
        %v2863 = vunpack.c.l.b16 %v2767
        %v2864 = vunpack.c.l.b16 %v2768
        %v2865 = vunpack.c.l.b16 %v2769
        %v2866 = vunpack.c.l.b16 %v2770
        %v2867 = vunpack.c.l.b16 %v2771
        %v2868 = vunpack.c.l.b16 %v2772
        %v2869 = vunpack.c.l.b16 %v2773
        %v2870 = vunpack.c.l.b16 %v2774
        %v2871 = vunpack.c.l.b16 %v2775
        %v2872 = vunpack.c.l.b16 %v2776
        %v2873 = vunpack.c.l.b16 %v2777
        %v2874 = vunpack.c.l.b16 %v2778
        %v2875 = vunpack.c.l.b16 %v2779
        %v2876 = vunpack.c.l.b16 %v2780
        %v2877 = vpack.c.b16 %v2830, %v2829
        %v2878 = vpack.c.b16 %v2831, %v2831
        %v2879 = vpack.c.b16 %v2833, %v2832
        %v2880 = vpack.c.b16 %v2834, %v2834
        %v2881 = vpack.c.b16 %v2836, %v2835
        %v2882 = vpack.c.b16 %v2837, %v2837
        %v2883 = vpack.c.b16 %v2839, %v2838
        %v2884 = vpack.c.b16 %v2840, %v2840
        %v2885 = vpack.c.b16 %v2842, %v2841
        %v2886 = vpack.c.b16 %v2843, %v2843
        %v2887 = vpack.c.b16 %v2845, %v2844
        %v2888 = vpack.c.b16 %v2846, %v2846
        %v2889 = vpack.c.b16 %v2848, %v2847
        %v2890 = vpack.c.b16 %v2849, %v2849
        %v2891 = vpack.c.b16 %v2851, %v2850
        %v2892 = vpack.c.b16 %v2852, %v2852
        %v2893 = vpack.c.b16 %v2854, %v2853
        %v2894 = vpack.c.b16 %v2855, %v2855
        %v2895 = vpack.c.b16 %v2857, %v2856
        %v2896 = vpack.c.b16 %v2858, %v2858
        %v2897 = vpack.c.b16 %v2860, %v2859
        %v2898 = vpack.c.b16 %v2861, %v2861
        %v2899 = vpack.c.b16 %v2863, %v2862
        %v2900 = vpack.c.b16 %v2864, %v2864
        %v2901 = vpack.c.b16 %v2866, %v2865
        %v2902 = vpack.c.b16 %v2867, %v2867
        %v2903 = vpack.c.b16 %v2869, %v2868
        %v2904 = vpack.c.b16 %v2870, %v2870
        %v2905 = vpack.c.b16 %v2872, %v2871
        %v2906 = vpack.c.b16 %v2873, %v2873
        %v2907 = vpack.c.b16 %v2875, %v2874
        %v2908 = vpack.c.b16 %v2876, %v2876
        %v2909 = vrot.slane %v2877, 1
        %v2910 = vrot.slane %v2878, 1
        %v2911 = vsel %vm2108, %v2909, %v2910
        %v2912 = vrot.slane %v2879, 1
        %v2913 = vrot.slane %v2880, 1
        %v2914 = vsel %vm2108, %v2912, %v2913
        %v2915 = vrot.slane %v2881, 1
        %v2916 = vrot.slane %v2882, 1
        %v2917 = vsel %vm2108, %v2915, %v2916
        %v2918 = vrot.slane %v2883, 1
        %v2919 = vrot.slane %v2884, 1
        %v2920 = vsel %vm2108, %v2918, %v2919
        %v2921 = vrot.slane %v2885, 1
        %v2922 = vrot.slane %v2886, 1
        %v2923 = vsel %vm2108, %v2921, %v2922
        %v2924 = vrot.slane %v2887, 1
        %v2925 = vrot.slane %v2888, 1
        %v2926 = vsel %vm2108, %v2924, %v2925
        %v2927 = vrot.slane %v2889, 1
        %v2928 = vrot.slane %v2890, 1
        %v2929 = vsel %vm2108, %v2927, %v2928
        %v2930 = vrot.slane %v2891, 1
        %v2931 = vrot.slane %v2892, 1
        %v2932 = vsel %vm2108, %v2930, %v2931
        %v2933 = vrot.slane %v2893, 1
        %v2934 = vrot.slane %v2894, 1
        %v2935 = vsel %vm2108, %v2933, %v2934
        %v2936 = vrot.slane %v2895, 1
        %v2937 = vrot.slane %v2896, 1
        %v2938 = vsel %vm2108, %v2936, %v2937
        %v2939 = vrot.slane %v2897, 1
        %v2940 = vrot.slane %v2898, 1
        %v2941 = vsel %vm2108, %v2939, %v2940
        %v2942 = vrot.slane %v2899, 1
        %v2943 = vrot.slane %v2900, 1
        %v2944 = vsel %vm2108, %v2942, %v2943
        %v2945 = vrot.slane %v2901, 1
        %v2946 = vrot.slane %v2902, 1
        %v2947 = vsel %vm2108, %v2945, %v2946
        %v2948 = vrot.slane %v2903, 1
        %v2949 = vrot.slane %v2904, 1
        %v2950 = vsel %vm2108, %v2948, %v2949
        %v2951 = vrot.slane %v2905, 1
        %v2952 = vrot.slane %v2906, 1
        %v2953 = vsel %vm2108, %v2951, %v2952
        %v2954 = vrot.slane %v2907, 1
        %v2955 = vrot.slane %v2908, 1
        %v2956 = vsel %vm2108, %v2954, %v2955
        %2973 = vst [vmem:[#allocation3 + $0x28] sm:$0xff] %v2911
        %2974 = vst [vmem:[#allocation3 + $0x70] sm:$0xff] %v2914
        %2975 = vst [vmem:[#allocation3 + $0xb8] sm:$0xff] %v2917
        %2976 = vst [vmem:[#allocation3 + $0x100] sm:$0xff] %v2920
        %2977 = vst [vmem:[#allocation3 + $0x148] sm:$0xff] %v2923
        %2978 = vst [vmem:[#allocation3 + $0x190] sm:$0xff] %v2926
        %2979 = vst [vmem:[#allocation3 + $0x1d8] sm:$0xff] %v2929
        %2980 = vst [vmem:[#allocation3 + $0x220] sm:$0xff] %v2932
        %2981 = vst [vmem:[#allocation3 + $0x268] sm:$0xff] %v2935
        %2982 = vst [vmem:[#allocation3 + $0x2b0] sm:$0xff] %v2938
        %2983 = vst [vmem:[#allocation3 + $0x2f8] sm:$0xff] %v2941
        %2984 = vst [vmem:[#allocation3 + $0x340] sm:$0xff] %v2944
        %2985 = vst [vmem:[#allocation3 + $0x388] sm:$0xff] %v2947
        %2986 = vst [vmem:[#allocation3 + $0x3d0] sm:$0xff] %v2950
        %2987 = vst [vmem:[#allocation3 + $0x418] sm:$0xff] %v2953
        %2988 = vst [vmem:[#allocation3 + $0x460] sm:$0xff] %v2956
        %s2989 = scalar_lea.vmem [#allocation2], 24
        %v2990 = vld [vmem:[%s2989] sm:$0xf]
        %v2991 = vld [vmem:[%s2989 + $0x4] sm:$0xf]
        %v2992 = vld [vmem:[%s2989 + $0xc] sm:$0xf]
        %v2993 = vld [vmem:[%s2989 + $0x10] sm:$0xf]
        %v2994 = vld [vmem:[%s2989 + $0x18] sm:$0xf]
        %v2995 = vld [vmem:[%s2989 + $0x1c] sm:$0xf]
        %v2996 = vld [vmem:[%s2989 + $0x24] sm:$0xf]
        %v2997 = vld [vmem:[%s2989 + $0x28] sm:$0xf]
        %v2998 = vld [vmem:[%s2989 + $0x30] sm:$0xf]
        %v2999 = vld [vmem:[%s2989 + $0x34] sm:$0xf]
        %v3000 = vld [vmem:[%s2989 + $0x3c] sm:$0xf]
        %v3001 = vld [vmem:[%s2989 + $0x40] sm:$0xf]
        %v3002 = vld [vmem:[%s2989 + $0x48] sm:$0xf]
        %v3003 = vld [vmem:[%s2989 + $0x4c] sm:$0xf]
        %v3004 = vld [vmem:[%s2989 + $0x54] sm:$0xf]
        %v3005 = vld [vmem:[%s2989 + $0x58] sm:$0xf]
        %v3006 = vld [vmem:[%s2989 + $0x60] sm:$0xf]
        %v3007 = vld [vmem:[%s2989 + $0x64] sm:$0xf]
        %v3008 = vld [vmem:[%s2989 + $0x6c] sm:$0xf]
        %v3009 = vld [vmem:[%s2989 + $0x70] sm:$0xf]
        %v3010 = vld [vmem:[%s2989 + $0x78] sm:$0xf]
        %v3011 = vld [vmem:[%s2989 + $0x7c] sm:$0xf]
        %v3012 = vld [vmem:[%s2989 + $0x84] sm:$0xf]
        %v3013 = vld [vmem:[%s2989 + $0x88] sm:$0xf]
        %v3014 = vld [vmem:[%s2989 + $0x90] sm:$0xf]
        %v3015 = vld [vmem:[%s2989 + $0x94] sm:$0xf]
        %v3016 = vld [vmem:[%s2989 + $0x9c] sm:$0xf]
        %v3017 = vld [vmem:[%s2989 + $0xa0] sm:$0xf]
        %v3018 = vld [vmem:[%s2989 + $0xa8] sm:$0xf]
        %v3019 = vld [vmem:[%s2989 + $0xac] sm:$0xf]
        %v3020 = vld [vmem:[%s2989 + $0xb4] sm:$0xf]
        %v3021 = vld [vmem:[%s2989 + $0xb8] sm:$0xf]
        %v3054 = vunpack.c.l.b16 %v2990
        %v3055 = vunpack.c.l.b16 %v2991
        %v3056 = vunpack.c.l.b16 %v2992
        %v3057 = vunpack.c.l.b16 %v2993
        %v3058 = vunpack.c.l.b16 %v2994
        %v3059 = vunpack.c.l.b16 %v2995
        %v3060 = vunpack.c.l.b16 %v2996
        %v3061 = vunpack.c.l.b16 %v2997
        %v3062 = vunpack.c.l.b16 %v2998
        %v3063 = vunpack.c.l.b16 %v2999
        %v3064 = vunpack.c.l.b16 %v3000
        %v3065 = vunpack.c.l.b16 %v3001
        %v3066 = vunpack.c.l.b16 %v3002
        %v3067 = vunpack.c.l.b16 %v3003
        %v3068 = vunpack.c.l.b16 %v3004
        %v3069 = vunpack.c.l.b16 %v3005
        %v3070 = vunpack.c.l.b16 %v3006
        %v3071 = vunpack.c.l.b16 %v3007
        %v3072 = vunpack.c.l.b16 %v3008
        %v3073 = vunpack.c.l.b16 %v3009
        %v3074 = vunpack.c.l.b16 %v3010
        %v3075 = vunpack.c.l.b16 %v3011
        %v3076 = vunpack.c.l.b16 %v3012
        %v3077 = vunpack.c.l.b16 %v3013
        %v3078 = vunpack.c.l.b16 %v3014
        %v3079 = vunpack.c.l.b16 %v3015
        %v3080 = vunpack.c.l.b16 %v3016
        %v3081 = vunpack.c.l.b16 %v3017
        %v3082 = vunpack.c.l.b16 %v3018
        %v3083 = vunpack.c.l.b16 %v3019
        %v3084 = vunpack.c.l.b16 %v3020
        %v3085 = vunpack.c.l.b16 %v3021
        %v3086 = vpack.c.b16 %v3055, %v3054
        %v3087 = vpack.c.b16 %v3057, %v3056
        %v3088 = vpack.c.b16 %v3059, %v3058
        %v3089 = vpack.c.b16 %v3061, %v3060
        %v3090 = vpack.c.b16 %v3063, %v3062
        %v3091 = vpack.c.b16 %v3065, %v3064
        %v3092 = vpack.c.b16 %v3067, %v3066
        %v3093 = vpack.c.b16 %v3069, %v3068
        %v3094 = vpack.c.b16 %v3071, %v3070
        %v3095 = vpack.c.b16 %v3073, %v3072
        %v3096 = vpack.c.b16 %v3075, %v3074
        %v3097 = vpack.c.b16 %v3077, %v3076
        %v3098 = vpack.c.b16 %v3079, %v3078
        %v3099 = vpack.c.b16 %v3081, %v3080
        %v3100 = vpack.c.b16 %v3083, %v3082
        %v3101 = vpack.c.b16 %v3085, %v3084
        %3118 = vst [vmem:[#allocation3 + $0x30] sm:$0xff] %v3086
        %3119 = vst [vmem:[#allocation3 + $0x78] sm:$0xff] %v3087
        %3120 = vst [vmem:[#allocation3 + $0xc0] sm:$0xff] %v3088
        %3121 = vst [vmem:[#allocation3 + $0x108] sm:$0xff] %v3089
        %3122 = vst [vmem:[#allocation3 + $0x150] sm:$0xff] %v3090
        %3123 = vst [vmem:[#allocation3 + $0x198] sm:$0xff] %v3091
        %3124 = vst [vmem:[#allocation3 + $0x1e0] sm:$0xff] %v3092
        %3125 = vst [vmem:[#allocation3 + $0x228] sm:$0xff] %v3093
        %3126 = vst [vmem:[#allocation3 + $0x270] sm:$0xff] %v3094
        %3127 = vst [vmem:[#allocation3 + $0x2b8] sm:$0xff] %v3095
        %3128 = vst [vmem:[#allocation3 + $0x300] sm:$0xff] %v3096
        %3129 = vst [vmem:[#allocation3 + $0x348] sm:$0xff] %v3097
        %3130 = vst [vmem:[#allocation3 + $0x390] sm:$0xff] %v3098
        %3131 = vst [vmem:[#allocation3 + $0x3d8] sm:$0xff] %v3099
        %3132 = vst [vmem:[#allocation3 + $0x420] sm:$0xff] %v3100
        %3133 = vst [vmem:[#allocation3 + $0x468] sm:$0xff] %v3101
        %v3134 = vld [vmem:[%s2989] sm:$0xf]
        %v3135 = vld [vmem:[%s2989 + $0x4] sm:$0xf]
        %v3136 = vld [vmem:[%s2989 + $0x8] sm:$0x1]
        %v3137 = vld [vmem:[%s2989 + $0xc] sm:$0xf]
        %v3138 = vld [vmem:[%s2989 + $0x10] sm:$0xf]
        %v3139 = vld [vmem:[%s2989 + $0x14] sm:$0x1]
        %v3140 = vld [vmem:[%s2989 + $0x18] sm:$0xf]
        %v3141 = vld [vmem:[%s2989 + $0x1c] sm:$0xf]
        %v3142 = vld [vmem:[%s2989 + $0x20] sm:$0x1]
        %v3143 = vld [vmem:[%s2989 + $0x24] sm:$0xf]
        %v3144 = vld [vmem:[%s2989 + $0x28] sm:$0xf]
        %v3145 = vld [vmem:[%s2989 + $0x2c] sm:$0x1]
        %v3146 = vld [vmem:[%s2989 + $0x30] sm:$0xf]
        %v3147 = vld [vmem:[%s2989 + $0x34] sm:$0xf]
        %v3148 = vld [vmem:[%s2989 + $0x38] sm:$0x1]
        %v3149 = vld [vmem:[%s2989 + $0x3c] sm:$0xf]
        %v3150 = vld [vmem:[%s2989 + $0x40] sm:$0xf]
        %v3151 = vld [vmem:[%s2989 + $0x44] sm:$0x1]
        %v3152 = vld [vmem:[%s2989 + $0x48] sm:$0xf]
        %v3153 = vld [vmem:[%s2989 + $0x4c] sm:$0xf]
        %v3154 = vld [vmem:[%s2989 + $0x50] sm:$0x1]
        %v3155 = vld [vmem:[%s2989 + $0x54] sm:$0xf]
        %v3156 = vld [vmem:[%s2989 + $0x58] sm:$0xf]
        %v3157 = vld [vmem:[%s2989 + $0x5c] sm:$0x1]
        %v3158 = vld [vmem:[%s2989 + $0x60] sm:$0xf]
        %v3159 = vld [vmem:[%s2989 + $0x64] sm:$0xf]
        %v3160 = vld [vmem:[%s2989 + $0x68] sm:$0x1]
        %v3161 = vld [vmem:[%s2989 + $0x6c] sm:$0xf]
        %v3162 = vld [vmem:[%s2989 + $0x70] sm:$0xf]
        %v3163 = vld [vmem:[%s2989 + $0x74] sm:$0x1]
        %v3164 = vld [vmem:[%s2989 + $0x78] sm:$0xf]
        %v3165 = vld [vmem:[%s2989 + $0x7c] sm:$0xf]
        %v3166 = vld [vmem:[%s2989 + $0x80] sm:$0x1]
        %v3167 = vld [vmem:[%s2989 + $0x84] sm:$0xf]
        %v3168 = vld [vmem:[%s2989 + $0x88] sm:$0xf]
        %v3169 = vld [vmem:[%s2989 + $0x8c] sm:$0x1]
        %v3170 = vld [vmem:[%s2989 + $0x90] sm:$0xf]
        %v3171 = vld [vmem:[%s2989 + $0x94] sm:$0xf]
        %v3172 = vld [vmem:[%s2989 + $0x98] sm:$0x1]
        %v3173 = vld [vmem:[%s2989 + $0x9c] sm:$0xf]
        %v3174 = vld [vmem:[%s2989 + $0xa0] sm:$0xf]
        %v3175 = vld [vmem:[%s2989 + $0xa4] sm:$0x1]
        %v3176 = vld [vmem:[%s2989 + $0xa8] sm:$0xf]
        %v3177 = vld [vmem:[%s2989 + $0xac] sm:$0xf]
        %v3178 = vld [vmem:[%s2989 + $0xb0] sm:$0x1]
        %v3179 = vld [vmem:[%s2989 + $0xb4] sm:$0xf]
        %v3180 = vld [vmem:[%s2989 + $0xb8] sm:$0xf]
        %v3181 = vld [vmem:[%s2989 + $0xbc] sm:$0x1]
        %v3230 = vunpack.c.l.b16 %v3134
        %v3231 = vunpack.c.l.b16 %v3135
        %v3232 = vunpack.c.l.b16 %v3136
        %v3233 = vunpack.c.l.b16 %v3137
        %v3234 = vunpack.c.l.b16 %v3138
        %v3235 = vunpack.c.l.b16 %v3139
        %v3236 = vunpack.c.l.b16 %v3140
        %v3237 = vunpack.c.l.b16 %v3141
        %v3238 = vunpack.c.l.b16 %v3142
        %v3239 = vunpack.c.l.b16 %v3143
        %v3240 = vunpack.c.l.b16 %v3144
        %v3241 = vunpack.c.l.b16 %v3145
        %v3242 = vunpack.c.l.b16 %v3146
        %v3243 = vunpack.c.l.b16 %v3147
        %v3244 = vunpack.c.l.b16 %v3148
        %v3245 = vunpack.c.l.b16 %v3149
        %v3246 = vunpack.c.l.b16 %v3150
        %v3247 = vunpack.c.l.b16 %v3151
        %v3248 = vunpack.c.l.b16 %v3152
        %v3249 = vunpack.c.l.b16 %v3153
        %v3250 = vunpack.c.l.b16 %v3154
        %v3251 = vunpack.c.l.b16 %v3155
        %v3252 = vunpack.c.l.b16 %v3156
        %v3253 = vunpack.c.l.b16 %v3157
        %v3254 = vunpack.c.l.b16 %v3158
        %v3255 = vunpack.c.l.b16 %v3159
        %v3256 = vunpack.c.l.b16 %v3160
        %v3257 = vunpack.c.l.b16 %v3161
        %v3258 = vunpack.c.l.b16 %v3162
        %v3259 = vunpack.c.l.b16 %v3163
        %v3260 = vunpack.c.l.b16 %v3164
        %v3261 = vunpack.c.l.b16 %v3165
        %v3262 = vunpack.c.l.b16 %v3166
        %v3263 = vunpack.c.l.b16 %v3167
        %v3264 = vunpack.c.l.b16 %v3168
        %v3265 = vunpack.c.l.b16 %v3169
        %v3266 = vunpack.c.l.b16 %v3170
        %v3267 = vunpack.c.l.b16 %v3171
        %v3268 = vunpack.c.l.b16 %v3172
        %v3269 = vunpack.c.l.b16 %v3173
        %v3270 = vunpack.c.l.b16 %v3174
        %v3271 = vunpack.c.l.b16 %v3175
        %v3272 = vunpack.c.l.b16 %v3176
        %v3273 = vunpack.c.l.b16 %v3177
        %v3274 = vunpack.c.l.b16 %v3178
        %v3275 = vunpack.c.l.b16 %v3179
        %v3276 = vunpack.c.l.b16 %v3180
        %v3277 = vunpack.c.l.b16 %v3181
        %v3278 = vpack.c.b16 %v3231, %v3230
        %v3279 = vpack.c.b16 %v3232, %v3232
        %v3280 = vpack.c.b16 %v3234, %v3233
        %v3281 = vpack.c.b16 %v3235, %v3235
        %v3282 = vpack.c.b16 %v3237, %v3236
        %v3283 = vpack.c.b16 %v3238, %v3238
        %v3284 = vpack.c.b16 %v3240, %v3239
        %v3285 = vpack.c.b16 %v3241, %v3241
        %v3286 = vpack.c.b16 %v3243, %v3242
        %v3287 = vpack.c.b16 %v3244, %v3244
        %v3288 = vpack.c.b16 %v3246, %v3245
        %v3289 = vpack.c.b16 %v3247, %v3247
        %v3290 = vpack.c.b16 %v3249, %v3248
        %v3291 = vpack.c.b16 %v3250, %v3250
        %v3292 = vpack.c.b16 %v3252, %v3251
        %v3293 = vpack.c.b16 %v3253, %v3253
        %v3294 = vpack.c.b16 %v3255, %v3254
        %v3295 = vpack.c.b16 %v3256, %v3256
        %v3296 = vpack.c.b16 %v3258, %v3257
        %v3297 = vpack.c.b16 %v3259, %v3259
        %v3298 = vpack.c.b16 %v3261, %v3260
        %v3299 = vpack.c.b16 %v3262, %v3262
        %v3300 = vpack.c.b16 %v3264, %v3263
        %v3301 = vpack.c.b16 %v3265, %v3265
        %v3302 = vpack.c.b16 %v3267, %v3266
        %v3303 = vpack.c.b16 %v3268, %v3268
        %v3304 = vpack.c.b16 %v3270, %v3269
        %v3305 = vpack.c.b16 %v3271, %v3271
        %v3306 = vpack.c.b16 %v3273, %v3272
        %v3307 = vpack.c.b16 %v3274, %v3274
        %v3308 = vpack.c.b16 %v3276, %v3275
        %v3309 = vpack.c.b16 %v3277, %v3277
        %v3311 = vshrl.u32 %v3278, 16
        %v3313 = vshll.u32 %v3278, 16
        %v3315 = vrot.slane %v3313, 1
        %v3316 = vor.u32 %v3311, %v3315
        %v3318 = vshll.u32 %v3279, 16
        %v3320 = vrot.slane %v3318, 1
        %v3321 = vsel %vm1707, %v3316, %v3320
        %v3323 = vshrl.u32 %v3280, 16
        %v3325 = vshll.u32 %v3280, 16
        %v3327 = vrot.slane %v3325, 1
        %v3328 = vor.u32 %v3323, %v3327
        %v3330 = vshll.u32 %v3281, 16
        %v3332 = vrot.slane %v3330, 1
        %v3333 = vsel %vm1707, %v3328, %v3332
        %v3335 = vshrl.u32 %v3282, 16
        %v3337 = vshll.u32 %v3282, 16
        %v3339 = vrot.slane %v3337, 1
        %v3340 = vor.u32 %v3335, %v3339
        %v3342 = vshll.u32 %v3283, 16
        %v3344 = vrot.slane %v3342, 1
        %v3345 = vsel %vm1707, %v3340, %v3344
        %v3347 = vshrl.u32 %v3284, 16
        %v3349 = vshll.u32 %v3284, 16
        %v3351 = vrot.slane %v3349, 1
        %v3352 = vor.u32 %v3347, %v3351
        %v3354 = vshll.u32 %v3285, 16
        %v3356 = vrot.slane %v3354, 1
        %v3357 = vsel %vm1707, %v3352, %v3356
        %v3359 = vshrl.u32 %v3286, 16
        %v3361 = vshll.u32 %v3286, 16
        %v3363 = vrot.slane %v3361, 1
        %v3364 = vor.u32 %v3359, %v3363
        %v3366 = vshll.u32 %v3287, 16
        %v3368 = vrot.slane %v3366, 1
        %v3369 = vsel %vm1707, %v3364, %v3368
        %v3371 = vshrl.u32 %v3288, 16
        %v3373 = vshll.u32 %v3288, 16
        %v3375 = vrot.slane %v3373, 1
        %v3376 = vor.u32 %v3371, %v3375
        %v3378 = vshll.u32 %v3289, 16
        %v3380 = vrot.slane %v3378, 1
        %v3381 = vsel %vm1707, %v3376, %v3380
        %v3383 = vshrl.u32 %v3290, 16
        %v3385 = vshll.u32 %v3290, 16
        %v3387 = vrot.slane %v3385, 1
        %v3388 = vor.u32 %v3383, %v3387
        %v3390 = vshll.u32 %v3291, 16
        %v3392 = vrot.slane %v3390, 1
        %v3393 = vsel %vm1707, %v3388, %v3392
        %v3395 = vshrl.u32 %v3292, 16
        %v3397 = vshll.u32 %v3292, 16
        %v3399 = vrot.slane %v3397, 1
        %v3400 = vor.u32 %v3395, %v3399
        %v3402 = vshll.u32 %v3293, 16
        %v3404 = vrot.slane %v3402, 1
        %v3405 = vsel %vm1707, %v3400, %v3404
        %v3407 = vshrl.u32 %v3294, 16
        %v3409 = vshll.u32 %v3294, 16
        %v3411 = vrot.slane %v3409, 1
        %v3412 = vor.u32 %v3407, %v3411
        %v3414 = vshll.u32 %v3295, 16
        %v3416 = vrot.slane %v3414, 1
        %v3417 = vsel %vm1707, %v3412, %v3416
        %v3419 = vshrl.u32 %v3296, 16
        %v3421 = vshll.u32 %v3296, 16
        %v3423 = vrot.slane %v3421, 1
        %v3424 = vor.u32 %v3419, %v3423
        %v3426 = vshll.u32 %v3297, 16
        %v3428 = vrot.slane %v3426, 1
        %v3429 = vsel %vm1707, %v3424, %v3428
        %v3431 = vshrl.u32 %v3298, 16
        %v3433 = vshll.u32 %v3298, 16
        %v3435 = vrot.slane %v3433, 1
        %v3436 = vor.u32 %v3431, %v3435
        %v3438 = vshll.u32 %v3299, 16
        %v3440 = vrot.slane %v3438, 1
        %v3441 = vsel %vm1707, %v3436, %v3440
        %v3443 = vshrl.u32 %v3300, 16
        %v3445 = vshll.u32 %v3300, 16
        %v3447 = vrot.slane %v3445, 1
        %v3448 = vor.u32 %v3443, %v3447
        %v3450 = vshll.u32 %v3301, 16
        %v3452 = vrot.slane %v3450, 1
        %v3453 = vsel %vm1707, %v3448, %v3452
        %v3455 = vshrl.u32 %v3302, 16
        %v3457 = vshll.u32 %v3302, 16
        %v3459 = vrot.slane %v3457, 1
        %v3460 = vor.u32 %v3455, %v3459
        %v3462 = vshll.u32 %v3303, 16
        %v3464 = vrot.slane %v3462, 1
        %v3465 = vsel %vm1707, %v3460, %v3464
        %v3467 = vshrl.u32 %v3304, 16
        %v3469 = vshll.u32 %v3304, 16
        %v3471 = vrot.slane %v3469, 1
        %v3472 = vor.u32 %v3467, %v3471
        %v3474 = vshll.u32 %v3305, 16
        %v3476 = vrot.slane %v3474, 1
        %v3477 = vsel %vm1707, %v3472, %v3476
        %v3479 = vshrl.u32 %v3306, 16
        %v3481 = vshll.u32 %v3306, 16
        %v3483 = vrot.slane %v3481, 1
        %v3484 = vor.u32 %v3479, %v3483
        %v3486 = vshll.u32 %v3307, 16
        %v3488 = vrot.slane %v3486, 1
        %v3489 = vsel %vm1707, %v3484, %v3488
        %v3491 = vshrl.u32 %v3308, 16
        %v3493 = vshll.u32 %v3308, 16
        %v3495 = vrot.slane %v3493, 1
        %v3496 = vor.u32 %v3491, %v3495
        %v3498 = vshll.u32 %v3309, 16
        %v3500 = vrot.slane %v3498, 1
        %v3501 = vsel %vm1707, %v3496, %v3500
        %3518 = vst [vmem:[#allocation3 + $0x38] sm:$0xff] %v3321
        %3519 = vst [vmem:[#allocation3 + $0x80] sm:$0xff] %v3333
        %3520 = vst [vmem:[#allocation3 + $0xc8] sm:$0xff] %v3345
        %3521 = vst [vmem:[#allocation3 + $0x110] sm:$0xff] %v3357
        %3522 = vst [vmem:[#allocation3 + $0x158] sm:$0xff] %v3369
        %3523 = vst [vmem:[#allocation3 + $0x1a0] sm:$0xff] %v3381
        %3524 = vst [vmem:[#allocation3 + $0x1e8] sm:$0xff] %v3393
        %3525 = vst [vmem:[#allocation3 + $0x230] sm:$0xff] %v3405
        %3526 = vst [vmem:[#allocation3 + $0x278] sm:$0xff] %v3417
        %3527 = vst [vmem:[#allocation3 + $0x2c0] sm:$0xff] %v3429
        %3528 = vst [vmem:[#allocation3 + $0x308] sm:$0xff] %v3441
        %3529 = vst [vmem:[#allocation3 + $0x350] sm:$0xff] %v3453
        %3530 = vst [vmem:[#allocation3 + $0x398] sm:$0xff] %v3465
        %3531 = vst [vmem:[#allocation3 + $0x3e0] sm:$0xff] %v3477
        %3532 = vst [vmem:[#allocation3 + $0x428] sm:$0xff] %v3489
        %3533 = vst [vmem:[#allocation3 + $0x470] sm:$0xff] %v3501
        %v3534 = vld [vmem:[%s2989] sm:$0xe]
        %v3535 = vld [vmem:[%s2989 + $0x4] sm:$0xf]
        %v3536 = vld [vmem:[%s2989 + $0x8] sm:$0x1]
        %v3537 = vld [vmem:[%s2989 + $0xc] sm:$0xe]
        %v3538 = vld [vmem:[%s2989 + $0x10] sm:$0xf]
        %v3539 = vld [vmem:[%s2989 + $0x14] sm:$0x1]
        %v3540 = vld [vmem:[%s2989 + $0x18] sm:$0xe]
        %v3541 = vld [vmem:[%s2989 + $0x1c] sm:$0xf]
        %v3542 = vld [vmem:[%s2989 + $0x20] sm:$0x1]
        %v3543 = vld [vmem:[%s2989 + $0x24] sm:$0xe]
        %v3544 = vld [vmem:[%s2989 + $0x28] sm:$0xf]
        %v3545 = vld [vmem:[%s2989 + $0x2c] sm:$0x1]
        %v3546 = vld [vmem:[%s2989 + $0x30] sm:$0xe]
        %v3547 = vld [vmem:[%s2989 + $0x34] sm:$0xf]
        %v3548 = vld [vmem:[%s2989 + $0x38] sm:$0x1]
        %v3549 = vld [vmem:[%s2989 + $0x3c] sm:$0xe]
        %v3550 = vld [vmem:[%s2989 + $0x40] sm:$0xf]
        %v3551 = vld [vmem:[%s2989 + $0x44] sm:$0x1]
        %v3552 = vld [vmem:[%s2989 + $0x48] sm:$0xe]
        %v3553 = vld [vmem:[%s2989 + $0x4c] sm:$0xf]
        %v3554 = vld [vmem:[%s2989 + $0x50] sm:$0x1]
        %v3555 = vld [vmem:[%s2989 + $0x54] sm:$0xe]
        %v3556 = vld [vmem:[%s2989 + $0x58] sm:$0xf]
        %v3557 = vld [vmem:[%s2989 + $0x5c] sm:$0x1]
        %v3558 = vld [vmem:[%s2989 + $0x60] sm:$0xe]
        %v3559 = vld [vmem:[%s2989 + $0x64] sm:$0xf]
        %v3560 = vld [vmem:[%s2989 + $0x68] sm:$0x1]
        %v3561 = vld [vmem:[%s2989 + $0x6c] sm:$0xe]
        %v3562 = vld [vmem:[%s2989 + $0x70] sm:$0xf]
        %v3563 = vld [vmem:[%s2989 + $0x74] sm:$0x1]
        %v3564 = vld [vmem:[%s2989 + $0x78] sm:$0xe]
        %v3565 = vld [vmem:[%s2989 + $0x7c] sm:$0xf]
        %v3566 = vld [vmem:[%s2989 + $0x80] sm:$0x1]
        %v3567 = vld [vmem:[%s2989 + $0x84] sm:$0xe]
        %v3568 = vld [vmem:[%s2989 + $0x88] sm:$0xf]
        %v3569 = vld [vmem:[%s2989 + $0x8c] sm:$0x1]
        %v3570 = vld [vmem:[%s2989 + $0x90] sm:$0xe]
        %v3571 = vld [vmem:[%s2989 + $0x94] sm:$0xf]
        %v3572 = vld [vmem:[%s2989 + $0x98] sm:$0x1]
        %v3573 = vld [vmem:[%s2989 + $0x9c] sm:$0xe]
        %v3574 = vld [vmem:[%s2989 + $0xa0] sm:$0xf]
        %v3575 = vld [vmem:[%s2989 + $0xa4] sm:$0x1]
        %v3576 = vld [vmem:[%s2989 + $0xa8] sm:$0xe]
        %v3577 = vld [vmem:[%s2989 + $0xac] sm:$0xf]
        %v3578 = vld [vmem:[%s2989 + $0xb0] sm:$0x1]
        %v3579 = vld [vmem:[%s2989 + $0xb4] sm:$0xe]
        %v3580 = vld [vmem:[%s2989 + $0xb8] sm:$0xf]
        %v3581 = vld [vmem:[%s2989 + $0xbc] sm:$0x1]
        %v3630 = vunpack.c.l.b16 %v3534
        %v3631 = vunpack.c.l.b16 %v3535
        %v3632 = vunpack.c.l.b16 %v3536
        %v3633 = vunpack.c.l.b16 %v3537
        %v3634 = vunpack.c.l.b16 %v3538
        %v3635 = vunpack.c.l.b16 %v3539
        %v3636 = vunpack.c.l.b16 %v3540
        %v3637 = vunpack.c.l.b16 %v3541
        %v3638 = vunpack.c.l.b16 %v3542
        %v3639 = vunpack.c.l.b16 %v3543
        %v3640 = vunpack.c.l.b16 %v3544
        %v3641 = vunpack.c.l.b16 %v3545
        %v3642 = vunpack.c.l.b16 %v3546
        %v3643 = vunpack.c.l.b16 %v3547
        %v3644 = vunpack.c.l.b16 %v3548
        %v3645 = vunpack.c.l.b16 %v3549
        %v3646 = vunpack.c.l.b16 %v3550
        %v3647 = vunpack.c.l.b16 %v3551
        %v3648 = vunpack.c.l.b16 %v3552
        %v3649 = vunpack.c.l.b16 %v3553
        %v3650 = vunpack.c.l.b16 %v3554
        %v3651 = vunpack.c.l.b16 %v3555
        %v3652 = vunpack.c.l.b16 %v3556
        %v3653 = vunpack.c.l.b16 %v3557
        %v3654 = vunpack.c.l.b16 %v3558
        %v3655 = vunpack.c.l.b16 %v3559
        %v3656 = vunpack.c.l.b16 %v3560
        %v3657 = vunpack.c.l.b16 %v3561
        %v3658 = vunpack.c.l.b16 %v3562
        %v3659 = vunpack.c.l.b16 %v3563
        %v3660 = vunpack.c.l.b16 %v3564
        %v3661 = vunpack.c.l.b16 %v3565
        %v3662 = vunpack.c.l.b16 %v3566
        %v3663 = vunpack.c.l.b16 %v3567
        %v3664 = vunpack.c.l.b16 %v3568
        %v3665 = vunpack.c.l.b16 %v3569
        %v3666 = vunpack.c.l.b16 %v3570
        %v3667 = vunpack.c.l.b16 %v3571
        %v3668 = vunpack.c.l.b16 %v3572
        %v3669 = vunpack.c.l.b16 %v3573
        %v3670 = vunpack.c.l.b16 %v3574
        %v3671 = vunpack.c.l.b16 %v3575
        %v3672 = vunpack.c.l.b16 %v3576
        %v3673 = vunpack.c.l.b16 %v3577
        %v3674 = vunpack.c.l.b16 %v3578
        %v3675 = vunpack.c.l.b16 %v3579
        %v3676 = vunpack.c.l.b16 %v3580
        %v3677 = vunpack.c.l.b16 %v3581
        %v3678 = vpack.c.b16 %v3631, %v3630
        %v3679 = vpack.c.b16 %v3632, %v3632
        %v3680 = vpack.c.b16 %v3634, %v3633
        %v3681 = vpack.c.b16 %v3635, %v3635
        %v3682 = vpack.c.b16 %v3637, %v3636
        %v3683 = vpack.c.b16 %v3638, %v3638
        %v3684 = vpack.c.b16 %v3640, %v3639
        %v3685 = vpack.c.b16 %v3641, %v3641
        %v3686 = vpack.c.b16 %v3643, %v3642
        %v3687 = vpack.c.b16 %v3644, %v3644
        %v3688 = vpack.c.b16 %v3646, %v3645
        %v3689 = vpack.c.b16 %v3647, %v3647
        %v3690 = vpack.c.b16 %v3649, %v3648
        %v3691 = vpack.c.b16 %v3650, %v3650
        %v3692 = vpack.c.b16 %v3652, %v3651
        %v3693 = vpack.c.b16 %v3653, %v3653
        %v3694 = vpack.c.b16 %v3655, %v3654
        %v3695 = vpack.c.b16 %v3656, %v3656
        %v3696 = vpack.c.b16 %v3658, %v3657
        %v3697 = vpack.c.b16 %v3659, %v3659
        %v3698 = vpack.c.b16 %v3661, %v3660
        %v3699 = vpack.c.b16 %v3662, %v3662
        %v3700 = vpack.c.b16 %v3664, %v3663
        %v3701 = vpack.c.b16 %v3665, %v3665
        %v3702 = vpack.c.b16 %v3667, %v3666
        %v3703 = vpack.c.b16 %v3668, %v3668
        %v3704 = vpack.c.b16 %v3670, %v3669
        %v3705 = vpack.c.b16 %v3671, %v3671
        %v3706 = vpack.c.b16 %v3673, %v3672
        %v3707 = vpack.c.b16 %v3674, %v3674
        %v3708 = vpack.c.b16 %v3676, %v3675
        %v3709 = vpack.c.b16 %v3677, %v3677
        %v3710 = vrot.slane %v3678, 1
        %v3711 = vrot.slane %v3679, 1
        %v3712 = vsel %vm2108, %v3710, %v3711
        %v3713 = vrot.slane %v3680, 1
        %v3714 = vrot.slane %v3681, 1
        %v3715 = vsel %vm2108, %v3713, %v3714
        %v3716 = vrot.slane %v3682, 1
        %v3717 = vrot.slane %v3683, 1
        %v3718 = vsel %vm2108, %v3716, %v3717
        %v3719 = vrot.slane %v3684, 1
        %v3720 = vrot.slane %v3685, 1
        %v3721 = vsel %vm2108, %v3719, %v3720
        %v3722 = vrot.slane %v3686, 1
        %v3723 = vrot.slane %v3687, 1
        %v3724 = vsel %vm2108, %v3722, %v3723
        %v3725 = vrot.slane %v3688, 1
        %v3726 = vrot.slane %v3689, 1
        %v3727 = vsel %vm2108, %v3725, %v3726
        %v3728 = vrot.slane %v3690, 1
        %v3729 = vrot.slane %v3691, 1
        %v3730 = vsel %vm2108, %v3728, %v3729
        %v3731 = vrot.slane %v3692, 1
        %v3732 = vrot.slane %v3693, 1
        %v3733 = vsel %vm2108, %v3731, %v3732
        %v3734 = vrot.slane %v3694, 1
        %v3735 = vrot.slane %v3695, 1
        %v3736 = vsel %vm2108, %v3734, %v3735
        %v3737 = vrot.slane %v3696, 1
        %v3738 = vrot.slane %v3697, 1
        %v3739 = vsel %vm2108, %v3737, %v3738
        %v3740 = vrot.slane %v3698, 1
        %v3741 = vrot.slane %v3699, 1
        %v3742 = vsel %vm2108, %v3740, %v3741
        %v3743 = vrot.slane %v3700, 1
        %v3744 = vrot.slane %v3701, 1
        %v3745 = vsel %vm2108, %v3743, %v3744
        %v3746 = vrot.slane %v3702, 1
        %v3747 = vrot.slane %v3703, 1
        %v3748 = vsel %vm2108, %v3746, %v3747
        %v3749 = vrot.slane %v3704, 1
        %v3750 = vrot.slane %v3705, 1
        %v3751 = vsel %vm2108, %v3749, %v3750
        %v3752 = vrot.slane %v3706, 1
        %v3753 = vrot.slane %v3707, 1
        %v3754 = vsel %vm2108, %v3752, %v3753
        %v3755 = vrot.slane %v3708, 1
        %v3756 = vrot.slane %v3709, 1
        %v3757 = vsel %vm2108, %v3755, %v3756
        %3774 = vst [vmem:[#allocation3 + $0x40] sm:$0xff] %v3712
        %3775 = vst [vmem:[#allocation3 + $0x88] sm:$0xff] %v3715
        %3776 = vst [vmem:[#allocation3 + $0xd0] sm:$0xff] %v3718
        %3777 = vst [vmem:[#allocation3 + $0x118] sm:$0xff] %v3721
        %3778 = vst [vmem:[#allocation3 + $0x160] sm:$0xff] %v3724
        %3779 = vst [vmem:[#allocation3 + $0x1a8] sm:$0xff] %v3727
        %3780 = vst [vmem:[#allocation3 + $0x1f0] sm:$0xff] %v3730
        %3781 = vst [vmem:[#allocation3 + $0x238] sm:$0xff] %v3733
        %3782 = vst [vmem:[#allocation3 + $0x280] sm:$0xff] %v3736
        %3783 = vst [vmem:[#allocation3 + $0x2c8] sm:$0xff] %v3739
        %3784 = vst [vmem:[#allocation3 + $0x310] sm:$0xff] %v3742
        %3785 = vst [vmem:[#allocation3 + $0x358] sm:$0xff] %v3745
        %3786 = vst [vmem:[#allocation3 + $0x3a0] sm:$0xff] %v3748
        %3787 = vst [vmem:[#allocation3 + $0x3e8] sm:$0xff] %v3751
        %3788 = vst [vmem:[#allocation3 + $0x430] sm:$0xff] %v3754
        %3789 = vst [vmem:[#allocation3 + $0x478] sm:$0xff] %v3757
        %v3790 = vld [vmem:[#allocation3] sm:$0xff]
        %v3791 = vld [vmem:[#allocation3 + $0x8] sm:$0xff]
        %v3792 = vld [vmem:[#allocation3 + $0x10] sm:$0xff]
        %v3793 = vld [vmem:[#allocation3 + $0x18] sm:$0xff]
        %v3794 = vld [vmem:[#allocation3 + $0x20] sm:$0xff]
        %v3795 = vld [vmem:[#allocation3 + $0x28] sm:$0xff]
        %v3796 = vld [vmem:[#allocation3 + $0x30] sm:$0xff]
        %v3797 = vld [vmem:[#allocation3 + $0x38] sm:$0xff]
        %v3798 = vld [vmem:[#allocation3 + $0x40] sm:$0xff]
        %v3799 = vld [vmem:[#allocation3 + $0x48] sm:$0xff]
        %v3800 = vld [vmem:[#allocation3 + $0x50] sm:$0xff]
        %v3801 = vld [vmem:[#allocation3 + $0x58] sm:$0xff]
        %v3802 = vld [vmem:[#allocation3 + $0x60] sm:$0xff]
        %v3803 = vld [vmem:[#allocation3 + $0x68] sm:$0xff]
        %v3804 = vld [vmem:[#allocation3 + $0x70] sm:$0xff]
        %v3805 = vld [vmem:[#allocation3 + $0x78] sm:$0xff]
        %v3806 = vld [vmem:[#allocation3 + $0x80] sm:$0xff]
        %v3807 = vld [vmem:[#allocation3 + $0x88] sm:$0xff]
        %v3808 = vld [vmem:[#allocation3 + $0x90] sm:$0xff]
        %v3809 = vld [vmem:[#allocation3 + $0x98] sm:$0xff]
        %v3810 = vld [vmem:[#allocation3 + $0xa0] sm:$0xff]
        %v3811 = vld [vmem:[#allocation3 + $0xa8] sm:$0xff]
        %v3812 = vld [vmem:[#allocation3 + $0xb0] sm:$0xff]
        %v3813 = vld [vmem:[#allocation3 + $0xb8] sm:$0xff]
        %v3814 = vld [vmem:[#allocation3 + $0xc0] sm:$0xff]
        %v3815 = vld [vmem:[#allocation3 + $0xc8] sm:$0xff]
        %v3816 = vld [vmem:[#allocation3 + $0xd0] sm:$0xff]
        %v3817 = vld [vmem:[#allocation3 + $0xd8] sm:$0xff]
        %v3818 = vld [vmem:[#allocation3 + $0xe0] sm:$0xff]
        %v3819 = vld [vmem:[#allocation3 + $0xe8] sm:$0xff]
        %v3820 = vld [vmem:[#allocation3 + $0xf0] sm:$0xff]
        %v3821 = vld [vmem:[#allocation3 + $0xf8] sm:$0xff]
        %v3822 = vld [vmem:[#allocation3 + $0x100] sm:$0xff]
        %v3823 = vld [vmem:[#allocation3 + $0x108] sm:$0xff]
        %v3824 = vld [vmem:[#allocation3 + $0x110] sm:$0xff]
        %v3825 = vld [vmem:[#allocation3 + $0x118] sm:$0xff]
        %v3826 = vld [vmem:[#allocation3 + $0x120] sm:$0xff]
        %v3827 = vld [vmem:[#allocation3 + $0x128] sm:$0xff]
        %v3828 = vld [vmem:[#allocation3 + $0x130] sm:$0xff]
        %v3829 = vld [vmem:[#allocation3 + $0x138] sm:$0xff]
        %v3830 = vld [vmem:[#allocation3 + $0x140] sm:$0xff]
        %v3831 = vld [vmem:[#allocation3 + $0x148] sm:$0xff]
        %v3832 = vld [vmem:[#allocation3 + $0x150] sm:$0xff]
        %v3833 = vld [vmem:[#allocation3 + $0x158] sm:$0xff]
        %v3834 = vld [vmem:[#allocation3 + $0x160] sm:$0xff]
        %v3835 = vld [vmem:[#allocation3 + $0x168] sm:$0xff]
        %v3836 = vld [vmem:[#allocation3 + $0x170] sm:$0xff]
        %v3837 = vld [vmem:[#allocation3 + $0x178] sm:$0xff]
        %v3838 = vld [vmem:[#allocation3 + $0x180] sm:$0xff]
        %v3839 = vld [vmem:[#allocation3 + $0x188] sm:$0xff]
        %v3840 = vld [vmem:[#allocation3 + $0x190] sm:$0xff]
        %v3841 = vld [vmem:[#allocation3 + $0x198] sm:$0xff]
        %v3842 = vld [vmem:[#allocation3 + $0x1a0] sm:$0xff]
        %v3843 = vld [vmem:[#allocation3 + $0x1a8] sm:$0xff]
        %v3844 = vld [vmem:[#allocation3 + $0x1b0] sm:$0xff]
        %v3845 = vld [vmem:[#allocation3 + $0x1b8] sm:$0xff]
        %v3846 = vld [vmem:[#allocation3 + $0x1c0] sm:$0xff]
        %v3847 = vld [vmem:[#allocation3 + $0x1c8] sm:$0xff]
        %v3848 = vld [vmem:[#allocation3 + $0x1d0] sm:$0xff]
        %v3849 = vld [vmem:[#allocation3 + $0x1d8] sm:$0xff]
        %v3850 = vld [vmem:[#allocation3 + $0x1e0] sm:$0xff]
        %v3851 = vld [vmem:[#allocation3 + $0x1e8] sm:$0xff]
        %v3852 = vld [vmem:[#allocation3 + $0x1f0] sm:$0xff]
        %v3853 = vld [vmem:[#allocation3 + $0x1f8] sm:$0xff]
        %v3854 = vld [vmem:[#allocation3 + $0x200] sm:$0xff]
        %v3855 = vld [vmem:[#allocation3 + $0x208] sm:$0xff]
        %v3856 = vld [vmem:[#allocation3 + $0x210] sm:$0xff]
        %v3857 = vld [vmem:[#allocation3 + $0x218] sm:$0xff]
        %v3858 = vld [vmem:[#allocation3 + $0x220] sm:$0xff]
        %v3859 = vld [vmem:[#allocation3 + $0x228] sm:$0xff]
        %v3860 = vld [vmem:[#allocation3 + $0x230] sm:$0xff]
        %v3861 = vld [vmem:[#allocation3 + $0x238] sm:$0xff]
        %v3862 = vld [vmem:[#allocation3 + $0x240] sm:$0xff]
        %v3863 = vld [vmem:[#allocation3 + $0x248] sm:$0xff]
        %v3864 = vld [vmem:[#allocation3 + $0x250] sm:$0xff]
        %v3865 = vld [vmem:[#allocation3 + $0x258] sm:$0xff]
        %v3866 = vld [vmem:[#allocation3 + $0x260] sm:$0xff]
        %v3867 = vld [vmem:[#allocation3 + $0x268] sm:$0xff]
        %v3868 = vld [vmem:[#allocation3 + $0x270] sm:$0xff]
        %v3869 = vld [vmem:[#allocation3 + $0x278] sm:$0xff]
        %v3870 = vld [vmem:[#allocation3 + $0x280] sm:$0xff]
        %v3871 = vld [vmem:[#allocation3 + $0x288] sm:$0xff]
        %v3872 = vld [vmem:[#allocation3 + $0x290] sm:$0xff]
        %v3873 = vld [vmem:[#allocation3 + $0x298] sm:$0xff]
        %v3874 = vld [vmem:[#allocation3 + $0x2a0] sm:$0xff]
        %v3875 = vld [vmem:[#allocation3 + $0x2a8] sm:$0xff]
        %v3876 = vld [vmem:[#allocation3 + $0x2b0] sm:$0xff]
        %v3877 = vld [vmem:[#allocation3 + $0x2b8] sm:$0xff]
        %v3878 = vld [vmem:[#allocation3 + $0x2c0] sm:$0xff]
        %v3879 = vld [vmem:[#allocation3 + $0x2c8] sm:$0xff]
        %v3880 = vld [vmem:[#allocation3 + $0x2d0] sm:$0xff]
        %v3881 = vld [vmem:[#allocation3 + $0x2d8] sm:$0xff]
        %v3882 = vld [vmem:[#allocation3 + $0x2e0] sm:$0xff]
        %v3883 = vld [vmem:[#allocation3 + $0x2e8] sm:$0xff]
        %v3884 = vld [vmem:[#allocation3 + $0x2f0] sm:$0xff]
        %v3885 = vld [vmem:[#allocation3 + $0x2f8] sm:$0xff]
        %v3886 = vld [vmem:[#allocation3 + $0x300] sm:$0xff]
        %v3887 = vld [vmem:[#allocation3 + $0x308] sm:$0xff]
        %v3888 = vld [vmem:[#allocation3 + $0x310] sm:$0xff]
        %v3889 = vld [vmem:[#allocation3 + $0x318] sm:$0xff]
        %v3890 = vld [vmem:[#allocation3 + $0x320] sm:$0xff]
        %v3891 = vld [vmem:[#allocation3 + $0x328] sm:$0xff]
        %v3892 = vld [vmem:[#allocation3 + $0x330] sm:$0xff]
        %v3893 = vld [vmem:[#allocation3 + $0x338] sm:$0xff]
        %v3894 = vld [vmem:[#allocation3 + $0x340] sm:$0xff]
        %v3895 = vld [vmem:[#allocation3 + $0x348] sm:$0xff]
        %v3896 = vld [vmem:[#allocation3 + $0x350] sm:$0xff]
        %v3897 = vld [vmem:[#allocation3 + $0x358] sm:$0xff]
        %v3898 = vld [vmem:[#allocation3 + $0x360] sm:$0xff]
        %v3899 = vld [vmem:[#allocation3 + $0x368] sm:$0xff]
        %v3900 = vld [vmem:[#allocation3 + $0x370] sm:$0xff]
        %v3901 = vld [vmem:[#allocation3 + $0x378] sm:$0xff]
        %v3902 = vld [vmem:[#allocation3 + $0x380] sm:$0xff]
        %v3903 = vld [vmem:[#allocation3 + $0x388] sm:$0xff]
        %v3904 = vld [vmem:[#allocation3 + $0x390] sm:$0xff]
        %v3905 = vld [vmem:[#allocation3 + $0x398] sm:$0xff]
        %v3906 = vld [vmem:[#allocation3 + $0x3a0] sm:$0xff]
        %v3907 = vld [vmem:[#allocation3 + $0x3a8] sm:$0xff]
        %v3908 = vld [vmem:[#allocation3 + $0x3b0] sm:$0xff]
        %v3909 = vld [vmem:[#allocation3 + $0x3b8] sm:$0xff]
        %v3910 = vld [vmem:[#allocation3 + $0x3c0] sm:$0xff]
        %v3911 = vld [vmem:[#allocation3 + $0x3c8] sm:$0xff]
        %v3912 = vld [vmem:[#allocation3 + $0x3d0] sm:$0xff]
        %v3913 = vld [vmem:[#allocation3 + $0x3d8] sm:$0xff]
        %v3914 = vld [vmem:[#allocation3 + $0x3e0] sm:$0xff]
        %v3915 = vld [vmem:[#allocation3 + $0x3e8] sm:$0xff]
        %v3916 = vld [vmem:[#allocation3 + $0x3f0] sm:$0xff]
        %v3917 = vld [vmem:[#allocation3 + $0x3f8] sm:$0xff]
        %v3918 = vld [vmem:[#allocation3 + $0x400] sm:$0xff]
        %v3919 = vld [vmem:[#allocation3 + $0x408] sm:$0xff]
        %v3920 = vld [vmem:[#allocation3 + $0x410] sm:$0xff]
        %v3921 = vld [vmem:[#allocation3 + $0x418] sm:$0xff]
        %v3922 = vld [vmem:[#allocation3 + $0x420] sm:$0xff]
        %v3923 = vld [vmem:[#allocation3 + $0x428] sm:$0xff]
        %v3924 = vld [vmem:[#allocation3 + $0x430] sm:$0xff]
        %v3925 = vld [vmem:[#allocation3 + $0x438] sm:$0xff]
        %v3926 = vld [vmem:[#allocation3 + $0x440] sm:$0xff]
        %v3927 = vld [vmem:[#allocation3 + $0x448] sm:$0xff]
        %v3928 = vld [vmem:[#allocation3 + $0x450] sm:$0xff]
        %v3929 = vld [vmem:[#allocation3 + $0x458] sm:$0xff]
        %v3930 = vld [vmem:[#allocation3 + $0x460] sm:$0xff]
        %v3931 = vld [vmem:[#allocation3 + $0x468] sm:$0xff]
        %v3932 = vld [vmem:[#allocation3 + $0x470] sm:$0xff]
        %v3933 = vld [vmem:[#allocation3 + $0x478] sm:$0xff]
        %v3934 = vld [vmem:[#allocation9] sm:$0xf]
        %v3935 = vld [vmem:[#allocation9 + $0x4] sm:$0xf]
        %v3936 = vld [vmem:[#allocation9 + $0x8] sm:$0xf]
        %v3937 = vld [vmem:[#allocation9 + $0xc] sm:$0xf]
        %v3938 = vld [vmem:[#allocation9 + $0x10] sm:$0xf]
        %v3939 = vld [vmem:[#allocation9 + $0x14] sm:$0xf]
        %v3940 = vld [vmem:[#allocation9 + $0x18] sm:$0xf]
        %v3941 = vld [vmem:[#allocation9 + $0x1c] sm:$0xf]
        %v3942 = vld [vmem:[#allocation9 + $0x20] sm:$0xf]
        %v3943 = vld [vmem:[#allocation9 + $0x24] sm:$0xf]
        %v3944 = vld [vmem:[#allocation9 + $0x28] sm:$0xf]
        %v3945 = vld [vmem:[#allocation9 + $0x2c] sm:$0xf]
        %v3946 = vld [vmem:[#allocation9 + $0x30] sm:$0xf]
        %v3947 = vld [vmem:[#allocation9 + $0x34] sm:$0xf]
        %v3948 = vld [vmem:[#allocation9 + $0x38] sm:$0xf]
        %v3949 = vld [vmem:[#allocation9 + $0x3c] sm:$0xf]
        %v3950 = vld [vmem:[#allocation9 + $0x40] sm:$0xf]
        %v3951 = vld [vmem:[#allocation9 + $0x44] sm:$0xf]
        %v3952 = vld [vmem:[#allocation9 + $0x48] sm:$0xf]
        %v3953 = vld [vmem:[#allocation9 + $0x4c] sm:$0xf]
        %v3954 = vld [vmem:[#allocation9 + $0x50] sm:$0xf]
        %v3955 = vld [vmem:[#allocation9 + $0x54] sm:$0xf]
        %v3956 = vld [vmem:[#allocation9 + $0x58] sm:$0xf]
        %v3957 = vld [vmem:[#allocation9 + $0x5c] sm:$0xf]
        %v3958 = vld [vmem:[#allocation9 + $0x60] sm:$0xf]
        %v3959 = vld [vmem:[#allocation9 + $0x64] sm:$0xf]
        %v3960 = vld [vmem:[#allocation9 + $0x68] sm:$0xf]
        %v3961 = vld [vmem:[#allocation9 + $0x6c] sm:$0xf]
        %v3962 = vld [vmem:[#allocation9 + $0x70] sm:$0xf]
        %v3963 = vld [vmem:[#allocation9 + $0x74] sm:$0xf]
        %v3964 = vld [vmem:[#allocation9 + $0x78] sm:$0xf]
        %v3965 = vld [vmem:[#allocation9 + $0x7c] sm:$0xf]
        %v3966 = vld [vmem:[#allocation9 + $0x80] sm:$0xf]
        %v3967 = vld [vmem:[#allocation9 + $0x84] sm:$0xf]
        %v3968 = vld [vmem:[#allocation9 + $0x88] sm:$0xf]
        %v3969 = vld [vmem:[#allocation9 + $0x8c] sm:$0xf]
        %v3970 = vld [vmem:[#allocation9 + $0x90] sm:$0xf]
        %v3971 = vld [vmem:[#allocation9 + $0x94] sm:$0xf]
        %v3972 = vld [vmem:[#allocation9 + $0x98] sm:$0xf]
        %v3973 = vld [vmem:[#allocation9 + $0x9c] sm:$0xf]
        %v3974 = vld [vmem:[#allocation9 + $0xa0] sm:$0xf]
        %v3975 = vld [vmem:[#allocation9 + $0xa4] sm:$0xf]
        %v3976 = vld [vmem:[#allocation9 + $0xa8] sm:$0xf]
        %v3977 = vld [vmem:[#allocation9 + $0xac] sm:$0xf]
        %v3978 = vld [vmem:[#allocation9 + $0xb0] sm:$0xf]
        %v3979 = vld [vmem:[#allocation9 + $0xb4] sm:$0xf]
        %v3980 = vld [vmem:[#allocation9 + $0xb8] sm:$0xf]
        %v3981 = vld [vmem:[#allocation9 + $0xbc] sm:$0xf]
        %v3982 = vld [vmem:[#allocation9 + $0xc0] sm:$0xf]
        %v3983 = vld [vmem:[#allocation9 + $0xc4] sm:$0xf]
        %v3984 = vld [vmem:[#allocation9 + $0xc8] sm:$0xf]
        %v3985 = vld [vmem:[#allocation9 + $0xcc] sm:$0xf]
        %v3986 = vld [vmem:[#allocation9 + $0xd0] sm:$0xf]
        %v3987 = vld [vmem:[#allocation9 + $0xd4] sm:$0xf]
        %v3988 = vld [vmem:[#allocation9 + $0xd8] sm:$0xf]
        %v3989 = vld [vmem:[#allocation9 + $0xdc] sm:$0xf]
        %v3990 = vld [vmem:[#allocation9 + $0xe0] sm:$0xf]
        %v3991 = vld [vmem:[#allocation9 + $0xe4] sm:$0xf]
        %v3992 = vld [vmem:[#allocation9 + $0xe8] sm:$0xf]
        %v3993 = vld [vmem:[#allocation9 + $0xec] sm:$0xf]
        %v3994 = vld [vmem:[#allocation9 + $0xf0] sm:$0xf]
        %v3995 = vld [vmem:[#allocation9 + $0xf4] sm:$0xf]
        %v3996 = vld [vmem:[#allocation9 + $0xf8] sm:$0xf]
        %v3997 = vld [vmem:[#allocation9 + $0xfc] sm:$0xf]
        %v3998 = vld [vmem:[#allocation9 + $0x100] sm:$0xf]
        %v3999 = vld [vmem:[#allocation9 + $0x104] sm:$0xf]
        %v4000 = vld [vmem:[#allocation9 + $0x108] sm:$0xf]
        %v4001 = vld [vmem:[#allocation9 + $0x10c] sm:$0xf]
        %v4002 = vld [vmem:[#allocation9 + $0x110] sm:$0xf]
        %v4003 = vld [vmem:[#allocation9 + $0x114] sm:$0xf]
        %v4004 = vld [vmem:[#allocation9 + $0x118] sm:$0xf]
        %v4005 = vld [vmem:[#allocation9 + $0x11c] sm:$0xf]
        %v4006 = vld [vmem:[#allocation9 + $0x120] sm:$0xf]
        %v4007 = vld [vmem:[#allocation9 + $0x124] sm:$0xf]
        %v4008 = vld [vmem:[#allocation9 + $0x128] sm:$0xf]
        %v4009 = vld [vmem:[#allocation9 + $0x12c] sm:$0xf]
        %v4010 = vld [vmem:[#allocation9 + $0x130] sm:$0xf]
        %v4011 = vld [vmem:[#allocation9 + $0x134] sm:$0xf]
        %v4012 = vld [vmem:[#allocation9 + $0x138] sm:$0xf]
        %v4013 = vld [vmem:[#allocation9 + $0x13c] sm:$0xf]
        %v4014 = vld [vmem:[#allocation9 + $0x140] sm:$0xf]
        %v4015 = vld [vmem:[#allocation9 + $0x144] sm:$0xf]
        %v4016 = vld [vmem:[#allocation9 + $0x148] sm:$0xf]
        %v4017 = vld [vmem:[#allocation9 + $0x14c] sm:$0xf]
        %v4018 = vld [vmem:[#allocation9 + $0x150] sm:$0xf]
        %v4019 = vld [vmem:[#allocation9 + $0x154] sm:$0xf]
        %v4020 = vld [vmem:[#allocation9 + $0x158] sm:$0xf]
        %v4021 = vld [vmem:[#allocation9 + $0x15c] sm:$0xf]
        %v4022 = vld [vmem:[#allocation9 + $0x160] sm:$0xf]
        %v4023 = vld [vmem:[#allocation9 + $0x164] sm:$0xf]
        %v4024 = vld [vmem:[#allocation9 + $0x168] sm:$0xf]
        %v4025 = vld [vmem:[#allocation9 + $0x16c] sm:$0xf]
        %v4026 = vld [vmem:[#allocation9 + $0x170] sm:$0xf]
        %v4027 = vld [vmem:[#allocation9 + $0x174] sm:$0xf]
        %v4028 = vld [vmem:[#allocation9 + $0x178] sm:$0xf]
        %v4029 = vld [vmem:[#allocation9 + $0x17c] sm:$0xf]
        %v4030 = vld [vmem:[#allocation9 + $0x180] sm:$0xf]
        %v4031 = vld [vmem:[#allocation9 + $0x184] sm:$0xf]
        %v4032 = vld [vmem:[#allocation9 + $0x188] sm:$0xf]
        %v4033 = vld [vmem:[#allocation9 + $0x18c] sm:$0xf]
        %v4034 = vld [vmem:[#allocation9 + $0x190] sm:$0xf]
        %v4035 = vld [vmem:[#allocation9 + $0x194] sm:$0xf]
        %v4036 = vld [vmem:[#allocation9 + $0x198] sm:$0xf]
        %v4037 = vld [vmem:[#allocation9 + $0x19c] sm:$0xf]
        %v4038 = vld [vmem:[#allocation9 + $0x1a0] sm:$0xf]
        %v4039 = vld [vmem:[#allocation9 + $0x1a4] sm:$0xf]
        %v4040 = vld [vmem:[#allocation9 + $0x1a8] sm:$0xf]
        %v4041 = vld [vmem:[#allocation9 + $0x1ac] sm:$0xf]
        %v4042 = vld [vmem:[#allocation9 + $0x1b0] sm:$0xf]
        %v4043 = vld [vmem:[#allocation9 + $0x1b4] sm:$0xf]
        %v4044 = vld [vmem:[#allocation9 + $0x1b8] sm:$0xf]
        %v4045 = vld [vmem:[#allocation9 + $0x1bc] sm:$0xf]
        %v4046 = vld [vmem:[#allocation9 + $0x1c0] sm:$0xf]
        %v4047 = vld [vmem:[#allocation9 + $0x1c4] sm:$0xf]
        %v4048 = vld [vmem:[#allocation9 + $0x1c8] sm:$0xf]
        %v4049 = vld [vmem:[#allocation9 + $0x1cc] sm:$0xf]
        %v4050 = vld [vmem:[#allocation9 + $0x1d0] sm:$0xf]
        %v4051 = vld [vmem:[#allocation9 + $0x1d4] sm:$0xf]
        %v4052 = vld [vmem:[#allocation9 + $0x1d8] sm:$0xf]
        %v4053 = vld [vmem:[#allocation9 + $0x1dc] sm:$0xf]
        %v4054 = vld [vmem:[#allocation9 + $0x1e0] sm:$0xf]
        %v4055 = vld [vmem:[#allocation9 + $0x1e4] sm:$0xf]
        %v4056 = vld [vmem:[#allocation9 + $0x1e8] sm:$0xf]
        %v4057 = vld [vmem:[#allocation9 + $0x1ec] sm:$0xf]
        %v4058 = vld [vmem:[#allocation9 + $0x1f0] sm:$0xf]
        %v4059 = vld [vmem:[#allocation9 + $0x1f4] sm:$0xf]
        %v4060 = vld [vmem:[#allocation9 + $0x1f8] sm:$0xf]
        %v4061 = vld [vmem:[#allocation9 + $0x1fc] sm:$0xf]
        %v4062 = vld [vmem:[#allocation9 + $0x200] sm:$0xf]
        %v4063 = vld [vmem:[#allocation9 + $0x204] sm:$0xf]
        %v4064 = vld [vmem:[#allocation9 + $0x208] sm:$0xf]
        %v4065 = vld [vmem:[#allocation9 + $0x20c] sm:$0xf]
        %v4066 = vld [vmem:[#allocation9 + $0x210] sm:$0xf]
        %v4067 = vld [vmem:[#allocation9 + $0x214] sm:$0xf]
        %v4068 = vld [vmem:[#allocation9 + $0x218] sm:$0xf]
        %v4069 = vld [vmem:[#allocation9 + $0x21c] sm:$0xf]
        %v4070 = vld [vmem:[#allocation9 + $0x220] sm:$0xf]
        %v4071 = vld [vmem:[#allocation9 + $0x224] sm:$0xf]
        %v4072 = vld [vmem:[#allocation9 + $0x228] sm:$0xf]
        %v4073 = vld [vmem:[#allocation9 + $0x22c] sm:$0xf]
        %v4074 = vld [vmem:[#allocation9 + $0x230] sm:$0xf]
        %v4075 = vld [vmem:[#allocation9 + $0x234] sm:$0xf]
        %v4076 = vld [vmem:[#allocation9 + $0x238] sm:$0xf]
        %v4077 = vld [vmem:[#allocation9 + $0x23c] sm:$0xf]
        %v4078 = vld [vmem:[#allocation13] sm:$0x1]
        %v4080 = vlaneseq
        %v4081 = vshrl.u32 %v4080, 7
        %v4082 = vsub.s32 0, %v4081
        %v4083 = vrot.slane %v4078, %v4082
        %v4229 = vunpack.c.l.b16 %v3934
        %v4230 = vunpack.c.l.b16 %v3935
        %v4231 = vunpack.c.l.b16 %v3936
        %v4232 = vunpack.c.l.b16 %v3937
        %v4233 = vunpack.c.l.b16 %v3938
        %v4234 = vunpack.c.l.b16 %v3939
        %v4235 = vunpack.c.l.b16 %v3940
        %v4236 = vunpack.c.l.b16 %v3941
        %v4237 = vunpack.c.l.b16 %v3942
        %v4238 = vunpack.c.l.b16 %v3943
        %v4239 = vunpack.c.l.b16 %v3944
        %v4240 = vunpack.c.l.b16 %v3945
        %v4241 = vunpack.c.l.b16 %v3946
        %v4242 = vunpack.c.l.b16 %v3947
        %v4243 = vunpack.c.l.b16 %v3948
        %v4244 = vunpack.c.l.b16 %v3949
        %v4245 = vunpack.c.l.b16 %v3950
        %v4246 = vunpack.c.l.b16 %v3951
        %v4247 = vunpack.c.l.b16 %v3952
        %v4248 = vunpack.c.l.b16 %v3953
        %v4249 = vunpack.c.l.b16 %v3954
        %v4250 = vunpack.c.l.b16 %v3955
        %v4251 = vunpack.c.l.b16 %v3956
        %v4252 = vunpack.c.l.b16 %v3957
        %v4253 = vunpack.c.l.b16 %v3958
        %v4254 = vunpack.c.l.b16 %v3959
        %v4255 = vunpack.c.l.b16 %v3960
        %v4256 = vunpack.c.l.b16 %v3961
        %v4257 = vunpack.c.l.b16 %v3962
        %v4258 = vunpack.c.l.b16 %v3963
        %v4259 = vunpack.c.l.b16 %v3964
        %v4260 = vunpack.c.l.b16 %v3965
        %v4261 = vunpack.c.l.b16 %v3966
        %v4262 = vunpack.c.l.b16 %v3967
        %v4263 = vunpack.c.l.b16 %v3968
        %v4264 = vunpack.c.l.b16 %v3969
        %v4265 = vunpack.c.l.b16 %v3970
        %v4266 = vunpack.c.l.b16 %v3971
        %v4267 = vunpack.c.l.b16 %v3972
        %v4268 = vunpack.c.l.b16 %v3973
        %v4269 = vunpack.c.l.b16 %v3974
        %v4270 = vunpack.c.l.b16 %v3975
        %v4271 = vunpack.c.l.b16 %v3976
        %v4272 = vunpack.c.l.b16 %v3977
        %v4273 = vunpack.c.l.b16 %v3978
        %v4274 = vunpack.c.l.b16 %v3979
        %v4275 = vunpack.c.l.b16 %v3980
        %v4276 = vunpack.c.l.b16 %v3981
        %v4277 = vunpack.c.l.b16 %v3982
        %v4278 = vunpack.c.l.b16 %v3983
        %v4279 = vunpack.c.l.b16 %v3984
        %v4280 = vunpack.c.l.b16 %v3985
        %v4281 = vunpack.c.l.b16 %v3986
        %v4282 = vunpack.c.l.b16 %v3987
        %v4283 = vunpack.c.l.b16 %v3988
        %v4284 = vunpack.c.l.b16 %v3989
        %v4285 = vunpack.c.l.b16 %v3990
        %v4286 = vunpack.c.l.b16 %v3991
        %v4287 = vunpack.c.l.b16 %v3992
        %v4288 = vunpack.c.l.b16 %v3993
        %v4289 = vunpack.c.l.b16 %v3994
        %v4290 = vunpack.c.l.b16 %v3995
        %v4291 = vunpack.c.l.b16 %v3996
        %v4292 = vunpack.c.l.b16 %v3997
        %v4293 = vunpack.c.l.b16 %v3998
        %v4294 = vunpack.c.l.b16 %v3999
        %v4295 = vunpack.c.l.b16 %v4000
        %v4296 = vunpack.c.l.b16 %v4001
        %v4297 = vunpack.c.l.b16 %v4002
        %v4298 = vunpack.c.l.b16 %v4003
        %v4299 = vunpack.c.l.b16 %v4004
        %v4300 = vunpack.c.l.b16 %v4005
        %v4301 = vunpack.c.l.b16 %v4006
        %v4302 = vunpack.c.l.b16 %v4007
        %v4303 = vunpack.c.l.b16 %v4008
        %v4304 = vunpack.c.l.b16 %v4009
        %v4305 = vunpack.c.l.b16 %v4010
        %v4306 = vunpack.c.l.b16 %v4011
        %v4307 = vunpack.c.l.b16 %v4012
        %v4308 = vunpack.c.l.b16 %v4013
        %v4309 = vunpack.c.l.b16 %v4014
        %v4310 = vunpack.c.l.b16 %v4015
        %v4311 = vunpack.c.l.b16 %v4016
        %v4312 = vunpack.c.l.b16 %v4017
        %v4313 = vunpack.c.l.b16 %v4018
        %v4314 = vunpack.c.l.b16 %v4019
        %v4315 = vunpack.c.l.b16 %v4020
        %v4316 = vunpack.c.l.b16 %v4021
        %v4317 = vunpack.c.l.b16 %v4022
        %v4318 = vunpack.c.l.b16 %v4023
        %v4319 = vunpack.c.l.b16 %v4024
        %v4320 = vunpack.c.l.b16 %v4025
        %v4321 = vunpack.c.l.b16 %v4026
        %v4322 = vunpack.c.l.b16 %v4027
        %v4323 = vunpack.c.l.b16 %v4028
        %v4324 = vunpack.c.l.b16 %v4029
        %v4325 = vunpack.c.l.b16 %v4030
        %v4326 = vunpack.c.l.b16 %v4031
        %v4327 = vunpack.c.l.b16 %v4032
        %v4328 = vunpack.c.l.b16 %v4033
        %v4329 = vunpack.c.l.b16 %v4034
        %v4330 = vunpack.c.l.b16 %v4035
        %v4331 = vunpack.c.l.b16 %v4036
        %v4332 = vunpack.c.l.b16 %v4037
        %v4333 = vunpack.c.l.b16 %v4038
        %v4334 = vunpack.c.l.b16 %v4039
        %v4335 = vunpack.c.l.b16 %v4040
        %v4336 = vunpack.c.l.b16 %v4041
        %v4337 = vunpack.c.l.b16 %v4042
        %v4338 = vunpack.c.l.b16 %v4043
        %v4339 = vunpack.c.l.b16 %v4044
        %v4340 = vunpack.c.l.b16 %v4045
        %v4341 = vunpack.c.l.b16 %v4046
        %v4342 = vunpack.c.l.b16 %v4047
        %v4343 = vunpack.c.l.b16 %v4048
        %v4344 = vunpack.c.l.b16 %v4049
        %v4345 = vunpack.c.l.b16 %v4050
        %v4346 = vunpack.c.l.b16 %v4051
        %v4347 = vunpack.c.l.b16 %v4052
        %v4348 = vunpack.c.l.b16 %v4053
        %v4349 = vunpack.c.l.b16 %v4054
        %v4350 = vunpack.c.l.b16 %v4055
        %v4351 = vunpack.c.l.b16 %v4056
        %v4352 = vunpack.c.l.b16 %v4057
        %v4353 = vunpack.c.l.b16 %v4058
        %v4354 = vunpack.c.l.b16 %v4059
        %v4355 = vunpack.c.l.b16 %v4060
        %v4356 = vunpack.c.l.b16 %v4061
        %v4357 = vunpack.c.l.b16 %v4062
        %v4358 = vunpack.c.l.b16 %v4063
        %v4359 = vunpack.c.l.b16 %v4064
        %v4360 = vunpack.c.l.b16 %v4065
        %v4361 = vunpack.c.l.b16 %v4066
        %v4362 = vunpack.c.l.b16 %v4067
        %v4363 = vunpack.c.l.b16 %v4068
        %v4364 = vunpack.c.l.b16 %v4069
        %v4365 = vunpack.c.l.b16 %v4070
        %v4366 = vunpack.c.l.b16 %v4071
        %v4367 = vunpack.c.l.b16 %v4072
        %v4368 = vunpack.c.l.b16 %v4073
        %v4369 = vunpack.c.l.b16 %v4074
        %v4370 = vunpack.c.l.b16 %v4075
        %v4371 = vunpack.c.l.b16 %v4076
        %v4372 = vunpack.c.l.b16 %v4077
        %v4373 = vpack.c.b16 %v4230, %v4229
        %v4374 = vpack.c.b16 %v4232, %v4231
        %v4375 = vpack.c.b16 %v4234, %v4233
        %v4376 = vpack.c.b16 %v4236, %v4235
        %v4377 = vpack.c.b16 %v4238, %v4237
        %v4378 = vpack.c.b16 %v4240, %v4239
        %v4379 = vpack.c.b16 %v4242, %v4241
        %v4380 = vpack.c.b16 %v4244, %v4243
        %v4381 = vpack.c.b16 %v4246, %v4245
        %v4382 = vpack.c.b16 %v4248, %v4247
        %v4383 = vpack.c.b16 %v4250, %v4249
        %v4384 = vpack.c.b16 %v4252, %v4251
        %v4385 = vpack.c.b16 %v4254, %v4253
        %v4386 = vpack.c.b16 %v4256, %v4255
        %v4387 = vpack.c.b16 %v4258, %v4257
        %v4388 = vpack.c.b16 %v4260, %v4259
        %v4389 = vpack.c.b16 %v4262, %v4261
        %v4390 = vpack.c.b16 %v4264, %v4263
        %v4391 = vpack.c.b16 %v4266, %v4265
        %v4392 = vpack.c.b16 %v4268, %v4267
        %v4393 = vpack.c.b16 %v4270, %v4269
        %v4394 = vpack.c.b16 %v4272, %v4271
        %v4395 = vpack.c.b16 %v4274, %v4273
        %v4396 = vpack.c.b16 %v4276, %v4275
        %v4397 = vpack.c.b16 %v4278, %v4277
        %v4398 = vpack.c.b16 %v4280, %v4279
        %v4399 = vpack.c.b16 %v4282, %v4281
        %v4400 = vpack.c.b16 %v4284, %v4283
        %v4401 = vpack.c.b16 %v4286, %v4285
        %v4402 = vpack.c.b16 %v4288, %v4287
        %v4403 = vpack.c.b16 %v4290, %v4289
        %v4404 = vpack.c.b16 %v4292, %v4291
        %v4405 = vpack.c.b16 %v4294, %v4293
        %v4406 = vpack.c.b16 %v4296, %v4295
        %v4407 = vpack.c.b16 %v4298, %v4297
        %v4408 = vpack.c.b16 %v4300, %v4299
        %v4409 = vpack.c.b16 %v4302, %v4301
        %v4410 = vpack.c.b16 %v4304, %v4303
        %v4411 = vpack.c.b16 %v4306, %v4305
        %v4412 = vpack.c.b16 %v4308, %v4307
        %v4413 = vpack.c.b16 %v4310, %v4309
        %v4414 = vpack.c.b16 %v4312, %v4311
        %v4415 = vpack.c.b16 %v4314, %v4313
        %v4416 = vpack.c.b16 %v4316, %v4315
        %v4417 = vpack.c.b16 %v4318, %v4317
        %v4418 = vpack.c.b16 %v4320, %v4319
        %v4419 = vpack.c.b16 %v4322, %v4321
        %v4420 = vpack.c.b16 %v4324, %v4323
        %v4421 = vpack.c.b16 %v4326, %v4325
        %v4422 = vpack.c.b16 %v4328, %v4327
        %v4423 = vpack.c.b16 %v4330, %v4329
        %v4424 = vpack.c.b16 %v4332, %v4331
        %v4425 = vpack.c.b16 %v4334, %v4333
        %v4426 = vpack.c.b16 %v4336, %v4335
        %v4427 = vpack.c.b16 %v4338, %v4337
        %v4428 = vpack.c.b16 %v4340, %v4339
        %v4429 = vpack.c.b16 %v4342, %v4341
        %v4430 = vpack.c.b16 %v4344, %v4343
        %v4431 = vpack.c.b16 %v4346, %v4345
        %v4432 = vpack.c.b16 %v4348, %v4347
        %v4433 = vpack.c.b16 %v4350, %v4349
        %v4434 = vpack.c.b16 %v4352, %v4351
        %v4435 = vpack.c.b16 %v4354, %v4353
        %v4436 = vpack.c.b16 %v4356, %v4355
        %v4437 = vpack.c.b16 %v4358, %v4357
        %v4438 = vpack.c.b16 %v4360, %v4359
        %v4439 = vpack.c.b16 %v4362, %v4361
        %v4440 = vpack.c.b16 %v4364, %v4363
        %v4441 = vpack.c.b16 %v4366, %v4365
        %v4442 = vpack.c.b16 %v4368, %v4367
        %v4443 = vpack.c.b16 %v4370, %v4369
        %v4444 = vpack.c.b16 %v4372, %v4371
        %4517 = vmatprep.subr.bf16.mxu0 0
        %4518 = vmatpush1.bf16.msra.mxu0 %v4373
        %4519 = vmatprep.subr.bf16.mxu0 0
        %4520 = vmatpush1.bf16.msra.mxu0 %v4374
        %4521 = vmatprep.subr.bf16.mxu0 0
        %4522 = vmatpush1.bf16.msra.mxu0 %v4375
        %4523 = vmatprep.subr.bf16.mxu0 0
        %4524 = vmatpush1.bf16.msra.mxu0 %v4376
        %4525 = vmatprep.subr.bf16.mxu0 0
        %4526 = vmatpush1.bf16.msra.mxu0 %v4377
        %4527 = vmatprep.subr.bf16.mxu0 0
        %4528 = vmatpush1.bf16.msra.mxu0 %v4378
        %4529 = vmatprep.subr.bf16.mxu0 0
        %4530 = vmatpush1.bf16.msra.mxu0 %v4379
        %4531 = vmatprep.subr.bf16.mxu0 0
        %4532 = vmatpush1.bf16.msra.mxu0 %v4380
        %4533 = vmatprep.subr.bf16.mxu0 0
        %4534 = vmatpush1.bf16.msra.mxu0 %v4381
        %4535 = vmatprep.subr.bf16.mxu0 0
        %4536 = vmatpush1.bf16.msra.mxu0 %v4382
        %4537 = vmatprep.subr.bf16.mxu0 0
        %4538 = vmatpush1.bf16.msra.mxu0 %v4383
        %4539 = vmatprep.subr.bf16.mxu0 0
        %4540 = vmatpush1.bf16.msra.mxu0 %v4384
        %4541 = vmatprep.subr.bf16.mxu0 0
        %4542 = vmatpush1.bf16.msra.mxu0 %v4385
        %4543 = vmatprep.subr.bf16.mxu0 0
        %4544 = vmatpush1.bf16.msra.mxu0 %v4386
        %4545 = vmatprep.subr.bf16.mxu0 0
        %4546 = vmatpush1.bf16.msra.mxu0 %v4387
        %4547 = vmatprep.subr.bf16.mxu0 0
        %4548 = vmatpush1.bf16.msra.mxu0 %v4388
        %4549 = vmatprep.mubr.bf16.mxu0 %v3791
        %4550 = vmatmul.mubr.bf16.gmra.mrb[0].mxu0 %v3790
        %v4551 = vpop.f32.mrb[0].mxu0
        %v4552 = vadd.f32 %v4083, %v4551
        %v4553 = vpop.f32.mrb[0].mxu0
        %v4554 = vpop.f32.mrb[0].mxu0
        %v4555 = vadd.f32 %v4083, %v4554
        %v4556 = vpop.f32.mrb[0].mxu0
        %4557 = vmatprep.mubr.bf16.mxu0 %v3800
        %4558 = vmatmul.mubr.bf16.gmra.mrb[0].mxu0 %v3799
        %v4559 = vpop.f32.mrb[0].mxu0
        %v4560 = vadd.f32 %v4083, %v4559
        %v4561 = vpop.f32.mrb[0].mxu0
        %v4562 = vpop.f32.mrb[0].mxu0
        %v4563 = vadd.f32 %v4083, %v4562
        %v4564 = vpop.f32.mrb[0].mxu0
        %4565 = vmatprep.mubr.bf16.mxu0 %v3809
        %4566 = vmatmul.mubr.bf16.gmra.mrb[0].mxu0 %v3808
        %v4567 = vpop.f32.mrb[0].mxu0
        %v4568 = vadd.f32 %v4083, %v4567
        %v4569 = vpop.f32.mrb[0].mxu0
        %v4570 = vpop.f32.mrb[0].mxu0
        %v4571 = vadd.f32 %v4083, %v4570
        %v4572 = vpop.f32.mrb[0].mxu0
        %4573 = vmatprep.mubr.bf16.mxu0 %v3818
        %4574 = vmatmul.mubr.bf16.gmra.mrb[0].mxu0 %v3817
        %v4575 = vpop.f32.mrb[0].mxu0
        %v4576 = vadd.f32 %v4083, %v4575
        %v4577 = vpop.f32.mrb[0].mxu0
        %v4578 = vpop.f32.mrb[0].mxu0
        %v4579 = vadd.f32 %v4083, %v4578
        %v4580 = vpop.f32.mrb[0].mxu0
        %4581 = vmatprep.mubr.bf16.mxu0 %v3827
        %4582 = vmatmul.mubr.bf16.gmra.mrb[0].mxu0 %v3826
        %v4583 = vpop.f32.mrb[0].mxu0
        %v4584 = vadd.f32 %v4083, %v4583
        %v4585 = vpop.f32.mrb[0].mxu0
        %v4586 = vpop.f32.mrb[0].mxu0
        %v4587 = vadd.f32 %v4083, %v4586
        %v4588 = vpop.f32.mrb[0].mxu0
        %4589 = vmatprep.mubr.bf16.mxu0 %v3836
        %4590 = vmatmul.mubr.bf16.gmra.mrb[0].mxu0 %v3835
        %v4591 = vpop.f32.mrb[0].mxu0
        %v4592 = vadd.f32 %v4083, %v4591
        %v4593 = vpop.f32.mrb[0].mxu0
        %v4594 = vpop.f32.mrb[0].mxu0
        %v4595 = vadd.f32 %v4083, %v4594
        %v4596 = vpop.f32.mrb[0].mxu0
        %4597 = vmatprep.mubr.bf16.mxu0 %v3845
        %4598 = vmatmul.mubr.bf16.gmra.mrb[0].mxu0 %v3844
        %v4599 = vpop.f32.mrb[0].mxu0
        %v4600 = vadd.f32 %v4083, %v4599
        %v4601 = vpop.f32.mrb[0].mxu0
        %v4602 = vpop.f32.mrb[0].mxu0
        %v4603 = vadd.f32 %v4083, %v4602
        %v4604 = vpop.f32.mrb[0].mxu0
        %4605 = vmatprep.mubr.bf16.mxu0 %v3854
        %4606 = vmatmul.mubr.bf16.gmra.mrb[0].mxu0 %v3853
        %v4607 = vpop.f32.mrb[0].mxu0
        %v4608 = vadd.f32 %v4083, %v4607
        %v4609 = vpop.f32.mrb[0].mxu0
        %v4610 = vpop.f32.mrb[0].mxu0
        %v4611 = vadd.f32 %v4083, %v4610
        %v4612 = vpop.f32.mrb[0].mxu0
        %4613 = vmatprep.mubr.bf16.mxu0 %v3863
        %4614 = vmatmul.mubr.bf16.gmra.mrb[0].mxu0 %v3862
        %v4615 = vpop.f32.mrb[0].mxu0
        %v4616 = vadd.f32 %v4083, %v4615
        %v4617 = vpop.f32.mrb[0].mxu0
        %v4618 = vpop.f32.mrb[0].mxu0
        %v4619 = vadd.f32 %v4083, %v4618
        %v4620 = vpop.f32.mrb[0].mxu0
        %4621 = vmatprep.mubr.bf16.mxu0 %v3872
        %4622 = vmatmul.mubr.bf16.gmra.mrb[0].mxu0 %v3871
        %v4623 = vpop.f32.mrb[0].mxu0
        %v4624 = vadd.f32 %v4083, %v4623
        %v4625 = vpop.f32.mrb[0].mxu0
        %v4626 = vpop.f32.mrb[0].mxu0
        %v4627 = vadd.f32 %v4083, %v4626
        %v4628 = vpop.f32.mrb[0].mxu0
        %4629 = vmatprep.mubr.bf16.mxu0 %v3881
        %4630 = vmatmul.mubr.bf16.gmra.mrb[0].mxu0 %v3880
        %v4631 = vpop.f32.mrb[0].mxu0
        %v4632 = vadd.f32 %v4083, %v4631
        %v4633 = vpop.f32.mrb[0].mxu0
        %v4634 = vpop.f32.mrb[0].mxu0
        %v4635 = vadd.f32 %v4083, %v4634
        %v4636 = vpop.f32.mrb[0].mxu0
        %4637 = vmatprep.mubr.bf16.mxu0 %v3890
        %4638 = vmatmul.mubr.bf16.gmra.mrb[0].mxu0 %v3889
        %v4639 = vpop.f32.mrb[0].mxu0
        %v4640 = vadd.f32 %v4083, %v4639
        %v4641 = vpop.f32.mrb[0].mxu0
        %v4642 = vpop.f32.mrb[0].mxu0
        %v4643 = vadd.f32 %v4083, %v4642
        %v4644 = vpop.f32.mrb[0].mxu0
        %4645 = vmatprep.mubr.bf16.mxu0 %v3899
        %4646 = vmatmul.mubr.bf16.gmra.mrb[0].mxu0 %v3898
        %v4647 = vpop.f32.mrb[0].mxu0
        %v4648 = vadd.f32 %v4083, %v4647
        %v4649 = vpop.f32.mrb[0].mxu0
        %v4650 = vpop.f32.mrb[0].mxu0
        %v4651 = vadd.f32 %v4083, %v4650
        %v4652 = vpop.f32.mrb[0].mxu0
        %4653 = vmatprep.mubr.bf16.mxu0 %v3908
        %4654 = vmatmul.mubr.bf16.gmra.mrb[0].mxu0 %v3907
        %v4655 = vpop.f32.mrb[0].mxu0
        %v4656 = vadd.f32 %v4083, %v4655
        %v4657 = vpop.f32.mrb[0].mxu0
        %v4658 = vpop.f32.mrb[0].mxu0
        %v4659 = vadd.f32 %v4083, %v4658
        %v4660 = vpop.f32.mrb[0].mxu0
        %4661 = vmatprep.mubr.bf16.mxu0 %v3917
        %4662 = vmatmul.mubr.bf16.gmra.mrb[0].mxu0 %v3916
        %v4663 = vpop.f32.mrb[0].mxu0
        %v4664 = vadd.f32 %v4083, %v4663
        %v4665 = vpop.f32.mrb[0].mxu0
        %v4666 = vpop.f32.mrb[0].mxu0
        %v4667 = vadd.f32 %v4083, %v4666
        %v4668 = vpop.f32.mrb[0].mxu0
        %4669 = vmatprep.mubr.bf16.mxu0 %v3926
        %4670 = vmatmul.mubr.bf16.gmra.mrb[0].mxu0 %v3925
        %v4671 = vpop.f32.mrb[0].mxu0
        %v4672 = vadd.f32 %v4083, %v4671
        %v4673 = vpop.f32.mrb[0].mxu0
        %v4674 = vpop.f32.mrb[0].mxu0
        %v4675 = vadd.f32 %v4083, %v4674
        %v4676 = vpop.f32.mrb[0].mxu0
        %4677 = vdwg.mxu0
        %4678 = vmatprep.subr.bf16.mxu0 0
        %4679 = vmatpush1.bf16.msra.mxu0 %v4389
        %4680 = vmatprep.subr.bf16.mxu0 0
        %4681 = vmatpush1.bf16.msra.mxu0 %v4390
        %4682 = vmatprep.subr.bf16.mxu0 0
        %4683 = vmatpush1.bf16.msra.mxu0 %v4391
        %4684 = vmatprep.subr.bf16.mxu0 0
        %4685 = vmatpush1.bf16.msra.mxu0 %v4392
        %4686 = vmatprep.subr.bf16.mxu0 0
        %4687 = vmatpush1.bf16.msra.mxu0 %v4393
        %4688 = vmatprep.subr.bf16.mxu0 0
        %4689 = vmatpush1.bf16.msra.mxu0 %v4394
        %4690 = vmatprep.subr.bf16.mxu0 0
        %4691 = vmatpush1.bf16.msra.mxu0 %v4395
        %4692 = vmatprep.subr.bf16.mxu0 0
        %4693 = vmatpush1.bf16.msra.mxu0 %v4396
        %4694 = vmatprep.subr.bf16.mxu0 0
        %4695 = vmatpush1.bf16.msra.mxu0 %v4397
        %4696 = vmatprep.subr.bf16.mxu0 0
        %4697 = vmatpush1.bf16.msra.mxu0 %v4398
        %4698 = vmatprep.subr.bf16.mxu0 0
        %4699 = vmatpush1.bf16.msra.mxu0 %v4399
        %4700 = vmatprep.subr.bf16.mxu0 0
        %4701 = vmatpush1.bf16.msra.mxu0 %v4400
        %4702 = vmatprep.subr.bf16.mxu0 0
        %4703 = vmatpush1.bf16.msra.mxu0 %v4401
        %4704 = vmatprep.subr.bf16.mxu0 0
        %4705 = vmatpush1.bf16.msra.mxu0 %v4402
        %4706 = vmatprep.subr.bf16.mxu0 0
        %4707 = vmatpush1.bf16.msra.mxu0 %v4403
        %4708 = vmatprep.subr.bf16.mxu0 0
        %4709 = vmatpush1.bf16.msra.mxu0 %v4404
        %4710 = vmatprep.mubr.bf16.mxu0 %v3793
        %4711 = vmatmul.mubr.bf16.gmra.mrb[0].mxu0 %v3792
        %v4712 = vpop.f32.mrb[0].mxu0
        %v4713 = vadd.f32 %v4552, %v4712
        %v4714 = vpop.f32.mrb[0].mxu0
        %v4715 = vpop.f32.mrb[0].mxu0
        %v4716 = vadd.f32 %v4555, %v4715
        %v4717 = vpop.f32.mrb[0].mxu0
        %4718 = vmatprep.mubr.bf16.mxu0 %v3802
        %4719 = vmatmul.mubr.bf16.gmra.mrb[0].mxu0 %v3801
        %v4720 = vpop.f32.mrb[0].mxu0
        %v4721 = vadd.f32 %v4560, %v4720
        %v4722 = vpop.f32.mrb[0].mxu0
        %v4723 = vpop.f32.mrb[0].mxu0
        %v4724 = vadd.f32 %v4563, %v4723
        %v4725 = vpop.f32.mrb[0].mxu0
        %4726 = vmatprep.mubr.bf16.mxu0 %v3811
        %4727 = vmatmul.mubr.bf16.gmra.mrb[0].mxu0 %v3810
        %v4728 = vpop.f32.mrb[0].mxu0
        %v4729 = vadd.f32 %v4568, %v4728
        %v4730 = vpop.f32.mrb[0].mxu0
        %v4731 = vpop.f32.mrb[0].mxu0
        %v4732 = vadd.f32 %v4571, %v4731
        %v4733 = vpop.f32.mrb[0].mxu0
        %4734 = vmatprep.mubr.bf16.mxu0 %v3820
        %4735 = vmatmul.mubr.bf16.gmra.mrb[0].mxu0 %v3819
        %v4736 = vpop.f32.mrb[0].mxu0
        %v4737 = vadd.f32 %v4576, %v4736
        %v4738 = vpop.f32.mrb[0].mxu0
        %v4739 = vpop.f32.mrb[0].mxu0
        %v4740 = vadd.f32 %v4579, %v4739
        %v4741 = vpop.f32.mrb[0].mxu0
        %4742 = vmatprep.mubr.bf16.mxu0 %v3829
        %4743 = vmatmul.mubr.bf16.gmra.mrb[0].mxu0 %v3828
        %v4744 = vpop.f32.mrb[0].mxu0
        %v4745 = vadd.f32 %v4584, %v4744
        %v4746 = vpop.f32.mrb[0].mxu0
        %v4747 = vpop.f32.mrb[0].mxu0
        %v4748 = vadd.f32 %v4587, %v4747
        %v4749 = vpop.f32.mrb[0].mxu0
        %4750 = vmatprep.mubr.bf16.mxu0 %v3838
        %4751 = vmatmul.mubr.bf16.gmra.mrb[0].mxu0 %v3837
        %v4752 = vpop.f32.mrb[0].mxu0
        %v4753 = vadd.f32 %v4592, %v4752
        %v4754 = vpop.f32.mrb[0].mxu0
        %v4755 = vpop.f32.mrb[0].mxu0
        %v4756 = vadd.f32 %v4595, %v4755
        %v4757 = vpop.f32.mrb[0].mxu0
        %4758 = vmatprep.mubr.bf16.mxu0 %v3847
        %4759 = vmatmul.mubr.bf16.gmra.mrb[0].mxu0 %v3846
        %v4760 = vpop.f32.mrb[0].mxu0
        %v4761 = vadd.f32 %v4600, %v4760
        %v4762 = vpop.f32.mrb[0].mxu0
        %v4763 = vpop.f32.mrb[0].mxu0
        %v4764 = vadd.f32 %v4603, %v4763
        %v4765 = vpop.f32.mrb[0].mxu0
        %4766 = vmatprep.mubr.bf16.mxu0 %v3856
        %4767 = vmatmul.mubr.bf16.gmra.mrb[0].mxu0 %v3855
        %v4768 = vpop.f32.mrb[0].mxu0
        %v4769 = vadd.f32 %v4608, %v4768
        %v4770 = vpop.f32.mrb[0].mxu0
        %v4771 = vpop.f32.mrb[0].mxu0
        %v4772 = vadd.f32 %v4611, %v4771
        %v4773 = vpop.f32.mrb[0].mxu0
        %4774 = vmatprep.mubr.bf16.mxu0 %v3865
        %4775 = vmatmul.mubr.bf16.gmra.mrb[0].mxu0 %v3864
        %v4776 = vpop.f32.mrb[0].mxu0
        %v4777 = vadd.f32 %v4616, %v4776
        %v4778 = vpop.f32.mrb[0].mxu0
        %v4779 = vpop.f32.mrb[0].mxu0
        %v4780 = vadd.f32 %v4619, %v4779
        %v4781 = vpop.f32.mrb[0].mxu0
        %4782 = vmatprep.mubr.bf16.mxu0 %v3874
        %4783 = vmatmul.mubr.bf16.gmra.mrb[0].mxu0 %v3873
        %v4784 = vpop.f32.mrb[0].mxu0
        %v4785 = vadd.f32 %v4624, %v4784
        %v4786 = vpop.f32.mrb[0].mxu0
        %v4787 = vpop.f32.mrb[0].mxu0
        %v4788 = vadd.f32 %v4627, %v4787
        %v4789 = vpop.f32.mrb[0].mxu0
        %4790 = vmatprep.mubr.bf16.mxu0 %v3883
        %4791 = vmatmul.mubr.bf16.gmra.mrb[0].mxu0 %v3882
        %v4792 = vpop.f32.mrb[0].mxu0
        %v4793 = vadd.f32 %v4632, %v4792
        %v4794 = vpop.f32.mrb[0].mxu0
        %v4795 = vpop.f32.mrb[0].mxu0
        %v4796 = vadd.f32 %v4635, %v4795
        %v4797 = vpop.f32.mrb[0].mxu0
        %4798 = vmatprep.mubr.bf16.mxu0 %v3892
        %4799 = vmatmul.mubr.bf16.gmra.mrb[0].mxu0 %v3891
        %v4800 = vpop.f32.mrb[0].mxu0
        %v4801 = vadd.f32 %v4640, %v4800
        %v4802 = vpop.f32.mrb[0].mxu0
        %v4803 = vpop.f32.mrb[0].mxu0
        %v4804 = vadd.f32 %v4643, %v4803
        %v4805 = vpop.f32.mrb[0].mxu0
        %4806 = vmatprep.mubr.bf16.mxu0 %v3901
        %4807 = vmatmul.mubr.bf16.gmra.mrb[0].mxu0 %v3900
        %v4808 = vpop.f32.mrb[0].mxu0
        %v4809 = vadd.f32 %v4648, %v4808
        %v4810 = vpop.f32.mrb[0].mxu0
        %v4811 = vpop.f32.mrb[0].mxu0
        %v4812 = vadd.f32 %v4651, %v4811
        %v4813 = vpop.f32.mrb[0].mxu0
        %4814 = vmatprep.mubr.bf16.mxu0 %v3910
        %4815 = vmatmul.mubr.bf16.gmra.mrb[0].mxu0 %v3909
        %v4816 = vpop.f32.mrb[0].mxu0
        %v4817 = vadd.f32 %v4656, %v4816
        %v4818 = vpop.f32.mrb[0].mxu0
        %v4819 = vpop.f32.mrb[0].mxu0
        %v4820 = vadd.f32 %v4659, %v4819
        %v4821 = vpop.f32.mrb[0].mxu0
        %4822 = vmatprep.mubr.bf16.mxu0 %v3919
        %4823 = vmatmul.mubr.bf16.gmra.mrb[0].mxu0 %v3918
        %v4824 = vpop.f32.mrb[0].mxu0
        %v4825 = vadd.f32 %v4664, %v4824
        %v4826 = vpop.f32.mrb[0].mxu0
        %v4827 = vpop.f32.mrb[0].mxu0
        %v4828 = vadd.f32 %v4667, %v4827
        %v4829 = vpop.f32.mrb[0].mxu0
        %4830 = vmatprep.mubr.bf16.mxu0 %v3928
        %4831 = vmatmul.mubr.bf16.gmra.mrb[0].mxu0 %v3927
        %v4832 = vpop.f32.mrb[0].mxu0
        %v4833 = vadd.f32 %v4672, %v4832
        %v4834 = vpop.f32.mrb[0].mxu0
        %v4835 = vpop.f32.mrb[0].mxu0
        %v4836 = vadd.f32 %v4675, %v4835
        %v4837 = vpop.f32.mrb[0].mxu0
        %4838 = vdwg.mxu0
        %4839 = vmatprep.subr.bf16.mxu0 0
        %4840 = vmatpush1.bf16.msra.mxu0 %v4405
        %4841 = vmatprep.subr.bf16.mxu0 0
        %4842 = vmatpush1.bf16.msra.mxu0 %v4406
        %4843 = vmatprep.subr.bf16.mxu0 0
        %4844 = vmatpush1.bf16.msra.mxu0 %v4407
        %4845 = vmatprep.subr.bf16.mxu0 0
        %4846 = vmatpush1.bf16.msra.mxu0 %v4408
        %4847 = vmatprep.subr.bf16.mxu0 0
        %4848 = vmatpush1.bf16.msra.mxu0 %v4409
        %4849 = vmatprep.subr.bf16.mxu0 0
        %4850 = vmatpush1.bf16.msra.mxu0 %v4410
        %4851 = vmatprep.subr.bf16.mxu0 0
        %4852 = vmatpush1.bf16.msra.mxu0 %v4411
        %4853 = vmatprep.subr.bf16.mxu0 0
        %4854 = vmatpush1.bf16.msra.mxu0 %v4412
        %4855 = vmatprep.subr.bf16.mxu0 0
        %4856 = vmatpush1.bf16.msra.mxu0 %v4413
        %4857 = vmatprep.subr.bf16.mxu0 0
        %4858 = vmatpush1.bf16.msra.mxu0 %v4414
        %4859 = vmatprep.subr.bf16.mxu0 0
        %4860 = vmatpush1.bf16.msra.mxu0 %v4415
        %4861 = vmatprep.subr.bf16.mxu0 0
        %4862 = vmatpush1.bf16.msra.mxu0 %v4416
        %4863 = vmatprep.subr.bf16.mxu0 0
        %4864 = vmatpush1.bf16.msra.mxu0 %v4417
        %4865 = vmatprep.subr.bf16.mxu0 0
        %4866 = vmatpush1.bf16.msra.mxu0 %v4418
        %4867 = vmatprep.subr.bf16.mxu0 0
        %4868 = vmatpush1.bf16.msra.mxu0 %v4419
        %4869 = vmatprep.subr.bf16.mxu0 0
        %4870 = vmatpush1.bf16.msra.mxu0 %v4420
        %4871 = vmatprep.mubr.bf16.mxu0 %v3795
        %4872 = vmatmul.mubr.bf16.gmra.mrb[0].mxu0 %v3794
        %v4873 = vpop.f32.mrb[0].mxu0
        %v4874 = vadd.f32 %v4713, %v4873
        %v4875 = vpop.f32.mrb[0].mxu0
        %v4876 = vpop.f32.mrb[0].mxu0
        %v4877 = vadd.f32 %v4716, %v4876
        %v4878 = vpop.f32.mrb[0].mxu0
        %4879 = vmatprep.mubr.bf16.mxu0 %v3804
        %4880 = vmatmul.mubr.bf16.gmra.mrb[0].mxu0 %v3803
        %v4881 = vpop.f32.mrb[0].mxu0
        %v4882 = vadd.f32 %v4721, %v4881
        %v4883 = vpop.f32.mrb[0].mxu0
        %v4884 = vpop.f32.mrb[0].mxu0
        %v4885 = vadd.f32 %v4724, %v4884
        %v4886 = vpop.f32.mrb[0].mxu0
        %4887 = vmatprep.mubr.bf16.mxu0 %v3813
        %4888 = vmatmul.mubr.bf16.gmra.mrb[0].mxu0 %v3812
        %v4889 = vpop.f32.mrb[0].mxu0
        %v4890 = vadd.f32 %v4729, %v4889
        %v4891 = vpop.f32.mrb[0].mxu0
        %v4892 = vpop.f32.mrb[0].mxu0
        %v4893 = vadd.f32 %v4732, %v4892
        %v4894 = vpop.f32.mrb[0].mxu0
        %4895 = vmatprep.mubr.bf16.mxu0 %v3822
        %4896 = vmatmul.mubr.bf16.gmra.mrb[0].mxu0 %v3821
        %v4897 = vpop.f32.mrb[0].mxu0
        %v4898 = vadd.f32 %v4737, %v4897
        %v4899 = vpop.f32.mrb[0].mxu0
        %v4900 = vpop.f32.mrb[0].mxu0
        %v4901 = vadd.f32 %v4740, %v4900
        %v4902 = vpop.f32.mrb[0].mxu0
        %4903 = vmatprep.mubr.bf16.mxu0 %v3831
        %4904 = vmatmul.mubr.bf16.gmra.mrb[0].mxu0 %v3830
        %v4905 = vpop.f32.mrb[0].mxu0
        %v4906 = vadd.f32 %v4745, %v4905
        %v4907 = vpop.f32.mrb[0].mxu0
        %v4908 = vpop.f32.mrb[0].mxu0
        %v4909 = vadd.f32 %v4748, %v4908
        %v4910 = vpop.f32.mrb[0].mxu0
        %4911 = vmatprep.mubr.bf16.mxu0 %v3840
        %4912 = vmatmul.mubr.bf16.gmra.mrb[0].mxu0 %v3839
        %v4913 = vpop.f32.mrb[0].mxu0
        %v4914 = vadd.f32 %v4753, %v4913
        %v4915 = vpop.f32.mrb[0].mxu0
        %v4916 = vpop.f32.mrb[0].mxu0
        %v4917 = vadd.f32 %v4756, %v4916
        %v4918 = vpop.f32.mrb[0].mxu0
        %4919 = vmatprep.mubr.bf16.mxu0 %v3849
        %4920 = vmatmul.mubr.bf16.gmra.mrb[0].mxu0 %v3848
        %v4921 = vpop.f32.mrb[0].mxu0
        %v4922 = vadd.f32 %v4761, %v4921
        %v4923 = vpop.f32.mrb[0].mxu0
        %v4924 = vpop.f32.mrb[0].mxu0
        %v4925 = vadd.f32 %v4764, %v4924
        %v4926 = vpop.f32.mrb[0].mxu0
        %4927 = vmatprep.mubr.bf16.mxu0 %v3858
        %4928 = vmatmul.mubr.bf16.gmra.mrb[0].mxu0 %v3857
        %v4929 = vpop.f32.mrb[0].mxu0
        %v4930 = vadd.f32 %v4769, %v4929
        %v4931 = vpop.f32.mrb[0].mxu0
        %v4932 = vpop.f32.mrb[0].mxu0
        %v4933 = vadd.f32 %v4772, %v4932
        %v4934 = vpop.f32.mrb[0].mxu0
        %4935 = vmatprep.mubr.bf16.mxu0 %v3867
        %4936 = vmatmul.mubr.bf16.gmra.mrb[0].mxu0 %v3866
        %v4937 = vpop.f32.mrb[0].mxu0
        %v4938 = vadd.f32 %v4777, %v4937
        %v4939 = vpop.f32.mrb[0].mxu0
        %v4940 = vpop.f32.mrb[0].mxu0
        %v4941 = vadd.f32 %v4780, %v4940
        %v4942 = vpop.f32.mrb[0].mxu0
        %4943 = vmatprep.mubr.bf16.mxu0 %v3876
        %4944 = vmatmul.mubr.bf16.gmra.mrb[0].mxu0 %v3875
        %v4945 = vpop.f32.mrb[0].mxu0
        %v4946 = vadd.f32 %v4785, %v4945
        %v4947 = vpop.f32.mrb[0].mxu0
        %v4948 = vpop.f32.mrb[0].mxu0
        %v4949 = vadd.f32 %v4788, %v4948
        %v4950 = vpop.f32.mrb[0].mxu0
        %4951 = vmatprep.mubr.bf16.mxu0 %v3885
        %4952 = vmatmul.mubr.bf16.gmra.mrb[0].mxu0 %v3884
        %v4953 = vpop.f32.mrb[0].mxu0
        %v4954 = vadd.f32 %v4793, %v4953
        %v4955 = vpop.f32.mrb[0].mxu0
        %v4956 = vpop.f32.mrb[0].mxu0
        %v4957 = vadd.f32 %v4796, %v4956
        %v4958 = vpop.f32.mrb[0].mxu0
        %4959 = vmatprep.mubr.bf16.mxu0 %v3894
        %4960 = vmatmul.mubr.bf16.gmra.mrb[0].mxu0 %v3893
        %v4961 = vpop.f32.mrb[0].mxu0
        %v4962 = vadd.f32 %v4801, %v4961
        %v4963 = vpop.f32.mrb[0].mxu0
        %v4964 = vpop.f32.mrb[0].mxu0
        %v4965 = vadd.f32 %v4804, %v4964
        %v4966 = vpop.f32.mrb[0].mxu0
        %4967 = vmatprep.mubr.bf16.mxu0 %v3903
        %4968 = vmatmul.mubr.bf16.gmra.mrb[0].mxu0 %v3902
        %v4969 = vpop.f32.mrb[0].mxu0
        %v4970 = vadd.f32 %v4809, %v4969
        %v4971 = vpop.f32.mrb[0].mxu0
        %v4972 = vpop.f32.mrb[0].mxu0
        %v4973 = vadd.f32 %v4812, %v4972
        %v4974 = vpop.f32.mrb[0].mxu0
        %4975 = vmatprep.mubr.bf16.mxu0 %v3912
        %4976 = vmatmul.mubr.bf16.gmra.mrb[0].mxu0 %v3911
        %v4977 = vpop.f32.mrb[0].mxu0
        %v4978 = vadd.f32 %v4817, %v4977
        %v4979 = vpop.f32.mrb[0].mxu0
        %v4980 = vpop.f32.mrb[0].mxu0
        %v4981 = vadd.f32 %v4820, %v4980
        %v4982 = vpop.f32.mrb[0].mxu0
        %4983 = vmatprep.mubr.bf16.mxu0 %v3921
        %4984 = vmatmul.mubr.bf16.gmra.mrb[0].mxu0 %v3920
        %v4985 = vpop.f32.mrb[0].mxu0
        %v4986 = vadd.f32 %v4825, %v4985
        %v4987 = vpop.f32.mrb[0].mxu0
        %v4988 = vpop.f32.mrb[0].mxu0
        %v4989 = vadd.f32 %v4828, %v4988
        %v4990 = vpop.f32.mrb[0].mxu0
        %4991 = vmatprep.mubr.bf16.mxu0 %v3930
        %4992 = vmatmul.mubr.bf16.gmra.mrb[0].mxu0 %v3929
        %v4993 = vpop.f32.mrb[0].mxu0
        %v4994 = vadd.f32 %v4833, %v4993
        %v4995 = vpop.f32.mrb[0].mxu0
        %v4996 = vpop.f32.mrb[0].mxu0
        %v4997 = vadd.f32 %v4836, %v4996
        %v4998 = vpop.f32.mrb[0].mxu0
        %4999 = vdwg.mxu0
        %5000 = vmatprep.subr.bf16.mxu0 0
        %5001 = vmatpush1.bf16.msra.mxu0 %v4421
        %5002 = vmatprep.subr.bf16.mxu0 0
        %5003 = vmatpush1.bf16.msra.mxu0 %v4422
        %5004 = vmatprep.subr.bf16.mxu0 0
        %5005 = vmatpush1.bf16.msra.mxu0 %v4423
        %5006 = vmatprep.subr.bf16.mxu0 0
        %5007 = vmatpush1.bf16.msra.mxu0 %v4424
        %5008 = vmatprep.subr.bf16.mxu0 0
        %5009 = vmatpush1.bf16.msra.mxu0 %v4425
        %5010 = vmatprep.subr.bf16.mxu0 0
        %5011 = vmatpush1.bf16.msra.mxu0 %v4426
        %5012 = vmatprep.subr.bf16.mxu0 0
        %5013 = vmatpush1.bf16.msra.mxu0 %v4427
        %5014 = vmatprep.subr.bf16.mxu0 0
        %5015 = vmatpush1.bf16.msra.mxu0 %v4428
        %5016 = vmatprep.subr.bf16.mxu0 0
        %5017 = vmatpush1.bf16.msra.mxu0 %v4429
        %5018 = vmatprep.subr.bf16.mxu0 0
        %5019 = vmatpush1.bf16.msra.mxu0 %v4430
        %5020 = vmatprep.subr.bf16.mxu0 0
        %5021 = vmatpush1.bf16.msra.mxu0 %v4431
        %5022 = vmatprep.subr.bf16.mxu0 0
        %5023 = vmatpush1.bf16.msra.mxu0 %v4432
        %5024 = vmatprep.subr.bf16.mxu0 0
        %5025 = vmatpush1.bf16.msra.mxu0 %v4433
        %5026 = vmatprep.subr.bf16.mxu0 0
        %5027 = vmatpush1.bf16.msra.mxu0 %v4434
        %5028 = vmatprep.subr.bf16.mxu0 0
        %5029 = vmatpush1.bf16.msra.mxu0 %v4435
        %5030 = vmatprep.subr.bf16.mxu0 0
        %5031 = vmatpush1.bf16.msra.mxu0 %v4436
        %5032 = vmatprep.mubr.bf16.mxu0 %v3797
        %5033 = vmatmul.mubr.bf16.gmra.mrb[0].mxu0 %v3796
        %v5034 = vpop.f32.mrb[0].mxu0
        %v5035 = vadd.f32 %v4874, %v5034
        %v5036 = vpop.f32.mrb[0].mxu0
        %v5037 = vpop.f32.mrb[0].mxu0
        %v5038 = vadd.f32 %v4877, %v5037
        %v5039 = vpop.f32.mrb[0].mxu0
        %5040 = vmatprep.mubr.bf16.mxu0 %v3806
        %5041 = vmatmul.mubr.bf16.gmra.mrb[0].mxu0 %v3805
        %v5042 = vpop.f32.mrb[0].mxu0
        %v5043 = vadd.f32 %v4882, %v5042
        %v5044 = vpop.f32.mrb[0].mxu0
        %v5045 = vpop.f32.mrb[0].mxu0
        %v5046 = vadd.f32 %v4885, %v5045
        %v5047 = vpop.f32.mrb[0].mxu0
        %5048 = vmatprep.mubr.bf16.mxu0 %v3815
        %5049 = vmatmul.mubr.bf16.gmra.mrb[0].mxu0 %v3814
        %v5050 = vpop.f32.mrb[0].mxu0
        %v5051 = vadd.f32 %v4890, %v5050
        %v5052 = vpop.f32.mrb[0].mxu0
        %v5053 = vpop.f32.mrb[0].mxu0
        %v5054 = vadd.f32 %v4893, %v5053
        %v5055 = vpop.f32.mrb[0].mxu0
        %5056 = vmatprep.mubr.bf16.mxu0 %v3824
        %5057 = vmatmul.mubr.bf16.gmra.mrb[0].mxu0 %v3823
        %v5058 = vpop.f32.mrb[0].mxu0
        %v5059 = vadd.f32 %v4898, %v5058
        %v5060 = vpop.f32.mrb[0].mxu0
        %v5061 = vpop.f32.mrb[0].mxu0
        %v5062 = vadd.f32 %v4901, %v5061
        %v5063 = vpop.f32.mrb[0].mxu0
        %5064 = vmatprep.mubr.bf16.mxu0 %v3833
        %5065 = vmatmul.mubr.bf16.gmra.mrb[0].mxu0 %v3832
        %v5066 = vpop.f32.mrb[0].mxu0
        %v5067 = vadd.f32 %v4906, %v5066
        %v5068 = vpop.f32.mrb[0].mxu0
        %v5069 = vpop.f32.mrb[0].mxu0
        %v5070 = vadd.f32 %v4909, %v5069
        %v5071 = vpop.f32.mrb[0].mxu0
        %5072 = vmatprep.mubr.bf16.mxu0 %v3842
        %5073 = vmatmul.mubr.bf16.gmra.mrb[0].mxu0 %v3841
        %v5074 = vpop.f32.mrb[0].mxu0
        %v5075 = vadd.f32 %v4914, %v5074
        %v5076 = vpop.f32.mrb[0].mxu0
        %v5077 = vpop.f32.mrb[0].mxu0
        %v5078 = vadd.f32 %v4917, %v5077
        %v5079 = vpop.f32.mrb[0].mxu0
        %5080 = vmatprep.mubr.bf16.mxu0 %v3851
        %5081 = vmatmul.mubr.bf16.gmra.mrb[0].mxu0 %v3850
        %v5082 = vpop.f32.mrb[0].mxu0
        %v5083 = vadd.f32 %v4922, %v5082
        %v5084 = vpop.f32.mrb[0].mxu0
        %v5085 = vpop.f32.mrb[0].mxu0
        %v5086 = vadd.f32 %v4925, %v5085
        %v5087 = vpop.f32.mrb[0].mxu0
        %5088 = vmatprep.mubr.bf16.mxu0 %v3860
        %5089 = vmatmul.mubr.bf16.gmra.mrb[0].mxu0 %v3859
        %v5090 = vpop.f32.mrb[0].mxu0
        %v5091 = vadd.f32 %v4930, %v5090
        %v5092 = vpop.f32.mrb[0].mxu0
        %v5093 = vpop.f32.mrb[0].mxu0
        %v5094 = vadd.f32 %v4933, %v5093
        %v5095 = vpop.f32.mrb[0].mxu0
        %5096 = vmatprep.mubr.bf16.mxu0 %v3869
        %5097 = vmatmul.mubr.bf16.gmra.mrb[0].mxu0 %v3868
        %v5098 = vpop.f32.mrb[0].mxu0
        %v5099 = vadd.f32 %v4938, %v5098
        %v5100 = vpop.f32.mrb[0].mxu0
        %v5101 = vpop.f32.mrb[0].mxu0
        %v5102 = vadd.f32 %v4941, %v5101
        %v5103 = vpop.f32.mrb[0].mxu0
        %5104 = vmatprep.mubr.bf16.mxu0 %v3878
        %5105 = vmatmul.mubr.bf16.gmra.mrb[0].mxu0 %v3877
        %v5106 = vpop.f32.mrb[0].mxu0
        %v5107 = vadd.f32 %v4946, %v5106
        %v5108 = vpop.f32.mrb[0].mxu0
        %v5109 = vpop.f32.mrb[0].mxu0
        %v5110 = vadd.f32 %v4949, %v5109
        %v5111 = vpop.f32.mrb[0].mxu0
        %5112 = vmatprep.mubr.bf16.mxu0 %v3887
        %5113 = vmatmul.mubr.bf16.gmra.mrb[0].mxu0 %v3886
        %v5114 = vpop.f32.mrb[0].mxu0
        %v5115 = vadd.f32 %v4954, %v5114
        %v5116 = vpop.f32.mrb[0].mxu0
        %v5117 = vpop.f32.mrb[0].mxu0
        %v5118 = vadd.f32 %v4957, %v5117
        %v5119 = vpop.f32.mrb[0].mxu0
        %5120 = vmatprep.mubr.bf16.mxu0 %v3896
        %5121 = vmatmul.mubr.bf16.gmra.mrb[0].mxu0 %v3895
        %v5122 = vpop.f32.mrb[0].mxu0
        %v5123 = vadd.f32 %v4962, %v5122
        %v5124 = vpop.f32.mrb[0].mxu0
        %v5125 = vpop.f32.mrb[0].mxu0
        %v5126 = vadd.f32 %v4965, %v5125
        %v5127 = vpop.f32.mrb[0].mxu0
        %5128 = vmatprep.mubr.bf16.mxu0 %v3905
        %5129 = vmatmul.mubr.bf16.gmra.mrb[0].mxu0 %v3904
        %v5130 = vpop.f32.mrb[0].mxu0
        %v5131 = vadd.f32 %v4970, %v5130
        %v5132 = vpop.f32.mrb[0].mxu0
        %v5133 = vpop.f32.mrb[0].mxu0
        %v5134 = vadd.f32 %v4973, %v5133
        %v5135 = vpop.f32.mrb[0].mxu0
        %5136 = vmatprep.mubr.bf16.mxu0 %v3914
        %5137 = vmatmul.mubr.bf16.gmra.mrb[0].mxu0 %v3913
        %v5138 = vpop.f32.mrb[0].mxu0
        %v5139 = vadd.f32 %v4978, %v5138
        %v5140 = vpop.f32.mrb[0].mxu0
        %v5141 = vpop.f32.mrb[0].mxu0
        %v5142 = vadd.f32 %v4981, %v5141
        %v5143 = vpop.f32.mrb[0].mxu0
        %5144 = vmatprep.mubr.bf16.mxu0 %v3923
        %5145 = vmatmul.mubr.bf16.gmra.mrb[0].mxu0 %v3922
        %v5146 = vpop.f32.mrb[0].mxu0
        %v5147 = vadd.f32 %v4986, %v5146
        %v5148 = vpop.f32.mrb[0].mxu0
        %v5149 = vpop.f32.mrb[0].mxu0
        %v5150 = vadd.f32 %v4989, %v5149
        %v5151 = vpop.f32.mrb[0].mxu0
        %5152 = vmatprep.mubr.bf16.mxu0 %v3932
        %5153 = vmatmul.mubr.bf16.gmra.mrb[0].mxu0 %v3931
        %v5154 = vpop.f32.mrb[0].mxu0
        %v5155 = vadd.f32 %v4994, %v5154
        %v5156 = vpop.f32.mrb[0].mxu0
        %v5157 = vpop.f32.mrb[0].mxu0
        %v5158 = vadd.f32 %v4997, %v5157
        %v5159 = vpop.f32.mrb[0].mxu0
        %5160 = vdwg.mxu0
        %5161 = vmatprep.subr.bf16.mxu0 0
        %5162 = vmatpush1.bf16.msra.mxu0 %v4437
        %5163 = vmatprep.subr.bf16.mxu0 0
        %5164 = vmatpush1.bf16.msra.mxu0 %v4438
        %5165 = vmatprep.subr.bf16.mxu0 0
        %5166 = vmatpush1.bf16.msra.mxu0 %v4439
        %5167 = vmatprep.subr.bf16.mxu0 0
        %5168 = vmatpush1.bf16.msra.mxu0 %v4440
        %5169 = vmatprep.subr.bf16.mxu0 0
        %5170 = vmatpush1.bf16.msra.mxu0 %v4441
        %5171 = vmatprep.subr.bf16.mxu0 0
        %5172 = vmatpush1.bf16.msra.mxu0 %v4442
        %5173 = vmatprep.subr.bf16.mxu0 0
        %5174 = vmatpush1.bf16.msra.mxu0 %v4443
        %5175 = vmatprep.subr.bf16.mxu0 0
        %5176 = vmatpush1.bf16.msra.mxu0 %v4444
        %5177 = vmatprep.subr.bf16.mxu0 0
        %5178 = vmatpush1.bf16.msra.mxu0 0
        %5179 = vmatprep.subr.bf16.mxu0 0
        %5180 = vmatpush1.bf16.msra.mxu0 0
        %5181 = vmatprep.subr.bf16.mxu0 0
        %5182 = vmatpush1.bf16.msra.mxu0 0
        %5183 = vmatprep.subr.bf16.mxu0 0
        %5184 = vmatpush1.bf16.msra.mxu0 0
        %5185 = vmatprep.subr.bf16.mxu0 0
        %5186 = vmatpush1.bf16.msra.mxu0 0
        %5187 = vmatprep.subr.bf16.mxu0 0
        %5188 = vmatpush1.bf16.msra.mxu0 0
        %5189 = vmatprep.subr.bf16.mxu0 0
        %5190 = vmatpush1.bf16.msra.mxu0 0
        %5191 = vmatprep.subr.bf16.mxu0 0
        %5192 = vmatpush1.bf16.msra.mxu0 0
        %5193 = vmatprep.mubr.bf16.mxu0 0
        %5194 = vmatmul.mubr.bf16.gmra.mrb[0].mxu0 %v3798
        %v5195 = vpop.f32.mrb[0].mxu0
        %v5196 = vadd.f32 %v5035, %v5195
        %v5197 = vpop.f32.mrb[0].mxu0
        %v5198 = vpop.f32.mrb[0].mxu0
        %v5199 = vadd.f32 %v5038, %v5198
        %v5200 = vpop.f32.mrb[0].mxu0
        %5201 = vmatprep.mubr.bf16.mxu0 0
        %5202 = vmatmul.mubr.bf16.gmra.mrb[0].mxu0 %v3807
        %v5203 = vpop.f32.mrb[0].mxu0
        %v5204 = vadd.f32 %v5043, %v5203
        %v5205 = vpop.f32.mrb[0].mxu0
        %v5206 = vpop.f32.mrb[0].mxu0
        %v5207 = vadd.f32 %v5046, %v5206
        %v5208 = vpop.f32.mrb[0].mxu0
        %5209 = vmatprep.mubr.bf16.mxu0 0
        %5210 = vmatmul.mubr.bf16.gmra.mrb[0].mxu0 %v3816
        %v5211 = vpop.f32.mrb[0].mxu0
        %v5212 = vadd.f32 %v5051, %v5211
        %v5213 = vpop.f32.mrb[0].mxu0
        %v5214 = vpop.f32.mrb[0].mxu0
        %v5215 = vadd.f32 %v5054, %v5214
        %v5216 = vpop.f32.mrb[0].mxu0
        %5217 = vmatprep.mubr.bf16.mxu0 0
        %5218 = vmatmul.mubr.bf16.gmra.mrb[0].mxu0 %v3825
        %v5219 = vpop.f32.mrb[0].mxu0
        %v5220 = vadd.f32 %v5059, %v5219
        %v5221 = vpop.f32.mrb[0].mxu0
        %v5222 = vpop.f32.mrb[0].mxu0
        %v5223 = vadd.f32 %v5062, %v5222
        %v5224 = vpop.f32.mrb[0].mxu0
        %5225 = vmatprep.mubr.bf16.mxu0 0
        %5226 = vmatmul.mubr.bf16.gmra.mrb[0].mxu0 %v3834
        %v5227 = vpop.f32.mrb[0].mxu0
        %v5228 = vadd.f32 %v5067, %v5227
        %v5229 = vpop.f32.mrb[0].mxu0
        %v5230 = vpop.f32.mrb[0].mxu0
        %v5231 = vadd.f32 %v5070, %v5230
        %v5232 = vpop.f32.mrb[0].mxu0
        %5233 = vmatprep.mubr.bf16.mxu0 0
        %5234 = vmatmul.mubr.bf16.gmra.mrb[0].mxu0 %v3843
        %v5235 = vpop.f32.mrb[0].mxu0
        %v5236 = vadd.f32 %v5075, %v5235
        %v5237 = vpop.f32.mrb[0].mxu0
        %v5238 = vpop.f32.mrb[0].mxu0
        %v5239 = vadd.f32 %v5078, %v5238
        %v5240 = vpop.f32.mrb[0].mxu0
        %5241 = vmatprep.mubr.bf16.mxu0 0
        %5242 = vmatmul.mubr.bf16.gmra.mrb[0].mxu0 %v3852
        %v5243 = vpop.f32.mrb[0].mxu0
        %v5244 = vadd.f32 %v5083, %v5243
        %v5245 = vpop.f32.mrb[0].mxu0
        %v5246 = vpop.f32.mrb[0].mxu0
        %v5247 = vadd.f32 %v5086, %v5246
        %v5248 = vpop.f32.mrb[0].mxu0
        %5249 = vmatprep.mubr.bf16.mxu0 0
        %5250 = vmatmul.mubr.bf16.gmra.mrb[0].mxu0 %v3861
        %v5251 = vpop.f32.mrb[0].mxu0
        %v5252 = vadd.f32 %v5091, %v5251
        %v5253 = vpop.f32.mrb[0].mxu0
        %v5254 = vpop.f32.mrb[0].mxu0
        %v5255 = vadd.f32 %v5094, %v5254
        %v5256 = vpop.f32.mrb[0].mxu0
        %5257 = vmatprep.mubr.bf16.mxu0 0
        %5258 = vmatmul.mubr.bf16.gmra.mrb[0].mxu0 %v3870
        %v5259 = vpop.f32.mrb[0].mxu0
        %v5260 = vadd.f32 %v5099, %v5259
        %v5261 = vpop.f32.mrb[0].mxu0
        %v5262 = vpop.f32.mrb[0].mxu0
        %v5263 = vadd.f32 %v5102, %v5262
        %v5264 = vpop.f32.mrb[0].mxu0
        %5265 = vmatprep.mubr.bf16.mxu0 0
        %5266 = vmatmul.mubr.bf16.gmra.mrb[0].mxu0 %v3879
        %v5267 = vpop.f32.mrb[0].mxu0
        %v5268 = vadd.f32 %v5107, %v5267
        %v5269 = vpop.f32.mrb[0].mxu0
        %v5270 = vpop.f32.mrb[0].mxu0
        %v5271 = vadd.f32 %v5110, %v5270
        %v5272 = vpop.f32.mrb[0].mxu0
        %5273 = vmatprep.mubr.bf16.mxu0 0
        %5274 = vmatmul.mubr.bf16.gmra.mrb[0].mxu0 %v3888
        %v5275 = vpop.f32.mrb[0].mxu0
        %v5276 = vadd.f32 %v5115, %v5275
        %v5277 = vpop.f32.mrb[0].mxu0
        %v5278 = vpop.f32.mrb[0].mxu0
        %v5279 = vadd.f32 %v5118, %v5278
        %v5280 = vpop.f32.mrb[0].mxu0
        %5281 = vmatprep.mubr.bf16.mxu0 0
        %5282 = vmatmul.mubr.bf16.gmra.mrb[0].mxu0 %v3897
        %v5283 = vpop.f32.mrb[0].mxu0
        %v5284 = vadd.f32 %v5123, %v5283
        %v5285 = vpop.f32.mrb[0].mxu0
        %v5286 = vpop.f32.mrb[0].mxu0
        %v5287 = vadd.f32 %v5126, %v5286
        %v5288 = vpop.f32.mrb[0].mxu0
        %5289 = vmatprep.mubr.bf16.mxu0 0
        %5290 = vmatmul.mubr.bf16.gmra.mrb[0].mxu0 %v3906
        %v5291 = vpop.f32.mrb[0].mxu0
        %v5292 = vadd.f32 %v5131, %v5291
        %v5293 = vpop.f32.mrb[0].mxu0
        %v5294 = vpop.f32.mrb[0].mxu0
        %v5295 = vadd.f32 %v5134, %v5294
        %v5296 = vpop.f32.mrb[0].mxu0
        %5297 = vmatprep.mubr.bf16.mxu0 0
        %5298 = vmatmul.mubr.bf16.gmra.mrb[0].mxu0 %v3915
        %v5299 = vpop.f32.mrb[0].mxu0
        %v5300 = vadd.f32 %v5139, %v5299
        %v5301 = vpop.f32.mrb[0].mxu0
        %v5302 = vpop.f32.mrb[0].mxu0
        %v5303 = vadd.f32 %v5142, %v5302
        %v5304 = vpop.f32.mrb[0].mxu0
        %5305 = vmatprep.mubr.bf16.mxu0 0
        %5306 = vmatmul.mubr.bf16.gmra.mrb[0].mxu0 %v3924
        %v5307 = vpop.f32.mrb[0].mxu0
        %v5308 = vadd.f32 %v5147, %v5307
        %v5309 = vpop.f32.mrb[0].mxu0
        %v5310 = vpop.f32.mrb[0].mxu0
        %v5311 = vadd.f32 %v5150, %v5310
        %v5312 = vpop.f32.mrb[0].mxu0
        %5313 = vmatprep.mubr.bf16.mxu0 0
        %5314 = vmatmul.mubr.bf16.gmra.mrb[0].mxu0 %v3933
        %v5315 = vpop.f32.mrb[0].mxu0
        %v5316 = vadd.f32 %v5155, %v5315
        %v5317 = vpop.f32.mrb[0].mxu0
        %v5318 = vpop.f32.mrb[0].mxu0
        %v5319 = vadd.f32 %v5158, %v5318
        %v5320 = vpop.f32.mrb[0].mxu0
        %5321 = vdwg.mxu0
        %v5322 = vmax.f32 %v5196, 0.0
        %v5323 = vmax.f32 %v5199, 0.0
        %v5324 = vmax.f32 %v5204, 0.0
        %v5325 = vmax.f32 %v5207, 0.0
        %v5326 = vmax.f32 %v5212, 0.0
        %v5327 = vmax.f32 %v5215, 0.0
        %v5328 = vmax.f32 %v5220, 0.0
        %v5329 = vmax.f32 %v5223, 0.0
        %v5330 = vmax.f32 %v5228, 0.0
        %v5331 = vmax.f32 %v5231, 0.0
        %v5332 = vmax.f32 %v5236, 0.0
        %v5333 = vmax.f32 %v5239, 0.0
        %v5334 = vmax.f32 %v5244, 0.0
        %v5335 = vmax.f32 %v5247, 0.0
        %v5336 = vmax.f32 %v5252, 0.0
        %v5337 = vmax.f32 %v5255, 0.0
        %v5338 = vmax.f32 %v5260, 0.0
        %v5339 = vmax.f32 %v5263, 0.0
        %v5340 = vmax.f32 %v5268, 0.0
        %v5341 = vmax.f32 %v5271, 0.0
        %v5342 = vmax.f32 %v5276, 0.0
        %v5343 = vmax.f32 %v5279, 0.0
        %v5344 = vmax.f32 %v5284, 0.0
        %v5345 = vmax.f32 %v5287, 0.0
        %v5346 = vmax.f32 %v5292, 0.0
        %v5347 = vmax.f32 %v5295, 0.0
        %v5348 = vmax.f32 %v5300, 0.0
        %v5349 = vmax.f32 %v5303, 0.0
        %v5350 = vmax.f32 %v5308, 0.0
        %v5351 = vmax.f32 %v5311, 0.0
        %v5352 = vmax.f32 %v5316, 0.0
        %v5353 = vmax.f32 %v5319, 0.0
        %v5354 = vpack.c.bf16 %v5323, %v5322
        %v5355 = vpack.c.bf16 %v5325, %v5324
        %v5356 = vpack.c.bf16 %v5327, %v5326
        %v5357 = vpack.c.bf16 %v5329, %v5328
        %v5358 = vpack.c.bf16 %v5331, %v5330
        %v5359 = vpack.c.bf16 %v5333, %v5332
        %v5360 = vpack.c.bf16 %v5335, %v5334
        %v5361 = vpack.c.bf16 %v5337, %v5336
        %v5362 = vpack.c.bf16 %v5339, %v5338
        %v5363 = vpack.c.bf16 %v5341, %v5340
        %v5364 = vpack.c.bf16 %v5343, %v5342
        %v5365 = vpack.c.bf16 %v5345, %v5344
        %v5366 = vpack.c.bf16 %v5347, %v5346
        %v5367 = vpack.c.bf16 %v5349, %v5348
        %v5368 = vpack.c.bf16 %v5351, %v5350
        %v5369 = vpack.c.bf16 %v5353, %v5352
        %v5370 = vld [vmem:[#allocation10] sm:$0x3]
        %v5371 = vld [vmem:[#allocation15] sm:$0x1]
        %v5373 = vlaneseq
        %v5374 = vshrl.u32 %v5373, 7
        %v5375 = vsub.s32 0, %v5374
        %v5376 = vrot.slane %v5371, %v5375
        %vm5378 = vcmask 31744
        %v5380 = vsel %vm5378, %v5354, 0
        %v5383 = vsel %vm5378, %v5355, 0
        %v5386 = vsel %vm5378, %v5356, 0
        %v5389 = vsel %vm5378, %v5357, 0
        %v5392 = vsel %vm5378, %v5358, 0
        %v5395 = vsel %vm5378, %v5359, 0
        %v5398 = vsel %vm5378, %v5360, 0
        %v5401 = vsel %vm5378, %v5361, 0
        %v5404 = vsel %vm5378, %v5362, 0
        %v5407 = vsel %vm5378, %v5363, 0
        %v5410 = vsel %vm5378, %v5364, 0
        %v5413 = vsel %vm5378, %v5365, 0
        %v5416 = vsel %vm5378, %v5366, 0
        %v5419 = vsel %vm5378, %v5367, 0
        %v5422 = vsel %vm5378, %v5368, 0
        %v5425 = vsel %vm5378, %v5369, 0
        %vm5427 = vcmask 1041408
        %v5429 = vsel %vm5427, %v5370, 0
        %5431 = vmatprep.subr.bf16.mxu0 0
        %5432 = vmatpush1.bf16.msra.mxu0 %v5429
        %5433 = vmatprep.subr.bf16.mxu0 0
        %5434 = vmatpush1.bf16.msra.mxu0 0
        %5435 = vmatprep.subr.bf16.mxu0 0
        %5436 = vmatpush1.bf16.msra.mxu0 0
        %5437 = vmatprep.subr.bf16.mxu0 0
        %5438 = vmatpush1.bf16.msra.mxu0 0
        %5439 = vmatprep.subr.bf16.mxu0 0
        %5440 = vmatpush1.bf16.msra.mxu0 0
        %5441 = vmatprep.subr.bf16.mxu0 0
        %5442 = vmatpush1.bf16.msra.mxu0 0
        %5443 = vmatprep.subr.bf16.mxu0 0
        %5444 = vmatpush1.bf16.msra.mxu0 0
        %5445 = vmatprep.subr.bf16.mxu0 0
        %5446 = vmatpush1.bf16.msra.mxu0 0
        %5447 = vmatprep.subr.bf16.mxu0 0
        %5448 = vmatpush1.bf16.msra.mxu0 0
        %5449 = vmatprep.subr.bf16.mxu0 0
        %5450 = vmatpush1.bf16.msra.mxu0 0
        %5451 = vmatprep.subr.bf16.mxu0 0
        %5452 = vmatpush1.bf16.msra.mxu0 0
        %5453 = vmatprep.subr.bf16.mxu0 0
        %5454 = vmatpush1.bf16.msra.mxu0 0
        %5455 = vmatprep.subr.bf16.mxu0 0
        %5456 = vmatpush1.bf16.msra.mxu0 0
        %5457 = vmatprep.subr.bf16.mxu0 0
        %5458 = vmatpush1.bf16.msra.mxu0 0
        %5459 = vmatprep.subr.bf16.mxu0 0
        %5460 = vmatpush1.bf16.msra.mxu0 0
        %5461 = vmatprep.subr.bf16.mxu0 0
        %5462 = vmatpush1.bf16.msra.mxu0 0
        %5463 = vmatprep.mubr.bf16.mxu0 0
        %5464 = vmatmul.mubr.bf16.gmra.mrb[0].mxu0 %v5380
        %v5465 = vpop.f32.mrb[0].mxu0
        %v5466 = vadd.f32 %v5376, %v5465
        %v5467 = vpop.f32.mrb[0].mxu0
        %v5468 = vpop.f32.mrb[0].mxu0
        %v5469 = vadd.f32 %v5376, %v5468
        %v5470 = vpop.f32.mrb[0].mxu0
        %5471 = vmatprep.mubr.bf16.mxu0 0
        %5472 = vmatmul.mubr.bf16.gmra.mrb[0].mxu0 %v5383
        %v5473 = vpop.f32.mrb[0].mxu0
        %v5474 = vadd.f32 %v5376, %v5473
        %v5475 = vpop.f32.mrb[0].mxu0
        %v5476 = vpop.f32.mrb[0].mxu0
        %v5477 = vadd.f32 %v5376, %v5476
        %v5478 = vpop.f32.mrb[0].mxu0
        %5479 = vmatprep.mubr.bf16.mxu0 0
        %5480 = vmatmul.mubr.bf16.gmra.mrb[0].mxu0 %v5386
        %v5481 = vpop.f32.mrb[0].mxu0
        %v5482 = vadd.f32 %v5376, %v5481
        %v5483 = vpop.f32.mrb[0].mxu0
        %v5484 = vpop.f32.mrb[0].mxu0
        %v5485 = vadd.f32 %v5376, %v5484
        %v5486 = vpop.f32.mrb[0].mxu0
        %5487 = vmatprep.mubr.bf16.mxu0 0
        %5488 = vmatmul.mubr.bf16.gmra.mrb[0].mxu0 %v5389
        %v5489 = vpop.f32.mrb[0].mxu0
        %v5490 = vadd.f32 %v5376, %v5489
        %v5491 = vpop.f32.mrb[0].mxu0
        %v5492 = vpop.f32.mrb[0].mxu0
        %v5493 = vadd.f32 %v5376, %v5492
        %v5494 = vpop.f32.mrb[0].mxu0
        %5495 = vmatprep.mubr.bf16.mxu0 0
        %5496 = vmatmul.mubr.bf16.gmra.mrb[0].mxu0 %v5392
        %v5497 = vpop.f32.mrb[0].mxu0
        %v5498 = vadd.f32 %v5376, %v5497
        %v5499 = vpop.f32.mrb[0].mxu0
        %v5500 = vpop.f32.mrb[0].mxu0
        %v5501 = vadd.f32 %v5376, %v5500
        %v5502 = vpop.f32.mrb[0].mxu0
        %5503 = vmatprep.mubr.bf16.mxu0 0
        %5504 = vmatmul.mubr.bf16.gmra.mrb[0].mxu0 %v5395
        %v5505 = vpop.f32.mrb[0].mxu0
        %v5506 = vadd.f32 %v5376, %v5505
        %v5507 = vpop.f32.mrb[0].mxu0
        %v5508 = vpop.f32.mrb[0].mxu0
        %v5509 = vadd.f32 %v5376, %v5508
        %v5510 = vpop.f32.mrb[0].mxu0
        %5511 = vmatprep.mubr.bf16.mxu0 0
        %5512 = vmatmul.mubr.bf16.gmra.mrb[0].mxu0 %v5398
        %v5513 = vpop.f32.mrb[0].mxu0
        %v5514 = vadd.f32 %v5376, %v5513
        %v5515 = vpop.f32.mrb[0].mxu0
        %v5516 = vpop.f32.mrb[0].mxu0
        %v5517 = vadd.f32 %v5376, %v5516
        %v5518 = vpop.f32.mrb[0].mxu0
        %5519 = vmatprep.mubr.bf16.mxu0 0
        %5520 = vmatmul.mubr.bf16.gmra.mrb[0].mxu0 %v5401
        %v5521 = vpop.f32.mrb[0].mxu0
        %v5522 = vadd.f32 %v5376, %v5521
        %v5523 = vpop.f32.mrb[0].mxu0
        %v5524 = vpop.f32.mrb[0].mxu0
        %v5525 = vadd.f32 %v5376, %v5524
        %v5526 = vpop.f32.mrb[0].mxu0
        %5527 = vmatprep.mubr.bf16.mxu0 0
        %5528 = vmatmul.mubr.bf16.gmra.mrb[0].mxu0 %v5404
        %v5529 = vpop.f32.mrb[0].mxu0
        %v5530 = vadd.f32 %v5376, %v5529
        %v5531 = vpop.f32.mrb[0].mxu0
        %v5532 = vpop.f32.mrb[0].mxu0
        %v5533 = vadd.f32 %v5376, %v5532
        %v5534 = vpop.f32.mrb[0].mxu0
        %5535 = vmatprep.mubr.bf16.mxu0 0
        %5536 = vmatmul.mubr.bf16.gmra.mrb[0].mxu0 %v5407
        %v5537 = vpop.f32.mrb[0].mxu0
        %v5538 = vadd.f32 %v5376, %v5537
        %v5539 = vpop.f32.mrb[0].mxu0
        %v5540 = vpop.f32.mrb[0].mxu0
        %v5541 = vadd.f32 %v5376, %v5540
        %v5542 = vpop.f32.mrb[0].mxu0
        %5543 = vmatprep.mubr.bf16.mxu0 0
        %5544 = vmatmul.mubr.bf16.gmra.mrb[0].mxu0 %v5410
        %v5545 = vpop.f32.mrb[0].mxu0
        %v5546 = vadd.f32 %v5376, %v5545
        %v5547 = vpop.f32.mrb[0].mxu0
        %v5548 = vpop.f32.mrb[0].mxu0
        %v5549 = vadd.f32 %v5376, %v5548
        %v5550 = vpop.f32.mrb[0].mxu0
        %5551 = vmatprep.mubr.bf16.mxu0 0
        %5552 = vmatmul.mubr.bf16.gmra.mrb[0].mxu0 %v5413
        %v5553 = vpop.f32.mrb[0].mxu0
        %v5554 = vadd.f32 %v5376, %v5553
        %v5555 = vpop.f32.mrb[0].mxu0
        %v5556 = vpop.f32.mrb[0].mxu0
        %v5557 = vadd.f32 %v5376, %v5556
        %v5558 = vpop.f32.mrb[0].mxu0
        %5559 = vmatprep.mubr.bf16.mxu0 0
        %5560 = vmatmul.mubr.bf16.gmra.mrb[0].mxu0 %v5416
        %v5561 = vpop.f32.mrb[0].mxu0
        %v5562 = vadd.f32 %v5376, %v5561
        %v5563 = vpop.f32.mrb[0].mxu0
        %v5564 = vpop.f32.mrb[0].mxu0
        %v5565 = vadd.f32 %v5376, %v5564
        %v5566 = vpop.f32.mrb[0].mxu0
        %5567 = vmatprep.mubr.bf16.mxu0 0
        %5568 = vmatmul.mubr.bf16.gmra.mrb[0].mxu0 %v5419
        %v5569 = vpop.f32.mrb[0].mxu0
        %v5570 = vadd.f32 %v5376, %v5569
        %v5571 = vpop.f32.mrb[0].mxu0
        %v5572 = vpop.f32.mrb[0].mxu0
        %v5573 = vadd.f32 %v5376, %v5572
        %v5574 = vpop.f32.mrb[0].mxu0
        %5575 = vmatprep.mubr.bf16.mxu0 0
        %5576 = vmatmul.mubr.bf16.gmra.mrb[0].mxu0 %v5422
        %v5577 = vpop.f32.mrb[0].mxu0
        %v5578 = vadd.f32 %v5376, %v5577
        %v5579 = vpop.f32.mrb[0].mxu0
        %v5580 = vpop.f32.mrb[0].mxu0
        %v5581 = vadd.f32 %v5376, %v5580
        %v5582 = vpop.f32.mrb[0].mxu0
        %5583 = vmatprep.mubr.bf16.mxu0 0
        %5584 = vmatmul.mubr.bf16.gmra.mrb[0].mxu0 %v5425
        %v5585 = vpop.f32.mrb[0].mxu0
        %v5586 = vadd.f32 %v5376, %v5585
        %v5587 = vpop.f32.mrb[0].mxu0
        %v5588 = vpop.f32.mrb[0].mxu0
        %v5589 = vadd.f32 %v5376, %v5588
        %v5590 = vpop.f32.mrb[0].mxu0
        %5591 = vdwg.mxu0
        %v5592 = vunpack.c.l.bf16 %v377
        %v5593 = vunpack.c.l.bf16 %v378
        %v5594 = vunpack.c.l.bf16 %v379
        %v5595 = vunpack.c.l.bf16 %v380
        %v5596 = vunpack.c.l.bf16 %v381
        %v5597 = vunpack.c.l.bf16 %v382
        %v5598 = vunpack.c.l.bf16 %v383
        %v5599 = vunpack.c.l.bf16 %v384
        %v5600 = vunpack.c.l.bf16 %v385
        %v5601 = vunpack.c.l.bf16 %v386
        %v5602 = vunpack.c.l.bf16 %v387
        %v5603 = vunpack.c.l.bf16 %v388
        %v5604 = vunpack.c.l.bf16 %v389
        %v5605 = vunpack.c.l.bf16 %v390
        %v5606 = vunpack.c.l.bf16 %v391
        %v5607 = vunpack.c.l.bf16 %v392
        %v5608 = vunpack.c.l.bf16 %v393
        %v5609 = vunpack.c.l.bf16 %v394
        %v5610 = vunpack.c.l.bf16 %v395
        %v5611 = vunpack.c.l.bf16 %v396
        %v5612 = vunpack.c.l.bf16 %v397
        %v5613 = vunpack.c.l.bf16 %v398
        %v5614 = vunpack.c.l.bf16 %v399
        %v5615 = vunpack.c.l.bf16 %v400
        %v5616 = vunpack.c.l.bf16 %v401
        %v5617 = vunpack.c.l.bf16 %v402
        %v5618 = vunpack.c.l.bf16 %v403
        %v5619 = vunpack.c.l.bf16 %v404
        %v5620 = vunpack.c.l.bf16 %v405
        %v5621 = vunpack.c.l.bf16 %v406
        %v5622 = vunpack.c.l.bf16 %v407
        %v5623 = vunpack.c.l.bf16 %v408
        %v5624 = vadd.f32 %v5466, %v5592
        %v5625 = vadd.f32 %v5469, %v5593
        %v5626 = vadd.f32 %v5474, %v5594
        %v5627 = vadd.f32 %v5477, %v5595
        %v5628 = vadd.f32 %v5482, %v5596
        %v5629 = vadd.f32 %v5485, %v5597
        %v5630 = vadd.f32 %v5490, %v5598
        %v5631 = vadd.f32 %v5493, %v5599
        %v5632 = vadd.f32 %v5498, %v5600
        %v5633 = vadd.f32 %v5501, %v5601
        %v5634 = vadd.f32 %v5506, %v5602
        %v5635 = vadd.f32 %v5509, %v5603
        %v5636 = vadd.f32 %v5514, %v5604
        %v5637 = vadd.f32 %v5517, %v5605
        %v5638 = vadd.f32 %v5522, %v5606
        %v5639 = vadd.f32 %v5525, %v5607
        %v5640 = vadd.f32 %v5530, %v5608
        %v5641 = vadd.f32 %v5533, %v5609
        %v5642 = vadd.f32 %v5538, %v5610
        %v5643 = vadd.f32 %v5541, %v5611
        %v5644 = vadd.f32 %v5546, %v5612
        %v5645 = vadd.f32 %v5549, %v5613
        %v5646 = vadd.f32 %v5554, %v5614
        %v5647 = vadd.f32 %v5557, %v5615
        %v5648 = vadd.f32 %v5562, %v5616
        %v5649 = vadd.f32 %v5565, %v5617
        %v5650 = vadd.f32 %v5570, %v5618
        %v5651 = vadd.f32 %v5573, %v5619
        %v5652 = vadd.f32 %v5578, %v5620
        %v5653 = vadd.f32 %v5581, %v5621
        %v5654 = vadd.f32 %v5586, %v5622
        %v5655 = vadd.f32 %v5589, %v5623
        %v5656 = vmax.f32 %v5624, 0.0
        %v5657 = vmax.f32 %v5625, 0.0
        %v5658 = vmax.f32 %v5626, 0.0
        %v5659 = vmax.f32 %v5627, 0.0
        %v5660 = vmax.f32 %v5628, 0.0
        %v5661 = vmax.f32 %v5629, 0.0
        %v5662 = vmax.f32 %v5630, 0.0
        %v5663 = vmax.f32 %v5631, 0.0
        %v5664 = vmax.f32 %v5632, 0.0
        %v5665 = vmax.f32 %v5633, 0.0
        %v5666 = vmax.f32 %v5634, 0.0
        %v5667 = vmax.f32 %v5635, 0.0
        %v5668 = vmax.f32 %v5636, 0.0
        %v5669 = vmax.f32 %v5637, 0.0
        %v5670 = vmax.f32 %v5638, 0.0
        %v5671 = vmax.f32 %v5639, 0.0
        %v5672 = vmax.f32 %v5640, 0.0
        %v5673 = vmax.f32 %v5641, 0.0
        %v5674 = vmax.f32 %v5642, 0.0
        %v5675 = vmax.f32 %v5643, 0.0
        %v5676 = vmax.f32 %v5644, 0.0
        %v5677 = vmax.f32 %v5645, 0.0
        %v5678 = vmax.f32 %v5646, 0.0
        %v5679 = vmax.f32 %v5647, 0.0
        %v5680 = vmax.f32 %v5648, 0.0
        %v5681 = vmax.f32 %v5649, 0.0
        %v5682 = vmax.f32 %v5650, 0.0
        %v5683 = vmax.f32 %v5651, 0.0
        %v5684 = vmax.f32 %v5652, 0.0
        %v5685 = vmax.f32 %v5653, 0.0
        %v5686 = vmax.f32 %v5654, 0.0
        %v5687 = vmax.f32 %v5655, 0.0
        %v5688 = vpack.c.bf16 %v5657, %v5656
        %v5689 = vpack.c.bf16 %v5659, %v5658
        %v5690 = vpack.c.bf16 %v5661, %v5660
        %v5691 = vpack.c.bf16 %v5663, %v5662
        %v5692 = vpack.c.bf16 %v5665, %v5664
        %v5693 = vpack.c.bf16 %v5667, %v5666
        %v5694 = vpack.c.bf16 %v5669, %v5668
        %v5695 = vpack.c.bf16 %v5671, %v5670
        %v5696 = vpack.c.bf16 %v5673, %v5672
        %v5697 = vpack.c.bf16 %v5675, %v5674
        %v5698 = vpack.c.bf16 %v5677, %v5676
        %v5699 = vpack.c.bf16 %v5679, %v5678
        %v5700 = vpack.c.bf16 %v5681, %v5680
        %v5701 = vpack.c.bf16 %v5683, %v5682
        %v5702 = vpack.c.bf16 %v5685, %v5684
        %v5703 = vpack.c.bf16 %v5687, %v5686
        %v5720 = vunpack.c.l.b16 %v5688
        %v5721 = vunpack.c.h.b16 %v5688
        %v5722 = vunpack.c.l.b16 %v5689
        %v5723 = vunpack.c.h.b16 %v5689
        %v5724 = vunpack.c.l.b16 %v5690
        %v5725 = vunpack.c.h.b16 %v5690
        %v5726 = vunpack.c.l.b16 %v5691
        %v5727 = vunpack.c.h.b16 %v5691
        %v5728 = vunpack.c.l.b16 %v5692
        %v5729 = vunpack.c.h.b16 %v5692
        %v5730 = vunpack.c.l.b16 %v5693
        %v5731 = vunpack.c.h.b16 %v5693
        %v5732 = vunpack.c.l.b16 %v5694
        %v5733 = vunpack.c.h.b16 %v5694
        %v5734 = vunpack.c.l.b16 %v5695
        %v5735 = vunpack.c.h.b16 %v5695
        %v5736 = vunpack.c.l.b16 %v5696
        %v5737 = vunpack.c.h.b16 %v5696
        %v5738 = vunpack.c.l.b16 %v5697
        %v5739 = vunpack.c.h.b16 %v5697
        %v5740 = vunpack.c.l.b16 %v5698
        %v5741 = vunpack.c.h.b16 %v5698
        %v5742 = vunpack.c.l.b16 %v5699
        %v5743 = vunpack.c.h.b16 %v5699
        %v5744 = vunpack.c.l.b16 %v5700
        %v5745 = vunpack.c.h.b16 %v5700
        %v5746 = vunpack.c.l.b16 %v5701
        %v5747 = vunpack.c.h.b16 %v5701
        %v5748 = vunpack.c.l.b16 %v5702
        %v5749 = vunpack.c.h.b16 %v5702
        %v5750 = vunpack.c.l.b16 %v5703
        %v5751 = vunpack.c.h.b16 %v5703
        %v5752 = vpack.c.b16 %v5720, %v5720
        %v5753 = vpack.c.b16 %v5721, %v5721
        %v5754 = vpack.c.b16 %v5722, %v5722
        %v5755 = vpack.c.b16 %v5723, %v5723
        %v5756 = vpack.c.b16 %v5724, %v5724
        %v5757 = vpack.c.b16 %v5725, %v5725
        %v5758 = vpack.c.b16 %v5726, %v5726
        %v5759 = vpack.c.b16 %v5727, %v5727
        %v5760 = vpack.c.b16 %v5728, %v5728
        %v5761 = vpack.c.b16 %v5729, %v5729
        %v5762 = vpack.c.b16 %v5730, %v5730
        %v5763 = vpack.c.b16 %v5731, %v5731
        %v5764 = vpack.c.b16 %v5732, %v5732
        %v5765 = vpack.c.b16 %v5733, %v5733
        %v5766 = vpack.c.b16 %v5734, %v5734
        %v5767 = vpack.c.b16 %v5735, %v5735
        %v5768 = vpack.c.b16 %v5736, %v5736
        %v5769 = vpack.c.b16 %v5737, %v5737
        %v5770 = vpack.c.b16 %v5738, %v5738
        %v5771 = vpack.c.b16 %v5739, %v5739
        %v5772 = vpack.c.b16 %v5740, %v5740
        %v5773 = vpack.c.b16 %v5741, %v5741
        %v5774 = vpack.c.b16 %v5742, %v5742
        %v5775 = vpack.c.b16 %v5743, %v5743
        %v5776 = vpack.c.b16 %v5744, %v5744
        %v5777 = vpack.c.b16 %v5745, %v5745
        %v5778 = vpack.c.b16 %v5746, %v5746
        %v5779 = vpack.c.b16 %v5747, %v5747
        %v5780 = vpack.c.b16 %v5748, %v5748
        %v5781 = vpack.c.b16 %v5749, %v5749
        %v5782 = vpack.c.b16 %v5750, %v5750
        %v5783 = vpack.c.b16 %v5751, %v5751
        %vm5816 = vcmask 125952
        %5817 = vst.msk [vmem:[%s375] sm:$0xf] %vm5816, %v5752
        %5818 = vst.msk [vmem:[%s375 + $0x4] sm:$0xf] %vm5816, %v5753
        %5819 = vst.msk [vmem:[%s375 + $0x8] sm:$0xf] %vm5816, %v5754
        %5820 = vst.msk [vmem:[%s375 + $0xc] sm:$0xf] %vm5816, %v5755
        %5821 = vst.msk [vmem:[%s375 + $0x10] sm:$0xf] %vm5816, %v5756
        %5822 = vst.msk [vmem:[%s375 + $0x14] sm:$0xf] %vm5816, %v5757
        %5823 = vst.msk [vmem:[%s375 + $0x18] sm:$0xf] %vm5816, %v5758
        %5824 = vst.msk [vmem:[%s375 + $0x1c] sm:$0xf] %vm5816, %v5759
        %5825 = vst.msk [vmem:[%s375 + $0x20] sm:$0xf] %vm5816, %v5760
        %5826 = vst.msk [vmem:[%s375 + $0x24] sm:$0xf] %vm5816, %v5761
        %5827 = vst.msk [vmem:[%s375 + $0x28] sm:$0xf] %vm5816, %v5762
        %5828 = vst.msk [vmem:[%s375 + $0x2c] sm:$0xf] %vm5816, %v5763
        %5829 = vst.msk [vmem:[%s375 + $0x30] sm:$0xf] %vm5816, %v5764
        %5830 = vst.msk [vmem:[%s375 + $0x34] sm:$0xf] %vm5816, %v5765
        %5831 = vst.msk [vmem:[%s375 + $0x38] sm:$0xf] %vm5816, %v5766
        %5832 = vst.msk [vmem:[%s375 + $0x3c] sm:$0xf] %vm5816, %v5767
        %5833 = vst.msk [vmem:[%s375 + $0x40] sm:$0xf] %vm5816, %v5768
        %5834 = vst.msk [vmem:[%s375 + $0x44] sm:$0xf] %vm5816, %v5769
        %5835 = vst.msk [vmem:[%s375 + $0x48] sm:$0xf] %vm5816, %v5770
        %5836 = vst.msk [vmem:[%s375 + $0x4c] sm:$0xf] %vm5816, %v5771
        %5837 = vst.msk [vmem:[%s375 + $0x50] sm:$0xf] %vm5816, %v5772
        %5838 = vst.msk [vmem:[%s375 + $0x54] sm:$0xf] %vm5816, %v5773
        %5839 = vst.msk [vmem:[%s375 + $0x58] sm:$0xf] %vm5816, %v5774
        %5840 = vst.msk [vmem:[%s375 + $0x5c] sm:$0xf] %vm5816, %v5775
        %5841 = vst.msk [vmem:[%s375 + $0x60] sm:$0xf] %vm5816, %v5776
        %5842 = vst.msk [vmem:[%s375 + $0x64] sm:$0xf] %vm5816, %v5777
        %5843 = vst.msk [vmem:[%s375 + $0x68] sm:$0xf] %vm5816, %v5778
        %5844 = vst.msk [vmem:[%s375 + $0x6c] sm:$0xf] %vm5816, %v5779
        %5845 = vst.msk [vmem:[%s375 + $0x70] sm:$0xf] %vm5816, %v5780
        %5846 = vst.msk [vmem:[%s375 + $0x74] sm:$0xf] %vm5816, %v5781
        %5847 = vst.msk [vmem:[%s375 + $0x78] sm:$0xf] %vm5816, %v5782
        %5848 = vst.msk [vmem:[%s375 + $0x7c] sm:$0xf] %vm5816, %v5783
        %s5849 = sand.u32 %s187, 1
        %s5850 = scalar_lea.sflag [#allocation6], %s5849
        %s5851 = sand.u32 %s187, 1
        %s5852 = smul.addr %s5851, 128
        %s5853 = scalar_lea.vmem [#allocation16], %s5852
        // Predicated region
        $region77: #{tpu_custom_call.1} parent=47 // pred_check
          %p5854 = pneg %p197
        $region78: #{tpu_custom_call.1} parent=47 // pred_check_branch
          %5856 = sbr.rel (%p5854) target = $region80
        $region79: #{tpu_custom_call.1} parent=47 // pred_region
          %s5858 = ssub.s32 2048, 2048
          %5859 = vsyncadd %s5850, %s5858
          %s5860 = smul.addr %s27, 32
          %s5861 = smul.addr %s5860, 64
          %s5862 = scalar_lea.hbm %s7, %s5861
          %s5863 = sshll.u32 %s5853, 4
          %s5864 = int_to_ptr.vmem [resolvable:$true] %s5863
          %5869 = dma.vmem_to_hbm [thread:$0]  %s5864, 2048, %s5862, %s5850, 64, 64, 4
        $region80: #{tpu_custom_call.1} parent=47 // pred_fallthru
          _
      $region48: #{tpu_custom_call.1} parent=5 // pred_fallthru
        _
      %p5870 = scmp.le.s32.totalorder 2, %s22
      // Predicated region
      $region81: #{tpu_custom_call.1} parent=5 // pred_check
        %p5871 = pneg %p5870
      $region82: #{tpu_custom_call.1} parent=5 // pred_check_branch
        %5873 = sbr.rel (%p5871) target = $region84
      $region83: #{tpu_custom_call.1} parent=5 // pred_region
        %s5874 = ssub.s32 %s22, 2
        // Predicated region
        $region85: #{tpu_custom_call.1} parent=83 // pred_check
          %p5875 = pneg %p203
        $region86: #{tpu_custom_call.1} parent=83 // pred_check_branch
          %5877 = sbr.rel (%p5875) target = $region88
        $region87: #{tpu_custom_call.1} parent=83 // pred_region
          %s5878 = sand.u32 %s188, 1
          %s5879 = scalar_lea.sflag [#allocation6], %s5878
          %s5880 = sand.u32 %s188, 1
          %s5881 = smul.addr %s5880, 128
          %s5882 = scalar_lea.vmem [#allocation16], %s5881
          %5883 = dma.done %s5879, 2048
        $region88: #{tpu_custom_call.1} parent=83 // pred_fallthru
          _
      $region84: #{tpu_custom_call.1} parent=5 // pred_fallthru
        _
    $region6: #{tpu_custom_call.1} parent=1 // loop_footer
      %s26 = sadd.s32 1, %s22
    $region7: #{tpu_custom_call.1} parent=1 // loop_footer_branch
      %21 = sbr.rel target = $region3
    $region8: #{tpu_custom_call.1} parent=1 // loop_exit
      _
    %5884 = vsyncpa [#allocation5], 1
    %s5885 = scalar_lea.sflag [#allocation5], 1
    %5886 = vsyncpa %s5885, 1
    %5887 = vsyncpa [#allocation8], 1
    %5888 = vsyncpa [#allocation11], 1
    %5889 = vsyncpa [#allocation14], 1
    %5890 = vsyncpa [#allocation6], 1
    %s5891 = scalar_lea.sflag [#allocation6], 1
    %5892 = vsyncpa %s5891, 1

// kernel: tpu_custom_call.1
$region0: #{tpu_custom_call.1}
  #allocation0 [shape = 'u32[]', space=smem, size = 0x4, offset = 0x4, fixed_abs, tag = 'smem constant byte address 0x4 - core index']
  #allocation1 [shape = 'u32[144,128]{1,0:T(1,128)}', space=vmem, size = 0x12000, scoped, tag = 'internal scratch']
  #allocation2 [shape = 'bf16[18,18,128]{2,1,0:T(8,128)(2,1)}', space=vmem, size = 0x1b000, scoped, tag = 'scratch operand']
  #allocation3 [shape = 'bf16[16,16,1152]{2,1,0:T(16,128)(2,1)}', space=vmem, size = 0x90000, scoped, tag = 'scratch operand']
  %s0 = inlined_call_operand.hbm [shape: bf16[2,256,16], index: 0, kind: input, shape index: {}]
  %s1 = inlined_call_operand.hbm [shape: bf16[16,128], index: 1, kind: input, shape index: {}]
  %s2 = inlined_call_operand.hbm [shape: bf16[1152,4], index: 2, kind: input, shape index: {}]
  %s3 = inlined_call_operand.hbm [shape: bf16[4,16], index: 3, kind: input, shape index: {}]
  %s4 = inlined_call_operand.hbm [shape: f32[1,128], index: 4, kind: input, shape index: {}]
  %s5 = inlined_call_operand.hbm [shape: f32[1,4], index: 5, kind: input, shape index: {}]
  %s6 = inlined_call_operand.hbm [shape: f32[1,16], index: 6, kind: input, shape index: {}]
  %s7 = inlined_call_operand.hbm [shape: bf16[2,256,16], index: 7, kind: output, shape index: {}]
  %s8 = sld [smem:[#allocation0]]
  $region89: #{tpu_custom_call.1} parent=0
    _
  %s10 = ssub.s32 1, %s8
  %s11 = scalar_select 0, %s10, %s8
  $region1: #{tpu_custom_call.1} parent=0
    #allocation4 [shape = 'u8[131072]{0}', space=vmem, size = 0x20000, scoped, tag = 'input window, operand 0']
    #allocation5 [shape = 's32[2]{0}', space=sflag, size = 0x8, scoped, tag = 'scoped memory for tpu_custom_call.1']
    #allocation6 [shape = 's32[2]{0}', space=sflag, size = 0x8, scoped, tag = 'scoped memory for tpu_custom_call.1']
    #allocation7 [shape = 'u8[4096]{0}', space=vmem, size = 0x1000, scoped, tag = 'input window, operand 1, single buffered']
    #allocation8 [shape = 's32[1]{0}', space=sflag, size = 0x4, scoped, tag = 'scoped memory for tpu_custom_call.1']
    #allocation9 [shape = 'u8[294912]{0}', space=vmem, size = 0x48000, scoped, tag = 'input window, operand 2, single buffered']
    #allocation10 [shape = 'u8[1024]{0}', space=vmem, size = 0x400, scoped, tag = 'input window, operand 3, single buffered']
    #allocation11 [shape = 's32[1]{0}', space=sflag, size = 0x4, scoped, tag = 'scoped memory for tpu_custom_call.1']
    #allocation12 [shape = 'u8[512]{0}', space=vmem, size = 0x400, scoped, tag = 'input window, operand 4, single buffered']
    #allocation13 [shape = 'u8[512]{0}', space=vmem, size = 0x400, scoped, tag = 'input window, operand 5, single buffered']
    #allocation14 [shape = 's32[1]{0}', space=sflag, size = 0x4, scoped, tag = 'scoped memory for tpu_custom_call.1']
    #allocation15 [shape = 'u8[512]{0}', space=vmem, size = 0x400, scoped, tag = 'input window, operand 6, single buffered']
    #allocation16 [shape = 'u8[131072]{0}', space=vmem, size = 0x20000, scoped, tag = 'output window, operand 0']
    %12 = vsyncpa [#allocation5], 0
    %s13 = scalar_lea.sflag [#allocation5], 1
    %14 = vsyncpa %s13, 0
    %15 = vsyncpa [#allocation8], 0
    %16 = vsyncpa [#allocation11], 0
    %17 = vsyncpa [#allocation14], 0
    %18 = vsyncpa [#allocation6], 0
    %s19 = scalar_lea.sflag [#allocation6], 1
    %20 = vsyncpa %s19, 0
    loop: start=0, step=1, limit=4
    $region2: #{tpu_custom_call.1} parent=1 // loop_pre_header
      _
    $region3: #{tpu_custom_call.1} parent=1 // loop_header
      %s22 = sphi 0, %s26
      %p23 = scmp.ge.s32.totalorder %s22, 4
      %s32 = sphi 0, %s34
      %s35 = sphi 0, %s32
      %s36 = sphi 0, %s35
      %s52 = sphi 0, %s36
      %s56 = sphi 0, %s56
      %s58 = sphi 0, %s56
      %s59 = sphi 0, %s58
      %s73 = sphi 0, %s59
      %s77 = sphi 0, %s77
      %s79 = sphi 0, %s77
      %s80 = sphi 0, %s79
      %s94 = sphi 0, %s80
      %s98 = sphi 0, %s98
      %s100 = sphi 0, %s98
      %s101 = sphi 0, %s100
      %s115 = sphi 0, %s101
      %s119 = sphi 0, %s119
      %s121 = sphi 0, %s119
      %s122 = sphi 0, %s121
      %s136 = sphi 0, %s122
      %s140 = sphi 0, %s140
      %s142 = sphi 0, %s140
      %s143 = sphi 0, %s142
      %s157 = sphi 0, %s143
      %s161 = sphi 0, %s161
      %s163 = sphi 0, %s161
      %s164 = sphi 0, %s163
      %s178 = sphi 0, %s164
      %s184 = sphi 0, %s186
      %s187 = sphi 0, %s184
      %s188 = sphi 0, %s187
      %s204 = sphi 0, %s188
    $region4: #{tpu_custom_call.1} parent=1 // loop_header_branch
      %25 = sbr.rel (%p23) target = $region8
    $region5: #{tpu_custom_call.1} parent=1 // loop_body
      %s27 = ssub.s32 %s22, 1
      %s28 = ssub.s32 %s22, 2
      %s29 = sadd.s32 %s22, 1
      %s30 = ssub.s32 %s22, %s29
      %p31 = scmp.eq.s32.totalorder %s30, 0
      %s33 = sadd.s32 %s32, 1
      %s34 = scalar_select %p31, %s32, %s33
      %p37 = pneg %p31
      %p38 = scmp.eq.s32.totalorder %s22, 1
      %p39 = por %p37, %p38
      %p40 = scmp.ne.s32.totalorder %s32, %s35
      %p41 = scmp.eq.s32.totalorder %s22, 0
      %p42 = por %p40, %p41
      %p43 = scmp.ne.s32.totalorder %s32, %s35
      %p44 = scmp.eq.s32.totalorder %s27, 1
      %p45 = por %p43, %p44
      %p46 = scmp.ne.s32.totalorder %s35, %s36
      %p47 = scmp.eq.s32.totalorder %s27, 0
      %p48 = por %p46, %p47
      %p49 = scmp.ne.s32.totalorder %s35, %s36
      %p50 = scmp.eq.s32.totalorder %s28, 1
      %p51 = por %p49, %p50
      %p53 = scmp.ne.s32.totalorder %s36, %s52
      %p54 = scmp.eq.s32.totalorder %s28, 0
      %p55 = por %p53, %p54
      %s57 = sadd.s32 %s56, 1
      %p60 = scmp.eq.s32.totalorder %s22, 1
      %p61 = scmp.ne.s32.totalorder %s56, %s58
      %p62 = scmp.eq.s32.totalorder %s22, 0
      %p63 = por %p61, %p62
      %p64 = scmp.ne.s32.totalorder %s56, %s58
      %p65 = scmp.eq.s32.totalorder %s27, 1
      %p66 = por %p64, %p65
      %p67 = scmp.ne.s32.totalorder %s58, %s59
      %p68 = scmp.eq.s32.totalorder %s27, 0
      %p69 = por %p67, %p68
      %p70 = scmp.ne.s32.totalorder %s58, %s59
      %p71 = scmp.eq.s32.totalorder %s28, 1
      %p72 = por %p70, %p71
      %p74 = scmp.ne.s32.totalorder %s59, %s73
      %p75 = scmp.eq.s32.totalorder %s28, 0
      %p76 = por %p74, %p75
      %s78 = sadd.s32 %s77, 1
      %p81 = scmp.eq.s32.totalorder %s22, 1
      %p82 = scmp.ne.s32.totalorder %s77, %s79
      %p83 = scmp.eq.s32.totalorder %s22, 0
      %p84 = por %p82, %p83
      %p85 = scmp.ne.s32.totalorder %s77, %s79
      %p86 = scmp.eq.s32.totalorder %s27, 1
      %p87 = por %p85, %p86
      %p88 = scmp.ne.s32.totalorder %s79, %s80
      %p89 = scmp.eq.s32.totalorder %s27, 0
      %p90 = por %p88, %p89
      %p91 = scmp.ne.s32.totalorder %s79, %s80
      %p92 = scmp.eq.s32.totalorder %s28, 1
      %p93 = por %p91, %p92
      %p95 = scmp.ne.s32.totalorder %s80, %s94
      %p96 = scmp.eq.s32.totalorder %s28, 0
      %p97 = por %p95, %p96
      %s99 = sadd.s32 %s98, 1
      %p102 = scmp.eq.s32.totalorder %s22, 1
      %p103 = scmp.ne.s32.totalorder %s98, %s100
      %p104 = scmp.eq.s32.totalorder %s22, 0
      %p105 = por %p103, %p104
      %p106 = scmp.ne.s32.totalorder %s98, %s100
      %p107 = scmp.eq.s32.totalorder %s27, 1
      %p108 = por %p106, %p107
      %p109 = scmp.ne.s32.totalorder %s100, %s101
      %p110 = scmp.eq.s32.totalorder %s27, 0
      %p111 = por %p109, %p110
      %p112 = scmp.ne.s32.totalorder %s100, %s101
      %p113 = scmp.eq.s32.totalorder %s28, 1
      %p114 = por %p112, %p113
      %p116 = scmp.ne.s32.totalorder %s101, %s115
      %p117 = scmp.eq.s32.totalorder %s28, 0
      %p118 = por %p116, %p117
      %s120 = sadd.s32 %s119, 1
      %p123 = scmp.eq.s32.totalorder %s22, 1
      %p124 = scmp.ne.s32.totalorder %s119, %s121
      %p125 = scmp.eq.s32.totalorder %s22, 0
      %p126 = por %p124, %p125
      %p127 = scmp.ne.s32.totalorder %s119, %s121
      %p128 = scmp.eq.s32.totalorder %s27, 1
      %p129 = por %p127, %p128
      %p130 = scmp.ne.s32.totalorder %s121, %s122
      %p131 = scmp.eq.s32.totalorder %s27, 0
      %p132 = por %p130, %p131
      %p133 = scmp.ne.s32.totalorder %s121, %s122
      %p134 = scmp.eq.s32.totalorder %s28, 1
      %p135 = por %p133, %p134
      %p137 = scmp.ne.s32.totalorder %s122, %s136
      %p138 = scmp.eq.s32.totalorder %s28, 0
      %p139 = por %p137, %p138
      %s141 = sadd.s32 %s140, 1
      %p144 = scmp.eq.s32.totalorder %s22, 1
      %p145 = scmp.ne.s32.totalorder %s140, %s142
      %p146 = scmp.eq.s32.totalorder %s22, 0
      %p147 = por %p145, %p146
      %p148 = scmp.ne.s32.totalorder %s140, %s142
      %p149 = scmp.eq.s32.totalorder %s27, 1
      %p150 = por %p148, %p149
      %p151 = scmp.ne.s32.totalorder %s142, %s143
      %p152 = scmp.eq.s32.totalorder %s27, 0
      %p153 = por %p151, %p152
      %p154 = scmp.ne.s32.totalorder %s142, %s143
      %p155 = scmp.eq.s32.totalorder %s28, 1
      %p156 = por %p154, %p155
      %p158 = scmp.ne.s32.totalorder %s143, %s157
      %p159 = scmp.eq.s32.totalorder %s28, 0
      %p160 = por %p158, %p159
      %s162 = sadd.s32 %s161, 1
      %p165 = scmp.eq.s32.totalorder %s22, 1
      %p166 = scmp.ne.s32.totalorder %s161, %s163
      %p167 = scmp.eq.s32.totalorder %s22, 0
      %p168 = por %p166, %p167
      %p169 = scmp.ne.s32.totalorder %s161, %s163
      %p170 = scmp.eq.s32.totalorder %s27, 1
      %p171 = por %p169, %p170
      %p172 = scmp.ne.s32.totalorder %s163, %s164
      %p173 = scmp.eq.s32.totalorder %s27, 0
      %p174 = por %p172, %p173
      %p175 = scmp.ne.s32.totalorder %s163, %s164
      %p176 = scmp.eq.s32.totalorder %s28, 1
      %p177 = por %p175, %p176
      %p179 = scmp.ne.s32.totalorder %s164, %s178
      %p180 = scmp.eq.s32.totalorder %s28, 0
      %p181 = por %p179, %p180
      %s182 = ssub.s32 %s22, %s29
      %p183 = scmp.eq.s32.totalorder %s182, 0
      %s185 = sadd.s32 %s184, 1
      %s186 = scalar_select %p183, %s184, %s185
      %p189 = pneg %p183
      %p190 = scmp.eq.s32.totalorder %s22, 1
      %p191 = por %p189, %p190
      %p192 = scmp.ne.s32.totalorder %s184, %s187
      %p193 = scmp.eq.s32.totalorder %s22, 0
      %p194 = por %p192, %p193
      %p195 = scmp.ne.s32.totalorder %s184, %s187
      %p196 = scmp.eq.s32.totalorder %s27, 1
      %p197 = por %p195, %p196
      %p198 = scmp.ne.s32.totalorder %s187, %s188
      %p199 = scmp.eq.s32.totalorder %s27, 0
      %p200 = por %p198, %p199
      %p201 = scmp.ne.s32.totalorder %s187, %s188
      %p202 = scmp.eq.s32.totalorder %s28, 1
      %p203 = por %p201, %p202
      %p205 = scmp.ne.s32.totalorder %s188, %s204
      %p206 = scmp.eq.s32.totalorder %s28, 0
      %p207 = por %p205, %p206
      %p208 = scmp.le.s32.totalorder 1, %s22
      %p209 = scmp.lt.s32.totalorder %s22, 3
      %p210 = pnand %p208, %p209
      %p211 = pneg %p210
      // Predicated region
      $region9: #{tpu_custom_call.1} parent=5 // pred_check
        _
      $region10: #{tpu_custom_call.1} parent=5 // pred_check_branch
        %213 = sbr.rel (%p210) target = $region12
      $region11: #{tpu_custom_call.1} parent=5 // pred_region
        %s214 = ssub.s32 %s22, 1
        // Predicated region
        $region13: #{tpu_custom_call.1} parent=11 // pred_check
          %p215 = pneg %p69
        $region14: #{tpu_custom_call.1} parent=11 // pred_check_branch
          %217 = sbr.rel (%p215) target = $region16
        $region15: #{tpu_custom_call.1} parent=11 // pred_region
          %s219 = ssub.s32 128, 128
          %220 = vsyncadd [#allocation8], %s219
          %s221 = sshll.u32 [#allocation7], 4
          %s222 = int_to_ptr.vmem [resolvable:$true] %s221
          %227 = dma.hbm_to_vmem [thread:$0]  %s1, 128, %s222, [#allocation8], 64, 64, 4
        $region16: #{tpu_custom_call.1} parent=11 // pred_fallthru
          _
        // Predicated region
        $region17: #{tpu_custom_call.1} parent=11 // pred_check
          %p228 = pneg %p90
        $region18: #{tpu_custom_call.1} parent=11 // pred_check_branch
          %230 = sbr.rel (%p228) target = $region20
        $region19: #{tpu_custom_call.1} parent=11 // pred_region
          %s232 = ssub.s32 9216, 9216
          %233 = vsyncadd [#allocation8], %s232
          %s234 = sshll.u32 [#allocation9], 4
          %s235 = int_to_ptr.vmem [resolvable:$true] %s234
          %240 = dma.hbm_to_vmem [thread:$0]  %s2, 9216, %s235, [#allocation8], 64, 64, 4
        $region20: #{tpu_custom_call.1} parent=11 // pred_fallthru
          _
        // Predicated region
        $region21: #{tpu_custom_call.1} parent=11 // pred_check
          %p241 = pneg %p111
        $region22: #{tpu_custom_call.1} parent=11 // pred_check_branch
          %243 = sbr.rel (%p241) target = $region24
        $region23: #{tpu_custom_call.1} parent=11 // pred_region
          %s245 = ssub.s32 32, 32
          %246 = vsyncadd [#allocation11], %s245
          %s248 = sshll.u32 [#allocation10], 4
          %s249 = int_to_ptr.vmem [resolvable:$true] %s248
          %251 = dma.hbm_to_vmem [thread:$0]  %s3, 32, %s249, [#allocation11]
        $region24: #{tpu_custom_call.1} parent=11 // pred_fallthru
          _
        // Predicated region
        $region25: #{tpu_custom_call.1} parent=11 // pred_check
          %p252 = pneg %p132
        $region26: #{tpu_custom_call.1} parent=11 // pred_check_branch
          %254 = sbr.rel (%p252) target = $region28
        $region27: #{tpu_custom_call.1} parent=11 // pred_region
          %s256 = ssub.s32 16, 16
          %257 = vsyncadd [#allocation11], %s256
          %s259 = sshll.u32 [#allocation12], 4
          %s260 = int_to_ptr.vmem [resolvable:$true] %s259
          %262 = dma.hbm_to_vmem [thread:$0]  %s4, 16, %s260, [#allocation11]
        $region28: #{tpu_custom_call.1} parent=11 // pred_fallthru
          _
        // Predicated region
        $region29: #{tpu_custom_call.1} parent=11 // pred_check
          %p263 = pneg %p153
        $region30: #{tpu_custom_call.1} parent=11 // pred_check_branch
          %265 = sbr.rel (%p263) target = $region32
        $region31: #{tpu_custom_call.1} parent=11 // pred_region
          %s267 = ssub.s32 16, 16
          %268 = vsyncadd [#allocation14], %s267
          %s270 = sshll.u32 [#allocation13], 4
          %s271 = int_to_ptr.vmem [resolvable:$true] %s270
          %273 = dma.hbm_to_vmem [thread:$0]  %s5, 16, %s271, [#allocation14]
        $region32: #{tpu_custom_call.1} parent=11 // pred_fallthru
          _
        // Predicated region
        $region33: #{tpu_custom_call.1} parent=11 // pred_check
          %p274 = pneg %p174
        $region34: #{tpu_custom_call.1} parent=11 // pred_check_branch
          %276 = sbr.rel (%p274) target = $region36
        $region35: #{tpu_custom_call.1} parent=11 // pred_region
          %s278 = ssub.s32 16, 16
          %279 = vsyncadd [#allocation14], %s278
          %s281 = sshll.u32 [#allocation15], 4
          %s282 = int_to_ptr.vmem [resolvable:$true] %s281
          %284 = dma.hbm_to_vmem [thread:$0]  %s6, 16, %s282, [#allocation14]
        $region36: #{tpu_custom_call.1} parent=11 // pred_fallthru
          _
      $region12: #{tpu_custom_call.1} parent=5 // pred_fallthru
        _
      %p285 = scmp.lt.s32.totalorder %s22, 2
      // Predicated region
      $region37: #{tpu_custom_call.1} parent=5 // pred_check
        %p286 = pneg %p285
      $region38: #{tpu_custom_call.1} parent=5 // pred_check_branch
        %288 = sbr.rel (%p286) target = $region40
      $region39: #{tpu_custom_call.1} parent=5 // pred_region
        // Predicated region
        $region41: #{tpu_custom_call.1} parent=39 // pred_check
          %p289 = pneg %p42
        $region42: #{tpu_custom_call.1} parent=39 // pred_check_branch
          %291 = sbr.rel (%p289) target = $region44
        $region43: #{tpu_custom_call.1} parent=39 // pred_region
          %s292 = sand.u32 %s32, 1
          %s293 = scalar_lea.sflag [#allocation5], %s292
          %s294 = sand.u32 %s32, 1
          %s295 = smul.addr %s294, 128
          %s296 = scalar_lea.vmem [#allocation4], %s295
          %s298 = ssub.s32 2048, 2048
          %299 = vsyncadd %s293, %s298
          %s300 = smul.addr %s22, 32
          %s301 = smul.addr %s300, 64
          %s302 = scalar_lea.hbm %s0, %s301
          %s303 = sshll.u32 %s296, 4
          %s304 = int_to_ptr.vmem [resolvable:$true] %s303
          %309 = dma.hbm_to_vmem [thread:$0]  %s302, 2048, %s304, %s293, 64, 64, 4
        $region44: #{tpu_custom_call.1} parent=39 // pred_fallthru
          _
      $region40: #{tpu_custom_call.1} parent=5 // pred_fallthru
        _
      %p310 = scmp.le.s32.totalorder 1, %s22
      %p311 = scmp.lt.s32.totalorder %s22, 3
      %p312 = pnand %p310, %p311
      %p313 = pneg %p312
      // Predicated region
      $region45: #{tpu_custom_call.1} parent=5 // pred_check
        _
      $region46: #{tpu_custom_call.1} parent=5 // pred_check_branch
        %315 = sbr.rel (%p312) target = $region48
      $region47: #{tpu_custom_call.1} parent=5 // pred_region
        %s316 = ssub.s32 %s22, 1
        %s317 = sand.u32 %s35, 1
        %s318 = scalar_lea.sflag [#allocation5], %s317
        %s319 = sand.u32 %s35, 1
        %s320 = smul.addr %s319, 128
        %s321 = scalar_lea.vmem [#allocation4], %s320
        // Predicated region
        $region49: #{tpu_custom_call.1} parent=47 // pred_check
          %p322 = pneg %p48
        $region50: #{tpu_custom_call.1} parent=47 // pred_check_branch
          %324 = sbr.rel (%p322) target = $region52
        $region51: #{tpu_custom_call.1} parent=47 // pred_region
          %325 = dma.done %s318, 2048
        $region52: #{tpu_custom_call.1} parent=47 // pred_fallthru
          _
        // Predicated region
        $region53: #{tpu_custom_call.1} parent=47 // pred_check
          %p326 = pneg %p69
        $region54: #{tpu_custom_call.1} parent=47 // pred_check_branch
          %328 = sbr.rel (%p326) target = $region56
        $region55: #{tpu_custom_call.1} parent=47 // pred_region
          %329 = dma.done [#allocation8], 128
        $region56: #{tpu_custom_call.1} parent=47 // pred_fallthru
          _
        // Predicated region
        $region57: #{tpu_custom_call.1} parent=47 // pred_check
          %p330 = pneg %p90
        $region58: #{tpu_custom_call.1} parent=47 // pred_check_branch
          %332 = sbr.rel (%p330) target = $region60
        $region59: #{tpu_custom_call.1} parent=47 // pred_region
          %333 = dma.done [#allocation8], 9216
        $region60: #{tpu_custom_call.1} parent=47 // pred_fallthru
          _
        // Predicated region
        $region61: #{tpu_custom_call.1} parent=47 // pred_check
          %p334 = pneg %p111
        $region62: #{tpu_custom_call.1} parent=47 // pred_check_branch
          %336 = sbr.rel (%p334) target = $region64
        $region63: #{tpu_custom_call.1} parent=47 // pred_region
          %337 = dma.done [#allocation11], 32
        $region64: #{tpu_custom_call.1} parent=47 // pred_fallthru
          _
        // Predicated region
        $region65: #{tpu_custom_call.1} parent=47 // pred_check
          %p338 = pneg %p132
        $region66: #{tpu_custom_call.1} parent=47 // pred_check_branch
          %340 = sbr.rel (%p338) target = $region68
        $region67: #{tpu_custom_call.1} parent=47 // pred_region
          %341 = dma.done [#allocation11], 16
        $region68: #{tpu_custom_call.1} parent=47 // pred_fallthru
          _
        // Predicated region
        $region69: #{tpu_custom_call.1} parent=47 // pred_check
          %p342 = pneg %p153
        $region70: #{tpu_custom_call.1} parent=47 // pred_check_branch
          %344 = sbr.rel (%p342) target = $region72
        $region71: #{tpu_custom_call.1} parent=47 // pred_region
          %345 = dma.done [#allocation14], 16
        $region72: #{tpu_custom_call.1} parent=47 // pred_fallthru
          _
        // Predicated region
        $region73: #{tpu_custom_call.1} parent=47 // pred_check
          %p346 = pneg %p174
        $region74: #{tpu_custom_call.1} parent=47 // pred_check_branch
          %348 = sbr.rel (%p346) target = $region76
        $region75: #{tpu_custom_call.1} parent=47 // pred_region
          %349 = dma.done [#allocation14], 16
        $region76: #{tpu_custom_call.1} parent=47 // pred_fallthru
          _
        %s350 = sand.u32 %s35, 1
        %s351 = scalar_lea.sflag [#allocation5], %s350
        %s352 = sand.u32 %s35, 1
        %s353 = smul.addr %s352, 128
        %s354 = scalar_lea.vmem [#allocation4], %s353
        %p355 = pneg %p48
        %p356 = pneg %p45
        %p357 = pneg %p69
        %p358 = pneg %p66
        %p359 = pneg %p90
        %p360 = pneg %p87
        %p361 = pneg %p111
        %p362 = pneg %p108
        %p363 = pneg %p132
        %p364 = pneg %p129
        %p365 = pneg %p153
        %p366 = pneg %p150
        %p367 = pneg %p174
        %p368 = pneg %p171
        %p369 = pneg %p200
        %p370 = pneg %p197
        %s371 = sand.u32 %s187, 1
        %s372 = scalar_lea.sflag [#allocation6], %s371
        %s373 = sand.u32 %s187, 1
        %s374 = smul.addr %s373, 128
        %s375 = scalar_lea.vmem [#allocation16], %s374
        %v377 = vld [vmem:[%s321] sm:$0xf]
        %v378 = vld [vmem:[%s321 + $0x4] sm:$0xf]
        %v379 = vld [vmem:[%s321 + $0x8] sm:$0xf]
        %v380 = vld [vmem:[%s321 + $0xc] sm:$0xf]
        %v381 = vld [vmem:[%s321 + $0x10] sm:$0xf]
        %v382 = vld [vmem:[%s321 + $0x14] sm:$0xf]
        %v383 = vld [vmem:[%s321 + $0x18] sm:$0xf]
        %v384 = vld [vmem:[%s321 + $0x1c] sm:$0xf]
        %v385 = vld [vmem:[%s321 + $0x20] sm:$0xf]
        %v386 = vld [vmem:[%s321 + $0x24] sm:$0xf]
        %v387 = vld [vmem:[%s321 + $0x28] sm:$0xf]
        %v388 = vld [vmem:[%s321 + $0x2c] sm:$0xf]
        %v389 = vld [vmem:[%s321 + $0x30] sm:$0xf]
        %v390 = vld [vmem:[%s321 + $0x34] sm:$0xf]
        %v391 = vld [vmem:[%s321 + $0x38] sm:$0xf]
        %v392 = vld [vmem:[%s321 + $0x3c] sm:$0xf]
        %v393 = vld [vmem:[%s321 + $0x40] sm:$0xf]
        %v394 = vld [vmem:[%s321 + $0x44] sm:$0xf]
        %v395 = vld [vmem:[%s321 + $0x48] sm:$0xf]
        %v396 = vld [vmem:[%s321 + $0x4c] sm:$0xf]
        %v397 = vld [vmem:[%s321 + $0x50] sm:$0xf]
        %v398 = vld [vmem:[%s321 + $0x54] sm:$0xf]
        %v399 = vld [vmem:[%s321 + $0x58] sm:$0xf]
        %v400 = vld [vmem:[%s321 + $0x5c] sm:$0xf]
        %v401 = vld [vmem:[%s321 + $0x60] sm:$0xf]
        %v402 = vld [vmem:[%s321 + $0x64] sm:$0xf]
        %v403 = vld [vmem:[%s321 + $0x68] sm:$0xf]
        %v404 = vld [vmem:[%s321 + $0x6c] sm:$0xf]
        %v405 = vld [vmem:[%s321 + $0x70] sm:$0xf]
        %v406 = vld [vmem:[%s321 + $0x74] sm:$0xf]
        %v407 = vld [vmem:[%s321 + $0x78] sm:$0xf]
        %v408 = vld [vmem:[%s321 + $0x7c] sm:$0xf]
        %v409 = vld [vmem:[#allocation7] sm:$0xf]
        %v410 = vld [vmem:[#allocation7 + $0x4] sm:$0xf]
        %v411 = vld [vmem:[#allocation12] sm:$0x1]
        %v413 = vlaneseq
        %v414 = vshrl.u32 %v413, 7
        %v415 = vsub.s32 0, %v414
        %v416 = vrot.slane %v411, %v415
        %v450 = vunpack.c.l.b16 %v377
        %v451 = vunpack.c.l.b16 %v378
        %v452 = vunpack.c.l.b16 %v379
        %v453 = vunpack.c.l.b16 %v380
        %v454 = vunpack.c.l.b16 %v381
        %v455 = vunpack.c.l.b16 %v382
        %v456 = vunpack.c.l.b16 %v383
        %v457 = vunpack.c.l.b16 %v384
        %v458 = vunpack.c.l.b16 %v385
        %v459 = vunpack.c.l.b16 %v386
        %v460 = vunpack.c.l.b16 %v387
        %v461 = vunpack.c.l.b16 %v388
        %v462 = vunpack.c.l.b16 %v389
        %v463 = vunpack.c.l.b16 %v390
        %v464 = vunpack.c.l.b16 %v391
        %v465 = vunpack.c.l.b16 %v392
        %v466 = vunpack.c.l.b16 %v393
        %v467 = vunpack.c.l.b16 %v394
        %v468 = vunpack.c.l.b16 %v395
        %v469 = vunpack.c.l.b16 %v396
        %v470 = vunpack.c.l.b16 %v397
        %v471 = vunpack.c.l.b16 %v398
        %v472 = vunpack.c.l.b16 %v399
        %v473 = vunpack.c.l.b16 %v400
        %v474 = vunpack.c.l.b16 %v401
        %v475 = vunpack.c.l.b16 %v402
        %v476 = vunpack.c.l.b16 %v403
        %v477 = vunpack.c.l.b16 %v404
        %v478 = vunpack.c.l.b16 %v405
        %v479 = vunpack.c.l.b16 %v406
        %v480 = vunpack.c.l.b16 %v407
        %v481 = vunpack.c.l.b16 %v408
        %v482 = vpack.c.b16 %v451, %v450
        %v483 = vpack.c.b16 %v453, %v452
        %v484 = vpack.c.b16 %v455, %v454
        %v485 = vpack.c.b16 %v457, %v456
        %v486 = vpack.c.b16 %v459, %v458
        %v487 = vpack.c.b16 %v461, %v460
        %v488 = vpack.c.b16 %v463, %v462
        %v489 = vpack.c.b16 %v465, %v464
        %v490 = vpack.c.b16 %v467, %v466
        %v491 = vpack.c.b16 %v469, %v468
        %v492 = vpack.c.b16 %v471, %v470
        %v493 = vpack.c.b16 %v473, %v472
        %v494 = vpack.c.b16 %v475, %v474
        %v495 = vpack.c.b16 %v477, %v476
        %v496 = vpack.c.b16 %v479, %v478
        %v497 = vpack.c.b16 %v481, %v480
        %v500 = vunpack.c.l.b16 %v409
        %v501 = vunpack.c.l.b16 %v410
        %v502 = vpack.c.b16 %v501, %v500
        %vm504 = vcmask 130048
        %v506 = vsel %vm504, %v482, 0
        %v509 = vsel %vm504, %v483, 0
        %v512 = vsel %vm504, %v484, 0
        %v515 = vsel %vm504, %v485, 0
        %v518 = vsel %vm504, %v486, 0
        %v521 = vsel %vm504, %v487, 0
        %v524 = vsel %vm504, %v488, 0
        %v527 = vsel %vm504, %v489, 0
        %v530 = vsel %vm504, %v490, 0
        %v533 = vsel %vm504, %v491, 0
        %v536 = vsel %vm504, %v492, 0
        %v539 = vsel %vm504, %v493, 0
        %v542 = vsel %vm504, %v494, 0
        %v545 = vsel %vm504, %v495, 0
        %v548 = vsel %vm504, %v496, 0
        %v551 = vsel %vm504, %v497, 0
        %553 = vmatprep.subr.bf16.mxu0 0
        %554 = vmatpush1.bf16.msra.mxu0 %v502
        %555 = vmatprep.subr.bf16.mxu0 0
        %556 = vmatpush1.bf16.msra.mxu0 0
        %557 = vmatprep.subr.bf16.mxu0 0
        %558 = vmatpush1.bf16.msra.mxu0 0
        %559 = vmatprep.subr.bf16.mxu0 0
        %560 = vmatpush1.bf16.msra.mxu0 0
        %561 = vmatprep.subr.bf16.mxu0 0
        %562 = vmatpush1.bf16.msra.mxu0 0
        %563 = vmatprep.subr.bf16.mxu0 0
        %564 = vmatpush1.bf16.msra.mxu0 0
        %565 = vmatprep.subr.bf16.mxu0 0
        %566 = vmatpush1.bf16.msra.mxu0 0
        %567 = vmatprep.subr.bf16.mxu0 0
        %568 = vmatpush1.bf16.msra.mxu0 0
        %569 = vmatprep.subr.bf16.mxu0 0
        %570 = vmatpush1.bf16.msra.mxu0 0
        %571 = vmatprep.subr.bf16.mxu0 0
        %572 = vmatpush1.bf16.msra.mxu0 0
        %573 = vmatprep.subr.bf16.mxu0 0
        %574 = vmatpush1.bf16.msra.mxu0 0
        %575 = vmatprep.subr.bf16.mxu0 0
        %576 = vmatpush1.bf16.msra.mxu0 0
        %577 = vmatprep.subr.bf16.mxu0 0
        %578 = vmatpush1.bf16.msra.mxu0 0
        %579 = vmatprep.subr.bf16.mxu0 0
        %580 = vmatpush1.bf16.msra.mxu0 0
        %581 = vmatprep.subr.bf16.mxu0 0
        %582 = vmatpush1.bf16.msra.mxu0 0
        %583 = vmatprep.subr.bf16.mxu0 0
        %584 = vmatpush1.bf16.msra.mxu0 0
        %585 = vmatprep.mubr.bf16.mxu0 0
        %586 = vmatmul.mubr.bf16.gmra.mrb[0].mxu0 %v506
        %v587 = vpop.f32.mrb[0].mxu0
        %v588 = vadd.f32 %v416, %v587
        %v589 = vpop.f32.mrb[0].mxu0
        %v590 = vpop.f32.mrb[0].mxu0
        %v591 = vadd.f32 %v416, %v590
        %v592 = vpop.f32.mrb[0].mxu0
        %593 = vmatprep.mubr.bf16.mxu0 0
        %594 = vmatmul.mubr.bf16.gmra.mrb[0].mxu0 %v509
        %v595 = vpop.f32.mrb[0].mxu0
        %v596 = vadd.f32 %v416, %v595
        %v597 = vpop.f32.mrb[0].mxu0
        %v598 = vpop.f32.mrb[0].mxu0
        %v599 = vadd.f32 %v416, %v598
        %v600 = vpop.f32.mrb[0].mxu0
        %601 = vmatprep.mubr.bf16.mxu0 0
        %602 = vmatmul.mubr.bf16.gmra.mrb[0].mxu0 %v512
        %v603 = vpop.f32.mrb[0].mxu0
        %v604 = vadd.f32 %v416, %v603
        %v605 = vpop.f32.mrb[0].mxu0
        %v606 = vpop.f32.mrb[0].mxu0
        %v607 = vadd.f32 %v416, %v606
        %v608 = vpop.f32.mrb[0].mxu0
        %609 = vmatprep.mubr.bf16.mxu0 0
        %610 = vmatmul.mubr.bf16.gmra.mrb[0].mxu0 %v515
        %v611 = vpop.f32.mrb[0].mxu0
        %v612 = vadd.f32 %v416, %v611
        %v613 = vpop.f32.mrb[0].mxu0
        %v614 = vpop.f32.mrb[0].mxu0
        %v615 = vadd.f32 %v416, %v614
        %v616 = vpop.f32.mrb[0].mxu0
        %617 = vmatprep.mubr.bf16.mxu0 0
        %618 = vmatmul.mubr.bf16.gmra.mrb[0].mxu0 %v518
        %v619 = vpop.f32.mrb[0].mxu0
        %v620 = vadd.f32 %v416, %v619
        %v621 = vpop.f32.mrb[0].mxu0
        %v622 = vpop.f32.mrb[0].mxu0
        %v623 = vadd.f32 %v416, %v622
        %v624 = vpop.f32.mrb[0].mxu0
        %625 = vmatprep.mubr.bf16.mxu0 0
        %626 = vmatmul.mubr.bf16.gmra.mrb[0].mxu0 %v521
        %v627 = vpop.f32.mrb[0].mxu0
        %v628 = vadd.f32 %v416, %v627
        %v629 = vpop.f32.mrb[0].mxu0
        %v630 = vpop.f32.mrb[0].mxu0
        %v631 = vadd.f32 %v416, %v630
        %v632 = vpop.f32.mrb[0].mxu0
        %633 = vmatprep.mubr.bf16.mxu0 0
        %634 = vmatmul.mubr.bf16.gmra.mrb[0].mxu0 %v524
        %v635 = vpop.f32.mrb[0].mxu0
        %v636 = vadd.f32 %v416, %v635
        %v637 = vpop.f32.mrb[0].mxu0
        %v638 = vpop.f32.mrb[0].mxu0
        %v639 = vadd.f32 %v416, %v638
        %v640 = vpop.f32.mrb[0].mxu0
        %641 = vmatprep.mubr.bf16.mxu0 0
        %642 = vmatmul.mubr.bf16.gmra.mrb[0].mxu0 %v527
        %v643 = vpop.f32.mrb[0].mxu0
        %v644 = vadd.f32 %v416, %v643
        %v645 = vpop.f32.mrb[0].mxu0
        %v646 = vpop.f32.mrb[0].mxu0
        %v647 = vadd.f32 %v416, %v646
        %v648 = vpop.f32.mrb[0].mxu0
        %649 = vmatprep.mubr.bf16.mxu0 0
        %650 = vmatmul.mubr.bf16.gmra.mrb[0].mxu0 %v530
        %v651 = vpop.f32.mrb[0].mxu0
        %v652 = vadd.f32 %v416, %v651
        %v653 = vpop.f32.mrb[0].mxu0
        %v654 = vpop.f32.mrb[0].mxu0
        %v655 = vadd.f32 %v416, %v654
        %v656 = vpop.f32.mrb[0].mxu0
        %657 = vmatprep.mubr.bf16.mxu0 0
        %658 = vmatmul.mubr.bf16.gmra.mrb[0].mxu0 %v533
        %v659 = vpop.f32.mrb[0].mxu0
        %v660 = vadd.f32 %v416, %v659
        %v661 = vpop.f32.mrb[0].mxu0
        %v662 = vpop.f32.mrb[0].mxu0
        %v663 = vadd.f32 %v416, %v662
        %v664 = vpop.f32.mrb[0].mxu0
        %665 = vmatprep.mubr.bf16.mxu0 0
        %666 = vmatmul.mubr.bf16.gmra.mrb[0].mxu0 %v536
        %v667 = vpop.f32.mrb[0].mxu0
        %v668 = vadd.f32 %v416, %v667
        %v669 = vpop.f32.mrb[0].mxu0
        %v670 = vpop.f32.mrb[0].mxu0
        %v671 = vadd.f32 %v416, %v670
        %v672 = vpop.f32.mrb[0].mxu0
        %673 = vmatprep.mubr.bf16.mxu0 0
        %674 = vmatmul.mubr.bf16.gmra.mrb[0].mxu0 %v539
        %v675 = vpop.f32.mrb[0].mxu0
        %v676 = vadd.f32 %v416, %v675
        %v677 = vpop.f32.mrb[0].mxu0
        %v678 = vpop.f32.mrb[0].mxu0
        %v679 = vadd.f32 %v416, %v678
        %v680 = vpop.f32.mrb[0].mxu0
        %681 = vmatprep.mubr.bf16.mxu0 0
        %682 = vmatmul.mubr.bf16.gmra.mrb[0].mxu0 %v542
        %v683 = vpop.f32.mrb[0].mxu0
        %v684 = vadd.f32 %v416, %v683
        %v685 = vpop.f32.mrb[0].mxu0
        %v686 = vpop.f32.mrb[0].mxu0
        %v687 = vadd.f32 %v416, %v686
        %v688 = vpop.f32.mrb[0].mxu0
        %689 = vmatprep.mubr.bf16.mxu0 0
        %690 = vmatmul.mubr.bf16.gmra.mrb[0].mxu0 %v545
        %v691 = vpop.f32.mrb[0].mxu0
        %v692 = vadd.f32 %v416, %v691
        %v693 = vpop.f32.mrb[0].mxu0
        %v694 = vpop.f32.mrb[0].mxu0
        %v695 = vadd.f32 %v416, %v694
        %v696 = vpop.f32.mrb[0].mxu0
        %697 = vmatprep.mubr.bf16.mxu0 0
        %698 = vmatmul.mubr.bf16.gmra.mrb[0].mxu0 %v548
        %v699 = vpop.f32.mrb[0].mxu0
        %v700 = vadd.f32 %v416, %v699
        %v701 = vpop.f32.mrb[0].mxu0
        %v702 = vpop.f32.mrb[0].mxu0
        %v703 = vadd.f32 %v416, %v702
        %v704 = vpop.f32.mrb[0].mxu0
        %705 = vmatprep.mubr.bf16.mxu0 0
        %706 = vmatmul.mubr.bf16.gmra.mrb[0].mxu0 %v551
        %v707 = vpop.f32.mrb[0].mxu0
        %v708 = vadd.f32 %v416, %v707
        %v709 = vpop.f32.mrb[0].mxu0
        %v710 = vpop.f32.mrb[0].mxu0
        %v711 = vadd.f32 %v416, %v710
        %v712 = vpop.f32.mrb[0].mxu0
        %713 = vdwg.mxu0
        %v714 = vmax.f32 %v588, 0.0
        %v715 = vmax.f32 %v591, 0.0
        %v716 = vmax.f32 %v596, 0.0
        %v717 = vmax.f32 %v599, 0.0
        %v718 = vmax.f32 %v604, 0.0
        %v719 = vmax.f32 %v607, 0.0
        %v720 = vmax.f32 %v612, 0.0
        %v721 = vmax.f32 %v615, 0.0
        %v722 = vmax.f32 %v620, 0.0
        %v723 = vmax.f32 %v623, 0.0
        %v724 = vmax.f32 %v628, 0.0
        %v725 = vmax.f32 %v631, 0.0
        %v726 = vmax.f32 %v636, 0.0
        %v727 = vmax.f32 %v639, 0.0
        %v728 = vmax.f32 %v644, 0.0
        %v729 = vmax.f32 %v647, 0.0
        %v730 = vmax.f32 %v652, 0.0
        %v731 = vmax.f32 %v655, 0.0
        %v732 = vmax.f32 %v660, 0.0
        %v733 = vmax.f32 %v663, 0.0
        %v734 = vmax.f32 %v668, 0.0
        %v735 = vmax.f32 %v671, 0.0
        %v736 = vmax.f32 %v676, 0.0
        %v737 = vmax.f32 %v679, 0.0
        %v738 = vmax.f32 %v684, 0.0
        %v739 = vmax.f32 %v687, 0.0
        %v740 = vmax.f32 %v692, 0.0
        %v741 = vmax.f32 %v695, 0.0
        %v742 = vmax.f32 %v700, 0.0
        %v743 = vmax.f32 %v703, 0.0
        %v744 = vmax.f32 %v708, 0.0
        %v745 = vmax.f32 %v711, 0.0
        %v746 = vpack.c.bf16 %v715, %v714
        %v747 = vpack.c.bf16 %v717, %v716
        %v748 = vpack.c.bf16 %v719, %v718
        %v749 = vpack.c.bf16 %v721, %v720
        %v750 = vpack.c.bf16 %v723, %v722
        %v751 = vpack.c.bf16 %v725, %v724
        %v752 = vpack.c.bf16 %v727, %v726
        %v753 = vpack.c.bf16 %v729, %v728
        %v754 = vpack.c.bf16 %v731, %v730
        %v755 = vpack.c.bf16 %v733, %v732
        %v756 = vpack.c.bf16 %v735, %v734
        %v757 = vpack.c.bf16 %v737, %v736
        %v758 = vpack.c.bf16 %v739, %v738
        %v759 = vpack.c.bf16 %v741, %v740
        %v760 = vpack.c.bf16 %v743, %v742
        %v761 = vpack.c.bf16 %v745, %v744
        %762 = vst [vmem:[#allocation2] sm:$0xf] 0
        %763 = vst [vmem:[#allocation2 + $0x4] sm:$0xf] 0
        %764 = vst [vmem:[#allocation2 + $0x8] sm:$0x1] 0
        %s765 = scalar_lea.vmem [#allocation2], 204
        %766 = vst [vmem:[%s765] sm:$0xf] 0
        %767 = vst [vmem:[%s765 + $0x4] sm:$0xf] 0
        %768 = vst [vmem:[%s765 + $0x8] sm:$0x1] 0
        %s769 = scalar_lea.vmem [#allocation2], 12
        %vm770 = vcmask 1040384
        %vm771 = vsmask.f32 256
        %vm772 = vmand %vm770, %vm771
        %v773 = vld [vmem:[%s769] sm:$0x1]
        %v774 = vsel %vm772, 0, %v773
        %775 = vst [vmem:[%s769] sm:$0x1] %v774
        %v776 = vld [vmem:[%s769 + $0xc] sm:$0x1]
        %v777 = vsel %vm772, 0, %v776
        %778 = vst [vmem:[%s769 + $0xc] sm:$0x1] %v777
        %v779 = vld [vmem:[%s769 + $0x18] sm:$0x1]
        %v780 = vsel %vm772, 0, %v779
        %781 = vst [vmem:[%s769 + $0x18] sm:$0x1] %v780
        %v782 = vld [vmem:[%s769 + $0x24] sm:$0x1]
        %v783 = vsel %vm772, 0, %v782
        %784 = vst [vmem:[%s769 + $0x24] sm:$0x1] %v783
        %v785 = vld [vmem:[%s769 + $0x30] sm:$0x1]
        %v786 = vsel %vm772, 0, %v785
        %787 = vst [vmem:[%s769 + $0x30] sm:$0x1] %v786
        %v788 = vld [vmem:[%s769 + $0x3c] sm:$0x1]
        %v789 = vsel %vm772, 0, %v788
        %790 = vst [vmem:[%s769 + $0x3c] sm:$0x1] %v789
        %v791 = vld [vmem:[%s769 + $0x48] sm:$0x1]
        %v792 = vsel %vm772, 0, %v791
        %793 = vst [vmem:[%s769 + $0x48] sm:$0x1] %v792
        %v794 = vld [vmem:[%s769 + $0x54] sm:$0x1]
        %v795 = vsel %vm772, 0, %v794
        %796 = vst [vmem:[%s769 + $0x54] sm:$0x1] %v795
        %v797 = vld [vmem:[%s769 + $0x60] sm:$0x1]
        %v798 = vsel %vm772, 0, %v797
        %799 = vst [vmem:[%s769 + $0x60] sm:$0x1] %v798
        %v800 = vld [vmem:[%s769 + $0x6c] sm:$0x1]
        %v801 = vsel %vm772, 0, %v800
        %802 = vst [vmem:[%s769 + $0x6c] sm:$0x1] %v801
        %v803 = vld [vmem:[%s769 + $0x78] sm:$0x1]
        %v804 = vsel %vm772, 0, %v803
        %805 = vst [vmem:[%s769 + $0x78] sm:$0x1] %v804
        %v806 = vld [vmem:[%s769 + $0x84] sm:$0x1]
        %v807 = vsel %vm772, 0, %v806
        %808 = vst [vmem:[%s769 + $0x84] sm:$0x1] %v807
        %v809 = vld [vmem:[%s769 + $0x90] sm:$0x1]
        %v810 = vsel %vm772, 0, %v809
        %811 = vst [vmem:[%s769 + $0x90] sm:$0x1] %v810
        %v812 = vld [vmem:[%s769 + $0x9c] sm:$0x1]
        %v813 = vsel %vm772, 0, %v812
        %814 = vst [vmem:[%s769 + $0x9c] sm:$0x1] %v813
        %v815 = vld [vmem:[%s769 + $0xa8] sm:$0x1]
        %v816 = vsel %vm772, 0, %v815
        %817 = vst [vmem:[%s769 + $0xa8] sm:$0x1] %v816
        %v818 = vld [vmem:[%s769 + $0xb4] sm:$0x1]
        %v819 = vsel %vm772, 0, %v818
        %820 = vst [vmem:[%s769 + $0xb4] sm:$0x1] %v819
        %vm821 = vsmask.f32 7938
        %vm822 = vmand %vm770, %vm821
        %v823 = vld [vmem:[%s769 + $0x8] sm:$0x1]
        %v824 = vsel %vm822, 0, %v823
        %825 = vst [vmem:[%s769 + $0x8] sm:$0x1] %v824
        %v826 = vld [vmem:[%s769 + $0x14] sm:$0x1]
        %v827 = vsel %vm822, 0, %v826
        %828 = vst [vmem:[%s769 + $0x14] sm:$0x1] %v827
        %v829 = vld [vmem:[%s769 + $0x20] sm:$0x1]
        %v830 = vsel %vm822, 0, %v829
        %831 = vst [vmem:[%s769 + $0x20] sm:$0x1] %v830
        %v832 = vld [vmem:[%s769 + $0x2c] sm:$0x1]
        %v833 = vsel %vm822, 0, %v832
        %834 = vst [vmem:[%s769 + $0x2c] sm:$0x1] %v833
        %v835 = vld [vmem:[%s769 + $0x38] sm:$0x1]
        %v836 = vsel %vm822, 0, %v835
        %837 = vst [vmem:[%s769 + $0x38] sm:$0x1] %v836
        %v838 = vld [vmem:[%s769 + $0x44] sm:$0x1]
        %v839 = vsel %vm822, 0, %v838
        %840 = vst [vmem:[%s769 + $0x44] sm:$0x1] %v839
        %v841 = vld [vmem:[%s769 + $0x50] sm:$0x1]
        %v842 = vsel %vm822, 0, %v841
        %843 = vst [vmem:[%s769 + $0x50] sm:$0x1] %v842
        %v844 = vld [vmem:[%s769 + $0x5c] sm:$0x1]
        %v845 = vsel %vm822, 0, %v844
        %846 = vst [vmem:[%s769 + $0x5c] sm:$0x1] %v845
        %v847 = vld [vmem:[%s769 + $0x68] sm:$0x1]
        %v848 = vsel %vm822, 0, %v847
        %849 = vst [vmem:[%s769 + $0x68] sm:$0x1] %v848
        %v850 = vld [vmem:[%s769 + $0x74] sm:$0x1]
        %v851 = vsel %vm822, 0, %v850
        %852 = vst [vmem:[%s769 + $0x74] sm:$0x1] %v851
        %v853 = vld [vmem:[%s769 + $0x80] sm:$0x1]
        %v854 = vsel %vm822, 0, %v853
        %855 = vst [vmem:[%s769 + $0x80] sm:$0x1] %v854
        %v856 = vld [vmem:[%s769 + $0x8c] sm:$0x1]
        %v857 = vsel %vm822, 0, %v856
        %858 = vst [vmem:[%s769 + $0x8c] sm:$0x1] %v857
        %v859 = vld [vmem:[%s769 + $0x98] sm:$0x1]
        %v860 = vsel %vm822, 0, %v859
        %861 = vst [vmem:[%s769 + $0x98] sm:$0x1] %v860
        %v862 = vld [vmem:[%s769 + $0xa4] sm:$0x1]
        %v863 = vsel %vm822, 0, %v862
        %864 = vst [vmem:[%s769 + $0xa4] sm:$0x1] %v863
        %v865 = vld [vmem:[%s769 + $0xb0] sm:$0x1]
        %v866 = vsel %vm822, 0, %v865
        %867 = vst [vmem:[%s769 + $0xb0] sm:$0x1] %v866
        %v868 = vld [vmem:[%s769 + $0xbc] sm:$0x1]
        %v869 = vsel %vm822, 0, %v868
        %870 = vst [vmem:[%s769 + $0xbc] sm:$0x1] %v869
        %v887 = vunpack.c.l.b16 %v746
        %v888 = vunpack.c.h.b16 %v746
        %v889 = vunpack.c.l.b16 %v747
        %v890 = vunpack.c.h.b16 %v747
        %v891 = vunpack.c.l.b16 %v748
        %v892 = vunpack.c.h.b16 %v748
        %v893 = vunpack.c.l.b16 %v749
        %v894 = vunpack.c.h.b16 %v749
        %v895 = vunpack.c.l.b16 %v750
        %v896 = vunpack.c.h.b16 %v750
        %v897 = vunpack.c.l.b16 %v751
        %v898 = vunpack.c.h.b16 %v751
        %v899 = vunpack.c.l.b16 %v752
        %v900 = vunpack.c.h.b16 %v752
        %v901 = vunpack.c.l.b16 %v753
        %v902 = vunpack.c.h.b16 %v753
        %v903 = vunpack.c.l.b16 %v754
        %v904 = vunpack.c.h.b16 %v754
        %v905 = vunpack.c.l.b16 %v755
        %v906 = vunpack.c.h.b16 %v755
        %v907 = vunpack.c.l.b16 %v756
        %v908 = vunpack.c.h.b16 %v756
        %v909 = vunpack.c.l.b16 %v757
        %v910 = vunpack.c.h.b16 %v757
        %v911 = vunpack.c.l.b16 %v758
        %v912 = vunpack.c.h.b16 %v758
        %v913 = vunpack.c.l.b16 %v759
        %v914 = vunpack.c.h.b16 %v759
        %v915 = vunpack.c.l.b16 %v760
        %v916 = vunpack.c.h.b16 %v760
        %v917 = vunpack.c.l.b16 %v761
        %v918 = vunpack.c.h.b16 %v761
        %v919 = vpack.c.b16 %v887, %v887
        %v920 = vpack.c.b16 %v888, %v888
        %v921 = vpack.c.b16 %v889, %v889
        %v922 = vpack.c.b16 %v890, %v890
        %v923 = vpack.c.b16 %v891, %v891
        %v924 = vpack.c.b16 %v892, %v892
        %v925 = vpack.c.b16 %v893, %v893
        %v926 = vpack.c.b16 %v894, %v894
        %v927 = vpack.c.b16 %v895, %v895
        %v928 = vpack.c.b16 %v896, %v896
        %v929 = vpack.c.b16 %v897, %v897
        %v930 = vpack.c.b16 %v898, %v898
        %v931 = vpack.c.b16 %v899, %v899
        %v932 = vpack.c.b16 %v900, %v900
        %v933 = vpack.c.b16 %v901, %v901
        %v934 = vpack.c.b16 %v902, %v902
        %v935 = vpack.c.b16 %v903, %v903
        %v936 = vpack.c.b16 %v904, %v904
        %v937 = vpack.c.b16 %v905, %v905
        %v938 = vpack.c.b16 %v906, %v906
        %v939 = vpack.c.b16 %v907, %v907
        %v940 = vpack.c.b16 %v908, %v908
        %v941 = vpack.c.b16 %v909, %v909
        %v942 = vpack.c.b16 %v910, %v910
        %v943 = vpack.c.b16 %v911, %v911
        %v944 = vpack.c.b16 %v912, %v912
        %v945 = vpack.c.b16 %v913, %v913
        %v946 = vpack.c.b16 %v914, %v914
        %v947 = vpack.c.b16 %v915, %v915
        %v948 = vpack.c.b16 %v916, %v916
        %v949 = vpack.c.b16 %v917, %v917
        %v950 = vpack.c.b16 %v918, %v918
        %vm951 = vsmask.f32 4368
        %vm952 = vmor %vm771, %vm951
        %v954 = vshrl.u32 %v919, 16
        %v956 = vrot.slane %v954, 7
        %v957 = vshll.u32 %v919, 16
        %v959 = vor.u32 %v956, %v957
        %v960 = vrot.slane %v956, 4
        %v962 = vshrl.u32 %v920, 16
        %v964 = vrot.slane %v962, 7
        %v965 = vshll.u32 %v920, 16
        %v967 = vor.u32 %v964, %v965
        %v968 = vsel %vm952, %v960, %v967
        %v969 = vrot.slane %v964, 4
        %v971 = vshrl.u32 %v921, 16
        %v973 = vrot.slane %v971, 7
        %v974 = vshll.u32 %v921, 16
        %v976 = vor.u32 %v973, %v974
        %v977 = vrot.slane %v973, 4
        %v979 = vshrl.u32 %v922, 16
        %v981 = vrot.slane %v979, 7
        %v982 = vshll.u32 %v922, 16
        %v984 = vor.u32 %v981, %v982
        %v985 = vsel %vm952, %v977, %v984
        %v986 = vrot.slane %v981, 4
        %v988 = vshrl.u32 %v923, 16
        %v990 = vrot.slane %v988, 7
        %v991 = vshll.u32 %v923, 16
        %v993 = vor.u32 %v990, %v991
        %v994 = vrot.slane %v990, 4
        %v996 = vshrl.u32 %v924, 16
        %v998 = vrot.slane %v996, 7
        %v999 = vshll.u32 %v924, 16
        %v1001 = vor.u32 %v998, %v999
        %v1002 = vsel %vm952, %v994, %v1001
        %v1003 = vrot.slane %v998, 4
        %v1005 = vshrl.u32 %v925, 16
        %v1007 = vrot.slane %v1005, 7
        %v1008 = vshll.u32 %v925, 16
        %v1010 = vor.u32 %v1007, %v1008
        %v1011 = vrot.slane %v1007, 4
        %v1013 = vshrl.u32 %v926, 16
        %v1015 = vrot.slane %v1013, 7
        %v1016 = vshll.u32 %v926, 16
        %v1018 = vor.u32 %v1015, %v1016
        %v1019 = vsel %vm952, %v1011, %v1018
        %v1020 = vrot.slane %v1015, 4
        %v1022 = vshrl.u32 %v927, 16
        %v1024 = vrot.slane %v1022, 7
        %v1025 = vshll.u32 %v927, 16
        %v1027 = vor.u32 %v1024, %v1025
        %v1028 = vrot.slane %v1024, 4
        %v1030 = vshrl.u32 %v928, 16
        %v1032 = vrot.slane %v1030, 7
        %v1033 = vshll.u32 %v928, 16
        %v1035 = vor.u32 %v1032, %v1033
        %v1036 = vsel %vm952, %v1028, %v1035
        %v1037 = vrot.slane %v1032, 4
        %v1039 = vshrl.u32 %v929, 16
        %v1041 = vrot.slane %v1039, 7
        %v1042 = vshll.u32 %v929, 16
        %v1044 = vor.u32 %v1041, %v1042
        %v1045 = vrot.slane %v1041, 4
        %v1047 = vshrl.u32 %v930, 16
        %v1049 = vrot.slane %v1047, 7
        %v1050 = vshll.u32 %v930, 16
        %v1052 = vor.u32 %v1049, %v1050
        %v1053 = vsel %vm952, %v1045, %v1052
        %v1054 = vrot.slane %v1049, 4
        %v1056 = vshrl.u32 %v931, 16
        %v1058 = vrot.slane %v1056, 7
        %v1059 = vshll.u32 %v931, 16
        %v1061 = vor.u32 %v1058, %v1059
        %v1062 = vrot.slane %v1058, 4
        %v1064 = vshrl.u32 %v932, 16
        %v1066 = vrot.slane %v1064, 7
        %v1067 = vshll.u32 %v932, 16
        %v1069 = vor.u32 %v1066, %v1067
        %v1070 = vsel %vm952, %v1062, %v1069
        %v1071 = vrot.slane %v1066, 4
        %v1073 = vshrl.u32 %v933, 16
        %v1075 = vrot.slane %v1073, 7
        %v1076 = vshll.u32 %v933, 16
        %v1078 = vor.u32 %v1075, %v1076
        %v1079 = vrot.slane %v1075, 4
        %v1081 = vshrl.u32 %v934, 16
        %v1083 = vrot.slane %v1081, 7
        %v1084 = vshll.u32 %v934, 16
        %v1086 = vor.u32 %v1083, %v1084
        %v1087 = vsel %vm952, %v1079, %v1086
        %v1088 = vrot.slane %v1083, 4
        %v1090 = vshrl.u32 %v935, 16
        %v1092 = vrot.slane %v1090, 7
        %v1093 = vshll.u32 %v935, 16
        %v1095 = vor.u32 %v1092, %v1093
        %v1096 = vrot.slane %v1092, 4
        %v1098 = vshrl.u32 %v936, 16
        %v1100 = vrot.slane %v1098, 7
        %v1101 = vshll.u32 %v936, 16
        %v1103 = vor.u32 %v1100, %v1101
        %v1104 = vsel %vm952, %v1096, %v1103
        %v1105 = vrot.slane %v1100, 4
        %v1107 = vshrl.u32 %v937, 16
        %v1109 = vrot.slane %v1107, 7
        %v1110 = vshll.u32 %v937, 16
        %v1112 = vor.u32 %v1109, %v1110
        %v1113 = vrot.slane %v1109, 4
        %v1115 = vshrl.u32 %v938, 16
        %v1117 = vrot.slane %v1115, 7
        %v1118 = vshll.u32 %v938, 16
        %v1120 = vor.u32 %v1117, %v1118
        %v1121 = vsel %vm952, %v1113, %v1120
        %v1122 = vrot.slane %v1117, 4
        %v1124 = vshrl.u32 %v939, 16
        %v1126 = vrot.slane %v1124, 7
        %v1127 = vshll.u32 %v939, 16
        %v1129 = vor.u32 %v1126, %v1127
        %v1130 = vrot.slane %v1126, 4
        %v1132 = vshrl.u32 %v940, 16
        %v1134 = vrot.slane %v1132, 7
        %v1135 = vshll.u32 %v940, 16
        %v1137 = vor.u32 %v1134, %v1135
        %v1138 = vsel %vm952, %v1130, %v1137
        %v1139 = vrot.slane %v1134, 4
        %v1141 = vshrl.u32 %v941, 16
        %v1143 = vrot.slane %v1141, 7
        %v1144 = vshll.u32 %v941, 16
        %v1146 = vor.u32 %v1143, %v1144
        %v1147 = vrot.slane %v1143, 4
        %v1149 = vshrl.u32 %v942, 16
        %v1151 = vrot.slane %v1149, 7
        %v1152 = vshll.u32 %v942, 16
        %v1154 = vor.u32 %v1151, %v1152
        %v1155 = vsel %vm952, %v1147, %v1154
        %v1156 = vrot.slane %v1151, 4
        %v1158 = vshrl.u32 %v943, 16
        %v1160 = vrot.slane %v1158, 7
        %v1161 = vshll.u32 %v943, 16
        %v1163 = vor.u32 %v1160, %v1161
        %v1164 = vrot.slane %v1160, 4
        %v1166 = vshrl.u32 %v944, 16
        %v1168 = vrot.slane %v1166, 7
        %v1169 = vshll.u32 %v944, 16
        %v1171 = vor.u32 %v1168, %v1169
        %v1172 = vsel %vm952, %v1164, %v1171
        %v1173 = vrot.slane %v1168, 4
        %v1175 = vshrl.u32 %v945, 16
        %v1177 = vrot.slane %v1175, 7
        %v1178 = vshll.u32 %v945, 16
        %v1180 = vor.u32 %v1177, %v1178
        %v1181 = vrot.slane %v1177, 4
        %v1183 = vshrl.u32 %v946, 16
        %v1185 = vrot.slane %v1183, 7
        %v1186 = vshll.u32 %v946, 16
        %v1188 = vor.u32 %v1185, %v1186
        %v1189 = vsel %vm952, %v1181, %v1188
        %v1190 = vrot.slane %v1185, 4
        %v1192 = vshrl.u32 %v947, 16
        %v1194 = vrot.slane %v1192, 7
        %v1195 = vshll.u32 %v947, 16
        %v1197 = vor.u32 %v1194, %v1195
        %v1198 = vrot.slane %v1194, 4
        %v1200 = vshrl.u32 %v948, 16
        %v1202 = vrot.slane %v1200, 7
        %v1203 = vshll.u32 %v948, 16
        %v1205 = vor.u32 %v1202, %v1203
        %v1206 = vsel %vm952, %v1198, %v1205
        %v1207 = vrot.slane %v1202, 4
        %v1209 = vshrl.u32 %v949, 16
        %v1211 = vrot.slane %v1209, 7
        %v1212 = vshll.u32 %v949, 16
        %v1214 = vor.u32 %v1211, %v1212
        %v1215 = vrot.slane %v1211, 4
        %v1217 = vshrl.u32 %v950, 16
        %v1219 = vrot.slane %v1217, 7
        %v1220 = vshll.u32 %v950, 16
        %v1222 = vor.u32 %v1219, %v1220
        %v1223 = vsel %vm952, %v1215, %v1222
        %v1224 = vrot.slane %v1219, 4
        %vm1273 = vcmask 1043456
        %vm1274 = vmand %vm1273, %vm821
        %v1275 = vld [vmem:[%s769] sm:$0xf]
        %v1276 = vsel %vm1274, %v959, %v1275
        %1277 = vst [vmem:[%s769] sm:$0xf] %v1276
        %1278 = vst [vmem:[%s769 + $0x4] sm:$0xf] %v968
        %v1279 = vld [vmem:[%s769 + $0x8] sm:$0x1]
        %v1280 = vsel %vm772, %v969, %v1279
        %1281 = vst [vmem:[%s769 + $0x8] sm:$0x1] %v1280
        %v1282 = vld [vmem:[%s769 + $0xc] sm:$0xf]
        %v1283 = vsel %vm1274, %v976, %v1282
        %1284 = vst [vmem:[%s769 + $0xc] sm:$0xf] %v1283
        %1285 = vst [vmem:[%s769 + $0x10] sm:$0xf] %v985
        %v1286 = vld [vmem:[%s769 + $0x14] sm:$0x1]
        %v1287 = vsel %vm772, %v986, %v1286
        %1288 = vst [vmem:[%s769 + $0x14] sm:$0x1] %v1287
        %v1289 = vld [vmem:[%s769 + $0x18] sm:$0xf]
        %v1290 = vsel %vm1274, %v993, %v1289
        %1291 = vst [vmem:[%s769 + $0x18] sm:$0xf] %v1290
        %1292 = vst [vmem:[%s769 + $0x1c] sm:$0xf] %v1002
        %v1293 = vld [vmem:[%s769 + $0x20] sm:$0x1]
        %v1294 = vsel %vm772, %v1003, %v1293
        %1295 = vst [vmem:[%s769 + $0x20] sm:$0x1] %v1294
        %v1296 = vld [vmem:[%s769 + $0x24] sm:$0xf]
        %v1297 = vsel %vm1274, %v1010, %v1296
        %1298 = vst [vmem:[%s769 + $0x24] sm:$0xf] %v1297
        %1299 = vst [vmem:[%s769 + $0x28] sm:$0xf] %v1019
        %v1300 = vld [vmem:[%s769 + $0x2c] sm:$0x1]
        %v1301 = vsel %vm772, %v1020, %v1300
        %1302 = vst [vmem:[%s769 + $0x2c] sm:$0x1] %v1301
        %v1303 = vld [vmem:[%s769 + $0x30] sm:$0xf]
        %v1304 = vsel %vm1274, %v1027, %v1303
        %1305 = vst [vmem:[%s769 + $0x30] sm:$0xf] %v1304
        %1306 = vst [vmem:[%s769 + $0x34] sm:$0xf] %v1036
        %v1307 = vld [vmem:[%s769 + $0x38] sm:$0x1]
        %v1308 = vsel %vm772, %v1037, %v1307
        %1309 = vst [vmem:[%s769 + $0x38] sm:$0x1] %v1308
        %v1310 = vld [vmem:[%s769 + $0x3c] sm:$0xf]
        %v1311 = vsel %vm1274, %v1044, %v1310
        %1312 = vst [vmem:[%s769 + $0x3c] sm:$0xf] %v1311
        %1313 = vst [vmem:[%s769 + $0x40] sm:$0xf] %v1053
        %v1314 = vld [vmem:[%s769 + $0x44] sm:$0x1]
        %v1315 = vsel %vm772, %v1054, %v1314
        %1316 = vst [vmem:[%s769 + $0x44] sm:$0x1] %v1315
        %v1317 = vld [vmem:[%s769 + $0x48] sm:$0xf]
        %v1318 = vsel %vm1274, %v1061, %v1317
        %1319 = vst [vmem:[%s769 + $0x48] sm:$0xf] %v1318
        %1320 = vst [vmem:[%s769 + $0x4c] sm:$0xf] %v1070
        %v1321 = vld [vmem:[%s769 + $0x50] sm:$0x1]
        %v1322 = vsel %vm772, %v1071, %v1321
        %1323 = vst [vmem:[%s769 + $0x50] sm:$0x1] %v1322
        %v1324 = vld [vmem:[%s769 + $0x54] sm:$0xf]
        %v1325 = vsel %vm1274, %v1078, %v1324
        %1326 = vst [vmem:[%s769 + $0x54] sm:$0xf] %v1325
        %1327 = vst [vmem:[%s769 + $0x58] sm:$0xf] %v1087
        %v1328 = vld [vmem:[%s769 + $0x5c] sm:$0x1]
        %v1329 = vsel %vm772, %v1088, %v1328
        %1330 = vst [vmem:[%s769 + $0x5c] sm:$0x1] %v1329
        %v1331 = vld [vmem:[%s769 + $0x60] sm:$0xf]
        %v1332 = vsel %vm1274, %v1095, %v1331
        %1333 = vst [vmem:[%s769 + $0x60] sm:$0xf] %v1332
        %1334 = vst [vmem:[%s769 + $0x64] sm:$0xf] %v1104
        %v1335 = vld [vmem:[%s769 + $0x68] sm:$0x1]
        %v1336 = vsel %vm772, %v1105, %v1335
        %1337 = vst [vmem:[%s769 + $0x68] sm:$0x1] %v1336
        %v1338 = vld [vmem:[%s769 + $0x6c] sm:$0xf]
        %v1339 = vsel %vm1274, %v1112, %v1338
        %1340 = vst [vmem:[%s769 + $0x6c] sm:$0xf] %v1339
        %1341 = vst [vmem:[%s769 + $0x70] sm:$0xf] %v1121
        %v1342 = vld [vmem:[%s769 + $0x74] sm:$0x1]
        %v1343 = vsel %vm772, %v1122, %v1342
        %1344 = vst [vmem:[%s769 + $0x74] sm:$0x1] %v1343
        %v1345 = vld [vmem:[%s769 + $0x78] sm:$0xf]
        %v1346 = vsel %vm1274, %v1129, %v1345
        %1347 = vst [vmem:[%s769 + $0x78] sm:$0xf] %v1346
        %1348 = vst [vmem:[%s769 + $0x7c] sm:$0xf] %v1138
        %v1349 = vld [vmem:[%s769 + $0x80] sm:$0x1]
        %v1350 = vsel %vm772, %v1139, %v1349
        %1351 = vst [vmem:[%s769 + $0x80] sm:$0x1] %v1350
        %v1352 = vld [vmem:[%s769 + $0x84] sm:$0xf]
        %v1353 = vsel %vm1274, %v1146, %v1352
        %1354 = vst [vmem:[%s769 + $0x84] sm:$0xf] %v1353
        %1355 = vst [vmem:[%s769 + $0x88] sm:$0xf] %v1155
        %v1356 = vld [vmem:[%s769 + $0x8c] sm:$0x1]
        %v1357 = vsel %vm772, %v1156, %v1356
        %1358 = vst [vmem:[%s769 + $0x8c] sm:$0x1] %v1357
        %v1359 = vld [vmem:[%s769 + $0x90] sm:$0xf]
        %v1360 = vsel %vm1274, %v1163, %v1359
        %1361 = vst [vmem:[%s769 + $0x90] sm:$0xf] %v1360
        %1362 = vst [vmem:[%s769 + $0x94] sm:$0xf] %v1172
        %v1363 = vld [vmem:[%s769 + $0x98] sm:$0x1]
        %v1364 = vsel %vm772, %v1173, %v1363
        %1365 = vst [vmem:[%s769 + $0x98] sm:$0x1] %v1364
        %v1366 = vld [vmem:[%s769 + $0x9c] sm:$0xf]
        %v1367 = vsel %vm1274, %v1180, %v1366
        %1368 = vst [vmem:[%s769 + $0x9c] sm:$0xf] %v1367
        %1369 = vst [vmem:[%s769 + $0xa0] sm:$0xf] %v1189
        %v1370 = vld [vmem:[%s769 + $0xa4] sm:$0x1]
        %v1371 = vsel %vm772, %v1190, %v1370
        %1372 = vst [vmem:[%s769 + $0xa4] sm:$0x1] %v1371
        %v1373 = vld [vmem:[%s769 + $0xa8] sm:$0xf]
        %v1374 = vsel %vm1274, %v1197, %v1373
        %1375 = vst [vmem:[%s769 + $0xa8] sm:$0xf] %v1374
        %1376 = vst [vmem:[%s769 + $0xac] sm:$0xf] %v1206
        %v1377 = vld [vmem:[%s769 + $0xb0] sm:$0x1]
        %v1378 = vsel %vm772, %v1207, %v1377
        %1379 = vst [vmem:[%s769 + $0xb0] sm:$0x1] %v1378
        %v1380 = vld [vmem:[%s769 + $0xb4] sm:$0xf]
        %v1381 = vsel %vm1274, %v1214, %v1380
        %1382 = vst [vmem:[%s769 + $0xb4] sm:$0xf] %v1381
        %1383 = vst [vmem:[%s769 + $0xb8] sm:$0xf] %v1223
        %v1384 = vld [vmem:[%s769 + $0xbc] sm:$0x1]
        %v1385 = vsel %vm772, %v1224, %v1384
        %1386 = vst [vmem:[%s769 + $0xbc] sm:$0x1] %v1385
        %v1387 = vld [vmem:[#allocation2] sm:$0xf]
        %v1388 = vld [vmem:[#allocation2 + $0x4] sm:$0xf]
        %v1389 = vld [vmem:[#allocation2 + $0xc] sm:$0xf]
        %v1390 = vld [vmem:[#allocation2 + $0x10] sm:$0xf]
        %v1391 = vld [vmem:[#allocation2 + $0x18] sm:$0xf]
        %v1392 = vld [vmem:[#allocation2 + $0x1c] sm:$0xf]
        %v1393 = vld [vmem:[#allocation2 + $0x24] sm:$0xf]
        %v1394 = vld [vmem:[#allocation2 + $0x28] sm:$0xf]
        %v1395 = vld [vmem:[#allocation2 + $0x30] sm:$0xf]
        %v1396 = vld [vmem:[#allocation2 + $0x34] sm:$0xf]
        %v1397 = vld [vmem:[#allocation2 + $0x3c] sm:$0xf]
        %v1398 = vld [vmem:[#allocation2 + $0x40] sm:$0xf]
        %v1399 = vld [vmem:[#allocation2 + $0x48] sm:$0xf]
        %v1400 = vld [vmem:[#allocation2 + $0x4c] sm:$0xf]
        %v1401 = vld [vmem:[#allocation2 + $0x54] sm:$0xf]
        %v1402 = vld [vmem:[#allocation2 + $0x58] sm:$0xf]
        %v1403 = vld [vmem:[#allocation2 + $0x60] sm:$0xf]
        %v1404 = vld [vmem:[#allocation2 + $0x64] sm:$0xf]
        %v1405 = vld [vmem:[#allocation2 + $0x6c] sm:$0xf]
        %v1406 = vld [vmem:[#allocation2 + $0x70] sm:$0xf]
        %v1407 = vld [vmem:[#allocation2 + $0x78] sm:$0xf]
        %v1408 = vld [vmem:[#allocation2 + $0x7c] sm:$0xf]
        %v1409 = vld [vmem:[#allocation2 + $0x84] sm:$0xf]
        %v1410 = vld [vmem:[#allocation2 + $0x88] sm:$0xf]
        %v1411 = vld [vmem:[#allocation2 + $0x90] sm:$0xf]
        %v1412 = vld [vmem:[#allocation2 + $0x94] sm:$0xf]
        %v1413 = vld [vmem:[#allocation2 + $0x9c] sm:$0xf]
        %v1414 = vld [vmem:[#allocation2 + $0xa0] sm:$0xf]
        %v1415 = vld [vmem:[#allocation2 + $0xa8] sm:$0xf]
        %v1416 = vld [vmem:[#allocation2 + $0xac] sm:$0xf]
        %v1417 = vld [vmem:[#allocation2 + $0xb4] sm:$0xf]
        %v1418 = vld [vmem:[#allocation2 + $0xb8] sm:$0xf]
        %v1451 = vunpack.c.l.b16 %v1387
        %v1452 = vunpack.c.l.b16 %v1388
        %v1453 = vunpack.c.l.b16 %v1389
        %v1454 = vunpack.c.l.b16 %v1390
        %v1455 = vunpack.c.l.b16 %v1391
        %v1456 = vunpack.c.l.b16 %v1392
        %v1457 = vunpack.c.l.b16 %v1393
        %v1458 = vunpack.c.l.b16 %v1394
        %v1459 = vunpack.c.l.b16 %v1395
        %v1460 = vunpack.c.l.b16 %v1396
        %v1461 = vunpack.c.l.b16 %v1397
        %v1462 = vunpack.c.l.b16 %v1398
        %v1463 = vunpack.c.l.b16 %v1399
        %v1464 = vunpack.c.l.b16 %v1400
        %v1465 = vunpack.c.l.b16 %v1401
        %v1466 = vunpack.c.l.b16 %v1402
        %v1467 = vunpack.c.l.b16 %v1403
        %v1468 = vunpack.c.l.b16 %v1404
        %v1469 = vunpack.c.l.b16 %v1405
        %v1470 = vunpack.c.l.b16 %v1406
        %v1471 = vunpack.c.l.b16 %v1407
        %v1472 = vunpack.c.l.b16 %v1408
        %v1473 = vunpack.c.l.b16 %v1409
        %v1474 = vunpack.c.l.b16 %v1410
        %v1475 = vunpack.c.l.b16 %v1411
        %v1476 = vunpack.c.l.b16 %v1412
        %v1477 = vunpack.c.l.b16 %v1413
        %v1478 = vunpack.c.l.b16 %v1414
        %v1479 = vunpack.c.l.b16 %v1415
        %v1480 = vunpack.c.l.b16 %v1416
        %v1481 = vunpack.c.l.b16 %v1417
        %v1482 = vunpack.c.l.b16 %v1418
        %v1483 = vpack.c.b16 %v1452, %v1451
        %v1484 = vpack.c.b16 %v1454, %v1453
        %v1485 = vpack.c.b16 %v1456, %v1455
        %v1486 = vpack.c.b16 %v1458, %v1457
        %v1487 = vpack.c.b16 %v1460, %v1459
        %v1488 = vpack.c.b16 %v1462, %v1461
        %v1489 = vpack.c.b16 %v1464, %v1463
        %v1490 = vpack.c.b16 %v1466, %v1465
        %v1491 = vpack.c.b16 %v1468, %v1467
        %v1492 = vpack.c.b16 %v1470, %v1469
        %v1493 = vpack.c.b16 %v1472, %v1471
        %v1494 = vpack.c.b16 %v1474, %v1473
        %v1495 = vpack.c.b16 %v1476, %v1475
        %v1496 = vpack.c.b16 %v1478, %v1477
        %v1497 = vpack.c.b16 %v1480, %v1479
        %v1498 = vpack.c.b16 %v1482, %v1481
        %1515 = vst [vmem:[#allocation3] sm:$0xff] %v1483
        %1516 = vst [vmem:[#allocation3 + $0x48] sm:$0xff] %v1484
        %1517 = vst [vmem:[#allocation3 + $0x90] sm:$0xff] %v1485
        %1518 = vst [vmem:[#allocation3 + $0xd8] sm:$0xff] %v1486
        %1519 = vst [vmem:[#allocation3 + $0x120] sm:$0xff] %v1487
        %1520 = vst [vmem:[#allocation3 + $0x168] sm:$0xff] %v1488
        %1521 = vst [vmem:[#allocation3 + $0x1b0] sm:$0xff] %v1489
        %1522 = vst [vmem:[#allocation3 + $0x1f8] sm:$0xff] %v1490
        %1523 = vst [vmem:[#allocation3 + $0x240] sm:$0xff] %v1491
        %1524 = vst [vmem:[#allocation3 + $0x288] sm:$0xff] %v1492
        %1525 = vst [vmem:[#allocation3 + $0x2d0] sm:$0xff] %v1493
        %1526 = vst [vmem:[#allocation3 + $0x318] sm:$0xff] %v1494
        %1527 = vst [vmem:[#allocation3 + $0x360] sm:$0xff] %v1495
        %1528 = vst [vmem:[#allocation3 + $0x3a8] sm:$0xff] %v1496
        %1529 = vst [vmem:[#allocation3 + $0x3f0] sm:$0xff] %v1497
        %1530 = vst [vmem:[#allocation3 + $0x438] sm:$0xff] %v1498
        %v1531 = vld [vmem:[#allocation2] sm:$0xf]
        %v1532 = vld [vmem:[#allocation2 + $0x4] sm:$0xf]
        %v1533 = vld [vmem:[#allocation2 + $0x8] sm:$0x1]
        %v1534 = vld [vmem:[#allocation2 + $0xc] sm:$0xf]
        %v1535 = vld [vmem:[#allocation2 + $0x10] sm:$0xf]
        %v1536 = vld [vmem:[#allocation2 + $0x14] sm:$0x1]
        %v1537 = vld [vmem:[#allocation2 + $0x18] sm:$0xf]
        %v1538 = vld [vmem:[#allocation2 + $0x1c] sm:$0xf]
        %v1539 = vld [vmem:[#allocation2 + $0x20] sm:$0x1]
        %v1540 = vld [vmem:[#allocation2 + $0x24] sm:$0xf]
        %v1541 = vld [vmem:[#allocation2 + $0x28] sm:$0xf]
        %v1542 = vld [vmem:[#allocation2 + $0x2c] sm:$0x1]
        %v1543 = vld [vmem:[#allocation2 + $0x30] sm:$0xf]
        %v1544 = vld [vmem:[#allocation2 + $0x34] sm:$0xf]
        %v1545 = vld [vmem:[#allocation2 + $0x38] sm:$0x1]
        %v1546 = vld [vmem:[#allocation2 + $0x3c] sm:$0xf]
        %v1547 = vld [vmem:[#allocation2 + $0x40] sm:$0xf]
        %v1548 = vld [vmem:[#allocation2 + $0x44] sm:$0x1]
        %v1549 = vld [vmem:[#allocation2 + $0x48] sm:$0xf]
        %v1550 = vld [vmem:[#allocation2 + $0x4c] sm:$0xf]
        %v1551 = vld [vmem:[#allocation2 + $0x50] sm:$0x1]
        %v1552 = vld [vmem:[#allocation2 + $0x54] sm:$0xf]
        %v1553 = vld [vmem:[#allocation2 + $0x58] sm:$0xf]
        %v1554 = vld [vmem:[#allocation2 + $0x5c] sm:$0x1]
        %v1555 = vld [vmem:[#allocation2 + $0x60] sm:$0xf]
        %v1556 = vld [vmem:[#allocation2 + $0x64] sm:$0xf]
        %v1557 = vld [vmem:[#allocation2 + $0x68] sm:$0x1]
        %v1558 = vld [vmem:[#allocation2 + $0x6c] sm:$0xf]
        %v1559 = vld [vmem:[#allocation2 + $0x70] sm:$0xf]
        %v1560 = vld [vmem:[#allocation2 + $0x74] sm:$0x1]
        %v1561 = vld [vmem:[#allocation2 + $0x78] sm:$0xf]
        %v1562 = vld [vmem:[#allocation2 + $0x7c] sm:$0xf]
        %v1563 = vld [vmem:[#allocation2 + $0x80] sm:$0x1]
        %v1564 = vld [vmem:[#allocation2 + $0x84] sm:$0xf]
        %v1565 = vld [vmem:[#allocation2 + $0x88] sm:$0xf]
        %v1566 = vld [vmem:[#allocation2 + $0x8c] sm:$0x1]
        %v1567 = vld [vmem:[#allocation2 + $0x90] sm:$0xf]
        %v1568 = vld [vmem:[#allocation2 + $0x94] sm:$0xf]
        %v1569 = vld [vmem:[#allocation2 + $0x98] sm:$0x1]
        %v1570 = vld [vmem:[#allocation2 + $0x9c] sm:$0xf]
        %v1571 = vld [vmem:[#allocation2 + $0xa0] sm:$0xf]
        %v1572 = vld [vmem:[#allocation2 + $0xa4] sm:$0x1]
        %v1573 = vld [vmem:[#allocation2 + $0xa8] sm:$0xf]
        %v1574 = vld [vmem:[#allocation2 + $0xac] sm:$0xf]
        %v1575 = vld [vmem:[#allocation2 + $0xb0] sm:$0x1]
        %v1576 = vld [vmem:[#allocation2 + $0xb4] sm:$0xf]
        %v1577 = vld [vmem:[#allocation2 + $0xb8] sm:$0xf]
        %v1578 = vld [vmem:[#allocation2 + $0xbc] sm:$0x1]
        %v1627 = vunpack.c.l.b16 %v1531
        %v1628 = vunpack.c.l.b16 %v1532
        %v1629 = vunpack.c.l.b16 %v1533
        %v1630 = vunpack.c.l.b16 %v1534
        %v1631 = vunpack.c.l.b16 %v1535
        %v1632 = vunpack.c.l.b16 %v1536
        %v1633 = vunpack.c.l.b16 %v1537
        %v1634 = vunpack.c.l.b16 %v1538
        %v1635 = vunpack.c.l.b16 %v1539
        %v1636 = vunpack.c.l.b16 %v1540
        %v1637 = vunpack.c.l.b16 %v1541
        %v1638 = vunpack.c.l.b16 %v1542
        %v1639 = vunpack.c.l.b16 %v1543
        %v1640 = vunpack.c.l.b16 %v1544
        %v1641 = vunpack.c.l.b16 %v1545
        %v1642 = vunpack.c.l.b16 %v1546
        %v1643 = vunpack.c.l.b16 %v1547
        %v1644 = vunpack.c.l.b16 %v1548
        %v1645 = vunpack.c.l.b16 %v1549
        %v1646 = vunpack.c.l.b16 %v1550
        %v1647 = vunpack.c.l.b16 %v1551
        %v1648 = vunpack.c.l.b16 %v1552
        %v1649 = vunpack.c.l.b16 %v1553
        %v1650 = vunpack.c.l.b16 %v1554
        %v1651 = vunpack.c.l.b16 %v1555
        %v1652 = vunpack.c.l.b16 %v1556
        %v1653 = vunpack.c.l.b16 %v1557
        %v1654 = vunpack.c.l.b16 %v1558
        %v1655 = vunpack.c.l.b16 %v1559
        %v1656 = vunpack.c.l.b16 %v1560
        %v1657 = vunpack.c.l.b16 %v1561
        %v1658 = vunpack.c.l.b16 %v1562
        %v1659 = vunpack.c.l.b16 %v1563
        %v1660 = vunpack.c.l.b16 %v1564
        %v1661 = vunpack.c.l.b16 %v1565
        %v1662 = vunpack.c.l.b16 %v1566
        %v1663 = vunpack.c.l.b16 %v1567
        %v1664 = vunpack.c.l.b16 %v1568
        %v1665 = vunpack.c.l.b16 %v1569
        %v1666 = vunpack.c.l.b16 %v1570
        %v1667 = vunpack.c.l.b16 %v1571
        %v1668 = vunpack.c.l.b16 %v1572
        %v1669 = vunpack.c.l.b16 %v1573
        %v1670 = vunpack.c.l.b16 %v1574
        %v1671 = vunpack.c.l.b16 %v1575
        %v1672 = vunpack.c.l.b16 %v1576
        %v1673 = vunpack.c.l.b16 %v1577
        %v1674 = vunpack.c.l.b16 %v1578
        %v1675 = vpack.c.b16 %v1628, %v1627
        %v1676 = vpack.c.b16 %v1629, %v1629
        %v1677 = vpack.c.b16 %v1631, %v1630
        %v1678 = vpack.c.b16 %v1632, %v1632
        %v1679 = vpack.c.b16 %v1634, %v1633
        %v1680 = vpack.c.b16 %v1635, %v1635
        %v1681 = vpack.c.b16 %v1637, %v1636
        %v1682 = vpack.c.b16 %v1638, %v1638
        %v1683 = vpack.c.b16 %v1640, %v1639
        %v1684 = vpack.c.b16 %v1641, %v1641
        %v1685 = vpack.c.b16 %v1643, %v1642
        %v1686 = vpack.c.b16 %v1644, %v1644
        %v1687 = vpack.c.b16 %v1646, %v1645
        %v1688 = vpack.c.b16 %v1647, %v1647
        %v1689 = vpack.c.b16 %v1649, %v1648
        %v1690 = vpack.c.b16 %v1650, %v1650
        %v1691 = vpack.c.b16 %v1652, %v1651
        %v1692 = vpack.c.b16 %v1653, %v1653
        %v1693 = vpack.c.b16 %v1655, %v1654
        %v1694 = vpack.c.b16 %v1656, %v1656
        %v1695 = vpack.c.b16 %v1658, %v1657
        %v1696 = vpack.c.b16 %v1659, %v1659
        %v1697 = vpack.c.b16 %v1661, %v1660
        %v1698 = vpack.c.b16 %v1662, %v1662
        %v1699 = vpack.c.b16 %v1664, %v1663
        %v1700 = vpack.c.b16 %v1665, %v1665
        %v1701 = vpack.c.b16 %v1667, %v1666
        %v1702 = vpack.c.b16 %v1668, %v1668
        %v1703 = vpack.c.b16 %v1670, %v1669
        %v1704 = vpack.c.b16 %v1671, %v1671
        %v1705 = vpack.c.b16 %v1673, %v1672
        %v1706 = vpack.c.b16 %v1674, %v1674
        %vm1707 = vsmask.f32 7424
        %v1709 = vshrl.u32 %v1675, 16
        %v1711 = vshll.u32 %v1675, 16
        %v1713 = vrot.slane %v1711, 1
        %v1714 = vor.u32 %v1709, %v1713
        %v1716 = vshll.u32 %v1676, 16
        %v1718 = vrot.slane %v1716, 1
        %v1719 = vsel %vm1707, %v1714, %v1718
        %v1721 = vshrl.u32 %v1677, 16
        %v1723 = vshll.u32 %v1677, 16
        %v1725 = vrot.slane %v1723, 1
        %v1726 = vor.u32 %v1721, %v1725
        %v1728 = vshll.u32 %v1678, 16
        %v1730 = vrot.slane %v1728, 1
        %v1731 = vsel %vm1707, %v1726, %v1730
        %v1733 = vshrl.u32 %v1679, 16
        %v1735 = vshll.u32 %v1679, 16
        %v1737 = vrot.slane %v1735, 1
        %v1738 = vor.u32 %v1733, %v1737
        %v1740 = vshll.u32 %v1680, 16
        %v1742 = vrot.slane %v1740, 1
        %v1743 = vsel %vm1707, %v1738, %v1742
        %v1745 = vshrl.u32 %v1681, 16
        %v1747 = vshll.u32 %v1681, 16
        %v1749 = vrot.slane %v1747, 1
        %v1750 = vor.u32 %v1745, %v1749
        %v1752 = vshll.u32 %v1682, 16
        %v1754 = vrot.slane %v1752, 1
        %v1755 = vsel %vm1707, %v1750, %v1754
        %v1757 = vshrl.u32 %v1683, 16
        %v1759 = vshll.u32 %v1683, 16
        %v1761 = vrot.slane %v1759, 1
        %v1762 = vor.u32 %v1757, %v1761
        %v1764 = vshll.u32 %v1684, 16
        %v1766 = vrot.slane %v1764, 1
        %v1767 = vsel %vm1707, %v1762, %v1766
        %v1769 = vshrl.u32 %v1685, 16
        %v1771 = vshll.u32 %v1685, 16
        %v1773 = vrot.slane %v1771, 1
        %v1774 = vor.u32 %v1769, %v1773
        %v1776 = vshll.u32 %v1686, 16
        %v1778 = vrot.slane %v1776, 1
        %v1779 = vsel %vm1707, %v1774, %v1778
        %v1781 = vshrl.u32 %v1687, 16
        %v1783 = vshll.u32 %v1687, 16
        %v1785 = vrot.slane %v1783, 1
        %v1786 = vor.u32 %v1781, %v1785
        %v1788 = vshll.u32 %v1688, 16
        %v1790 = vrot.slane %v1788, 1
        %v1791 = vsel %vm1707, %v1786, %v1790
        %v1793 = vshrl.u32 %v1689, 16
        %v1795 = vshll.u32 %v1689, 16
        %v1797 = vrot.slane %v1795, 1
        %v1798 = vor.u32 %v1793, %v1797
        %v1800 = vshll.u32 %v1690, 16
        %v1802 = vrot.slane %v1800, 1
        %v1803 = vsel %vm1707, %v1798, %v1802
        %v1805 = vshrl.u32 %v1691, 16
        %v1807 = vshll.u32 %v1691, 16
        %v1809 = vrot.slane %v1807, 1
        %v1810 = vor.u32 %v1805, %v1809
        %v1812 = vshll.u32 %v1692, 16
        %v1814 = vrot.slane %v1812, 1
        %v1815 = vsel %vm1707, %v1810, %v1814
        %v1817 = vshrl.u32 %v1693, 16
        %v1819 = vshll.u32 %v1693, 16
        %v1821 = vrot.slane %v1819, 1
        %v1822 = vor.u32 %v1817, %v1821
        %v1824 = vshll.u32 %v1694, 16
        %v1826 = vrot.slane %v1824, 1
        %v1827 = vsel %vm1707, %v1822, %v1826
        %v1829 = vshrl.u32 %v1695, 16
        %v1831 = vshll.u32 %v1695, 16
        %v1833 = vrot.slane %v1831, 1
        %v1834 = vor.u32 %v1829, %v1833
        %v1836 = vshll.u32 %v1696, 16
        %v1838 = vrot.slane %v1836, 1
        %v1839 = vsel %vm1707, %v1834, %v1838
        %v1841 = vshrl.u32 %v1697, 16
        %v1843 = vshll.u32 %v1697, 16
        %v1845 = vrot.slane %v1843, 1
        %v1846 = vor.u32 %v1841, %v1845
        %v1848 = vshll.u32 %v1698, 16
        %v1850 = vrot.slane %v1848, 1
        %v1851 = vsel %vm1707, %v1846, %v1850
        %v1853 = vshrl.u32 %v1699, 16
        %v1855 = vshll.u32 %v1699, 16
        %v1857 = vrot.slane %v1855, 1
        %v1858 = vor.u32 %v1853, %v1857
        %v1860 = vshll.u32 %v1700, 16
        %v1862 = vrot.slane %v1860, 1
        %v1863 = vsel %vm1707, %v1858, %v1862
        %v1865 = vshrl.u32 %v1701, 16
        %v1867 = vshll.u32 %v1701, 16
        %v1869 = vrot.slane %v1867, 1
        %v1870 = vor.u32 %v1865, %v1869
        %v1872 = vshll.u32 %v1702, 16
        %v1874 = vrot.slane %v1872, 1
        %v1875 = vsel %vm1707, %v1870, %v1874
        %v1877 = vshrl.u32 %v1703, 16
        %v1879 = vshll.u32 %v1703, 16
        %v1881 = vrot.slane %v1879, 1
        %v1882 = vor.u32 %v1877, %v1881
        %v1884 = vshll.u32 %v1704, 16
        %v1886 = vrot.slane %v1884, 1
        %v1887 = vsel %vm1707, %v1882, %v1886
        %v1889 = vshrl.u32 %v1705, 16
        %v1891 = vshll.u32 %v1705, 16
        %v1893 = vrot.slane %v1891, 1
        %v1894 = vor.u32 %v1889, %v1893
        %v1896 = vshll.u32 %v1706, 16
        %v1898 = vrot.slane %v1896, 1
        %v1899 = vsel %vm1707, %v1894, %v1898
        %1916 = vst [vmem:[#allocation3 + $0x8] sm:$0xff] %v1719
        %1917 = vst [vmem:[#allocation3 + $0x50] sm:$0xff] %v1731
        %1918 = vst [vmem:[#allocation3 + $0x98] sm:$0xff] %v1743
        %1919 = vst [vmem:[#allocation3 + $0xe0] sm:$0xff] %v1755
        %1920 = vst [vmem:[#allocation3 + $0x128] sm:$0xff] %v1767
        %1921 = vst [vmem:[#allocation3 + $0x170] sm:$0xff] %v1779
        %1922 = vst [vmem:[#allocation3 + $0x1b8] sm:$0xff] %v1791
        %1923 = vst [vmem:[#allocation3 + $0x200] sm:$0xff] %v1803
        %1924 = vst [vmem:[#allocation3 + $0x248] sm:$0xff] %v1815
        %1925 = vst [vmem:[#allocation3 + $0x290] sm:$0xff] %v1827
        %1926 = vst [vmem:[#allocation3 + $0x2d8] sm:$0xff] %v1839
        %1927 = vst [vmem:[#allocation3 + $0x320] sm:$0xff] %v1851
        %1928 = vst [vmem:[#allocation3 + $0x368] sm:$0xff] %v1863
        %1929 = vst [vmem:[#allocation3 + $0x3b0] sm:$0xff] %v1875
        %1930 = vst [vmem:[#allocation3 + $0x3f8] sm:$0xff] %v1887
        %1931 = vst [vmem:[#allocation3 + $0x440] sm:$0xff] %v1899
        %v1932 = vld [vmem:[#allocation2] sm:$0xe]
        %v1933 = vld [vmem:[#allocation2 + $0x4] sm:$0xf]
        %v1934 = vld [vmem:[#allocation2 + $0x8] sm:$0x1]
        %v1935 = vld [vmem:[#allocation2 + $0xc] sm:$0xe]
        %v1936 = vld [vmem:[#allocation2 + $0x10] sm:$0xf]
        %v1937 = vld [vmem:[#allocation2 + $0x14] sm:$0x1]
        %v1938 = vld [vmem:[#allocation2 + $0x18] sm:$0xe]
        %v1939 = vld [vmem:[#allocation2 + $0x1c] sm:$0xf]
        %v1940 = vld [vmem:[#allocation2 + $0x20] sm:$0x1]
        %v1941 = vld [vmem:[#allocation2 + $0x24] sm:$0xe]
        %v1942 = vld [vmem:[#allocation2 + $0x28] sm:$0xf]
        %v1943 = vld [vmem:[#allocation2 + $0x2c] sm:$0x1]
        %v1944 = vld [vmem:[#allocation2 + $0x30] sm:$0xe]
        %v1945 = vld [vmem:[#allocation2 + $0x34] sm:$0xf]
        %v1946 = vld [vmem:[#allocation2 + $0x38] sm:$0x1]
        %v1947 = vld [vmem:[#allocation2 + $0x3c] sm:$0xe]
        %v1948 = vld [vmem:[#allocation2 + $0x40] sm:$0xf]
        %v1949 = vld [vmem:[#allocation2 + $0x44] sm:$0x1]
        %v1950 = vld [vmem:[#allocation2 + $0x48] sm:$0xe]
        %v1951 = vld [vmem:[#allocation2 + $0x4c] sm:$0xf]
        %v1952 = vld [vmem:[#allocation2 + $0x50] sm:$0x1]
        %v1953 = vld [vmem:[#allocation2 + $0x54] sm:$0xe]
        %v1954 = vld [vmem:[#allocation2 + $0x58] sm:$0xf]
        %v1955 = vld [vmem:[#allocation2 + $0x5c] sm:$0x1]
        %v1956 = vld [vmem:[#allocation2 + $0x60] sm:$0xe]
        %v1957 = vld [vmem:[#allocation2 + $0x64] sm:$0xf]
        %v1958 = vld [vmem:[#allocation2 + $0x68] sm:$0x1]
        %v1959 = vld [vmem:[#allocation2 + $0x6c] sm:$0xe]
        %v1960 = vld [vmem:[#allocation2 + $0x70] sm:$0xf]
        %v1961 = vld [vmem:[#allocation2 + $0x74] sm:$0x1]
        %v1962 = vld [vmem:[#allocation2 + $0x78] sm:$0xe]
        %v1963 = vld [vmem:[#allocation2 + $0x7c] sm:$0xf]
        %v1964 = vld [vmem:[#allocation2 + $0x80] sm:$0x1]
        %v1965 = vld [vmem:[#allocation2 + $0x84] sm:$0xe]
        %v1966 = vld [vmem:[#allocation2 + $0x88] sm:$0xf]
        %v1967 = vld [vmem:[#allocation2 + $0x8c] sm:$0x1]
        %v1968 = vld [vmem:[#allocation2 + $0x90] sm:$0xe]
        %v1969 = vld [vmem:[#allocation2 + $0x94] sm:$0xf]
        %v1970 = vld [vmem:[#allocation2 + $0x98] sm:$0x1]
        %v1971 = vld [vmem:[#allocation2 + $0x9c] sm:$0xe]
        %v1972 = vld [vmem:[#allocation2 + $0xa0] sm:$0xf]
        %v1973 = vld [vmem:[#allocation2 + $0xa4] sm:$0x1]
        %v1974 = vld [vmem:[#allocation2 + $0xa8] sm:$0xe]
        %v1975 = vld [vmem:[#allocation2 + $0xac] sm:$0xf]
        %v1976 = vld [vmem:[#allocation2 + $0xb0] sm:$0x1]
        %v1977 = vld [vmem:[#allocation2 + $0xb4] sm:$0xe]
        %v1978 = vld [vmem:[#allocation2 + $0xb8] sm:$0xf]
        %v1979 = vld [vmem:[#allocation2 + $0xbc] sm:$0x1]
        %v2028 = vunpack.c.l.b16 %v1932
        %v2029 = vunpack.c.l.b16 %v1933
        %v2030 = vunpack.c.l.b16 %v1934
        %v2031 = vunpack.c.l.b16 %v1935
        %v2032 = vunpack.c.l.b16 %v1936
        %v2033 = vunpack.c.l.b16 %v1937
        %v2034 = vunpack.c.l.b16 %v1938
        %v2035 = vunpack.c.l.b16 %v1939
        %v2036 = vunpack.c.l.b16 %v1940
        %v2037 = vunpack.c.l.b16 %v1941
        %v2038 = vunpack.c.l.b16 %v1942
        %v2039 = vunpack.c.l.b16 %v1943
        %v2040 = vunpack.c.l.b16 %v1944
        %v2041 = vunpack.c.l.b16 %v1945
        %v2042 = vunpack.c.l.b16 %v1946
        %v2043 = vunpack.c.l.b16 %v1947
        %v2044 = vunpack.c.l.b16 %v1948
        %v2045 = vunpack.c.l.b16 %v1949
        %v2046 = vunpack.c.l.b16 %v1950
        %v2047 = vunpack.c.l.b16 %v1951
        %v2048 = vunpack.c.l.b16 %v1952
        %v2049 = vunpack.c.l.b16 %v1953
        %v2050 = vunpack.c.l.b16 %v1954
        %v2051 = vunpack.c.l.b16 %v1955
        %v2052 = vunpack.c.l.b16 %v1956
        %v2053 = vunpack.c.l.b16 %v1957
        %v2054 = vunpack.c.l.b16 %v1958
        %v2055 = vunpack.c.l.b16 %v1959
        %v2056 = vunpack.c.l.b16 %v1960
        %v2057 = vunpack.c.l.b16 %v1961
        %v2058 = vunpack.c.l.b16 %v1962
        %v2059 = vunpack.c.l.b16 %v1963
        %v2060 = vunpack.c.l.b16 %v1964
        %v2061 = vunpack.c.l.b16 %v1965
        %v2062 = vunpack.c.l.b16 %v1966
        %v2063 = vunpack.c.l.b16 %v1967
        %v2064 = vunpack.c.l.b16 %v1968
        %v2065 = vunpack.c.l.b16 %v1969
        %v2066 = vunpack.c.l.b16 %v1970
        %v2067 = vunpack.c.l.b16 %v1971
        %v2068 = vunpack.c.l.b16 %v1972
        %v2069 = vunpack.c.l.b16 %v1973
        %v2070 = vunpack.c.l.b16 %v1974
        %v2071 = vunpack.c.l.b16 %v1975
        %v2072 = vunpack.c.l.b16 %v1976
        %v2073 = vunpack.c.l.b16 %v1977
        %v2074 = vunpack.c.l.b16 %v1978
        %v2075 = vunpack.c.l.b16 %v1979
        %v2076 = vpack.c.b16 %v2029, %v2028
        %v2077 = vpack.c.b16 %v2030, %v2030
        %v2078 = vpack.c.b16 %v2032, %v2031
        %v2079 = vpack.c.b16 %v2033, %v2033
        %v2080 = vpack.c.b16 %v2035, %v2034
        %v2081 = vpack.c.b16 %v2036, %v2036
        %v2082 = vpack.c.b16 %v2038, %v2037
        %v2083 = vpack.c.b16 %v2039, %v2039
        %v2084 = vpack.c.b16 %v2041, %v2040
        %v2085 = vpack.c.b16 %v2042, %v2042
        %v2086 = vpack.c.b16 %v2044, %v2043
        %v2087 = vpack.c.b16 %v2045, %v2045
        %v2088 = vpack.c.b16 %v2047, %v2046
        %v2089 = vpack.c.b16 %v2048, %v2048
        %v2090 = vpack.c.b16 %v2050, %v2049
        %v2091 = vpack.c.b16 %v2051, %v2051
        %v2092 = vpack.c.b16 %v2053, %v2052
        %v2093 = vpack.c.b16 %v2054, %v2054
        %v2094 = vpack.c.b16 %v2056, %v2055
        %v2095 = vpack.c.b16 %v2057, %v2057
        %v2096 = vpack.c.b16 %v2059, %v2058
        %v2097 = vpack.c.b16 %v2060, %v2060
        %v2098 = vpack.c.b16 %v2062, %v2061
        %v2099 = vpack.c.b16 %v2063, %v2063
        %v2100 = vpack.c.b16 %v2065, %v2064
        %v2101 = vpack.c.b16 %v2066, %v2066
        %v2102 = vpack.c.b16 %v2068, %v2067
        %v2103 = vpack.c.b16 %v2069, %v2069
        %v2104 = vpack.c.b16 %v2071, %v2070
        %v2105 = vpack.c.b16 %v2072, %v2072
        %v2106 = vpack.c.b16 %v2074, %v2073
        %v2107 = vpack.c.b16 %v2075, %v2075
        %vm2108 = vcmask 1046528
        %v2109 = vrot.slane %v2076, 1
        %v2110 = vrot.slane %v2077, 1
        %v2111 = vsel %vm2108, %v2109, %v2110
        %v2112 = vrot.slane %v2078, 1
        %v2113 = vrot.slane %v2079, 1
        %v2114 = vsel %vm2108, %v2112, %v2113
        %v2115 = vrot.slane %v2080, 1
        %v2116 = vrot.slane %v2081, 1
        %v2117 = vsel %vm2108, %v2115, %v2116
        %v2118 = vrot.slane %v2082, 1
        %v2119 = vrot.slane %v2083, 1
        %v2120 = vsel %vm2108, %v2118, %v2119
        %v2121 = vrot.slane %v2084, 1
        %v2122 = vrot.slane %v2085, 1
        %v2123 = vsel %vm2108, %v2121, %v2122
        %v2124 = vrot.slane %v2086, 1
        %v2125 = vrot.slane %v2087, 1
        %v2126 = vsel %vm2108, %v2124, %v2125
        %v2127 = vrot.slane %v2088, 1
        %v2128 = vrot.slane %v2089, 1
        %v2129 = vsel %vm2108, %v2127, %v2128
        %v2130 = vrot.slane %v2090, 1
        %v2131 = vrot.slane %v2091, 1
        %v2132 = vsel %vm2108, %v2130, %v2131
        %v2133 = vrot.slane %v2092, 1
        %v2134 = vrot.slane %v2093, 1
        %v2135 = vsel %vm2108, %v2133, %v2134
        %v2136 = vrot.slane %v2094, 1
        %v2137 = vrot.slane %v2095, 1
        %v2138 = vsel %vm2108, %v2136, %v2137
        %v2139 = vrot.slane %v2096, 1
        %v2140 = vrot.slane %v2097, 1
        %v2141 = vsel %vm2108, %v2139, %v2140
        %v2142 = vrot.slane %v2098, 1
        %v2143 = vrot.slane %v2099, 1
        %v2144 = vsel %vm2108, %v2142, %v2143
        %v2145 = vrot.slane %v2100, 1
        %v2146 = vrot.slane %v2101, 1
        %v2147 = vsel %vm2108, %v2145, %v2146
        %v2148 = vrot.slane %v2102, 1
        %v2149 = vrot.slane %v2103, 1
        %v2150 = vsel %vm2108, %v2148, %v2149
        %v2151 = vrot.slane %v2104, 1
        %v2152 = vrot.slane %v2105, 1
        %v2153 = vsel %vm2108, %v2151, %v2152
        %v2154 = vrot.slane %v2106, 1
        %v2155 = vrot.slane %v2107, 1
        %v2156 = vsel %vm2108, %v2154, %v2155
        %2173 = vst [vmem:[#allocation3 + $0x10] sm:$0xff] %v2111
        %2174 = vst [vmem:[#allocation3 + $0x58] sm:$0xff] %v2114
        %2175 = vst [vmem:[#allocation3 + $0xa0] sm:$0xff] %v2117
        %2176 = vst [vmem:[#allocation3 + $0xe8] sm:$0xff] %v2120
        %2177 = vst [vmem:[#allocation3 + $0x130] sm:$0xff] %v2123
        %2178 = vst [vmem:[#allocation3 + $0x178] sm:$0xff] %v2126
        %2179 = vst [vmem:[#allocation3 + $0x1c0] sm:$0xff] %v2129
        %2180 = vst [vmem:[#allocation3 + $0x208] sm:$0xff] %v2132
        %2181 = vst [vmem:[#allocation3 + $0x250] sm:$0xff] %v2135
        %2182 = vst [vmem:[#allocation3 + $0x298] sm:$0xff] %v2138
        %2183 = vst [vmem:[#allocation3 + $0x2e0] sm:$0xff] %v2141
        %2184 = vst [vmem:[#allocation3 + $0x328] sm:$0xff] %v2144
        %2185 = vst [vmem:[#allocation3 + $0x370] sm:$0xff] %v2147
        %2186 = vst [vmem:[#allocation3 + $0x3b8] sm:$0xff] %v2150
        %2187 = vst [vmem:[#allocation3 + $0x400] sm:$0xff] %v2153
        %2188 = vst [vmem:[#allocation3 + $0x448] sm:$0xff] %v2156
        %v2189 = vld [vmem:[%s769] sm:$0xf]
        %v2190 = vld [vmem:[%s769 + $0x4] sm:$0xf]
        %v2191 = vld [vmem:[%s769 + $0xc] sm:$0xf]
        %v2192 = vld [vmem:[%s769 + $0x10] sm:$0xf]
        %v2193 = vld [vmem:[%s769 + $0x18] sm:$0xf]
        %v2194 = vld [vmem:[%s769 + $0x1c] sm:$0xf]
        %v2195 = vld [vmem:[%s769 + $0x24] sm:$0xf]
        %v2196 = vld [vmem:[%s769 + $0x28] sm:$0xf]
        %v2197 = vld [vmem:[%s769 + $0x30] sm:$0xf]
        %v2198 = vld [vmem:[%s769 + $0x34] sm:$0xf]
        %v2199 = vld [vmem:[%s769 + $0x3c] sm:$0xf]
        %v2200 = vld [vmem:[%s769 + $0x40] sm:$0xf]
        %v2201 = vld [vmem:[%s769 + $0x48] sm:$0xf]
        %v2202 = vld [vmem:[%s769 + $0x4c] sm:$0xf]
        %v2203 = vld [vmem:[%s769 + $0x54] sm:$0xf]
        %v2204 = vld [vmem:[%s769 + $0x58] sm:$0xf]
        %v2205 = vld [vmem:[%s769 + $0x60] sm:$0xf]
        %v2206 = vld [vmem:[%s769 + $0x64] sm:$0xf]
        %v2207 = vld [vmem:[%s769 + $0x6c] sm:$0xf]
        %v2208 = vld [vmem:[%s769 + $0x70] sm:$0xf]
        %v2209 = vld [vmem:[%s769 + $0x78] sm:$0xf]
        %v2210 = vld [vmem:[%s769 + $0x7c] sm:$0xf]
        %v2211 = vld [vmem:[%s769 + $0x84] sm:$0xf]
        %v2212 = vld [vmem:[%s769 + $0x88] sm:$0xf]
        %v2213 = vld [vmem:[%s769 + $0x90] sm:$0xf]
        %v2214 = vld [vmem:[%s769 + $0x94] sm:$0xf]
        %v2215 = vld [vmem:[%s769 + $0x9c] sm:$0xf]
        %v2216 = vld [vmem:[%s769 + $0xa0] sm:$0xf]
        %v2217 = vld [vmem:[%s769 + $0xa8] sm:$0xf]
        %v2218 = vld [vmem:[%s769 + $0xac] sm:$0xf]
        %v2219 = vld [vmem:[%s769 + $0xb4] sm:$0xf]
        %v2220 = vld [vmem:[%s769 + $0xb8] sm:$0xf]
        %v2253 = vunpack.c.l.b16 %v2189
        %v2254 = vunpack.c.l.b16 %v2190
        %v2255 = vunpack.c.l.b16 %v2191
        %v2256 = vunpack.c.l.b16 %v2192
        %v2257 = vunpack.c.l.b16 %v2193
        %v2258 = vunpack.c.l.b16 %v2194
        %v2259 = vunpack.c.l.b16 %v2195
        %v2260 = vunpack.c.l.b16 %v2196
        %v2261 = vunpack.c.l.b16 %v2197
        %v2262 = vunpack.c.l.b16 %v2198
        %v2263 = vunpack.c.l.b16 %v2199
        %v2264 = vunpack.c.l.b16 %v2200
        %v2265 = vunpack.c.l.b16 %v2201
        %v2266 = vunpack.c.l.b16 %v2202
        %v2267 = vunpack.c.l.b16 %v2203
        %v2268 = vunpack.c.l.b16 %v2204
        %v2269 = vunpack.c.l.b16 %v2205
        %v2270 = vunpack.c.l.b16 %v2206
        %v2271 = vunpack.c.l.b16 %v2207
        %v2272 = vunpack.c.l.b16 %v2208
        %v2273 = vunpack.c.l.b16 %v2209
        %v2274 = vunpack.c.l.b16 %v2210
        %v2275 = vunpack.c.l.b16 %v2211
        %v2276 = vunpack.c.l.b16 %v2212
        %v2277 = vunpack.c.l.b16 %v2213
        %v2278 = vunpack.c.l.b16 %v2214
        %v2279 = vunpack.c.l.b16 %v2215
        %v2280 = vunpack.c.l.b16 %v2216
        %v2281 = vunpack.c.l.b16 %v2217
        %v2282 = vunpack.c.l.b16 %v2218
        %v2283 = vunpack.c.l.b16 %v2219
        %v2284 = vunpack.c.l.b16 %v2220
        %v2285 = vpack.c.b16 %v2254, %v2253
        %v2286 = vpack.c.b16 %v2256, %v2255
        %v2287 = vpack.c.b16 %v2258, %v2257
        %v2288 = vpack.c.b16 %v2260, %v2259
        %v2289 = vpack.c.b16 %v2262, %v2261
        %v2290 = vpack.c.b16 %v2264, %v2263
        %v2291 = vpack.c.b16 %v2266, %v2265
        %v2292 = vpack.c.b16 %v2268, %v2267
        %v2293 = vpack.c.b16 %v2270, %v2269
        %v2294 = vpack.c.b16 %v2272, %v2271
        %v2295 = vpack.c.b16 %v2274, %v2273
        %v2296 = vpack.c.b16 %v2276, %v2275
        %v2297 = vpack.c.b16 %v2278, %v2277
        %v2298 = vpack.c.b16 %v2280, %v2279
        %v2299 = vpack.c.b16 %v2282, %v2281
        %v2300 = vpack.c.b16 %v2284, %v2283
        %2317 = vst [vmem:[#allocation3 + $0x18] sm:$0xff] %v2285
        %2318 = vst [vmem:[#allocation3 + $0x60] sm:$0xff] %v2286
        %2319 = vst [vmem:[#allocation3 + $0xa8] sm:$0xff] %v2287
        %2320 = vst [vmem:[#allocation3 + $0xf0] sm:$0xff] %v2288
        %2321 = vst [vmem:[#allocation3 + $0x138] sm:$0xff] %v2289
        %2322 = vst [vmem:[#allocation3 + $0x180] sm:$0xff] %v2290
        %2323 = vst [vmem:[#allocation3 + $0x1c8] sm:$0xff] %v2291
        %2324 = vst [vmem:[#allocation3 + $0x210] sm:$0xff] %v2292
        %2325 = vst [vmem:[#allocation3 + $0x258] sm:$0xff] %v2293
        %2326 = vst [vmem:[#allocation3 + $0x2a0] sm:$0xff] %v2294
        %2327 = vst [vmem:[#allocation3 + $0x2e8] sm:$0xff] %v2295
        %2328 = vst [vmem:[#allocation3 + $0x330] sm:$0xff] %v2296
        %2329 = vst [vmem:[#allocation3 + $0x378] sm:$0xff] %v2297
        %2330 = vst [vmem:[#allocation3 + $0x3c0] sm:$0xff] %v2298
        %2331 = vst [vmem:[#allocation3 + $0x408] sm:$0xff] %v2299
        %2332 = vst [vmem:[#allocation3 + $0x450] sm:$0xff] %v2300
        %v2333 = vld [vmem:[%s769] sm:$0xf]
        %v2334 = vld [vmem:[%s769 + $0x4] sm:$0xf]
        %v2335 = vld [vmem:[%s769 + $0x8] sm:$0x1]
        %v2336 = vld [vmem:[%s769 + $0xc] sm:$0xf]
        %v2337 = vld [vmem:[%s769 + $0x10] sm:$0xf]
        %v2338 = vld [vmem:[%s769 + $0x14] sm:$0x1]
        %v2339 = vld [vmem:[%s769 + $0x18] sm:$0xf]
        %v2340 = vld [vmem:[%s769 + $0x1c] sm:$0xf]
        %v2341 = vld [vmem:[%s769 + $0x20] sm:$0x1]
        %v2342 = vld [vmem:[%s769 + $0x24] sm:$0xf]
        %v2343 = vld [vmem:[%s769 + $0x28] sm:$0xf]
        %v2344 = vld [vmem:[%s769 + $0x2c] sm:$0x1]
        %v2345 = vld [vmem:[%s769 + $0x30] sm:$0xf]
        %v2346 = vld [vmem:[%s769 + $0x34] sm:$0xf]
        %v2347 = vld [vmem:[%s769 + $0x38] sm:$0x1]
        %v2348 = vld [vmem:[%s769 + $0x3c] sm:$0xf]
        %v2349 = vld [vmem:[%s769 + $0x40] sm:$0xf]
        %v2350 = vld [vmem:[%s769 + $0x44] sm:$0x1]
        %v2351 = vld [vmem:[%s769 + $0x48] sm:$0xf]
        %v2352 = vld [vmem:[%s769 + $0x4c] sm:$0xf]
        %v2353 = vld [vmem:[%s769 + $0x50] sm:$0x1]
        %v2354 = vld [vmem:[%s769 + $0x54] sm:$0xf]
        %v2355 = vld [vmem:[%s769 + $0x58] sm:$0xf]
        %v2356 = vld [vmem:[%s769 + $0x5c] sm:$0x1]
        %v2357 = vld [vmem:[%s769 + $0x60] sm:$0xf]
        %v2358 = vld [vmem:[%s769 + $0x64] sm:$0xf]
        %v2359 = vld [vmem:[%s769 + $0x68] sm:$0x1]
        %v2360 = vld [vmem:[%s769 + $0x6c] sm:$0xf]
        %v2361 = vld [vmem:[%s769 + $0x70] sm:$0xf]
        %v2362 = vld [vmem:[%s769 + $0x74] sm:$0x1]
        %v2363 = vld [vmem:[%s769 + $0x78] sm:$0xf]
        %v2364 = vld [vmem:[%s769 + $0x7c] sm:$0xf]
        %v2365 = vld [vmem:[%s769 + $0x80] sm:$0x1]
        %v2366 = vld [vmem:[%s769 + $0x84] sm:$0xf]
        %v2367 = vld [vmem:[%s769 + $0x88] sm:$0xf]
        %v2368 = vld [vmem:[%s769 + $0x8c] sm:$0x1]
        %v2369 = vld [vmem:[%s769 + $0x90] sm:$0xf]
        %v2370 = vld [vmem:[%s769 + $0x94] sm:$0xf]
        %v2371 = vld [vmem:[%s769 + $0x98] sm:$0x1]
        %v2372 = vld [vmem:[%s769 + $0x9c] sm:$0xf]
        %v2373 = vld [vmem:[%s769 + $0xa0] sm:$0xf]
        %v2374 = vld [vmem:[%s769 + $0xa4] sm:$0x1]
        %v2375 = vld [vmem:[%s769 + $0xa8] sm:$0xf]
        %v2376 = vld [vmem:[%s769 + $0xac] sm:$0xf]
        %v2377 = vld [vmem:[%s769 + $0xb0] sm:$0x1]
        %v2378 = vld [vmem:[%s769 + $0xb4] sm:$0xf]
        %v2379 = vld [vmem:[%s769 + $0xb8] sm:$0xf]
        %v2380 = vld [vmem:[%s769 + $0xbc] sm:$0x1]
        %v2429 = vunpack.c.l.b16 %v2333
        %v2430 = vunpack.c.l.b16 %v2334
        %v2431 = vunpack.c.l.b16 %v2335
        %v2432 = vunpack.c.l.b16 %v2336
        %v2433 = vunpack.c.l.b16 %v2337
        %v2434 = vunpack.c.l.b16 %v2338
        %v2435 = vunpack.c.l.b16 %v2339
        %v2436 = vunpack.c.l.b16 %v2340
        %v2437 = vunpack.c.l.b16 %v2341
        %v2438 = vunpack.c.l.b16 %v2342
        %v2439 = vunpack.c.l.b16 %v2343
        %v2440 = vunpack.c.l.b16 %v2344
        %v2441 = vunpack.c.l.b16 %v2345
        %v2442 = vunpack.c.l.b16 %v2346
        %v2443 = vunpack.c.l.b16 %v2347
        %v2444 = vunpack.c.l.b16 %v2348
        %v2445 = vunpack.c.l.b16 %v2349
        %v2446 = vunpack.c.l.b16 %v2350
        %v2447 = vunpack.c.l.b16 %v2351
        %v2448 = vunpack.c.l.b16 %v2352
        %v2449 = vunpack.c.l.b16 %v2353
        %v2450 = vunpack.c.l.b16 %v2354
        %v2451 = vunpack.c.l.b16 %v2355
        %v2452 = vunpack.c.l.b16 %v2356
        %v2453 = vunpack.c.l.b16 %v2357
        %v2454 = vunpack.c.l.b16 %v2358
        %v2455 = vunpack.c.l.b16 %v2359
        %v2456 = vunpack.c.l.b16 %v2360
        %v2457 = vunpack.c.l.b16 %v2361
        %v2458 = vunpack.c.l.b16 %v2362
        %v2459 = vunpack.c.l.b16 %v2363
        %v2460 = vunpack.c.l.b16 %v2364
        %v2461 = vunpack.c.l.b16 %v2365
        %v2462 = vunpack.c.l.b16 %v2366
        %v2463 = vunpack.c.l.b16 %v2367
        %v2464 = vunpack.c.l.b16 %v2368
        %v2465 = vunpack.c.l.b16 %v2369
        %v2466 = vunpack.c.l.b16 %v2370
        %v2467 = vunpack.c.l.b16 %v2371
        %v2468 = vunpack.c.l.b16 %v2372
        %v2469 = vunpack.c.l.b16 %v2373
        %v2470 = vunpack.c.l.b16 %v2374
        %v2471 = vunpack.c.l.b16 %v2375
        %v2472 = vunpack.c.l.b16 %v2376
        %v2473 = vunpack.c.l.b16 %v2377
        %v2474 = vunpack.c.l.b16 %v2378
        %v2475 = vunpack.c.l.b16 %v2379
        %v2476 = vunpack.c.l.b16 %v2380
        %v2477 = vpack.c.b16 %v2430, %v2429
        %v2478 = vpack.c.b16 %v2431, %v2431
        %v2479 = vpack.c.b16 %v2433, %v2432
        %v2480 = vpack.c.b16 %v2434, %v2434
        %v2481 = vpack.c.b16 %v2436, %v2435
        %v2482 = vpack.c.b16 %v2437, %v2437
        %v2483 = vpack.c.b16 %v2439, %v2438
        %v2484 = vpack.c.b16 %v2440, %v2440
        %v2485 = vpack.c.b16 %v2442, %v2441
        %v2486 = vpack.c.b16 %v2443, %v2443
        %v2487 = vpack.c.b16 %v2445, %v2444
        %v2488 = vpack.c.b16 %v2446, %v2446
        %v2489 = vpack.c.b16 %v2448, %v2447
        %v2490 = vpack.c.b16 %v2449, %v2449
        %v2491 = vpack.c.b16 %v2451, %v2450
        %v2492 = vpack.c.b16 %v2452, %v2452
        %v2493 = vpack.c.b16 %v2454, %v2453
        %v2494 = vpack.c.b16 %v2455, %v2455
        %v2495 = vpack.c.b16 %v2457, %v2456
        %v2496 = vpack.c.b16 %v2458, %v2458
        %v2497 = vpack.c.b16 %v2460, %v2459
        %v2498 = vpack.c.b16 %v2461, %v2461
        %v2499 = vpack.c.b16 %v2463, %v2462
        %v2500 = vpack.c.b16 %v2464, %v2464
        %v2501 = vpack.c.b16 %v2466, %v2465
        %v2502 = vpack.c.b16 %v2467, %v2467
        %v2503 = vpack.c.b16 %v2469, %v2468
        %v2504 = vpack.c.b16 %v2470, %v2470
        %v2505 = vpack.c.b16 %v2472, %v2471
        %v2506 = vpack.c.b16 %v2473, %v2473
        %v2507 = vpack.c.b16 %v2475, %v2474
        %v2508 = vpack.c.b16 %v2476, %v2476
        %v2510 = vshrl.u32 %v2477, 16
        %v2512 = vshll.u32 %v2477, 16
        %v2514 = vrot.slane %v2512, 1
        %v2515 = vor.u32 %v2510, %v2514
        %v2517 = vshll.u32 %v2478, 16
        %v2519 = vrot.slane %v2517, 1
        %v2520 = vsel %vm1707, %v2515, %v2519
        %v2522 = vshrl.u32 %v2479, 16
        %v2524 = vshll.u32 %v2479, 16
        %v2526 = vrot.slane %v2524, 1
        %v2527 = vor.u32 %v2522, %v2526
        %v2529 = vshll.u32 %v2480, 16
        %v2531 = vrot.slane %v2529, 1
        %v2532 = vsel %vm1707, %v2527, %v2531
        %v2534 = vshrl.u32 %v2481, 16
        %v2536 = vshll.u32 %v2481, 16
        %v2538 = vrot.slane %v2536, 1
        %v2539 = vor.u32 %v2534, %v2538
        %v2541 = vshll.u32 %v2482, 16
        %v2543 = vrot.slane %v2541, 1
        %v2544 = vsel %vm1707, %v2539, %v2543
        %v2546 = vshrl.u32 %v2483, 16
        %v2548 = vshll.u32 %v2483, 16
        %v2550 = vrot.slane %v2548, 1
        %v2551 = vor.u32 %v2546, %v2550
        %v2553 = vshll.u32 %v2484, 16
        %v2555 = vrot.slane %v2553, 1
        %v2556 = vsel %vm1707, %v2551, %v2555
        %v2558 = vshrl.u32 %v2485, 16
        %v2560 = vshll.u32 %v2485, 16
        %v2562 = vrot.slane %v2560, 1
        %v2563 = vor.u32 %v2558, %v2562
        %v2565 = vshll.u32 %v2486, 16
        %v2567 = vrot.slane %v2565, 1
        %v2568 = vsel %vm1707, %v2563, %v2567
        %v2570 = vshrl.u32 %v2487, 16
        %v2572 = vshll.u32 %v2487, 16
        %v2574 = vrot.slane %v2572, 1
        %v2575 = vor.u32 %v2570, %v2574
        %v2577 = vshll.u32 %v2488, 16
        %v2579 = vrot.slane %v2577, 1
        %v2580 = vsel %vm1707, %v2575, %v2579
        %v2582 = vshrl.u32 %v2489, 16
        %v2584 = vshll.u32 %v2489, 16
        %v2586 = vrot.slane %v2584, 1
        %v2587 = vor.u32 %v2582, %v2586
        %v2589 = vshll.u32 %v2490, 16
        %v2591 = vrot.slane %v2589, 1
        %v2592 = vsel %vm1707, %v2587, %v2591
        %v2594 = vshrl.u32 %v2491, 16
        %v2596 = vshll.u32 %v2491, 16
        %v2598 = vrot.slane %v2596, 1
        %v2599 = vor.u32 %v2594, %v2598
        %v2601 = vshll.u32 %v2492, 16
        %v2603 = vrot.slane %v2601, 1
        %v2604 = vsel %vm1707, %v2599, %v2603
        %v2606 = vshrl.u32 %v2493, 16
        %v2608 = vshll.u32 %v2493, 16
        %v2610 = vrot.slane %v2608, 1
        %v2611 = vor.u32 %v2606, %v2610
        %v2613 = vshll.u32 %v2494, 16
        %v2615 = vrot.slane %v2613, 1
        %v2616 = vsel %vm1707, %v2611, %v2615
        %v2618 = vshrl.u32 %v2495, 16
        %v2620 = vshll.u32 %v2495, 16
        %v2622 = vrot.slane %v2620, 1
        %v2623 = vor.u32 %v2618, %v2622
        %v2625 = vshll.u32 %v2496, 16
        %v2627 = vrot.slane %v2625, 1
        %v2628 = vsel %vm1707, %v2623, %v2627
        %v2630 = vshrl.u32 %v2497, 16
        %v2632 = vshll.u32 %v2497, 16
        %v2634 = vrot.slane %v2632, 1
        %v2635 = vor.u32 %v2630, %v2634
        %v2637 = vshll.u32 %v2498, 16
        %v2639 = vrot.slane %v2637, 1
        %v2640 = vsel %vm1707, %v2635, %v2639
        %v2642 = vshrl.u32 %v2499, 16
        %v2644 = vshll.u32 %v2499, 16
        %v2646 = vrot.slane %v2644, 1
        %v2647 = vor.u32 %v2642, %v2646
        %v2649 = vshll.u32 %v2500, 16
        %v2651 = vrot.slane %v2649, 1
        %v2652 = vsel %vm1707, %v2647, %v2651
        %v2654 = vshrl.u32 %v2501, 16
        %v2656 = vshll.u32 %v2501, 16
        %v2658 = vrot.slane %v2656, 1
        %v2659 = vor.u32 %v2654, %v2658
        %v2661 = vshll.u32 %v2502, 16
        %v2663 = vrot.slane %v2661, 1
        %v2664 = vsel %vm1707, %v2659, %v2663
        %v2666 = vshrl.u32 %v2503, 16
        %v2668 = vshll.u32 %v2503, 16
        %v2670 = vrot.slane %v2668, 1
        %v2671 = vor.u32 %v2666, %v2670
        %v2673 = vshll.u32 %v2504, 16
        %v2675 = vrot.slane %v2673, 1
        %v2676 = vsel %vm1707, %v2671, %v2675
        %v2678 = vshrl.u32 %v2505, 16
        %v2680 = vshll.u32 %v2505, 16
        %v2682 = vrot.slane %v2680, 1
        %v2683 = vor.u32 %v2678, %v2682
        %v2685 = vshll.u32 %v2506, 16
        %v2687 = vrot.slane %v2685, 1
        %v2688 = vsel %vm1707, %v2683, %v2687
        %v2690 = vshrl.u32 %v2507, 16
        %v2692 = vshll.u32 %v2507, 16
        %v2694 = vrot.slane %v2692, 1
        %v2695 = vor.u32 %v2690, %v2694
        %v2697 = vshll.u32 %v2508, 16
        %v2699 = vrot.slane %v2697, 1
        %v2700 = vsel %vm1707, %v2695, %v2699
        %2717 = vst [vmem:[#allocation3 + $0x20] sm:$0xff] %v2520
        %2718 = vst [vmem:[#allocation3 + $0x68] sm:$0xff] %v2532
        %2719 = vst [vmem:[#allocation3 + $0xb0] sm:$0xff] %v2544
        %2720 = vst [vmem:[#allocation3 + $0xf8] sm:$0xff] %v2556
        %2721 = vst [vmem:[#allocation3 + $0x140] sm:$0xff] %v2568
        %2722 = vst [vmem:[#allocation3 + $0x188] sm:$0xff] %v2580
        %2723 = vst [vmem:[#allocation3 + $0x1d0] sm:$0xff] %v2592
        %2724 = vst [vmem:[#allocation3 + $0x218] sm:$0xff] %v2604
        %2725 = vst [vmem:[#allocation3 + $0x260] sm:$0xff] %v2616
        %2726 = vst [vmem:[#allocation3 + $0x2a8] sm:$0xff] %v2628
        %2727 = vst [vmem:[#allocation3 + $0x2f0] sm:$0xff] %v2640
        %2728 = vst [vmem:[#allocation3 + $0x338] sm:$0xff] %v2652
        %2729 = vst [vmem:[#allocation3 + $0x380] sm:$0xff] %v2664
        %2730 = vst [vmem:[#allocation3 + $0x3c8] sm:$0xff] %v2676
        %2731 = vst [vmem:[#allocation3 + $0x410] sm:$0xff] %v2688
        %2732 = vst [vmem:[#allocation3 + $0x458] sm:$0xff] %v2700
        %v2733 = vld [vmem:[%s769] sm:$0xe]
        %v2734 = vld [vmem:[%s769 + $0x4] sm:$0xf]
        %v2735 = vld [vmem:[%s769 + $0x8] sm:$0x1]
        %v2736 = vld [vmem:[%s769 + $0xc] sm:$0xe]
        %v2737 = vld [vmem:[%s769 + $0x10] sm:$0xf]
        %v2738 = vld [vmem:[%s769 + $0x14] sm:$0x1]
        %v2739 = vld [vmem:[%s769 + $0x18] sm:$0xe]
        %v2740 = vld [vmem:[%s769 + $0x1c] sm:$0xf]
        %v2741 = vld [vmem:[%s769 + $0x20] sm:$0x1]
        %v2742 = vld [vmem:[%s769 + $0x24] sm:$0xe]
        %v2743 = vld [vmem:[%s769 + $0x28] sm:$0xf]
        %v2744 = vld [vmem:[%s769 + $0x2c] sm:$0x1]
        %v2745 = vld [vmem:[%s769 + $0x30] sm:$0xe]
        %v2746 = vld [vmem:[%s769 + $0x34] sm:$0xf]
        %v2747 = vld [vmem:[%s769 + $0x38] sm:$0x1]
        %v2748 = vld [vmem:[%s769 + $0x3c] sm:$0xe]
        %v2749 = vld [vmem:[%s769 + $0x40] sm:$0xf]
        %v2750 = vld [vmem:[%s769 + $0x44] sm:$0x1]
        %v2751 = vld [vmem:[%s769 + $0x48] sm:$0xe]
        %v2752 = vld [vmem:[%s769 + $0x4c] sm:$0xf]
        %v2753 = vld [vmem:[%s769 + $0x50] sm:$0x1]
        %v2754 = vld [vmem:[%s769 + $0x54] sm:$0xe]
        %v2755 = vld [vmem:[%s769 + $0x58] sm:$0xf]
        %v2756 = vld [vmem:[%s769 + $0x5c] sm:$0x1]
        %v2757 = vld [vmem:[%s769 + $0x60] sm:$0xe]
        %v2758 = vld [vmem:[%s769 + $0x64] sm:$0xf]
        %v2759 = vld [vmem:[%s769 + $0x68] sm:$0x1]
        %v2760 = vld [vmem:[%s769 + $0x6c] sm:$0xe]
        %v2761 = vld [vmem:[%s769 + $0x70] sm:$0xf]
        %v2762 = vld [vmem:[%s769 + $0x74] sm:$0x1]
        %v2763 = vld [vmem:[%s769 + $0x78] sm:$0xe]
        %v2764 = vld [vmem:[%s769 + $0x7c] sm:$0xf]
        %v2765 = vld [vmem:[%s769 + $0x80] sm:$0x1]
        %v2766 = vld [vmem:[%s769 + $0x84] sm:$0xe]
        %v2767 = vld [vmem:[%s769 + $0x88] sm:$0xf]
        %v2768 = vld [vmem:[%s769 + $0x8c] sm:$0x1]
        %v2769 = vld [vmem:[%s769 + $0x90] sm:$0xe]
        %v2770 = vld [vmem:[%s769 + $0x94] sm:$0xf]
        %v2771 = vld [vmem:[%s769 + $0x98] sm:$0x1]
        %v2772 = vld [vmem:[%s769 + $0x9c] sm:$0xe]
        %v2773 = vld [vmem:[%s769 + $0xa0] sm:$0xf]
        %v2774 = vld [vmem:[%s769 + $0xa4] sm:$0x1]
        %v2775 = vld [vmem:[%s769 + $0xa8] sm:$0xe]
        %v2776 = vld [vmem:[%s769 + $0xac] sm:$0xf]
        %v2777 = vld [vmem:[%s769 + $0xb0] sm:$0x1]
        %v2778 = vld [vmem:[%s769 + $0xb4] sm:$0xe]
        %v2779 = vld [vmem:[%s769 + $0xb8] sm:$0xf]
        %v2780 = vld [vmem:[%s769 + $0xbc] sm:$0x1]
        %v2829 = vunpack.c.l.b16 %v2733
        %v2830 = vunpack.c.l.b16 %v2734
        %v2831 = vunpack.c.l.b16 %v2735
        %v2832 = vunpack.c.l.b16 %v2736
        %v2833 = vunpack.c.l.b16 %v2737
        %v2834 = vunpack.c.l.b16 %v2738
        %v2835 = vunpack.c.l.b16 %v2739
        %v2836 = vunpack.c.l.b16 %v2740
        %v2837 = vunpack.c.l.b16 %v2741
        %v2838 = vunpack.c.l.b16 %v2742
        %v2839 = vunpack.c.l.b16 %v2743
        %v2840 = vunpack.c.l.b16 %v2744
        %v2841 = vunpack.c.l.b16 %v2745
        %v2842 = vunpack.c.l.b16 %v2746
        %v2843 = vunpack.c.l.b16 %v2747
        %v2844 = vunpack.c.l.b16 %v2748
        %v2845 = vunpack.c.l.b16 %v2749
        %v2846 = vunpack.c.l.b16 %v2750
        %v2847 = vunpack.c.l.b16 %v2751
        %v2848 = vunpack.c.l.b16 %v2752
        %v2849 = vunpack.c.l.b16 %v2753
        %v2850 = vunpack.c.l.b16 %v2754
        %v2851 = vunpack.c.l.b16 %v2755
        %v2852 = vunpack.c.l.b16 %v2756
        %v2853 = vunpack.c.l.b16 %v2757
        %v2854 = vunpack.c.l.b16 %v2758
        %v2855 = vunpack.c.l.b16 %v2759
        %v2856 = vunpack.c.l.b16 %v2760
        %v2857 = vunpack.c.l.b16 %v2761
        %v2858 = vunpack.c.l.b16 %v2762
        %v2859 = vunpack.c.l.b16 %v2763
        %v2860 = vunpack.c.l.b16 %v2764
        %v2861 = vunpack.c.l.b16 %v2765
        %v2862 = vunpack.c.l.b16 %v2766
        %v2863 = vunpack.c.l.b16 %v2767
        %v2864 = vunpack.c.l.b16 %v2768
        %v2865 = vunpack.c.l.b16 %v2769
        %v2866 = vunpack.c.l.b16 %v2770
        %v2867 = vunpack.c.l.b16 %v2771
        %v2868 = vunpack.c.l.b16 %v2772
        %v2869 = vunpack.c.l.b16 %v2773
        %v2870 = vunpack.c.l.b16 %v2774
        %v2871 = vunpack.c.l.b16 %v2775
        %v2872 = vunpack.c.l.b16 %v2776
        %v2873 = vunpack.c.l.b16 %v2777
        %v2874 = vunpack.c.l.b16 %v2778
        %v2875 = vunpack.c.l.b16 %v2779
        %v2876 = vunpack.c.l.b16 %v2780
        %v2877 = vpack.c.b16 %v2830, %v2829
        %v2878 = vpack.c.b16 %v2831, %v2831
        %v2879 = vpack.c.b16 %v2833, %v2832
        %v2880 = vpack.c.b16 %v2834, %v2834
        %v2881 = vpack.c.b16 %v2836, %v2835
        %v2882 = vpack.c.b16 %v2837, %v2837
        %v2883 = vpack.c.b16 %v2839, %v2838
        %v2884 = vpack.c.b16 %v2840, %v2840
        %v2885 = vpack.c.b16 %v2842, %v2841
        %v2886 = vpack.c.b16 %v2843, %v2843
        %v2887 = vpack.c.b16 %v2845, %v2844
        %v2888 = vpack.c.b16 %v2846, %v2846
        %v2889 = vpack.c.b16 %v2848, %v2847
        %v2890 = vpack.c.b16 %v2849, %v2849
        %v2891 = vpack.c.b16 %v2851, %v2850
        %v2892 = vpack.c.b16 %v2852, %v2852
        %v2893 = vpack.c.b16 %v2854, %v2853
        %v2894 = vpack.c.b16 %v2855, %v2855
        %v2895 = vpack.c.b16 %v2857, %v2856
        %v2896 = vpack.c.b16 %v2858, %v2858
        %v2897 = vpack.c.b16 %v2860, %v2859
        %v2898 = vpack.c.b16 %v2861, %v2861
        %v2899 = vpack.c.b16 %v2863, %v2862
        %v2900 = vpack.c.b16 %v2864, %v2864
        %v2901 = vpack.c.b16 %v2866, %v2865
        %v2902 = vpack.c.b16 %v2867, %v2867
        %v2903 = vpack.c.b16 %v2869, %v2868
        %v2904 = vpack.c.b16 %v2870, %v2870
        %v2905 = vpack.c.b16 %v2872, %v2871
        %v2906 = vpack.c.b16 %v2873, %v2873
        %v2907 = vpack.c.b16 %v2875, %v2874
        %v2908 = vpack.c.b16 %v2876, %v2876
        %v2909 = vrot.slane %v2877, 1
        %v2910 = vrot.slane %v2878, 1
        %v2911 = vsel %vm2108, %v2909, %v2910
        %v2912 = vrot.slane %v2879, 1
        %v2913 = vrot.slane %v2880, 1
        %v2914 = vsel %vm2108, %v2912, %v2913
        %v2915 = vrot.slane %v2881, 1
        %v2916 = vrot.slane %v2882, 1
        %v2917 = vsel %vm2108, %v2915, %v2916
        %v2918 = vrot.slane %v2883, 1
        %v2919 = vrot.slane %v2884, 1
        %v2920 = vsel %vm2108, %v2918, %v2919
        %v2921 = vrot.slane %v2885, 1
        %v2922 = vrot.slane %v2886, 1
        %v2923 = vsel %vm2108, %v2921, %v2922
        %v2924 = vrot.slane %v2887, 1
        %v2925 = vrot.slane %v2888, 1
        %v2926 = vsel %vm2108, %v2924, %v2925
        %v2927 = vrot.slane %v2889, 1
        %v2928 = vrot.slane %v2890, 1
        %v2929 = vsel %vm2108, %v2927, %v2928
        %v2930 = vrot.slane %v2891, 1
        %v2931 = vrot.slane %v2892, 1
        %v2932 = vsel %vm2108, %v2930, %v2931
        %v2933 = vrot.slane %v2893, 1
        %v2934 = vrot.slane %v2894, 1
        %v2935 = vsel %vm2108, %v2933, %v2934
        %v2936 = vrot.slane %v2895, 1
        %v2937 = vrot.slane %v2896, 1
        %v2938 = vsel %vm2108, %v2936, %v2937
        %v2939 = vrot.slane %v2897, 1
        %v2940 = vrot.slane %v2898, 1
        %v2941 = vsel %vm2108, %v2939, %v2940
        %v2942 = vrot.slane %v2899, 1
        %v2943 = vrot.slane %v2900, 1
        %v2944 = vsel %vm2108, %v2942, %v2943
        %v2945 = vrot.slane %v2901, 1
        %v2946 = vrot.slane %v2902, 1
        %v2947 = vsel %vm2108, %v2945, %v2946
        %v2948 = vrot.slane %v2903, 1
        %v2949 = vrot.slane %v2904, 1
        %v2950 = vsel %vm2108, %v2948, %v2949
        %v2951 = vrot.slane %v2905, 1
        %v2952 = vrot.slane %v2906, 1
        %v2953 = vsel %vm2108, %v2951, %v2952
        %v2954 = vrot.slane %v2907, 1
        %v2955 = vrot.slane %v2908, 1
        %v2956 = vsel %vm2108, %v2954, %v2955
        %2973 = vst [vmem:[#allocation3 + $0x28] sm:$0xff] %v2911
        %2974 = vst [vmem:[#allocation3 + $0x70] sm:$0xff] %v2914
        %2975 = vst [vmem:[#allocation3 + $0xb8] sm:$0xff] %v2917
        %2976 = vst [vmem:[#allocation3 + $0x100] sm:$0xff] %v2920
        %2977 = vst [vmem:[#allocation3 + $0x148] sm:$0xff] %v2923
        %2978 = vst [vmem:[#allocation3 + $0x190] sm:$0xff] %v2926
        %2979 = vst [vmem:[#allocation3 + $0x1d8] sm:$0xff] %v2929
        %2980 = vst [vmem:[#allocation3 + $0x220] sm:$0xff] %v2932
        %2981 = vst [vmem:[#allocation3 + $0x268] sm:$0xff] %v2935
        %2982 = vst [vmem:[#allocation3 + $0x2b0] sm:$0xff] %v2938
        %2983 = vst [vmem:[#allocation3 + $0x2f8] sm:$0xff] %v2941
        %2984 = vst [vmem:[#allocation3 + $0x340] sm:$0xff] %v2944
        %2985 = vst [vmem:[#allocation3 + $0x388] sm:$0xff] %v2947
        %2986 = vst [vmem:[#allocation3 + $0x3d0] sm:$0xff] %v2950
        %2987 = vst [vmem:[#allocation3 + $0x418] sm:$0xff] %v2953
        %2988 = vst [vmem:[#allocation3 + $0x460] sm:$0xff] %v2956
        %s2989 = scalar_lea.vmem [#allocation2], 24
        %v2990 = vld [vmem:[%s2989] sm:$0xf]
        %v2991 = vld [vmem:[%s2989 + $0x4] sm:$0xf]
        %v2992 = vld [vmem:[%s2989 + $0xc] sm:$0xf]
        %v2993 = vld [vmem:[%s2989 + $0x10] sm:$0xf]
        %v2994 = vld [vmem:[%s2989 + $0x18] sm:$0xf]
        %v2995 = vld [vmem:[%s2989 + $0x1c] sm:$0xf]
        %v2996 = vld [vmem:[%s2989 + $0x24] sm:$0xf]
        %v2997 = vld [vmem:[%s2989 + $0x28] sm:$0xf]
        %v2998 = vld [vmem:[%s2989 + $0x30] sm:$0xf]
        %v2999 = vld [vmem:[%s2989 + $0x34] sm:$0xf]
        %v3000 = vld [vmem:[%s2989 + $0x3c] sm:$0xf]
        %v3001 = vld [vmem:[%s2989 + $0x40] sm:$0xf]
        %v3002 = vld [vmem:[%s2989 + $0x48] sm:$0xf]
        %v3003 = vld [vmem:[%s2989 + $0x4c] sm:$0xf]
        %v3004 = vld [vmem:[%s2989 + $0x54] sm:$0xf]
        %v3005 = vld [vmem:[%s2989 + $0x58] sm:$0xf]
        %v3006 = vld [vmem:[%s2989 + $0x60] sm:$0xf]
        %v3007 = vld [vmem:[%s2989 + $0x64] sm:$0xf]
        %v3008 = vld [vmem:[%s2989 + $0x6c] sm:$0xf]
        %v3009 = vld [vmem:[%s2989 + $0x70] sm:$0xf]
        %v3010 = vld [vmem:[%s2989 + $0x78] sm:$0xf]
        %v3011 = vld [vmem:[%s2989 + $0x7c] sm:$0xf]
        %v3012 = vld [vmem:[%s2989 + $0x84] sm:$0xf]
        %v3013 = vld [vmem:[%s2989 + $0x88] sm:$0xf]
        %v3014 = vld [vmem:[%s2989 + $0x90] sm:$0xf]
        %v3015 = vld [vmem:[%s2989 + $0x94] sm:$0xf]
        %v3016 = vld [vmem:[%s2989 + $0x9c] sm:$0xf]
        %v3017 = vld [vmem:[%s2989 + $0xa0] sm:$0xf]
        %v3018 = vld [vmem:[%s2989 + $0xa8] sm:$0xf]
        %v3019 = vld [vmem:[%s2989 + $0xac] sm:$0xf]
        %v3020 = vld [vmem:[%s2989 + $0xb4] sm:$0xf]
        %v3021 = vld [vmem:[%s2989 + $0xb8] sm:$0xf]
        %v3054 = vunpack.c.l.b16 %v2990
        %v3055 = vunpack.c.l.b16 %v2991
        %v3056 = vunpack.c.l.b16 %v2992
        %v3057 = vunpack.c.l.b16 %v2993
        %v3058 = vunpack.c.l.b16 %v2994
        %v3059 = vunpack.c.l.b16 %v2995
        %v3060 = vunpack.c.l.b16 %v2996
        %v3061 = vunpack.c.l.b16 %v2997
        %v3062 = vunpack.c.l.b16 %v2998
        %v3063 = vunpack.c.l.b16 %v2999
        %v3064 = vunpack.c.l.b16 %v3000
        %v3065 = vunpack.c.l.b16 %v3001
        %v3066 = vunpack.c.l.b16 %v3002
        %v3067 = vunpack.c.l.b16 %v3003
        %v3068 = vunpack.c.l.b16 %v3004
        %v3069 = vunpack.c.l.b16 %v3005
        %v3070 = vunpack.c.l.b16 %v3006
        %v3071 = vunpack.c.l.b16 %v3007
        %v3072 = vunpack.c.l.b16 %v3008
        %v3073 = vunpack.c.l.b16 %v3009
        %v3074 = vunpack.c.l.b16 %v3010
        %v3075 = vunpack.c.l.b16 %v3011
        %v3076 = vunpack.c.l.b16 %v3012
        %v3077 = vunpack.c.l.b16 %v3013
        %v3078 = vunpack.c.l.b16 %v3014
        %v3079 = vunpack.c.l.b16 %v3015
        %v3080 = vunpack.c.l.b16 %v3016
        %v3081 = vunpack.c.l.b16 %v3017
        %v3082 = vunpack.c.l.b16 %v3018
        %v3083 = vunpack.c.l.b16 %v3019
        %v3084 = vunpack.c.l.b16 %v3020
        %v3085 = vunpack.c.l.b16 %v3021
        %v3086 = vpack.c.b16 %v3055, %v3054
        %v3087 = vpack.c.b16 %v3057, %v3056
        %v3088 = vpack.c.b16 %v3059, %v3058
        %v3089 = vpack.c.b16 %v3061, %v3060
        %v3090 = vpack.c.b16 %v3063, %v3062
        %v3091 = vpack.c.b16 %v3065, %v3064
        %v3092 = vpack.c.b16 %v3067, %v3066
        %v3093 = vpack.c.b16 %v3069, %v3068
        %v3094 = vpack.c.b16 %v3071, %v3070
        %v3095 = vpack.c.b16 %v3073, %v3072
        %v3096 = vpack.c.b16 %v3075, %v3074
        %v3097 = vpack.c.b16 %v3077, %v3076
        %v3098 = vpack.c.b16 %v3079, %v3078
        %v3099 = vpack.c.b16 %v3081, %v3080
        %v3100 = vpack.c.b16 %v3083, %v3082
        %v3101 = vpack.c.b16 %v3085, %v3084
        %3118 = vst [vmem:[#allocation3 + $0x30] sm:$0xff] %v3086
        %3119 = vst [vmem:[#allocation3 + $0x78] sm:$0xff] %v3087
        %3120 = vst [vmem:[#allocation3 + $0xc0] sm:$0xff] %v3088
        %3121 = vst [vmem:[#allocation3 + $0x108] sm:$0xff] %v3089
        %3122 = vst [vmem:[#allocation3 + $0x150] sm:$0xff] %v3090
        %3123 = vst [vmem:[#allocation3 + $0x198] sm:$0xff] %v3091
        %3124 = vst [vmem:[#allocation3 + $0x1e0] sm:$0xff] %v3092
        %3125 = vst [vmem:[#allocation3 + $0x228] sm:$0xff] %v3093
        %3126 = vst [vmem:[#allocation3 + $0x270] sm:$0xff] %v3094
        %3127 = vst [vmem:[#allocation3 + $0x2b8] sm:$0xff] %v3095
        %3128 = vst [vmem:[#allocation3 + $0x300] sm:$0xff] %v3096
        %3129 = vst [vmem:[#allocation3 + $0x348] sm:$0xff] %v3097
        %3130 = vst [vmem:[#allocation3 + $0x390] sm:$0xff] %v3098
        %3131 = vst [vmem:[#allocation3 + $0x3d8] sm:$0xff] %v3099
        %3132 = vst [vmem:[#allocation3 + $0x420] sm:$0xff] %v3100
        %3133 = vst [vmem:[#allocation3 + $0x468] sm:$0xff] %v3101
        %v3134 = vld [vmem:[%s2989] sm:$0xf]
        %v3135 = vld [vmem:[%s2989 + $0x4] sm:$0xf]
        %v3136 = vld [vmem:[%s2989 + $0x8] sm:$0x1]
        %v3137 = vld [vmem:[%s2989 + $0xc] sm:$0xf]
        %v3138 = vld [vmem:[%s2989 + $0x10] sm:$0xf]
        %v3139 = vld [vmem:[%s2989 + $0x14] sm:$0x1]
        %v3140 = vld [vmem:[%s2989 + $0x18] sm:$0xf]
        %v3141 = vld [vmem:[%s2989 + $0x1c] sm:$0xf]
        %v3142 = vld [vmem:[%s2989 + $0x20] sm:$0x1]
        %v3143 = vld [vmem:[%s2989 + $0x24] sm:$0xf]
        %v3144 = vld [vmem:[%s2989 + $0x28] sm:$0xf]
        %v3145 = vld [vmem:[%s2989 + $0x2c] sm:$0x1]
        %v3146 = vld [vmem:[%s2989 + $0x30] sm:$0xf]
        %v3147 = vld [vmem:[%s2989 + $0x34] sm:$0xf]
        %v3148 = vld [vmem:[%s2989 + $0x38] sm:$0x1]
        %v3149 = vld [vmem:[%s2989 + $0x3c] sm:$0xf]
        %v3150 = vld [vmem:[%s2989 + $0x40] sm:$0xf]
        %v3151 = vld [vmem:[%s2989 + $0x44] sm:$0x1]
        %v3152 = vld [vmem:[%s2989 + $0x48] sm:$0xf]
        %v3153 = vld [vmem:[%s2989 + $0x4c] sm:$0xf]
        %v3154 = vld [vmem:[%s2989 + $0x50] sm:$0x1]
        %v3155 = vld [vmem:[%s2989 + $0x54] sm:$0xf]
        %v3156 = vld [vmem:[%s2989 + $0x58] sm:$0xf]
        %v3157 = vld [vmem:[%s2989 + $0x5c] sm:$0x1]
        %v3158 = vld [vmem:[%s2989 + $0x60] sm:$0xf]
        %v3159 = vld [vmem:[%s2989 + $0x64] sm:$0xf]
        %v3160 = vld [vmem:[%s2989 + $0x68] sm:$0x1]
        %v3161 = vld [vmem:[%s2989 + $0x6c] sm:$0xf]
        %v3162 = vld [vmem:[%s2989 + $0x70] sm:$0xf]
        %v3163 = vld [vmem:[%s2989 + $0x74] sm:$0x1]
        %v3164 = vld [vmem:[%s2989 + $0x78] sm:$0xf]
        %v3165 = vld [vmem:[%s2989 + $0x7c] sm:$0xf]
        %v3166 = vld [vmem:[%s2989 + $0x80] sm:$0x1]
        %v3167 = vld [vmem:[%s2989 + $0x84] sm:$0xf]
        %v3168 = vld [vmem:[%s2989 + $0x88] sm:$0xf]
        %v3169 = vld [vmem:[%s2989 + $0x8c] sm:$0x1]
        %v3170 = vld [vmem:[%s2989 + $0x90] sm:$0xf]
        %v3171 = vld [vmem:[%s2989 + $0x94] sm:$0xf]
        %v3172 = vld [vmem:[%s2989 + $0x98] sm:$0x1]
        %v3173 = vld [vmem:[%s2989 + $0x9c] sm:$0xf]
        %v3174 = vld [vmem:[%s2989 + $0xa0] sm:$0xf]
        %v3175 = vld [vmem:[%s2989 + $0xa4] sm:$0x1]
        %v3176 = vld [vmem:[%s2989 + $0xa8] sm:$0xf]
        %v3177 = vld [vmem:[%s2989 + $0xac] sm:$0xf]
        %v3178 = vld [vmem:[%s2989 + $0xb0] sm:$0x1]
        %v3179 = vld [vmem:[%s2989 + $0xb4] sm:$0xf]
        %v3180 = vld [vmem:[%s2989 + $0xb8] sm:$0xf]
        %v3181 = vld [vmem:[%s2989 + $0xbc] sm:$0x1]
        %v3230 = vunpack.c.l.b16 %v3134
        %v3231 = vunpack.c.l.b16 %v3135
        %v3232 = vunpack.c.l.b16 %v3136
        %v3233 = vunpack.c.l.b16 %v3137
        %v3234 = vunpack.c.l.b16 %v3138
        %v3235 = vunpack.c.l.b16 %v3139
        %v3236 = vunpack.c.l.b16 %v3140
        %v3237 = vunpack.c.l.b16 %v3141
        %v3238 = vunpack.c.l.b16 %v3142
        %v3239 = vunpack.c.l.b16 %v3143
        %v3240 = vunpack.c.l.b16 %v3144
        %v3241 = vunpack.c.l.b16 %v3145
        %v3242 = vunpack.c.l.b16 %v3146
        %v3243 = vunpack.c.l.b16 %v3147
        %v3244 = vunpack.c.l.b16 %v3148
        %v3245 = vunpack.c.l.b16 %v3149
        %v3246 = vunpack.c.l.b16 %v3150
        %v3247 = vunpack.c.l.b16 %v3151
        %v3248 = vunpack.c.l.b16 %v3152
        %v3249 = vunpack.c.l.b16 %v3153
        %v3250 = vunpack.c.l.b16 %v3154
        %v3251 = vunpack.c.l.b16 %v3155
        %v3252 = vunpack.c.l.b16 %v3156
        %v3253 = vunpack.c.l.b16 %v3157
        %v3254 = vunpack.c.l.b16 %v3158
        %v3255 = vunpack.c.l.b16 %v3159
        %v3256 = vunpack.c.l.b16 %v3160
        %v3257 = vunpack.c.l.b16 %v3161
        %v3258 = vunpack.c.l.b16 %v3162
        %v3259 = vunpack.c.l.b16 %v3163
        %v3260 = vunpack.c.l.b16 %v3164
        %v3261 = vunpack.c.l.b16 %v3165
        %v3262 = vunpack.c.l.b16 %v3166
        %v3263 = vunpack.c.l.b16 %v3167
        %v3264 = vunpack.c.l.b16 %v3168
        %v3265 = vunpack.c.l.b16 %v3169
        %v3266 = vunpack.c.l.b16 %v3170
        %v3267 = vunpack.c.l.b16 %v3171
        %v3268 = vunpack.c.l.b16 %v3172
        %v3269 = vunpack.c.l.b16 %v3173
        %v3270 = vunpack.c.l.b16 %v3174
        %v3271 = vunpack.c.l.b16 %v3175
        %v3272 = vunpack.c.l.b16 %v3176
        %v3273 = vunpack.c.l.b16 %v3177
        %v3274 = vunpack.c.l.b16 %v3178
        %v3275 = vunpack.c.l.b16 %v3179
        %v3276 = vunpack.c.l.b16 %v3180
        %v3277 = vunpack.c.l.b16 %v3181
        %v3278 = vpack.c.b16 %v3231, %v3230
        %v3279 = vpack.c.b16 %v3232, %v3232
        %v3280 = vpack.c.b16 %v3234, %v3233
        %v3281 = vpack.c.b16 %v3235, %v3235
        %v3282 = vpack.c.b16 %v3237, %v3236
        %v3283 = vpack.c.b16 %v3238, %v3238
        %v3284 = vpack.c.b16 %v3240, %v3239
        %v3285 = vpack.c.b16 %v3241, %v3241
        %v3286 = vpack.c.b16 %v3243, %v3242
        %v3287 = vpack.c.b16 %v3244, %v3244
        %v3288 = vpack.c.b16 %v3246, %v3245
        %v3289 = vpack.c.b16 %v3247, %v3247
        %v3290 = vpack.c.b16 %v3249, %v3248
        %v3291 = vpack.c.b16 %v3250, %v3250
        %v3292 = vpack.c.b16 %v3252, %v3251
        %v3293 = vpack.c.b16 %v3253, %v3253
        %v3294 = vpack.c.b16 %v3255, %v3254
        %v3295 = vpack.c.b16 %v3256, %v3256
        %v3296 = vpack.c.b16 %v3258, %v3257
        %v3297 = vpack.c.b16 %v3259, %v3259
        %v3298 = vpack.c.b16 %v3261, %v3260
        %v3299 = vpack.c.b16 %v3262, %v3262
        %v3300 = vpack.c.b16 %v3264, %v3263
        %v3301 = vpack.c.b16 %v3265, %v3265
        %v3302 = vpack.c.b16 %v3267, %v3266
        %v3303 = vpack.c.b16 %v3268, %v3268
        %v3304 = vpack.c.b16 %v3270, %v3269
        %v3305 = vpack.c.b16 %v3271, %v3271
        %v3306 = vpack.c.b16 %v3273, %v3272
        %v3307 = vpack.c.b16 %v3274, %v3274
        %v3308 = vpack.c.b16 %v3276, %v3275
        %v3309 = vpack.c.b16 %v3277, %v3277
        %v3311 = vshrl.u32 %v3278, 16
        %v3313 = vshll.u32 %v3278, 16
        %v3315 = vrot.slane %v3313, 1
        %v3316 = vor.u32 %v3311, %v3315
        %v3318 = vshll.u32 %v3279, 16
        %v3320 = vrot.slane %v3318, 1
        %v3321 = vsel %vm1707, %v3316, %v3320
        %v3323 = vshrl.u32 %v3280, 16
        %v3325 = vshll.u32 %v3280, 16
        %v3327 = vrot.slane %v3325, 1
        %v3328 = vor.u32 %v3323, %v3327
        %v3330 = vshll.u32 %v3281, 16
        %v3332 = vrot.slane %v3330, 1
        %v3333 = vsel %vm1707, %v3328, %v3332
        %v3335 = vshrl.u32 %v3282, 16
        %v3337 = vshll.u32 %v3282, 16
        %v3339 = vrot.slane %v3337, 1
        %v3340 = vor.u32 %v3335, %v3339
        %v3342 = vshll.u32 %v3283, 16
        %v3344 = vrot.slane %v3342, 1
        %v3345 = vsel %vm1707, %v3340, %v3344
        %v3347 = vshrl.u32 %v3284, 16
        %v3349 = vshll.u32 %v3284, 16
        %v3351 = vrot.slane %v3349, 1
        %v3352 = vor.u32 %v3347, %v3351
        %v3354 = vshll.u32 %v3285, 16
        %v3356 = vrot.slane %v3354, 1
        %v3357 = vsel %vm1707, %v3352, %v3356
        %v3359 = vshrl.u32 %v3286, 16
        %v3361 = vshll.u32 %v3286, 16
        %v3363 = vrot.slane %v3361, 1
        %v3364 = vor.u32 %v3359, %v3363
        %v3366 = vshll.u32 %v3287, 16
        %v3368 = vrot.slane %v3366, 1
        %v3369 = vsel %vm1707, %v3364, %v3368
        %v3371 = vshrl.u32 %v3288, 16
        %v3373 = vshll.u32 %v3288, 16
        %v3375 = vrot.slane %v3373, 1
        %v3376 = vor.u32 %v3371, %v3375
        %v3378 = vshll.u32 %v3289, 16
        %v3380 = vrot.slane %v3378, 1
        %v3381 = vsel %vm1707, %v3376, %v3380
        %v3383 = vshrl.u32 %v3290, 16
        %v3385 = vshll.u32 %v3290, 16
        %v3387 = vrot.slane %v3385, 1
        %v3388 = vor.u32 %v3383, %v3387
        %v3390 = vshll.u32 %v3291, 16
        %v3392 = vrot.slane %v3390, 1
        %v3393 = vsel %vm1707, %v3388, %v3392
        %v3395 = vshrl.u32 %v3292, 16
        %v3397 = vshll.u32 %v3292, 16
        %v3399 = vrot.slane %v3397, 1
        %v3400 = vor.u32 %v3395, %v3399
        %v3402 = vshll.u32 %v3293, 16
        %v3404 = vrot.slane %v3402, 1
        %v3405 = vsel %vm1707, %v3400, %v3404
        %v3407 = vshrl.u32 %v3294, 16
        %v3409 = vshll.u32 %v3294, 16
        %v3411 = vrot.slane %v3409, 1
        %v3412 = vor.u32 %v3407, %v3411
        %v3414 = vshll.u32 %v3295, 16
        %v3416 = vrot.slane %v3414, 1
        %v3417 = vsel %vm1707, %v3412, %v3416
        %v3419 = vshrl.u32 %v3296, 16
        %v3421 = vshll.u32 %v3296, 16
        %v3423 = vrot.slane %v3421, 1
        %v3424 = vor.u32 %v3419, %v3423
        %v3426 = vshll.u32 %v3297, 16
        %v3428 = vrot.slane %v3426, 1
        %v3429 = vsel %vm1707, %v3424, %v3428
        %v3431 = vshrl.u32 %v3298, 16
        %v3433 = vshll.u32 %v3298, 16
        %v3435 = vrot.slane %v3433, 1
        %v3436 = vor.u32 %v3431, %v3435
        %v3438 = vshll.u32 %v3299, 16
        %v3440 = vrot.slane %v3438, 1
        %v3441 = vsel %vm1707, %v3436, %v3440
        %v3443 = vshrl.u32 %v3300, 16
        %v3445 = vshll.u32 %v3300, 16
        %v3447 = vrot.slane %v3445, 1
        %v3448 = vor.u32 %v3443, %v3447
        %v3450 = vshll.u32 %v3301, 16
        %v3452 = vrot.slane %v3450, 1
        %v3453 = vsel %vm1707, %v3448, %v3452
        %v3455 = vshrl.u32 %v3302, 16
        %v3457 = vshll.u32 %v3302, 16
        %v3459 = vrot.slane %v3457, 1
        %v3460 = vor.u32 %v3455, %v3459
        %v3462 = vshll.u32 %v3303, 16
        %v3464 = vrot.slane %v3462, 1
        %v3465 = vsel %vm1707, %v3460, %v3464
        %v3467 = vshrl.u32 %v3304, 16
        %v3469 = vshll.u32 %v3304, 16
        %v3471 = vrot.slane %v3469, 1
        %v3472 = vor.u32 %v3467, %v3471
        %v3474 = vshll.u32 %v3305, 16
        %v3476 = vrot.slane %v3474, 1
        %v3477 = vsel %vm1707, %v3472, %v3476
        %v3479 = vshrl.u32 %v3306, 16
        %v3481 = vshll.u32 %v3306, 16
        %v3483 = vrot.slane %v3481, 1
        %v3484 = vor.u32 %v3479, %v3483
        %v3486 = vshll.u32 %v3307, 16
        %v3488 = vrot.slane %v3486, 1
        %v3489 = vsel %vm1707, %v3484, %v3488
        %v3491 = vshrl.u32 %v3308, 16
        %v3493 = vshll.u32 %v3308, 16
        %v3495 = vrot.slane %v3493, 1
        %v3496 = vor.u32 %v3491, %v3495
        %v3498 = vshll.u32 %v3309, 16
        %v3500 = vrot.slane %v3498, 1
        %v3501 = vsel %vm1707, %v3496, %v3500
        %3518 = vst [vmem:[#allocation3 + $0x38] sm:$0xff] %v3321
        %3519 = vst [vmem:[#allocation3 + $0x80] sm:$0xff] %v3333
        %3520 = vst [vmem:[#allocation3 + $0xc8] sm:$0xff] %v3345
        %3521 = vst [vmem:[#allocation3 + $0x110] sm:$0xff] %v3357
        %3522 = vst [vmem:[#allocation3 + $0x158] sm:$0xff] %v3369
        %3523 = vst [vmem:[#allocation3 + $0x1a0] sm:$0xff] %v3381
        %3524 = vst [vmem:[#allocation3 + $0x1e8] sm:$0xff] %v3393
        %3525 = vst [vmem:[#allocation3 + $0x230] sm:$0xff] %v3405
        %3526 = vst [vmem:[#allocation3 + $0x278] sm:$0xff] %v3417
        %3527 = vst [vmem:[#allocation3 + $0x2c0] sm:$0xff] %v3429
        %3528 = vst [vmem:[#allocation3 + $0x308] sm:$0xff] %v3441
        %3529 = vst [vmem:[#allocation3 + $0x350] sm:$0xff] %v3453
        %3530 = vst [vmem:[#allocation3 + $0x398] sm:$0xff] %v3465
        %3531 = vst [vmem:[#allocation3 + $0x3e0] sm:$0xff] %v3477
        %3532 = vst [vmem:[#allocation3 + $0x428] sm:$0xff] %v3489
        %3533 = vst [vmem:[#allocation3 + $0x470] sm:$0xff] %v3501
        %v3534 = vld [vmem:[%s2989] sm:$0xe]
        %v3535 = vld [vmem:[%s2989 + $0x4] sm:$0xf]
        %v3536 = vld [vmem:[%s2989 + $0x8] sm:$0x1]
        %v3537 = vld [vmem:[%s2989 + $0xc] sm:$0xe]
        %v3538 = vld [vmem:[%s2989 + $0x10] sm:$0xf]
        %v3539 = vld [vmem:[%s2989 + $0x14] sm:$0x1]
        %v3540 = vld [vmem:[%s2989 + $0x18] sm:$0xe]
        %v3541 = vld [vmem:[%s2989 + $0x1c] sm:$0xf]
        %v3542 = vld [vmem:[%s2989 + $0x20] sm:$0x1]
        %v3543 = vld [vmem:[%s2989 + $0x24] sm:$0xe]
        %v3544 = vld [vmem:[%s2989 + $0x28] sm:$0xf]
        %v3545 = vld [vmem:[%s2989 + $0x2c] sm:$0x1]
        %v3546 = vld [vmem:[%s2989 + $0x30] sm:$0xe]
        %v3547 = vld [vmem:[%s2989 + $0x34] sm:$0xf]
        %v3548 = vld [vmem:[%s2989 + $0x38] sm:$0x1]
        %v3549 = vld [vmem:[%s2989 + $0x3c] sm:$0xe]
        %v3550 = vld [vmem:[%s2989 + $0x40] sm:$0xf]
        %v3551 = vld [vmem:[%s2989 + $0x44] sm:$0x1]
        %v3552 = vld [vmem:[%s2989 + $0x48] sm:$0xe]
        %v3553 = vld [vmem:[%s2989 + $0x4c] sm:$0xf]
        %v3554 = vld [vmem:[%s2989 + $0x50] sm:$0x1]
        %v3555 = vld [vmem:[%s2989 + $0x54] sm:$0xe]
        %v3556 = vld [vmem:[%s2989 + $0x58] sm:$0xf]
        %v3557 = vld [vmem:[%s2989 + $0x5c] sm:$0x1]
        %v3558 = vld [vmem:[%s2989 + $0x60] sm:$0xe]
        %v3559 = vld [vmem:[%s2989 + $0x64] sm:$0xf]
        %v3560 = vld [vmem:[%s2989 + $0x68] sm:$0x1]
        %v3561 = vld [vmem:[%s2989 + $0x6c] sm:$0xe]
        %v3562 = vld [vmem:[%s2989 + $0x70] sm:$0xf]
        %v3563 = vld [vmem:[%s2989 + $0x74] sm:$0x1]
        %v3564 = vld [vmem:[%s2989 + $0x78] sm:$0xe]
        %v3565 = vld [vmem:[%s2989 + $0x7c] sm:$0xf]
        %v3566 = vld [vmem:[%s2989 + $0x80] sm:$0x1]
        %v3567 = vld [vmem:[%s2989 + $0x84] sm:$0xe]
        %v3568 = vld [vmem:[%s2989 + $0x88] sm:$0xf]
        %v3569 = vld [vmem:[%s2989 + $0x8c] sm:$0x1]
        %v3570 = vld [vmem:[%s2989 + $0x90] sm:$0xe]
        %v3571 = vld [vmem:[%s2989 + $0x94] sm:$0xf]
        %v3572 = vld [vmem:[%s2989 + $0x98] sm:$0x1]
        %v3573 = vld [vmem:[%s2989 + $0x9c] sm:$0xe]
        %v3574 = vld [vmem:[%s2989 + $0xa0] sm:$0xf]
        %v3575 = vld [vmem:[%s2989 + $0xa4] sm:$0x1]
        %v3576 = vld [vmem:[%s2989 + $0xa8] sm:$0xe]
        %v3577 = vld [vmem:[%s2989 + $0xac] sm:$0xf]
        %v3578 = vld [vmem:[%s2989 + $0xb0] sm:$0x1]
        %v3579 = vld [vmem:[%s2989 + $0xb4] sm:$0xe]
        %v3580 = vld [vmem:[%s2989 + $0xb8] sm:$0xf]
        %v3581 = vld [vmem:[%s2989 + $0xbc] sm:$0x1]
        %v3630 = vunpack.c.l.b16 %v3534
        %v3631 = vunpack.c.l.b16 %v3535
        %v3632 = vunpack.c.l.b16 %v3536
        %v3633 = vunpack.c.l.b16 %v3537
        %v3634 = vunpack.c.l.b16 %v3538
        %v3635 = vunpack.c.l.b16 %v3539
        %v3636 = vunpack.c.l.b16 %v3540
        %v3637 = vunpack.c.l.b16 %v3541
        %v3638 = vunpack.c.l.b16 %v3542
        %v3639 = vunpack.c.l.b16 %v3543
        %v3640 = vunpack.c.l.b16 %v3544
        %v3641 = vunpack.c.l.b16 %v3545
        %v3642 = vunpack.c.l.b16 %v3546
        %v3643 = vunpack.c.l.b16 %v3547
        %v3644 = vunpack.c.l.b16 %v3548
        %v3645 = vunpack.c.l.b16 %v3549
        %v3646 = vunpack.c.l.b16 %v3550
        %v3647 = vunpack.c.l.b16 %v3551
        %v3648 = vunpack.c.l.b16 %v3552
        %v3649 = vunpack.c.l.b16 %v3553
        %v3650 = vunpack.c.l.b16 %v3554
        %v3651 = vunpack.c.l.b16 %v3555
        %v3652 = vunpack.c.l.b16 %v3556
        %v3653 = vunpack.c.l.b16 %v3557
        %v3654 = vunpack.c.l.b16 %v3558
        %v3655 = vunpack.c.l.b16 %v3559
        %v3656 = vunpack.c.l.b16 %v3560
        %v3657 = vunpack.c.l.b16 %v3561
        %v3658 = vunpack.c.l.b16 %v3562
        %v3659 = vunpack.c.l.b16 %v3563
        %v3660 = vunpack.c.l.b16 %v3564
        %v3661 = vunpack.c.l.b16 %v3565
        %v3662 = vunpack.c.l.b16 %v3566
        %v3663 = vunpack.c.l.b16 %v3567
        %v3664 = vunpack.c.l.b16 %v3568
        %v3665 = vunpack.c.l.b16 %v3569
        %v3666 = vunpack.c.l.b16 %v3570
        %v3667 = vunpack.c.l.b16 %v3571
        %v3668 = vunpack.c.l.b16 %v3572
        %v3669 = vunpack.c.l.b16 %v3573
        %v3670 = vunpack.c.l.b16 %v3574
        %v3671 = vunpack.c.l.b16 %v3575
        %v3672 = vunpack.c.l.b16 %v3576
        %v3673 = vunpack.c.l.b16 %v3577
        %v3674 = vunpack.c.l.b16 %v3578
        %v3675 = vunpack.c.l.b16 %v3579
        %v3676 = vunpack.c.l.b16 %v3580
        %v3677 = vunpack.c.l.b16 %v3581
        %v3678 = vpack.c.b16 %v3631, %v3630
        %v3679 = vpack.c.b16 %v3632, %v3632
        %v3680 = vpack.c.b16 %v3634, %v3633
        %v3681 = vpack.c.b16 %v3635, %v3635
        %v3682 = vpack.c.b16 %v3637, %v3636
        %v3683 = vpack.c.b16 %v3638, %v3638
        %v3684 = vpack.c.b16 %v3640, %v3639
        %v3685 = vpack.c.b16 %v3641, %v3641
        %v3686 = vpack.c.b16 %v3643, %v3642
        %v3687 = vpack.c.b16 %v3644, %v3644
        %v3688 = vpack.c.b16 %v3646, %v3645
        %v3689 = vpack.c.b16 %v3647, %v3647
        %v3690 = vpack.c.b16 %v3649, %v3648
        %v3691 = vpack.c.b16 %v3650, %v3650
        %v3692 = vpack.c.b16 %v3652, %v3651
        %v3693 = vpack.c.b16 %v3653, %v3653
        %v3694 = vpack.c.b16 %v3655, %v3654
        %v3695 = vpack.c.b16 %v3656, %v3656
        %v3696 = vpack.c.b16 %v3658, %v3657
        %v3697 = vpack.c.b16 %v3659, %v3659
        %v3698 = vpack.c.b16 %v3661, %v3660
        %v3699 = vpack.c.b16 %v3662, %v3662
        %v3700 = vpack.c.b16 %v3664, %v3663
        %v3701 = vpack.c.b16 %v3665, %v3665
        %v3702 = vpack.c.b16 %v3667, %v3666
        %v3703 = vpack.c.b16 %v3668, %v3668
        %v3704 = vpack.c.b16 %v3670, %v3669
        %v3705 = vpack.c.b16 %v3671, %v3671
        %v3706 = vpack.c.b16 %v3673, %v3672
        %v3707 = vpack.c.b16 %v3674, %v3674
        %v3708 = vpack.c.b16 %v3676, %v3675
        %v3709 = vpack.c.b16 %v3677, %v3677
        %v3710 = vrot.slane %v3678, 1
        %v3711 = vrot.slane %v3679, 1
        %v3712 = vsel %vm2108, %v3710, %v3711
        %v3713 = vrot.slane %v3680, 1
        %v3714 = vrot.slane %v3681, 1
        %v3715 = vsel %vm2108, %v3713, %v3714
        %v3716 = vrot.slane %v3682, 1
        %v3717 = vrot.slane %v3683, 1
        %v3718 = vsel %vm2108, %v3716, %v3717
        %v3719 = vrot.slane %v3684, 1
        %v3720 = vrot.slane %v3685, 1
        %v3721 = vsel %vm2108, %v3719, %v3720
        %v3722 = vrot.slane %v3686, 1
        %v3723 = vrot.slane %v3687, 1
        %v3724 = vsel %vm2108, %v3722, %v3723
        %v3725 = vrot.slane %v3688, 1
        %v3726 = vrot.slane %v3689, 1
        %v3727 = vsel %vm2108, %v3725, %v3726
        %v3728 = vrot.slane %v3690, 1
        %v3729 = vrot.slane %v3691, 1
        %v3730 = vsel %vm2108, %v3728, %v3729
        %v3731 = vrot.slane %v3692, 1
        %v3732 = vrot.slane %v3693, 1
        %v3733 = vsel %vm2108, %v3731, %v3732
        %v3734 = vrot.slane %v3694, 1
        %v3735 = vrot.slane %v3695, 1
        %v3736 = vsel %vm2108, %v3734, %v3735
        %v3737 = vrot.slane %v3696, 1
        %v3738 = vrot.slane %v3697, 1
        %v3739 = vsel %vm2108, %v3737, %v3738
        %v3740 = vrot.slane %v3698, 1
        %v3741 = vrot.slane %v3699, 1
        %v3742 = vsel %vm2108, %v3740, %v3741
        %v3743 = vrot.slane %v3700, 1
        %v3744 = vrot.slane %v3701, 1
        %v3745 = vsel %vm2108, %v3743, %v3744
        %v3746 = vrot.slane %v3702, 1
        %v3747 = vrot.slane %v3703, 1
        %v3748 = vsel %vm2108, %v3746, %v3747
        %v3749 = vrot.slane %v3704, 1
        %v3750 = vrot.slane %v3705, 1
        %v3751 = vsel %vm2108, %v3749, %v3750
        %v3752 = vrot.slane %v3706, 1
        %v3753 = vrot.slane %v3707, 1
        %v3754 = vsel %vm2108, %v3752, %v3753
        %v3755 = vrot.slane %v3708, 1
        %v3756 = vrot.slane %v3709, 1
        %v3757 = vsel %vm2108, %v3755, %v3756
        %3774 = vst [vmem:[#allocation3 + $0x40] sm:$0xff] %v3712
        %3775 = vst [vmem:[#allocation3 + $0x88] sm:$0xff] %v3715
        %3776 = vst [vmem:[#allocation3 + $0xd0] sm:$0xff] %v3718
        %3777 = vst [vmem:[#allocation3 + $0x118] sm:$0xff] %v3721
        %3778 = vst [vmem:[#allocation3 + $0x160] sm:$0xff] %v3724
        %3779 = vst [vmem:[#allocation3 + $0x1a8] sm:$0xff] %v3727
        %3780 = vst [vmem:[#allocation3 + $0x1f0] sm:$0xff] %v3730
        %3781 = vst [vmem:[#allocation3 + $0x238] sm:$0xff] %v3733
        %3782 = vst [vmem:[#allocation3 + $0x280] sm:$0xff] %v3736
        %3783 = vst [vmem:[#allocation3 + $0x2c8] sm:$0xff] %v3739
        %3784 = vst [vmem:[#allocation3 + $0x310] sm:$0xff] %v3742
        %3785 = vst [vmem:[#allocation3 + $0x358] sm:$0xff] %v3745
        %3786 = vst [vmem:[#allocation3 + $0x3a0] sm:$0xff] %v3748
        %3787 = vst [vmem:[#allocation3 + $0x3e8] sm:$0xff] %v3751
        %3788 = vst [vmem:[#allocation3 + $0x430] sm:$0xff] %v3754
        %3789 = vst [vmem:[#allocation3 + $0x478] sm:$0xff] %v3757
        %v3790 = vld [vmem:[#allocation3] sm:$0xff]
        %v3791 = vld [vmem:[#allocation3 + $0x8] sm:$0xff]
        %v3792 = vld [vmem:[#allocation3 + $0x10] sm:$0xff]
        %v3793 = vld [vmem:[#allocation3 + $0x18] sm:$0xff]
        %v3794 = vld [vmem:[#allocation3 + $0x20] sm:$0xff]
        %v3795 = vld [vmem:[#allocation3 + $0x28] sm:$0xff]
        %v3796 = vld [vmem:[#allocation3 + $0x30] sm:$0xff]
        %v3797 = vld [vmem:[#allocation3 + $0x38] sm:$0xff]
        %v3798 = vld [vmem:[#allocation3 + $0x40] sm:$0xff]
        %v3799 = vld [vmem:[#allocation3 + $0x48] sm:$0xff]
        %v3800 = vld [vmem:[#allocation3 + $0x50] sm:$0xff]
        %v3801 = vld [vmem:[#allocation3 + $0x58] sm:$0xff]
        %v3802 = vld [vmem:[#allocation3 + $0x60] sm:$0xff]
        %v3803 = vld [vmem:[#allocation3 + $0x68] sm:$0xff]
        %v3804 = vld [vmem:[#allocation3 + $0x70] sm:$0xff]
        %v3805 = vld [vmem:[#allocation3 + $0x78] sm:$0xff]
        %v3806 = vld [vmem:[#allocation3 + $0x80] sm:$0xff]
        %v3807 = vld [vmem:[#allocation3 + $0x88] sm:$0xff]
        %v3808 = vld [vmem:[#allocation3 + $0x90] sm:$0xff]
        %v3809 = vld [vmem:[#allocation3 + $0x98] sm:$0xff]
        %v3810 = vld [vmem:[#allocation3 + $0xa0] sm:$0xff]
        %v3811 = vld [vmem:[#allocation3 + $0xa8] sm:$0xff]
        %v3812 = vld [vmem:[#allocation3 + $0xb0] sm:$0xff]
        %v3813 = vld [vmem:[#allocation3 + $0xb8] sm:$0xff]
        %v3814 = vld [vmem:[#allocation3 + $0xc0] sm:$0xff]
        %v3815 = vld [vmem:[#allocation3 + $0xc8] sm:$0xff]
        %v3816 = vld [vmem:[#allocation3 + $0xd0] sm:$0xff]
        %v3817 = vld [vmem:[#allocation3 + $0xd8] sm:$0xff]
        %v3818 = vld [vmem:[#allocation3 + $0xe0] sm:$0xff]
        %v3819 = vld [vmem:[#allocation3 + $0xe8] sm:$0xff]
        %v3820 = vld [vmem:[#allocation3 + $0xf0] sm:$0xff]
        %v3821 = vld [vmem:[#allocation3 + $0xf8] sm:$0xff]
        %v3822 = vld [vmem:[#allocation3 + $0x100] sm:$0xff]
        %v3823 = vld [vmem:[#allocation3 + $0x108] sm:$0xff]
        %v3824 = vld [vmem:[#allocation3 + $0x110] sm:$0xff]
        %v3825 = vld [vmem:[#allocation3 + $0x118] sm:$0xff]
        %v3826 = vld [vmem:[#allocation3 + $0x120] sm:$0xff]
        %v3827 = vld [vmem:[#allocation3 + $0x128] sm:$0xff]
        %v3828 = vld [vmem:[#allocation3 + $0x130] sm:$0xff]
        %v3829 = vld [vmem:[#allocation3 + $0x138] sm:$0xff]
        %v3830 = vld [vmem:[#allocation3 + $0x140] sm:$0xff]
        %v3831 = vld [vmem:[#allocation3 + $0x148] sm:$0xff]
        %v3832 = vld [vmem:[#allocation3 + $0x150] sm:$0xff]
        %v3833 = vld [vmem:[#allocation3 + $0x158] sm:$0xff]
        %v3834 = vld [vmem:[#allocation3 + $0x160] sm:$0xff]
        %v3835 = vld [vmem:[#allocation3 + $0x168] sm:$0xff]
        %v3836 = vld [vmem:[#allocation3 + $0x170] sm:$0xff]
        %v3837 = vld [vmem:[#allocation3 + $0x178] sm:$0xff]
        %v3838 = vld [vmem:[#allocation3 + $0x180] sm:$0xff]
        %v3839 = vld [vmem:[#allocation3 + $0x188] sm:$0xff]
        %v3840 = vld [vmem:[#allocation3 + $0x190] sm:$0xff]
        %v3841 = vld [vmem:[#allocation3 + $0x198] sm:$0xff]
        %v3842 = vld [vmem:[#allocation3 + $0x1a0] sm:$0xff]
        %v3843 = vld [vmem:[#allocation3 + $0x1a8] sm:$0xff]
        %v3844 = vld [vmem:[#allocation3 + $0x1b0] sm:$0xff]
        %v3845 = vld [vmem:[#allocation3 + $0x1b8] sm:$0xff]
        %v3846 = vld [vmem:[#allocation3 + $0x1c0] sm:$0xff]
        %v3847 = vld [vmem:[#allocation3 + $0x1c8] sm:$0xff]
        %v3848 = vld [vmem:[#allocation3 + $0x1d0] sm:$0xff]
        %v3849 = vld [vmem:[#allocation3 + $0x1d8] sm:$0xff]
        %v3850 = vld [vmem:[#allocation3 + $0x1e0] sm:$0xff]
        %v3851 = vld [vmem:[#allocation3 + $0x1e8] sm:$0xff]
        %v3852 = vld [vmem:[#allocation3 + $0x1f0] sm:$0xff]
        %v3853 = vld [vmem:[#allocation3 + $0x1f8] sm:$0xff]
        %v3854 = vld [vmem:[#allocation3 + $0x200] sm:$0xff]
        %v3855 = vld [vmem:[#allocation3 + $0x208] sm:$0xff]
        %v3856 = vld [vmem:[#allocation3 + $0x210] sm:$0xff]
        %v3857 = vld [vmem:[#allocation3 + $0x218] sm:$0xff]
        %v3858 = vld [vmem:[#allocation3 + $0x220] sm:$0xff]
        %v3859 = vld [vmem:[#allocation3 + $0x228] sm:$0xff]
        %v3860 = vld [vmem:[#allocation3 + $0x230] sm:$0xff]
        %v3861 = vld [vmem:[#allocation3 + $0x238] sm:$0xff]
        %v3862 = vld [vmem:[#allocation3 + $0x240] sm:$0xff]
        %v3863 = vld [vmem:[#allocation3 + $0x248] sm:$0xff]
        %v3864 = vld [vmem:[#allocation3 + $0x250] sm:$0xff]
        %v3865 = vld [vmem:[#allocation3 + $0x258] sm:$0xff]
        %v3866 = vld [vmem:[#allocation3 + $0x260] sm:$0xff]
        %v3867 = vld [vmem:[#allocation3 + $0x268] sm:$0xff]
        %v3868 = vld [vmem:[#allocation3 + $0x270] sm:$0xff]
        %v3869 = vld [vmem:[#allocation3 + $0x278] sm:$0xff]
        %v3870 = vld [vmem:[#allocation3 + $0x280] sm:$0xff]
        %v3871 = vld [vmem:[#allocation3 + $0x288] sm:$0xff]
        %v3872 = vld [vmem:[#allocation3 + $0x290] sm:$0xff]
        %v3873 = vld [vmem:[#allocation3 + $0x298] sm:$0xff]
        %v3874 = vld [vmem:[#allocation3 + $0x2a0] sm:$0xff]
        %v3875 = vld [vmem:[#allocation3 + $0x2a8] sm:$0xff]
        %v3876 = vld [vmem:[#allocation3 + $0x2b0] sm:$0xff]
        %v3877 = vld [vmem:[#allocation3 + $0x2b8] sm:$0xff]
        %v3878 = vld [vmem:[#allocation3 + $0x2c0] sm:$0xff]
        %v3879 = vld [vmem:[#allocation3 + $0x2c8] sm:$0xff]
        %v3880 = vld [vmem:[#allocation3 + $0x2d0] sm:$0xff]
        %v3881 = vld [vmem:[#allocation3 + $0x2d8] sm:$0xff]
        %v3882 = vld [vmem:[#allocation3 + $0x2e0] sm:$0xff]
        %v3883 = vld [vmem:[#allocation3 + $0x2e8] sm:$0xff]
        %v3884 = vld [vmem:[#allocation3 + $0x2f0] sm:$0xff]
        %v3885 = vld [vmem:[#allocation3 + $0x2f8] sm:$0xff]
        %v3886 = vld [vmem:[#allocation3 + $0x300] sm:$0xff]
        %v3887 = vld [vmem:[#allocation3 + $0x308] sm:$0xff]
        %v3888 = vld [vmem:[#allocation3 + $0x310] sm:$0xff]
        %v3889 = vld [vmem:[#allocation3 + $0x318] sm:$0xff]
        %v3890 = vld [vmem:[#allocation3 + $0x320] sm:$0xff]
        %v3891 = vld [vmem:[#allocation3 + $0x328] sm:$0xff]
        %v3892 = vld [vmem:[#allocation3 + $0x330] sm:$0xff]
        %v3893 = vld [vmem:[#allocation3 + $0x338] sm:$0xff]
        %v3894 = vld [vmem:[#allocation3 + $0x340] sm:$0xff]
        %v3895 = vld [vmem:[#allocation3 + $0x348] sm:$0xff]
        %v3896 = vld [vmem:[#allocation3 + $0x350] sm:$0xff]
        %v3897 = vld [vmem:[#allocation3 + $0x358] sm:$0xff]
        %v3898 = vld [vmem:[#allocation3 + $0x360] sm:$0xff]
        %v3899 = vld [vmem:[#allocation3 + $0x368] sm:$0xff]
        %v3900 = vld [vmem:[#allocation3 + $0x370] sm:$0xff]
        %v3901 = vld [vmem:[#allocation3 + $0x378] sm:$0xff]
        %v3902 = vld [vmem:[#allocation3 + $0x380] sm:$0xff]
        %v3903 = vld [vmem:[#allocation3 + $0x388] sm:$0xff]
        %v3904 = vld [vmem:[#allocation3 + $0x390] sm:$0xff]
        %v3905 = vld [vmem:[#allocation3 + $0x398] sm:$0xff]
        %v3906 = vld [vmem:[#allocation3 + $0x3a0] sm:$0xff]
        %v3907 = vld [vmem:[#allocation3 + $0x3a8] sm:$0xff]
        %v3908 = vld [vmem:[#allocation3 + $0x3b0] sm:$0xff]
        %v3909 = vld [vmem:[#allocation3 + $0x3b8] sm:$0xff]
        %v3910 = vld [vmem:[#allocation3 + $0x3c0] sm:$0xff]
        %v3911 = vld [vmem:[#allocation3 + $0x3c8] sm:$0xff]
        %v3912 = vld [vmem:[#allocation3 + $0x3d0] sm:$0xff]
        %v3913 = vld [vmem:[#allocation3 + $0x3d8] sm:$0xff]
        %v3914 = vld [vmem:[#allocation3 + $0x3e0] sm:$0xff]
        %v3915 = vld [vmem:[#allocation3 + $0x3e8] sm:$0xff]
        %v3916 = vld [vmem:[#allocation3 + $0x3f0] sm:$0xff]
        %v3917 = vld [vmem:[#allocation3 + $0x3f8] sm:$0xff]
        %v3918 = vld [vmem:[#allocation3 + $0x400] sm:$0xff]
        %v3919 = vld [vmem:[#allocation3 + $0x408] sm:$0xff]
        %v3920 = vld [vmem:[#allocation3 + $0x410] sm:$0xff]
        %v3921 = vld [vmem:[#allocation3 + $0x418] sm:$0xff]
        %v3922 = vld [vmem:[#allocation3 + $0x420] sm:$0xff]
        %v3923 = vld [vmem:[#allocation3 + $0x428] sm:$0xff]
        %v3924 = vld [vmem:[#allocation3 + $0x430] sm:$0xff]
        %v3925 = vld [vmem:[#allocation3 + $0x438] sm:$0xff]
        %v3926 = vld [vmem:[#allocation3 + $0x440] sm:$0xff]
        %v3927 = vld [vmem:[#allocation3 + $0x448] sm:$0xff]
        %v3928 = vld [vmem:[#allocation3 + $0x450] sm:$0xff]
        %v3929 = vld [vmem:[#allocation3 + $0x458] sm:$0xff]
        %v3930 = vld [vmem:[#allocation3 + $0x460] sm:$0xff]
        %v3931 = vld [vmem:[#allocation3 + $0x468] sm:$0xff]
        %v3932 = vld [vmem:[#allocation3 + $0x470] sm:$0xff]
        %v3933 = vld [vmem:[#allocation3 + $0x478] sm:$0xff]
        %v3934 = vld [vmem:[#allocation9] sm:$0xf]
        %v3935 = vld [vmem:[#allocation9 + $0x4] sm:$0xf]
        %v3936 = vld [vmem:[#allocation9 + $0x8] sm:$0xf]
        %v3937 = vld [vmem:[#allocation9 + $0xc] sm:$0xf]
        %v3938 = vld [vmem:[#allocation9 + $0x10] sm:$0xf]
        %v3939 = vld [vmem:[#allocation9 + $0x14] sm:$0xf]
        %v3940 = vld [vmem:[#allocation9 + $0x18] sm:$0xf]
        %v3941 = vld [vmem:[#allocation9 + $0x1c] sm:$0xf]
        %v3942 = vld [vmem:[#allocation9 + $0x20] sm:$0xf]
        %v3943 = vld [vmem:[#allocation9 + $0x24] sm:$0xf]
        %v3944 = vld [vmem:[#allocation9 + $0x28] sm:$0xf]
        %v3945 = vld [vmem:[#allocation9 + $0x2c] sm:$0xf]
        %v3946 = vld [vmem:[#allocation9 + $0x30] sm:$0xf]
        %v3947 = vld [vmem:[#allocation9 + $0x34] sm:$0xf]
        %v3948 = vld [vmem:[#allocation9 + $0x38] sm:$0xf]
        %v3949 = vld [vmem:[#allocation9 + $0x3c] sm:$0xf]
        %v3950 = vld [vmem:[#allocation9 + $0x40] sm:$0xf]
        %v3951 = vld [vmem:[#allocation9 + $0x44] sm:$0xf]
        %v3952 = vld [vmem:[#allocation9 + $0x48] sm:$0xf]
        %v3953 = vld [vmem:[#allocation9 + $0x4c] sm:$0xf]
        %v3954 = vld [vmem:[#allocation9 + $0x50] sm:$0xf]
        %v3955 = vld [vmem:[#allocation9 + $0x54] sm:$0xf]
        %v3956 = vld [vmem:[#allocation9 + $0x58] sm:$0xf]
        %v3957 = vld [vmem:[#allocation9 + $0x5c] sm:$0xf]
        %v3958 = vld [vmem:[#allocation9 + $0x60] sm:$0xf]
        %v3959 = vld [vmem:[#allocation9 + $0x64] sm:$0xf]
        %v3960 = vld [vmem:[#allocation9 + $0x68] sm:$0xf]
        %v3961 = vld [vmem:[#allocation9 + $0x6c] sm:$0xf]
        %v3962 = vld [vmem:[#allocation9 + $0x70] sm:$0xf]
        %v3963 = vld [vmem:[#allocation9 + $0x74] sm:$0xf]
        %v3964 = vld [vmem:[#allocation9 + $0x78] sm:$0xf]
        %v3965 = vld [vmem:[#allocation9 + $0x7c] sm:$0xf]
        %v3966 = vld [vmem:[#allocation9 + $0x80] sm:$0xf]
        %v3967 = vld [vmem:[#allocation9 + $0x84] sm:$0xf]
        %v3968 = vld [vmem:[#allocation9 + $0x88] sm:$0xf]
        %v3969 = vld [vmem:[#allocation9 + $0x8c] sm:$0xf]
        %v3970 = vld [vmem:[#allocation9 + $0x90] sm:$0xf]
        %v3971 = vld [vmem:[#allocation9 + $0x94] sm:$0xf]
        %v3972 = vld [vmem:[#allocation9 + $0x98] sm:$0xf]
        %v3973 = vld [vmem:[#allocation9 + $0x9c] sm:$0xf]
        %v3974 = vld [vmem:[#allocation9 + $0xa0] sm:$0xf]
        %v3975 = vld [vmem:[#allocation9 + $0xa4] sm:$0xf]
        %v3976 = vld [vmem:[#allocation9 + $0xa8] sm:$0xf]
        %v3977 = vld [vmem:[#allocation9 + $0xac] sm:$0xf]
        %v3978 = vld [vmem:[#allocation9 + $0xb0] sm:$0xf]
        %v3979 = vld [vmem:[#allocation9 + $0xb4] sm:$0xf]
        %v3980 = vld [vmem:[#allocation9 + $0xb8] sm:$0xf]
        %v3981 = vld [vmem:[#allocation9 + $0xbc] sm:$0xf]
        %v3982 = vld [vmem:[#allocation9 + $0xc0] sm:$0xf]
        %v3983 = vld [vmem:[#allocation9 + $0xc4] sm:$0xf]
        %v3984 = vld [vmem:[#allocation9 + $0xc8] sm:$0xf]
        %v3985 = vld [vmem:[#allocation9 + $0xcc] sm:$0xf]
        %v3986 = vld [vmem:[#allocation9 + $0xd0] sm:$0xf]
        %v3987 = vld [vmem:[#allocation9 + $0xd4] sm:$0xf]
        %v3988 = vld [vmem:[#allocation9 + $0xd8] sm:$0xf]
        %v3989 = vld [vmem:[#allocation9 + $0xdc] sm:$0xf]
        %v3990 = vld [vmem:[#allocation9 + $0xe0] sm:$0xf]
        %v3991 = vld [vmem:[#allocation9 + $0xe4] sm:$0xf]
        %v3992 = vld [vmem:[#allocation9 + $0xe8] sm:$0xf]
        %v3993 = vld [vmem:[#allocation9 + $0xec] sm:$0xf]
        %v3994 = vld [vmem:[#allocation9 + $0xf0] sm:$0xf]
        %v3995 = vld [vmem:[#allocation9 + $0xf4] sm:$0xf]
        %v3996 = vld [vmem:[#allocation9 + $0xf8] sm:$0xf]
        %v3997 = vld [vmem:[#allocation9 + $0xfc] sm:$0xf]
        %v3998 = vld [vmem:[#allocation9 + $0x100] sm:$0xf]
        %v3999 = vld [vmem:[#allocation9 + $0x104] sm:$0xf]
        %v4000 = vld [vmem:[#allocation9 + $0x108] sm:$0xf]
        %v4001 = vld [vmem:[#allocation9 + $0x10c] sm:$0xf]
        %v4002 = vld [vmem:[#allocation9 + $0x110] sm:$0xf]
        %v4003 = vld [vmem:[#allocation9 + $0x114] sm:$0xf]
        %v4004 = vld [vmem:[#allocation9 + $0x118] sm:$0xf]
        %v4005 = vld [vmem:[#allocation9 + $0x11c] sm:$0xf]
        %v4006 = vld [vmem:[#allocation9 + $0x120] sm:$0xf]
        %v4007 = vld [vmem:[#allocation9 + $0x124] sm:$0xf]
        %v4008 = vld [vmem:[#allocation9 + $0x128] sm:$0xf]
        %v4009 = vld [vmem:[#allocation9 + $0x12c] sm:$0xf]
        %v4010 = vld [vmem:[#allocation9 + $0x130] sm:$0xf]
        %v4011 = vld [vmem:[#allocation9 + $0x134] sm:$0xf]
        %v4012 = vld [vmem:[#allocation9 + $0x138] sm:$0xf]
        %v4013 = vld [vmem:[#allocation9 + $0x13c] sm:$0xf]
        %v4014 = vld [vmem:[#allocation9 + $0x140] sm:$0xf]
        %v4015 = vld [vmem:[#allocation9 + $0x144] sm:$0xf]
        %v4016 = vld [vmem:[#allocation9 + $0x148] sm:$0xf]
        %v4017 = vld [vmem:[#allocation9 + $0x14c] sm:$0xf]
        %v4018 = vld [vmem:[#allocation9 + $0x150] sm:$0xf]
        %v4019 = vld [vmem:[#allocation9 + $0x154] sm:$0xf]
        %v4020 = vld [vmem:[#allocation9 + $0x158] sm:$0xf]
        %v4021 = vld [vmem:[#allocation9 + $0x15c] sm:$0xf]
        %v4022 = vld [vmem:[#allocation9 + $0x160] sm:$0xf]
        %v4023 = vld [vmem:[#allocation9 + $0x164] sm:$0xf]
        %v4024 = vld [vmem:[#allocation9 + $0x168] sm:$0xf]
        %v4025 = vld [vmem:[#allocation9 + $0x16c] sm:$0xf]
        %v4026 = vld [vmem:[#allocation9 + $0x170] sm:$0xf]
        %v4027 = vld [vmem:[#allocation9 + $0x174] sm:$0xf]
        %v4028 = vld [vmem:[#allocation9 + $0x178] sm:$0xf]
        %v4029 = vld [vmem:[#allocation9 + $0x17c] sm:$0xf]
        %v4030 = vld [vmem:[#allocation9 + $0x180] sm:$0xf]
        %v4031 = vld [vmem:[#allocation9 + $0x184] sm:$0xf]
        %v4032 = vld [vmem:[#allocation9 + $0x188] sm:$0xf]
        %v4033 = vld [vmem:[#allocation9 + $0x18c] sm:$0xf]
        %v4034 = vld [vmem:[#allocation9 + $0x190] sm:$0xf]
        %v4035 = vld [vmem:[#allocation9 + $0x194] sm:$0xf]
        %v4036 = vld [vmem:[#allocation9 + $0x198] sm:$0xf]
        %v4037 = vld [vmem:[#allocation9 + $0x19c] sm:$0xf]
        %v4038 = vld [vmem:[#allocation9 + $0x1a0] sm:$0xf]
        %v4039 = vld [vmem:[#allocation9 + $0x1a4] sm:$0xf]
        %v4040 = vld [vmem:[#allocation9 + $0x1a8] sm:$0xf]
        %v4041 = vld [vmem:[#allocation9 + $0x1ac] sm:$0xf]
        %v4042 = vld [vmem:[#allocation9 + $0x1b0] sm:$0xf]
        %v4043 = vld [vmem:[#allocation9 + $0x1b4] sm:$0xf]
        %v4044 = vld [vmem:[#allocation9 + $0x1b8] sm:$0xf]
        %v4045 = vld [vmem:[#allocation9 + $0x1bc] sm:$0xf]
        %v4046 = vld [vmem:[#allocation9 + $0x1c0] sm:$0xf]
        %v4047 = vld [vmem:[#allocation9 + $0x1c4] sm:$0xf]
        %v4048 = vld [vmem:[#allocation9 + $0x1c8] sm:$0xf]
        %v4049 = vld [vmem:[#allocation9 + $0x1cc] sm:$0xf]
        %v4050 = vld [vmem:[#allocation9 + $0x1d0] sm:$0xf]
        %v4051 = vld [vmem:[#allocation9 + $0x1d4] sm:$0xf]
        %v4052 = vld [vmem:[#allocation9 + $0x1d8] sm:$0xf]
        %v4053 = vld [vmem:[#allocation9 + $0x1dc] sm:$0xf]
        %v4054 = vld [vmem:[#allocation9 + $0x1e0] sm:$0xf]
        %v4055 = vld [vmem:[#allocation9 + $0x1e4] sm:$0xf]
        %v4056 = vld [vmem:[#allocation9 + $0x1e8] sm:$0xf]
        %v4057 = vld [vmem:[#allocation9 + $0x1ec] sm:$0xf]
        %v4058 = vld [vmem:[#allocation9 + $0x1f0] sm:$0xf]
        %v4059 = vld [vmem:[#allocation9 + $0x1f4] sm:$0xf]
        %v4060 = vld [vmem:[#allocation9 + $0x1f8] sm:$0xf]
        %v4061 = vld [vmem:[#allocation9 + $0x1fc] sm:$0xf]
        %v4062 = vld [vmem:[#allocation9 + $0x200] sm:$0xf]
        %v4063 = vld [vmem:[#allocation9 + $0x204] sm:$0xf]
        %v4064 = vld [vmem:[#allocation9 + $0x208] sm:$0xf]
        %v4065 = vld [vmem:[#allocation9 + $0x20c] sm:$0xf]
        %v4066 = vld [vmem:[#allocation9 + $0x210] sm:$0xf]
        %v4067 = vld [vmem:[#allocation9 + $0x214] sm:$0xf]
        %v4068 = vld [vmem:[#allocation9 + $0x218] sm:$0xf]
        %v4069 = vld [vmem:[#allocation9 + $0x21c] sm:$0xf]
        %v4070 = vld [vmem:[#allocation9 + $0x220] sm:$0xf]
        %v4071 = vld [vmem:[#allocation9 + $0x224] sm:$0xf]
        %v4072 = vld [vmem:[#allocation9 + $0x228] sm:$0xf]
        %v4073 = vld [vmem:[#allocation9 + $0x22c] sm:$0xf]
        %v4074 = vld [vmem:[#allocation9 + $0x230] sm:$0xf]
        %v4075 = vld [vmem:[#allocation9 + $0x234] sm:$0xf]
        %v4076 = vld [vmem:[#allocation9 + $0x238] sm:$0xf]
        %v4077 = vld [vmem:[#allocation9 + $0x23c] sm:$0xf]
        %v4078 = vld [vmem:[#allocation13] sm:$0x1]
        %v4080 = vlaneseq
        %v4081 = vshrl.u32 %v4080, 7
        %v4082 = vsub.s32 0, %v4081
        %v4083 = vrot.slane %v4078, %v4082
        %v4229 = vunpack.c.l.b16 %v3934
        %v4230 = vunpack.c.l.b16 %v3935
        %v4231 = vunpack.c.l.b16 %v3936
        %v4232 = vunpack.c.l.b16 %v3937
        %v4233 = vunpack.c.l.b16 %v3938
        %v4234 = vunpack.c.l.b16 %v3939
        %v4235 = vunpack.c.l.b16 %v3940
        %v4236 = vunpack.c.l.b16 %v3941
        %v4237 = vunpack.c.l.b16 %v3942
        %v4238 = vunpack.c.l.b16 %v3943
        %v4239 = vunpack.c.l.b16 %v3944
        %v4240 = vunpack.c.l.b16 %v3945
        %v4241 = vunpack.c.l.b16 %v3946
        %v4242 = vunpack.c.l.b16 %v3947
        %v4243 = vunpack.c.l.b16 %v3948
        %v4244 = vunpack.c.l.b16 %v3949
        %v4245 = vunpack.c.l.b16 %v3950
        %v4246 = vunpack.c.l.b16 %v3951
        %v4247 = vunpack.c.l.b16 %v3952
        %v4248 = vunpack.c.l.b16 %v3953
        %v4249 = vunpack.c.l.b16 %v3954
        %v4250 = vunpack.c.l.b16 %v3955
        %v4251 = vunpack.c.l.b16 %v3956
        %v4252 = vunpack.c.l.b16 %v3957
        %v4253 = vunpack.c.l.b16 %v3958
        %v4254 = vunpack.c.l.b16 %v3959
        %v4255 = vunpack.c.l.b16 %v3960
        %v4256 = vunpack.c.l.b16 %v3961
        %v4257 = vunpack.c.l.b16 %v3962
        %v4258 = vunpack.c.l.b16 %v3963
        %v4259 = vunpack.c.l.b16 %v3964
        %v4260 = vunpack.c.l.b16 %v3965
        %v4261 = vunpack.c.l.b16 %v3966
        %v4262 = vunpack.c.l.b16 %v3967
        %v4263 = vunpack.c.l.b16 %v3968
        %v4264 = vunpack.c.l.b16 %v3969
        %v4265 = vunpack.c.l.b16 %v3970
        %v4266 = vunpack.c.l.b16 %v3971
        %v4267 = vunpack.c.l.b16 %v3972
        %v4268 = vunpack.c.l.b16 %v3973
        %v4269 = vunpack.c.l.b16 %v3974
        %v4270 = vunpack.c.l.b16 %v3975
        %v4271 = vunpack.c.l.b16 %v3976
        %v4272 = vunpack.c.l.b16 %v3977
        %v4273 = vunpack.c.l.b16 %v3978
        %v4274 = vunpack.c.l.b16 %v3979
        %v4275 = vunpack.c.l.b16 %v3980
        %v4276 = vunpack.c.l.b16 %v3981
        %v4277 = vunpack.c.l.b16 %v3982
        %v4278 = vunpack.c.l.b16 %v3983
        %v4279 = vunpack.c.l.b16 %v3984
        %v4280 = vunpack.c.l.b16 %v3985
        %v4281 = vunpack.c.l.b16 %v3986
        %v4282 = vunpack.c.l.b16 %v3987
        %v4283 = vunpack.c.l.b16 %v3988
        %v4284 = vunpack.c.l.b16 %v3989
        %v4285 = vunpack.c.l.b16 %v3990
        %v4286 = vunpack.c.l.b16 %v3991
        %v4287 = vunpack.c.l.b16 %v3992
        %v4288 = vunpack.c.l.b16 %v3993
        %v4289 = vunpack.c.l.b16 %v3994
        %v4290 = vunpack.c.l.b16 %v3995
        %v4291 = vunpack.c.l.b16 %v3996
        %v4292 = vunpack.c.l.b16 %v3997
        %v4293 = vunpack.c.l.b16 %v3998
        %v4294 = vunpack.c.l.b16 %v3999
        %v4295 = vunpack.c.l.b16 %v4000
        %v4296 = vunpack.c.l.b16 %v4001
        %v4297 = vunpack.c.l.b16 %v4002
        %v4298 = vunpack.c.l.b16 %v4003
        %v4299 = vunpack.c.l.b16 %v4004
        %v4300 = vunpack.c.l.b16 %v4005
        %v4301 = vunpack.c.l.b16 %v4006
        %v4302 = vunpack.c.l.b16 %v4007
        %v4303 = vunpack.c.l.b16 %v4008
        %v4304 = vunpack.c.l.b16 %v4009
        %v4305 = vunpack.c.l.b16 %v4010
        %v4306 = vunpack.c.l.b16 %v4011
        %v4307 = vunpack.c.l.b16 %v4012
        %v4308 = vunpack.c.l.b16 %v4013
        %v4309 = vunpack.c.l.b16 %v4014
        %v4310 = vunpack.c.l.b16 %v4015
        %v4311 = vunpack.c.l.b16 %v4016
        %v4312 = vunpack.c.l.b16 %v4017
        %v4313 = vunpack.c.l.b16 %v4018
        %v4314 = vunpack.c.l.b16 %v4019
        %v4315 = vunpack.c.l.b16 %v4020
        %v4316 = vunpack.c.l.b16 %v4021
        %v4317 = vunpack.c.l.b16 %v4022
        %v4318 = vunpack.c.l.b16 %v4023
        %v4319 = vunpack.c.l.b16 %v4024
        %v4320 = vunpack.c.l.b16 %v4025
        %v4321 = vunpack.c.l.b16 %v4026
        %v4322 = vunpack.c.l.b16 %v4027
        %v4323 = vunpack.c.l.b16 %v4028
        %v4324 = vunpack.c.l.b16 %v4029
        %v4325 = vunpack.c.l.b16 %v4030
        %v4326 = vunpack.c.l.b16 %v4031
        %v4327 = vunpack.c.l.b16 %v4032
        %v4328 = vunpack.c.l.b16 %v4033
        %v4329 = vunpack.c.l.b16 %v4034
        %v4330 = vunpack.c.l.b16 %v4035
        %v4331 = vunpack.c.l.b16 %v4036
        %v4332 = vunpack.c.l.b16 %v4037
        %v4333 = vunpack.c.l.b16 %v4038
        %v4334 = vunpack.c.l.b16 %v4039
        %v4335 = vunpack.c.l.b16 %v4040
        %v4336 = vunpack.c.l.b16 %v4041
        %v4337 = vunpack.c.l.b16 %v4042
        %v4338 = vunpack.c.l.b16 %v4043
        %v4339 = vunpack.c.l.b16 %v4044
        %v4340 = vunpack.c.l.b16 %v4045
        %v4341 = vunpack.c.l.b16 %v4046
        %v4342 = vunpack.c.l.b16 %v4047
        %v4343 = vunpack.c.l.b16 %v4048
        %v4344 = vunpack.c.l.b16 %v4049
        %v4345 = vunpack.c.l.b16 %v4050
        %v4346 = vunpack.c.l.b16 %v4051
        %v4347 = vunpack.c.l.b16 %v4052
        %v4348 = vunpack.c.l.b16 %v4053
        %v4349 = vunpack.c.l.b16 %v4054
        %v4350 = vunpack.c.l.b16 %v4055
        %v4351 = vunpack.c.l.b16 %v4056
        %v4352 = vunpack.c.l.b16 %v4057
        %v4353 = vunpack.c.l.b16 %v4058
        %v4354 = vunpack.c.l.b16 %v4059
        %v4355 = vunpack.c.l.b16 %v4060
        %v4356 = vunpack.c.l.b16 %v4061
        %v4357 = vunpack.c.l.b16 %v4062
        %v4358 = vunpack.c.l.b16 %v4063
        %v4359 = vunpack.c.l.b16 %v4064
        %v4360 = vunpack.c.l.b16 %v4065
        %v4361 = vunpack.c.l.b16 %v4066
        %v4362 = vunpack.c.l.b16 %v4067
        %v4363 = vunpack.c.l.b16 %v4068
        %v4364 = vunpack.c.l.b16 %v4069
        %v4365 = vunpack.c.l.b16 %v4070
        %v4366 = vunpack.c.l.b16 %v4071
        %v4367 = vunpack.c.l.b16 %v4072
        %v4368 = vunpack.c.l.b16 %v4073
        %v4369 = vunpack.c.l.b16 %v4074
        %v4370 = vunpack.c.l.b16 %v4075
        %v4371 = vunpack.c.l.b16 %v4076
        %v4372 = vunpack.c.l.b16 %v4077
        %v4373 = vpack.c.b16 %v4230, %v4229
        %v4374 = vpack.c.b16 %v4232, %v4231
        %v4375 = vpack.c.b16 %v4234, %v4233
        %v4376 = vpack.c.b16 %v4236, %v4235
        %v4377 = vpack.c.b16 %v4238, %v4237
        %v4378 = vpack.c.b16 %v4240, %v4239
        %v4379 = vpack.c.b16 %v4242, %v4241
        %v4380 = vpack.c.b16 %v4244, %v4243
        %v4381 = vpack.c.b16 %v4246, %v4245
        %v4382 = vpack.c.b16 %v4248, %v4247
        %v4383 = vpack.c.b16 %v4250, %v4249
        %v4384 = vpack.c.b16 %v4252, %v4251
        %v4385 = vpack.c.b16 %v4254, %v4253
        %v4386 = vpack.c.b16 %v4256, %v4255
        %v4387 = vpack.c.b16 %v4258, %v4257
        %v4388 = vpack.c.b16 %v4260, %v4259
        %v4389 = vpack.c.b16 %v4262, %v4261
        %v4390 = vpack.c.b16 %v4264, %v4263
        %v4391 = vpack.c.b16 %v4266, %v4265
        %v4392 = vpack.c.b16 %v4268, %v4267
        %v4393 = vpack.c.b16 %v4270, %v4269
        %v4394 = vpack.c.b16 %v4272, %v4271
        %v4395 = vpack.c.b16 %v4274, %v4273
        %v4396 = vpack.c.b16 %v4276, %v4275
        %v4397 = vpack.c.b16 %v4278, %v4277
        %v4398 = vpack.c.b16 %v4280, %v4279
        %v4399 = vpack.c.b16 %v4282, %v4281
        %v4400 = vpack.c.b16 %v4284, %v4283
        %v4401 = vpack.c.b16 %v4286, %v4285
        %v4402 = vpack.c.b16 %v4288, %v4287
        %v4403 = vpack.c.b16 %v4290, %v4289
        %v4404 = vpack.c.b16 %v4292, %v4291
        %v4405 = vpack.c.b16 %v4294, %v4293
        %v4406 = vpack.c.b16 %v4296, %v4295
        %v4407 = vpack.c.b16 %v4298, %v4297
        %v4408 = vpack.c.b16 %v4300, %v4299
        %v4409 = vpack.c.b16 %v4302, %v4301
        %v4410 = vpack.c.b16 %v4304, %v4303
        %v4411 = vpack.c.b16 %v4306, %v4305
        %v4412 = vpack.c.b16 %v4308, %v4307
        %v4413 = vpack.c.b16 %v4310, %v4309
        %v4414 = vpack.c.b16 %v4312, %v4311
        %v4415 = vpack.c.b16 %v4314, %v4313
        %v4416 = vpack.c.b16 %v4316, %v4315
        %v4417 = vpack.c.b16 %v4318, %v4317
        %v4418 = vpack.c.b16 %v4320, %v4319
        %v4419 = vpack.c.b16 %v4322, %v4321
        %v4420 = vpack.c.b16 %v4324, %v4323
        %v4421 = vpack.c.b16 %v4326, %v4325
        %v4422 = vpack.c.b16 %v4328, %v4327
        %v4423 = vpack.c.b16 %v4330, %v4329
        %v4424 = vpack.c.b16 %v4332, %v4331
        %v4425 = vpack.c.b16 %v4334, %v4333
        %v4426 = vpack.c.b16 %v4336, %v4335
        %v4427 = vpack.c.b16 %v4338, %v4337
        %v4428 = vpack.c.b16 %v4340, %v4339
        %v4429 = vpack.c.b16 %v4342, %v4341
        %v4430 = vpack.c.b16 %v4344, %v4343
        %v4431 = vpack.c.b16 %v4346, %v4345
        %v4432 = vpack.c.b16 %v4348, %v4347
        %v4433 = vpack.c.b16 %v4350, %v4349
        %v4434 = vpack.c.b16 %v4352, %v4351
        %v4435 = vpack.c.b16 %v4354, %v4353
        %v4436 = vpack.c.b16 %v4356, %v4355
        %v4437 = vpack.c.b16 %v4358, %v4357
        %v4438 = vpack.c.b16 %v4360, %v4359
        %v4439 = vpack.c.b16 %v4362, %v4361
        %v4440 = vpack.c.b16 %v4364, %v4363
        %v4441 = vpack.c.b16 %v4366, %v4365
        %v4442 = vpack.c.b16 %v4368, %v4367
        %v4443 = vpack.c.b16 %v4370, %v4369
        %v4444 = vpack.c.b16 %v4372, %v4371
        %4517 = vmatprep.subr.bf16.mxu0 0
        %4518 = vmatpush1.bf16.msra.mxu0 %v4373
        %4519 = vmatprep.subr.bf16.mxu0 0
        %4520 = vmatpush1.bf16.msra.mxu0 %v4374
        %4521 = vmatprep.subr.bf16.mxu0 0
        %4522 = vmatpush1.bf16.msra.mxu0 %v4375
        %4523 = vmatprep.subr.bf16.mxu0 0
        %4524 = vmatpush1.bf16.msra.mxu0 %v4376
        %4525 = vmatprep.subr.bf16.mxu0 0
        %4526 = vmatpush1.bf16.msra.mxu0 %v4377
        %4527 = vmatprep.subr.bf16.mxu0 0
        %4528 = vmatpush1.bf16.msra.mxu0 %v4378
        %4529 = vmatprep.subr.bf16.mxu0 0
        %4530 = vmatpush1.bf16.msra.mxu0 %v4379
        %4531 = vmatprep.subr.bf16.mxu0 0
        %4532 = vmatpush1.bf16.msra.mxu0 %v4380
        %4533 = vmatprep.subr.bf16.mxu0 0
        %4534 = vmatpush1.bf16.msra.mxu0 %v4381
        %4535 = vmatprep.subr.bf16.mxu0 0
        %4536 = vmatpush1.bf16.msra.mxu0 %v4382
        %4537 = vmatprep.subr.bf16.mxu0 0
        %4538 = vmatpush1.bf16.msra.mxu0 %v4383
        %4539 = vmatprep.subr.bf16.mxu0 0
        %4540 = vmatpush1.bf16.msra.mxu0 %v4384
        %4541 = vmatprep.subr.bf16.mxu0 0
        %4542 = vmatpush1.bf16.msra.mxu0 %v4385
        %4543 = vmatprep.subr.bf16.mxu0 0
        %4544 = vmatpush1.bf16.msra.mxu0 %v4386
        %4545 = vmatprep.subr.bf16.mxu0 0
        %4546 = vmatpush1.bf16.msra.mxu0 %v4387
        %4547 = vmatprep.subr.bf16.mxu0 0
        %4548 = vmatpush1.bf16.msra.mxu0 %v4388
        %4549 = vmatprep.mubr.bf16.mxu0 %v3791
        %4550 = vmatmul.mubr.bf16.gmra.mrb[0].mxu0 %v3790
        %v4551 = vpop.f32.mrb[0].mxu0
        %v4552 = vadd.f32 %v4083, %v4551
        %v4553 = vpop.f32.mrb[0].mxu0
        %v4554 = vpop.f32.mrb[0].mxu0
        %v4555 = vadd.f32 %v4083, %v4554
        %v4556 = vpop.f32.mrb[0].mxu0
        %4557 = vmatprep.mubr.bf16.mxu0 %v3800
        %4558 = vmatmul.mubr.bf16.gmra.mrb[0].mxu0 %v3799
        %v4559 = vpop.f32.mrb[0].mxu0
        %v4560 = vadd.f32 %v4083, %v4559
        %v4561 = vpop.f32.mrb[0].mxu0
        %v4562 = vpop.f32.mrb[0].mxu0
        %v4563 = vadd.f32 %v4083, %v4562
        %v4564 = vpop.f32.mrb[0].mxu0
        %4565 = vmatprep.mubr.bf16.mxu0 %v3809
        %4566 = vmatmul.mubr.bf16.gmra.mrb[0].mxu0 %v3808
        %v4567 = vpop.f32.mrb[0].mxu0
        %v4568 = vadd.f32 %v4083, %v4567
        %v4569 = vpop.f32.mrb[0].mxu0
        %v4570 = vpop.f32.mrb[0].mxu0
        %v4571 = vadd.f32 %v4083, %v4570
        %v4572 = vpop.f32.mrb[0].mxu0
        %4573 = vmatprep.mubr.bf16.mxu0 %v3818
        %4574 = vmatmul.mubr.bf16.gmra.mrb[0].mxu0 %v3817
        %v4575 = vpop.f32.mrb[0].mxu0
        %v4576 = vadd.f32 %v4083, %v4575
        %v4577 = vpop.f32.mrb[0].mxu0
        %v4578 = vpop.f32.mrb[0].mxu0
        %v4579 = vadd.f32 %v4083, %v4578
        %v4580 = vpop.f32.mrb[0].mxu0
        %4581 = vmatprep.mubr.bf16.mxu0 %v3827
        %4582 = vmatmul.mubr.bf16.gmra.mrb[0].mxu0 %v3826
        %v4583 = vpop.f32.mrb[0].mxu0
        %v4584 = vadd.f32 %v4083, %v4583
        %v4585 = vpop.f32.mrb[0].mxu0
        %v4586 = vpop.f32.mrb[0].mxu0
        %v4587 = vadd.f32 %v4083, %v4586
        %v4588 = vpop.f32.mrb[0].mxu0
        %4589 = vmatprep.mubr.bf16.mxu0 %v3836
        %4590 = vmatmul.mubr.bf16.gmra.mrb[0].mxu0 %v3835
        %v4591 = vpop.f32.mrb[0].mxu0
        %v4592 = vadd.f32 %v4083, %v4591
        %v4593 = vpop.f32.mrb[0].mxu0
        %v4594 = vpop.f32.mrb[0].mxu0
        %v4595 = vadd.f32 %v4083, %v4594
        %v4596 = vpop.f32.mrb[0].mxu0
        %4597 = vmatprep.mubr.bf16.mxu0 %v3845
        %4598 = vmatmul.mubr.bf16.gmra.mrb[0].mxu0 %v3844
        %v4599 = vpop.f32.mrb[0].mxu0
        %v4600 = vadd.f32 %v4083, %v4599
        %v4601 = vpop.f32.mrb[0].mxu0
        %v4602 = vpop.f32.mrb[0].mxu0
        %v4603 = vadd.f32 %v4083, %v4602
        %v4604 = vpop.f32.mrb[0].mxu0
        %4605 = vmatprep.mubr.bf16.mxu0 %v3854
        %4606 = vmatmul.mubr.bf16.gmra.mrb[0].mxu0 %v3853
        %v4607 = vpop.f32.mrb[0].mxu0
        %v4608 = vadd.f32 %v4083, %v4607
        %v4609 = vpop.f32.mrb[0].mxu0
        %v4610 = vpop.f32.mrb[0].mxu0
        %v4611 = vadd.f32 %v4083, %v4610
        %v4612 = vpop.f32.mrb[0].mxu0
        %4613 = vmatprep.mubr.bf16.mxu0 %v3863
        %4614 = vmatmul.mubr.bf16.gmra.mrb[0].mxu0 %v3862
        %v4615 = vpop.f32.mrb[0].mxu0
        %v4616 = vadd.f32 %v4083, %v4615
        %v4617 = vpop.f32.mrb[0].mxu0
        %v4618 = vpop.f32.mrb[0].mxu0
        %v4619 = vadd.f32 %v4083, %v4618
        %v4620 = vpop.f32.mrb[0].mxu0
        %4621 = vmatprep.mubr.bf16.mxu0 %v3872
        %4622 = vmatmul.mubr.bf16.gmra.mrb[0].mxu0 %v3871
        %v4623 = vpop.f32.mrb[0].mxu0
        %v4624 = vadd.f32 %v4083, %v4623
        %v4625 = vpop.f32.mrb[0].mxu0
        %v4626 = vpop.f32.mrb[0].mxu0
        %v4627 = vadd.f32 %v4083, %v4626
        %v4628 = vpop.f32.mrb[0].mxu0
        %4629 = vmatprep.mubr.bf16.mxu0 %v3881
        %4630 = vmatmul.mubr.bf16.gmra.mrb[0].mxu0 %v3880
        %v4631 = vpop.f32.mrb[0].mxu0
        %v4632 = vadd.f32 %v4083, %v4631
        %v4633 = vpop.f32.mrb[0].mxu0
        %v4634 = vpop.f32.mrb[0].mxu0
        %v4635 = vadd.f32 %v4083, %v4634
        %v4636 = vpop.f32.mrb[0].mxu0
        %4637 = vmatprep.mubr.bf16.mxu0 %v3890
        %4638 = vmatmul.mubr.bf16.gmra.mrb[0].mxu0 %v3889
        %v4639 = vpop.f32.mrb[0].mxu0
        %v4640 = vadd.f32 %v4083, %v4639
        %v4641 = vpop.f32.mrb[0].mxu0
        %v4642 = vpop.f32.mrb[0].mxu0
        %v4643 = vadd.f32 %v4083, %v4642
        %v4644 = vpop.f32.mrb[0].mxu0
        %4645 = vmatprep.mubr.bf16.mxu0 %v3899
        %4646 = vmatmul.mubr.bf16.gmra.mrb[0].mxu0 %v3898
        %v4647 = vpop.f32.mrb[0].mxu0
        %v4648 = vadd.f32 %v4083, %v4647
        %v4649 = vpop.f32.mrb[0].mxu0
        %v4650 = vpop.f32.mrb[0].mxu0
        %v4651 = vadd.f32 %v4083, %v4650
        %v4652 = vpop.f32.mrb[0].mxu0
        %4653 = vmatprep.mubr.bf16.mxu0 %v3908
        %4654 = vmatmul.mubr.bf16.gmra.mrb[0].mxu0 %v3907
        %v4655 = vpop.f32.mrb[0].mxu0
        %v4656 = vadd.f32 %v4083, %v4655
        %v4657 = vpop.f32.mrb[0].mxu0
        %v4658 = vpop.f32.mrb[0].mxu0
        %v4659 = vadd.f32 %v4083, %v4658
        %v4660 = vpop.f32.mrb[0].mxu0
        %4661 = vmatprep.mubr.bf16.mxu0 %v3917
        %4662 = vmatmul.mubr.bf16.gmra.mrb[0].mxu0 %v3916
        %v4663 = vpop.f32.mrb[0].mxu0
        %v4664 = vadd.f32 %v4083, %v4663
        %v4665 = vpop.f32.mrb[0].mxu0
        %v4666 = vpop.f32.mrb[0].mxu0
        %v4667 = vadd.f32 %v4083, %v4666
        %v4668 = vpop.f32.mrb[0].mxu0
        %4669 = vmatprep.mubr.bf16.mxu0 %v3926
        %4670 = vmatmul.mubr.bf16.gmra.mrb[0].mxu0 %v3925
        %v4671 = vpop.f32.mrb[0].mxu0
        %v4672 = vadd.f32 %v4083, %v4671
        %v4673 = vpop.f32.mrb[0].mxu0
        %v4674 = vpop.f32.mrb[0].mxu0
        %v4675 = vadd.f32 %v4083, %v4674
        %v4676 = vpop.f32.mrb[0].mxu0
        %4677 = vdwg.mxu0
        %4678 = vmatprep.subr.bf16.mxu0 0
        %4679 = vmatpush1.bf16.msra.mxu0 %v4389
        %4680 = vmatprep.subr.bf16.mxu0 0
        %4681 = vmatpush1.bf16.msra.mxu0 %v4390
        %4682 = vmatprep.subr.bf16.mxu0 0
        %4683 = vmatpush1.bf16.msra.mxu0 %v4391
        %4684 = vmatprep.subr.bf16.mxu0 0
        %4685 = vmatpush1.bf16.msra.mxu0 %v4392
        %4686 = vmatprep.subr.bf16.mxu0 0
        %4687 = vmatpush1.bf16.msra.mxu0 %v4393
        %4688 = vmatprep.subr.bf16.mxu0 0
        %4689 = vmatpush1.bf16.msra.mxu0 %v4394
        %4690 = vmatprep.subr.bf16.mxu0 0
        %4691 = vmatpush1.bf16.msra.mxu0 %v4395
        %4692 = vmatprep.subr.bf16.mxu0 0
        %4693 = vmatpush1.bf16.msra.mxu0 %v4396
        %4694 = vmatprep.subr.bf16.mxu0 0
        %4695 = vmatpush1.bf16.msra.mxu0 %v4397
        %4696 = vmatprep.subr.bf16.mxu0 0
        %4697 = vmatpush1.bf16.msra.mxu0 %v4398
        %4698 = vmatprep.subr.bf16.mxu0 0
        %4699 = vmatpush1.bf16.msra.mxu0 %v4399
        %4700 = vmatprep.subr.bf16.mxu0 0
        %4701 = vmatpush1.bf16.msra.mxu0 %v4400
        %4702 = vmatprep.subr.bf16.mxu0 0
        %4703 = vmatpush1.bf16.msra.mxu0 %v4401
        %4704 = vmatprep.subr.bf16.mxu0 0
        %4705 = vmatpush1.bf16.msra.mxu0 %v4402
        %4706 = vmatprep.subr.bf16.mxu0 0
        %4707 = vmatpush1.bf16.msra.mxu0 %v4403
        %4708 = vmatprep.subr.bf16.mxu0 0
        %4709 = vmatpush1.bf16.msra.mxu0 %v4404
        %4710 = vmatprep.mubr.bf16.mxu0 %v3793
        %4711 = vmatmul.mubr.bf16.gmra.mrb[0].mxu0 %v3792
        %v4712 = vpop.f32.mrb[0].mxu0
        %v4713 = vadd.f32 %v4552, %v4712
        %v4714 = vpop.f32.mrb[0].mxu0
        %v4715 = vpop.f32.mrb[0].mxu0
        %v4716 = vadd.f32 %v4555, %v4715
        %v4717 = vpop.f32.mrb[0].mxu0
        %4718 = vmatprep.mubr.bf16.mxu0 %v3802
        %4719 = vmatmul.mubr.bf16.gmra.mrb[0].mxu0 %v3801
        %v4720 = vpop.f32.mrb[0].mxu0
        %v4721 = vadd.f32 %v4560, %v4720
        %v4722 = vpop.f32.mrb[0].mxu0
        %v4723 = vpop.f32.mrb[0].mxu0
        %v4724 = vadd.f32 %v4563, %v4723
        %v4725 = vpop.f32.mrb[0].mxu0
        %4726 = vmatprep.mubr.bf16.mxu0 %v3811
        %4727 = vmatmul.mubr.bf16.gmra.mrb[0].mxu0 %v3810
        %v4728 = vpop.f32.mrb[0].mxu0
        %v4729 = vadd.f32 %v4568, %v4728
        %v4730 = vpop.f32.mrb[0].mxu0
        %v4731 = vpop.f32.mrb[0].mxu0
        %v4732 = vadd.f32 %v4571, %v4731
        %v4733 = vpop.f32.mrb[0].mxu0
        %4734 = vmatprep.mubr.bf16.mxu0 %v3820
        %4735 = vmatmul.mubr.bf16.gmra.mrb[0].mxu0 %v3819
        %v4736 = vpop.f32.mrb[0].mxu0
        %v4737 = vadd.f32 %v4576, %v4736
        %v4738 = vpop.f32.mrb[0].mxu0
        %v4739 = vpop.f32.mrb[0].mxu0
        %v4740 = vadd.f32 %v4579, %v4739
        %v4741 = vpop.f32.mrb[0].mxu0
        %4742 = vmatprep.mubr.bf16.mxu0 %v3829
        %4743 = vmatmul.mubr.bf16.gmra.mrb[0].mxu0 %v3828
        %v4744 = vpop.f32.mrb[0].mxu0
        %v4745 = vadd.f32 %v4584, %v4744
        %v4746 = vpop.f32.mrb[0].mxu0
        %v4747 = vpop.f32.mrb[0].mxu0
        %v4748 = vadd.f32 %v4587, %v4747
        %v4749 = vpop.f32.mrb[0].mxu0
        %4750 = vmatprep.mubr.bf16.mxu0 %v3838
        %4751 = vmatmul.mubr.bf16.gmra.mrb[0].mxu0 %v3837
        %v4752 = vpop.f32.mrb[0].mxu0
        %v4753 = vadd.f32 %v4592, %v4752
        %v4754 = vpop.f32.mrb[0].mxu0
        %v4755 = vpop.f32.mrb[0].mxu0
        %v4756 = vadd.f32 %v4595, %v4755
        %v4757 = vpop.f32.mrb[0].mxu0
        %4758 = vmatprep.mubr.bf16.mxu0 %v3847
        %4759 = vmatmul.mubr.bf16.gmra.mrb[0].mxu0 %v3846
        %v4760 = vpop.f32.mrb[0].mxu0
        %v4761 = vadd.f32 %v4600, %v4760
        %v4762 = vpop.f32.mrb[0].mxu0
        %v4763 = vpop.f32.mrb[0].mxu0
        %v4764 = vadd.f32 %v4603, %v4763
        %v4765 = vpop.f32.mrb[0].mxu0
        %4766 = vmatprep.mubr.bf16.mxu0 %v3856
        %4767 = vmatmul.mubr.bf16.gmra.mrb[0].mxu0 %v3855
        %v4768 = vpop.f32.mrb[0].mxu0
        %v4769 = vadd.f32 %v4608, %v4768
        %v4770 = vpop.f32.mrb[0].mxu0
        %v4771 = vpop.f32.mrb[0].mxu0
        %v4772 = vadd.f32 %v4611, %v4771
        %v4773 = vpop.f32.mrb[0].mxu0
        %4774 = vmatprep.mubr.bf16.mxu0 %v3865
        %4775 = vmatmul.mubr.bf16.gmra.mrb[0].mxu0 %v3864
        %v4776 = vpop.f32.mrb[0].mxu0
        %v4777 = vadd.f32 %v4616, %v4776
        %v4778 = vpop.f32.mrb[0].mxu0
        %v4779 = vpop.f32.mrb[0].mxu0
        %v4780 = vadd.f32 %v4619, %v4779
        %v4781 = vpop.f32.mrb[0].mxu0
        %4782 = vmatprep.mubr.bf16.mxu0 %v3874
        %4783 = vmatmul.mubr.bf16.gmra.mrb[0].mxu0 %v3873
        %v4784 = vpop.f32.mrb[0].mxu0
        %v4785 = vadd.f32 %v4624, %v4784
        %v4786 = vpop.f32.mrb[0].mxu0
        %v4787 = vpop.f32.mrb[0].mxu0
        %v4788 = vadd.f32 %v4627, %v4787
        %v4789 = vpop.f32.mrb[0].mxu0
        %4790 = vmatprep.mubr.bf16.mxu0 %v3883
        %4791 = vmatmul.mubr.bf16.gmra.mrb[0].mxu0 %v3882
        %v4792 = vpop.f32.mrb[0].mxu0
        %v4793 = vadd.f32 %v4632, %v4792
        %v4794 = vpop.f32.mrb[0].mxu0
        %v4795 = vpop.f32.mrb[0].mxu0
        %v4796 = vadd.f32 %v4635, %v4795
        %v4797 = vpop.f32.mrb[0].mxu0
        %4798 = vmatprep.mubr.bf16.mxu0 %v3892
        %4799 = vmatmul.mubr.bf16.gmra.mrb[0].mxu0 %v3891
        %v4800 = vpop.f32.mrb[0].mxu0
        %v4801 = vadd.f32 %v4640, %v4800
        %v4802 = vpop.f32.mrb[0].mxu0
        %v4803 = vpop.f32.mrb[0].mxu0
        %v4804 = vadd.f32 %v4643, %v4803
        %v4805 = vpop.f32.mrb[0].mxu0
        %4806 = vmatprep.mubr.bf16.mxu0 %v3901
        %4807 = vmatmul.mubr.bf16.gmra.mrb[0].mxu0 %v3900
        %v4808 = vpop.f32.mrb[0].mxu0
        %v4809 = vadd.f32 %v4648, %v4808
        %v4810 = vpop.f32.mrb[0].mxu0
        %v4811 = vpop.f32.mrb[0].mxu0
        %v4812 = vadd.f32 %v4651, %v4811
        %v4813 = vpop.f32.mrb[0].mxu0
        %4814 = vmatprep.mubr.bf16.mxu0 %v3910
        %4815 = vmatmul.mubr.bf16.gmra.mrb[0].mxu0 %v3909
        %v4816 = vpop.f32.mrb[0].mxu0
        %v4817 = vadd.f32 %v4656, %v4816
        %v4818 = vpop.f32.mrb[0].mxu0
        %v4819 = vpop.f32.mrb[0].mxu0
        %v4820 = vadd.f32 %v4659, %v4819
        %v4821 = vpop.f32.mrb[0].mxu0
        %4822 = vmatprep.mubr.bf16.mxu0 %v3919
        %4823 = vmatmul.mubr.bf16.gmra.mrb[0].mxu0 %v3918
        %v4824 = vpop.f32.mrb[0].mxu0
        %v4825 = vadd.f32 %v4664, %v4824
        %v4826 = vpop.f32.mrb[0].mxu0
        %v4827 = vpop.f32.mrb[0].mxu0
        %v4828 = vadd.f32 %v4667, %v4827
        %v4829 = vpop.f32.mrb[0].mxu0
        %4830 = vmatprep.mubr.bf16.mxu0 %v3928
        %4831 = vmatmul.mubr.bf16.gmra.mrb[0].mxu0 %v3927
        %v4832 = vpop.f32.mrb[0].mxu0
        %v4833 = vadd.f32 %v4672, %v4832
        %v4834 = vpop.f32.mrb[0].mxu0
        %v4835 = vpop.f32.mrb[0].mxu0
        %v4836 = vadd.f32 %v4675, %v4835
        %v4837 = vpop.f32.mrb[0].mxu0
        %4838 = vdwg.mxu0
        %4839 = vmatprep.subr.bf16.mxu0 0
        %4840 = vmatpush1.bf16.msra.mxu0 %v4405
        %4841 = vmatprep.subr.bf16.mxu0 0
        %4842 = vmatpush1.bf16.msra.mxu0 %v4406
        %4843 = vmatprep.subr.bf16.mxu0 0
        %4844 = vmatpush1.bf16.msra.mxu0 %v4407
        %4845 = vmatprep.subr.bf16.mxu0 0
        %4846 = vmatpush1.bf16.msra.mxu0 %v4408
        %4847 = vmatprep.subr.bf16.mxu0 0
        %4848 = vmatpush1.bf16.msra.mxu0 %v4409
        %4849 = vmatprep.subr.bf16.mxu0 0
        %4850 = vmatpush1.bf16.msra.mxu0 %v4410
        %4851 = vmatprep.subr.bf16.mxu0 0
        %4852 = vmatpush1.bf16.msra.mxu0 %v4411
        %4853 = vmatprep.subr.bf16.mxu0 0
        %4854 = vmatpush1.bf16.msra.mxu0 %v4412
        %4855 = vmatprep.subr.bf16.mxu0 0
        %4856 = vmatpush1.bf16.msra.mxu0 %v4413
        %4857 = vmatprep.subr.bf16.mxu0 0
        %4858 = vmatpush1.bf16.msra.mxu0 %v4414
        %4859 = vmatprep.subr.bf16.mxu0 0
        %4860 = vmatpush1.bf16.msra.mxu0 %v4415
        %4861 = vmatprep.subr.bf16.mxu0 0
        %4862 = vmatpush1.bf16.msra.mxu0 %v4416
        %4863 = vmatprep.subr.bf16.mxu0 0
        %4864 = vmatpush1.bf16.msra.mxu0 %v4417
        %4865 = vmatprep.subr.bf16.mxu0 0
        %4866 = vmatpush1.bf16.msra.mxu0 %v4418
        %4867 = vmatprep.subr.bf16.mxu0 0
        %4868 = vmatpush1.bf16.msra.mxu0 %v4419
        %4869 = vmatprep.subr.bf16.mxu0 0
        %4870 = vmatpush1.bf16.msra.mxu0 %v4420
        %4871 = vmatprep.mubr.bf16.mxu0 %v3795
        %4872 = vmatmul.mubr.bf16.gmra.mrb[0].mxu0 %v3794
        %v4873 = vpop.f32.mrb[0].mxu0
        %v4874 = vadd.f32 %v4713, %v4873
        %v4875 = vpop.f32.mrb[0].mxu0
        %v4876 = vpop.f32.mrb[0].mxu0
        %v4877 = vadd.f32 %v4716, %v4876
        %v4878 = vpop.f32.mrb[0].mxu0
        %4879 = vmatprep.mubr.bf16.mxu0 %v3804
        %4880 = vmatmul.mubr.bf16.gmra.mrb[0].mxu0 %v3803
        %v4881 = vpop.f32.mrb[0].mxu0
        %v4882 = vadd.f32 %v4721, %v4881
        %v4883 = vpop.f32.mrb[0].mxu0
        %v4884 = vpop.f32.mrb[0].mxu0
        %v4885 = vadd.f32 %v4724, %v4884
        %v4886 = vpop.f32.mrb[0].mxu0
        %4887 = vmatprep.mubr.bf16.mxu0 %v3813
        %4888 = vmatmul.mubr.bf16.gmra.mrb[0].mxu0 %v3812
        %v4889 = vpop.f32.mrb[0].mxu0
        %v4890 = vadd.f32 %v4729, %v4889
        %v4891 = vpop.f32.mrb[0].mxu0
        %v4892 = vpop.f32.mrb[0].mxu0
        %v4893 = vadd.f32 %v4732, %v4892
        %v4894 = vpop.f32.mrb[0].mxu0
        %4895 = vmatprep.mubr.bf16.mxu0 %v3822
        %4896 = vmatmul.mubr.bf16.gmra.mrb[0].mxu0 %v3821
        %v4897 = vpop.f32.mrb[0].mxu0
        %v4898 = vadd.f32 %v4737, %v4897
        %v4899 = vpop.f32.mrb[0].mxu0
        %v4900 = vpop.f32.mrb[0].mxu0
        %v4901 = vadd.f32 %v4740, %v4900
        %v4902 = vpop.f32.mrb[0].mxu0
        %4903 = vmatprep.mubr.bf16.mxu0 %v3831
        %4904 = vmatmul.mubr.bf16.gmra.mrb[0].mxu0 %v3830
        %v4905 = vpop.f32.mrb[0].mxu0
        %v4906 = vadd.f32 %v4745, %v4905
        %v4907 = vpop.f32.mrb[0].mxu0
        %v4908 = vpop.f32.mrb[0].mxu0
        %v4909 = vadd.f32 %v4748, %v4908
        %v4910 = vpop.f32.mrb[0].mxu0
        %4911 = vmatprep.mubr.bf16.mxu0 %v3840
        %4912 = vmatmul.mubr.bf16.gmra.mrb[0].mxu0 %v3839
        %v4913 = vpop.f32.mrb[0].mxu0
        %v4914 = vadd.f32 %v4753, %v4913
        %v4915 = vpop.f32.mrb[0].mxu0
        %v4916 = vpop.f32.mrb[0].mxu0
        %v4917 = vadd.f32 %v4756, %v4916
        %v4918 = vpop.f32.mrb[0].mxu0
        %4919 = vmatprep.mubr.bf16.mxu0 %v3849
        %4920 = vmatmul.mubr.bf16.gmra.mrb[0].mxu0 %v3848
        %v4921 = vpop.f32.mrb[0].mxu0
        %v4922 = vadd.f32 %v4761, %v4921
        %v4923 = vpop.f32.mrb[0].mxu0
        %v4924 = vpop.f32.mrb[0].mxu0
        %v4925 = vadd.f32 %v4764, %v4924
        %v4926 = vpop.f32.mrb[0].mxu0
        %4927 = vmatprep.mubr.bf16.mxu0 %v3858
        %4928 = vmatmul.mubr.bf16.gmra.mrb[0].mxu0 %v3857
        %v4929 = vpop.f32.mrb[0].mxu0
        %v4930 = vadd.f32 %v4769, %v4929
        %v4931 = vpop.f32.mrb[0].mxu0
        %v4932 = vpop.f32.mrb[0].mxu0
        %v4933 = vadd.f32 %v4772, %v4932
        %v4934 = vpop.f32.mrb[0].mxu0
        %4935 = vmatprep.mubr.bf16.mxu0 %v3867
        %4936 = vmatmul.mubr.bf16.gmra.mrb[0].mxu0 %v3866
        %v4937 = vpop.f32.mrb[0].mxu0
        %v4938 = vadd.f32 %v4777, %v4937
        %v4939 = vpop.f32.mrb[0].mxu0
        %v4940 = vpop.f32.mrb[0].mxu0
        %v4941 = vadd.f32 %v4780, %v4940
        %v4942 = vpop.f32.mrb[0].mxu0
        %4943 = vmatprep.mubr.bf16.mxu0 %v3876
        %4944 = vmatmul.mubr.bf16.gmra.mrb[0].mxu0 %v3875
        %v4945 = vpop.f32.mrb[0].mxu0
        %v4946 = vadd.f32 %v4785, %v4945
        %v4947 = vpop.f32.mrb[0].mxu0
        %v4948 = vpop.f32.mrb[0].mxu0
        %v4949 = vadd.f32 %v4788, %v4948
        %v4950 = vpop.f32.mrb[0].mxu0
        %4951 = vmatprep.mubr.bf16.mxu0 %v3885
        %4952 = vmatmul.mubr.bf16.gmra.mrb[0].mxu0 %v3884
        %v4953 = vpop.f32.mrb[0].mxu0
        %v4954 = vadd.f32 %v4793, %v4953
        %v4955 = vpop.f32.mrb[0].mxu0
        %v4956 = vpop.f32.mrb[0].mxu0
        %v4957 = vadd.f32 %v4796, %v4956
        %v4958 = vpop.f32.mrb[0].mxu0
        %4959 = vmatprep.mubr.bf16.mxu0 %v3894
        %4960 = vmatmul.mubr.bf16.gmra.mrb[0].mxu0 %v3893
        %v4961 = vpop.f32.mrb[0].mxu0
        %v4962 = vadd.f32 %v4801, %v4961
        %v4963 = vpop.f32.mrb[0].mxu0
        %v4964 = vpop.f32.mrb[0].mxu0
        %v4965 = vadd.f32 %v4804, %v4964
        %v4966 = vpop.f32.mrb[0].mxu0
        %4967 = vmatprep.mubr.bf16.mxu0 %v3903
        %4968 = vmatmul.mubr.bf16.gmra.mrb[0].mxu0 %v3902
        %v4969 = vpop.f32.mrb[0].mxu0
        %v4970 = vadd.f32 %v4809, %v4969
        %v4971 = vpop.f32.mrb[0].mxu0
        %v4972 = vpop.f32.mrb[0].mxu0
        %v4973 = vadd.f32 %v4812, %v4972
        %v4974 = vpop.f32.mrb[0].mxu0
        %4975 = vmatprep.mubr.bf16.mxu0 %v3912
        %4976 = vmatmul.mubr.bf16.gmra.mrb[0].mxu0 %v3911
        %v4977 = vpop.f32.mrb[0].mxu0
        %v4978 = vadd.f32 %v4817, %v4977
        %v4979 = vpop.f32.mrb[0].mxu0
        %v4980 = vpop.f32.mrb[0].mxu0
        %v4981 = vadd.f32 %v4820, %v4980
        %v4982 = vpop.f32.mrb[0].mxu0
        %4983 = vmatprep.mubr.bf16.mxu0 %v3921
        %4984 = vmatmul.mubr.bf16.gmra.mrb[0].mxu0 %v3920
        %v4985 = vpop.f32.mrb[0].mxu0
        %v4986 = vadd.f32 %v4825, %v4985
        %v4987 = vpop.f32.mrb[0].mxu0
        %v4988 = vpop.f32.mrb[0].mxu0
        %v4989 = vadd.f32 %v4828, %v4988
        %v4990 = vpop.f32.mrb[0].mxu0
        %4991 = vmatprep.mubr.bf16.mxu0 %v3930
        %4992 = vmatmul.mubr.bf16.gmra.mrb[0].mxu0 %v3929
        %v4993 = vpop.f32.mrb[0].mxu0
        %v4994 = vadd.f32 %v4833, %v4993
        %v4995 = vpop.f32.mrb[0].mxu0
        %v4996 = vpop.f32.mrb[0].mxu0
        %v4997 = vadd.f32 %v4836, %v4996
        %v4998 = vpop.f32.mrb[0].mxu0
        %4999 = vdwg.mxu0
        %5000 = vmatprep.subr.bf16.mxu0 0
        %5001 = vmatpush1.bf16.msra.mxu0 %v4421
        %5002 = vmatprep.subr.bf16.mxu0 0
        %5003 = vmatpush1.bf16.msra.mxu0 %v4422
        %5004 = vmatprep.subr.bf16.mxu0 0
        %5005 = vmatpush1.bf16.msra.mxu0 %v4423
        %5006 = vmatprep.subr.bf16.mxu0 0
        %5007 = vmatpush1.bf16.msra.mxu0 %v4424
        %5008 = vmatprep.subr.bf16.mxu0 0
        %5009 = vmatpush1.bf16.msra.mxu0 %v4425
        %5010 = vmatprep.subr.bf16.mxu0 0
        %5011 = vmatpush1.bf16.msra.mxu0 %v4426
        %5012 = vmatprep.subr.bf16.mxu0 0
        %5013 = vmatpush1.bf16.msra.mxu0 %v4427
        %5014 = vmatprep.subr.bf16.mxu0 0
        %5015 = vmatpush1.bf16.msra.mxu0 %v4428
        %5016 = vmatprep.subr.bf16.mxu0 0
        %5017 = vmatpush1.bf16.msra.mxu0 %v4429
        %5018 = vmatprep.subr.bf16.mxu0 0
        %5019 = vmatpush1.bf16.msra.mxu0 %v4430
        %5020 = vmatprep.subr.bf16.mxu0 0
        %5021 = vmatpush1.bf16.msra.mxu0 %v4431
        %5022 = vmatprep.subr.bf16.mxu0 0
        %5023 = vmatpush1.bf16.msra.mxu0 %v4432
        %5024 = vmatprep.subr.bf16.mxu0 0
        %5025 = vmatpush1.bf16.msra.mxu0 %v4433
        %5026 = vmatprep.subr.bf16.mxu0 0
        %5027 = vmatpush1.bf16.msra.mxu0 %v4434
        %5028 = vmatprep.subr.bf16.mxu0 0
        %5029 = vmatpush1.bf16.msra.mxu0 %v4435
        %5030 = vmatprep.subr.bf16.mxu0 0
        %5031 = vmatpush1.bf16.msra.mxu0 %v4436
        %5032 = vmatprep.mubr.bf16.mxu0 %v3797
        %5033 = vmatmul.mubr.bf16.gmra.mrb[0].mxu0 %v3796
        %v5034 = vpop.f32.mrb[0].mxu0
        %v5035 = vadd.f32 %v4874, %v5034
        %v5036 = vpop.f32.mrb[0].mxu0
        %v5037 = vpop.f32.mrb[0].mxu0
        %v5038 = vadd.f32 %v4877, %v5037
        %v5039 = vpop.f32.mrb[0].mxu0
        %5040 = vmatprep.mubr.bf16.mxu0 %v3806
        %5041 = vmatmul.mubr.bf16.gmra.mrb[0].mxu0 %v3805
        %v5042 = vpop.f32.mrb[0].mxu0
        %v5043 = vadd.f32 %v4882, %v5042
        %v5044 = vpop.f32.mrb[0].mxu0
        %v5045 = vpop.f32.mrb[0].mxu0
        %v5046 = vadd.f32 %v4885, %v5045
        %v5047 = vpop.f32.mrb[0].mxu0
        %5048 = vmatprep.mubr.bf16.mxu0 %v3815
        %5049 = vmatmul.mubr.bf16.gmra.mrb[0].mxu0 %v3814
        %v5050 = vpop.f32.mrb[0].mxu0
        %v5051 = vadd.f32 %v4890, %v5050
        %v5052 = vpop.f32.mrb[0].mxu0
        %v5053 = vpop.f32.mrb[0].mxu0
        %v5054 = vadd.f32 %v4893, %v5053
        %v5055 = vpop.f32.mrb[0].mxu0
        %5056 = vmatprep.mubr.bf16.mxu0 %v3824
        %5057 = vmatmul.mubr.bf16.gmra.mrb[0].mxu0 %v3823
        %v5058 = vpop.f32.mrb[0].mxu0
        %v5059 = vadd.f32 %v4898, %v5058
        %v5060 = vpop.f32.mrb[0].mxu0
        %v5061 = vpop.f32.mrb[0].mxu0
        %v5062 = vadd.f32 %v4901, %v5061
        %v5063 = vpop.f32.mrb[0].mxu0
        %5064 = vmatprep.mubr.bf16.mxu0 %v3833
        %5065 = vmatmul.mubr.bf16.gmra.mrb[0].mxu0 %v3832
        %v5066 = vpop.f32.mrb[0].mxu0
        %v5067 = vadd.f32 %v4906, %v5066
        %v5068 = vpop.f32.mrb[0].mxu0
        %v5069 = vpop.f32.mrb[0].mxu0
        %v5070 = vadd.f32 %v4909, %v5069
        %v5071 = vpop.f32.mrb[0].mxu0
        %5072 = vmatprep.mubr.bf16.mxu0 %v3842
        %5073 = vmatmul.mubr.bf16.gmra.mrb[0].mxu0 %v3841
        %v5074 = vpop.f32.mrb[0].mxu0
        %v5075 = vadd.f32 %v4914, %v5074
        %v5076 = vpop.f32.mrb[0].mxu0
        %v5077 = vpop.f32.mrb[0].mxu0
        %v5078 = vadd.f32 %v4917, %v5077
        %v5079 = vpop.f32.mrb[0].mxu0
        %5080 = vmatprep.mubr.bf16.mxu0 %v3851
        %5081 = vmatmul.mubr.bf16.gmra.mrb[0].mxu0 %v3850
        %v5082 = vpop.f32.mrb[0].mxu0
        %v5083 = vadd.f32 %v4922, %v5082
        %v5084 = vpop.f32.mrb[0].mxu0
        %v5085 = vpop.f32.mrb[0].mxu0
        %v5086 = vadd.f32 %v4925, %v5085
        %v5087 = vpop.f32.mrb[0].mxu0
        %5088 = vmatprep.mubr.bf16.mxu0 %v3860
        %5089 = vmatmul.mubr.bf16.gmra.mrb[0].mxu0 %v3859
        %v5090 = vpop.f32.mrb[0].mxu0
        %v5091 = vadd.f32 %v4930, %v5090
        %v5092 = vpop.f32.mrb[0].mxu0
        %v5093 = vpop.f32.mrb[0].mxu0
        %v5094 = vadd.f32 %v4933, %v5093
        %v5095 = vpop.f32.mrb[0].mxu0
        %5096 = vmatprep.mubr.bf16.mxu0 %v3869
        %5097 = vmatmul.mubr.bf16.gmra.mrb[0].mxu0 %v3868
        %v5098 = vpop.f32.mrb[0].mxu0
        %v5099 = vadd.f32 %v4938, %v5098
        %v5100 = vpop.f32.mrb[0].mxu0
        %v5101 = vpop.f32.mrb[0].mxu0
        %v5102 = vadd.f32 %v4941, %v5101
        %v5103 = vpop.f32.mrb[0].mxu0
        %5104 = vmatprep.mubr.bf16.mxu0 %v3878
        %5105 = vmatmul.mubr.bf16.gmra.mrb[0].mxu0 %v3877
        %v5106 = vpop.f32.mrb[0].mxu0
        %v5107 = vadd.f32 %v4946, %v5106
        %v5108 = vpop.f32.mrb[0].mxu0
        %v5109 = vpop.f32.mrb[0].mxu0
        %v5110 = vadd.f32 %v4949, %v5109
        %v5111 = vpop.f32.mrb[0].mxu0
        %5112 = vmatprep.mubr.bf16.mxu0 %v3887
        %5113 = vmatmul.mubr.bf16.gmra.mrb[0].mxu0 %v3886
        %v5114 = vpop.f32.mrb[0].mxu0
        %v5115 = vadd.f32 %v4954, %v5114
        %v5116 = vpop.f32.mrb[0].mxu0
        %v5117 = vpop.f32.mrb[0].mxu0
        %v5118 = vadd.f32 %v4957, %v5117
        %v5119 = vpop.f32.mrb[0].mxu0
        %5120 = vmatprep.mubr.bf16.mxu0 %v3896
        %5121 = vmatmul.mubr.bf16.gmra.mrb[0].mxu0 %v3895
        %v5122 = vpop.f32.mrb[0].mxu0
        %v5123 = vadd.f32 %v4962, %v5122
        %v5124 = vpop.f32.mrb[0].mxu0
        %v5125 = vpop.f32.mrb[0].mxu0
        %v5126 = vadd.f32 %v4965, %v5125
        %v5127 = vpop.f32.mrb[0].mxu0
        %5128 = vmatprep.mubr.bf16.mxu0 %v3905
        %5129 = vmatmul.mubr.bf16.gmra.mrb[0].mxu0 %v3904
        %v5130 = vpop.f32.mrb[0].mxu0
        %v5131 = vadd.f32 %v4970, %v5130
        %v5132 = vpop.f32.mrb[0].mxu0
        %v5133 = vpop.f32.mrb[0].mxu0
        %v5134 = vadd.f32 %v4973, %v5133
        %v5135 = vpop.f32.mrb[0].mxu0
        %5136 = vmatprep.mubr.bf16.mxu0 %v3914
        %5137 = vmatmul.mubr.bf16.gmra.mrb[0].mxu0 %v3913
        %v5138 = vpop.f32.mrb[0].mxu0
        %v5139 = vadd.f32 %v4978, %v5138
        %v5140 = vpop.f32.mrb[0].mxu0
        %v5141 = vpop.f32.mrb[0].mxu0
        %v5142 = vadd.f32 %v4981, %v5141
        %v5143 = vpop.f32.mrb[0].mxu0
        %5144 = vmatprep.mubr.bf16.mxu0 %v3923
        %5145 = vmatmul.mubr.bf16.gmra.mrb[0].mxu0 %v3922
        %v5146 = vpop.f32.mrb[0].mxu0
        %v5147 = vadd.f32 %v4986, %v5146
        %v5148 = vpop.f32.mrb[0].mxu0
        %v5149 = vpop.f32.mrb[0].mxu0
        %v5150 = vadd.f32 %v4989, %v5149
        %v5151 = vpop.f32.mrb[0].mxu0
        %5152 = vmatprep.mubr.bf16.mxu0 %v3932
        %5153 = vmatmul.mubr.bf16.gmra.mrb[0].mxu0 %v3931
        %v5154 = vpop.f32.mrb[0].mxu0
        %v5155 = vadd.f32 %v4994, %v5154
        %v5156 = vpop.f32.mrb[0].mxu0
        %v5157 = vpop.f32.mrb[0].mxu0
        %v5158 = vadd.f32 %v4997, %v5157
        %v5159 = vpop.f32.mrb[0].mxu0
        %5160 = vdwg.mxu0
        %5161 = vmatprep.subr.bf16.mxu0 0
        %5162 = vmatpush1.bf16.msra.mxu0 %v4437
        %5163 = vmatprep.subr.bf16.mxu0 0
        %5164 = vmatpush1.bf16.msra.mxu0 %v4438
        %5165 = vmatprep.subr.bf16.mxu0 0
        %5166 = vmatpush1.bf16.msra.mxu0 %v4439
        %5167 = vmatprep.subr.bf16.mxu0 0
        %5168 = vmatpush1.bf16.msra.mxu0 %v4440
        %5169 = vmatprep.subr.bf16.mxu0 0
        %5170 = vmatpush1.bf16.msra.mxu0 %v4441
        %5171 = vmatprep.subr.bf16.mxu0 0
        %5172 = vmatpush1.bf16.msra.mxu0 %v4442
        %5173 = vmatprep.subr.bf16.mxu0 0
        %5174 = vmatpush1.bf16.msra.mxu0 %v4443
        %5175 = vmatprep.subr.bf16.mxu0 0
        %5176 = vmatpush1.bf16.msra.mxu0 %v4444
        %5177 = vmatprep.subr.bf16.mxu0 0
        %5178 = vmatpush1.bf16.msra.mxu0 0
        %5179 = vmatprep.subr.bf16.mxu0 0
        %5180 = vmatpush1.bf16.msra.mxu0 0
        %5181 = vmatprep.subr.bf16.mxu0 0
        %5182 = vmatpush1.bf16.msra.mxu0 0
        %5183 = vmatprep.subr.bf16.mxu0 0
        %5184 = vmatpush1.bf16.msra.mxu0 0
        %5185 = vmatprep.subr.bf16.mxu0 0
        %5186 = vmatpush1.bf16.msra.mxu0 0
        %5187 = vmatprep.subr.bf16.mxu0 0
        %5188 = vmatpush1.bf16.msra.mxu0 0
        %5189 = vmatprep.subr.bf16.mxu0 0
        %5190 = vmatpush1.bf16.msra.mxu0 0
        %5191 = vmatprep.subr.bf16.mxu0 0
        %5192 = vmatpush1.bf16.msra.mxu0 0
        %5193 = vmatprep.mubr.bf16.mxu0 0
        %5194 = vmatmul.mubr.bf16.gmra.mrb[0].mxu0 %v3798
        %v5195 = vpop.f32.mrb[0].mxu0
        %v5196 = vadd.f32 %v5035, %v5195
        %v5197 = vpop.f32.mrb[0].mxu0
        %v5198 = vpop.f32.mrb[0].mxu0
        %v5199 = vadd.f32 %v5038, %v5198
        %v5200 = vpop.f32.mrb[0].mxu0
        %5201 = vmatprep.mubr.bf16.mxu0 0
        %5202 = vmatmul.mubr.bf16.gmra.mrb[0].mxu0 %v3807
        %v5203 = vpop.f32.mrb[0].mxu0
        %v5204 = vadd.f32 %v5043, %v5203
        %v5205 = vpop.f32.mrb[0].mxu0
        %v5206 = vpop.f32.mrb[0].mxu0
        %v5207 = vadd.f32 %v5046, %v5206
        %v5208 = vpop.f32.mrb[0].mxu0
        %5209 = vmatprep.mubr.bf16.mxu0 0
        %5210 = vmatmul.mubr.bf16.gmra.mrb[0].mxu0 %v3816
        %v5211 = vpop.f32.mrb[0].mxu0
        %v5212 = vadd.f32 %v5051, %v5211
        %v5213 = vpop.f32.mrb[0].mxu0
        %v5214 = vpop.f32.mrb[0].mxu0
        %v5215 = vadd.f32 %v5054, %v5214
        %v5216 = vpop.f32.mrb[0].mxu0
        %5217 = vmatprep.mubr.bf16.mxu0 0
        %5218 = vmatmul.mubr.bf16.gmra.mrb[0].mxu0 %v3825
        %v5219 = vpop.f32.mrb[0].mxu0
        %v5220 = vadd.f32 %v5059, %v5219
        %v5221 = vpop.f32.mrb[0].mxu0
        %v5222 = vpop.f32.mrb[0].mxu0
        %v5223 = vadd.f32 %v5062, %v5222
        %v5224 = vpop.f32.mrb[0].mxu0
        %5225 = vmatprep.mubr.bf16.mxu0 0
        %5226 = vmatmul.mubr.bf16.gmra.mrb[0].mxu0 %v3834
        %v5227 = vpop.f32.mrb[0].mxu0
        %v5228 = vadd.f32 %v5067, %v5227
        %v5229 = vpop.f32.mrb[0].mxu0
        %v5230 = vpop.f32.mrb[0].mxu0
        %v5231 = vadd.f32 %v5070, %v5230
        %v5232 = vpop.f32.mrb[0].mxu0
        %5233 = vmatprep.mubr.bf16.mxu0 0
        %5234 = vmatmul.mubr.bf16.gmra.mrb[0].mxu0 %v3843
        %v5235 = vpop.f32.mrb[0].mxu0
        %v5236 = vadd.f32 %v5075, %v5235
        %v5237 = vpop.f32.mrb[0].mxu0
        %v5238 = vpop.f32.mrb[0].mxu0
        %v5239 = vadd.f32 %v5078, %v5238
        %v5240 = vpop.f32.mrb[0].mxu0
        %5241 = vmatprep.mubr.bf16.mxu0 0
        %5242 = vmatmul.mubr.bf16.gmra.mrb[0].mxu0 %v3852
        %v5243 = vpop.f32.mrb[0].mxu0
        %v5244 = vadd.f32 %v5083, %v5243
        %v5245 = vpop.f32.mrb[0].mxu0
        %v5246 = vpop.f32.mrb[0].mxu0
        %v5247 = vadd.f32 %v5086, %v5246
        %v5248 = vpop.f32.mrb[0].mxu0
        %5249 = vmatprep.mubr.bf16.mxu0 0
        %5250 = vmatmul.mubr.bf16.gmra.mrb[0].mxu0 %v3861
        %v5251 = vpop.f32.mrb[0].mxu0
        %v5252 = vadd.f32 %v5091, %v5251
        %v5253 = vpop.f32.mrb[0].mxu0
        %v5254 = vpop.f32.mrb[0].mxu0
        %v5255 = vadd.f32 %v5094, %v5254
        %v5256 = vpop.f32.mrb[0].mxu0
        %5257 = vmatprep.mubr.bf16.mxu0 0
        %5258 = vmatmul.mubr.bf16.gmra.mrb[0].mxu0 %v3870
        %v5259 = vpop.f32.mrb[0].mxu0
        %v5260 = vadd.f32 %v5099, %v5259
        %v5261 = vpop.f32.mrb[0].mxu0
        %v5262 = vpop.f32.mrb[0].mxu0
        %v5263 = vadd.f32 %v5102, %v5262
        %v5264 = vpop.f32.mrb[0].mxu0
        %5265 = vmatprep.mubr.bf16.mxu0 0
        %5266 = vmatmul.mubr.bf16.gmra.mrb[0].mxu0 %v3879
        %v5267 = vpop.f32.mrb[0].mxu0
        %v5268 = vadd.f32 %v5107, %v5267
        %v5269 = vpop.f32.mrb[0].mxu0
        %v5270 = vpop.f32.mrb[0].mxu0
        %v5271 = vadd.f32 %v5110, %v5270
        %v5272 = vpop.f32.mrb[0].mxu0
        %5273 = vmatprep.mubr.bf16.mxu0 0
        %5274 = vmatmul.mubr.bf16.gmra.mrb[0].mxu0 %v3888
        %v5275 = vpop.f32.mrb[0].mxu0
        %v5276 = vadd.f32 %v5115, %v5275
        %v5277 = vpop.f32.mrb[0].mxu0
        %v5278 = vpop.f32.mrb[0].mxu0
        %v5279 = vadd.f32 %v5118, %v5278
        %v5280 = vpop.f32.mrb[0].mxu0
        %5281 = vmatprep.mubr.bf16.mxu0 0
        %5282 = vmatmul.mubr.bf16.gmra.mrb[0].mxu0 %v3897
        %v5283 = vpop.f32.mrb[0].mxu0
        %v5284 = vadd.f32 %v5123, %v5283
        %v5285 = vpop.f32.mrb[0].mxu0
        %v5286 = vpop.f32.mrb[0].mxu0
        %v5287 = vadd.f32 %v5126, %v5286
        %v5288 = vpop.f32.mrb[0].mxu0
        %5289 = vmatprep.mubr.bf16.mxu0 0
        %5290 = vmatmul.mubr.bf16.gmra.mrb[0].mxu0 %v3906
        %v5291 = vpop.f32.mrb[0].mxu0
        %v5292 = vadd.f32 %v5131, %v5291
        %v5293 = vpop.f32.mrb[0].mxu0
        %v5294 = vpop.f32.mrb[0].mxu0
        %v5295 = vadd.f32 %v5134, %v5294
        %v5296 = vpop.f32.mrb[0].mxu0
        %5297 = vmatprep.mubr.bf16.mxu0 0
        %5298 = vmatmul.mubr.bf16.gmra.mrb[0].mxu0 %v3915
        %v5299 = vpop.f32.mrb[0].mxu0
        %v5300 = vadd.f32 %v5139, %v5299
        %v5301 = vpop.f32.mrb[0].mxu0
        %v5302 = vpop.f32.mrb[0].mxu0
        %v5303 = vadd.f32 %v5142, %v5302
        %v5304 = vpop.f32.mrb[0].mxu0
        %5305 = vmatprep.mubr.bf16.mxu0 0
        %5306 = vmatmul.mubr.bf16.gmra.mrb[0].mxu0 %v3924
        %v5307 = vpop.f32.mrb[0].mxu0
        %v5308 = vadd.f32 %v5147, %v5307
        %v5309 = vpop.f32.mrb[0].mxu0
        %v5310 = vpop.f32.mrb[0].mxu0
        %v5311 = vadd.f32 %v5150, %v5310
        %v5312 = vpop.f32.mrb[0].mxu0
        %5313 = vmatprep.mubr.bf16.mxu0 0
        %5314 = vmatmul.mubr.bf16.gmra.mrb[0].mxu0 %v3933
        %v5315 = vpop.f32.mrb[0].mxu0
        %v5316 = vadd.f32 %v5155, %v5315
        %v5317 = vpop.f32.mrb[0].mxu0
        %v5318 = vpop.f32.mrb[0].mxu0
        %v5319 = vadd.f32 %v5158, %v5318
        %v5320 = vpop.f32.mrb[0].mxu0
        %5321 = vdwg.mxu0
        %v5322 = vmax.f32 %v5196, 0.0
        %v5323 = vmax.f32 %v5199, 0.0
        %v5324 = vmax.f32 %v5204, 0.0
        %v5325 = vmax.f32 %v5207, 0.0
        %v5326 = vmax.f32 %v5212, 0.0
        %v5327 = vmax.f32 %v5215, 0.0
        %v5328 = vmax.f32 %v5220, 0.0
        %v5329 = vmax.f32 %v5223, 0.0
        %v5330 = vmax.f32 %v5228, 0.0
        %v5331 = vmax.f32 %v5231, 0.0
        %v5332 = vmax.f32 %v5236, 0.0
        %v5333 = vmax.f32 %v5239, 0.0
        %v5334 = vmax.f32 %v5244, 0.0
        %v5335 = vmax.f32 %v5247, 0.0
        %v5336 = vmax.f32 %v5252, 0.0
        %v5337 = vmax.f32 %v5255, 0.0
        %v5338 = vmax.f32 %v5260, 0.0
        %v5339 = vmax.f32 %v5263, 0.0
        %v5340 = vmax.f32 %v5268, 0.0
        %v5341 = vmax.f32 %v5271, 0.0
        %v5342 = vmax.f32 %v5276, 0.0
        %v5343 = vmax.f32 %v5279, 0.0
        %v5344 = vmax.f32 %v5284, 0.0
        %v5345 = vmax.f32 %v5287, 0.0
        %v5346 = vmax.f32 %v5292, 0.0
        %v5347 = vmax.f32 %v5295, 0.0
        %v5348 = vmax.f32 %v5300, 0.0
        %v5349 = vmax.f32 %v5303, 0.0
        %v5350 = vmax.f32 %v5308, 0.0
        %v5351 = vmax.f32 %v5311, 0.0
        %v5352 = vmax.f32 %v5316, 0.0
        %v5353 = vmax.f32 %v5319, 0.0
        %v5354 = vpack.c.bf16 %v5323, %v5322
        %v5355 = vpack.c.bf16 %v5325, %v5324
        %v5356 = vpack.c.bf16 %v5327, %v5326
        %v5357 = vpack.c.bf16 %v5329, %v5328
        %v5358 = vpack.c.bf16 %v5331, %v5330
        %v5359 = vpack.c.bf16 %v5333, %v5332
        %v5360 = vpack.c.bf16 %v5335, %v5334
        %v5361 = vpack.c.bf16 %v5337, %v5336
        %v5362 = vpack.c.bf16 %v5339, %v5338
        %v5363 = vpack.c.bf16 %v5341, %v5340
        %v5364 = vpack.c.bf16 %v5343, %v5342
        %v5365 = vpack.c.bf16 %v5345, %v5344
        %v5366 = vpack.c.bf16 %v5347, %v5346
        %v5367 = vpack.c.bf16 %v5349, %v5348
        %v5368 = vpack.c.bf16 %v5351, %v5350
        %v5369 = vpack.c.bf16 %v5353, %v5352
        %v5370 = vld [vmem:[#allocation10] sm:$0x3]
        %v5371 = vld [vmem:[#allocation15] sm:$0x1]
        %v5373 = vlaneseq
        %v5374 = vshrl.u32 %v5373, 7
        %v5375 = vsub.s32 0, %v5374
        %v5376 = vrot.slane %v5371, %v5375
        %vm5378 = vcmask 31744
        %v5380 = vsel %vm5378, %v5354, 0
        %v5383 = vsel %vm5378, %v5355, 0
        %v5386 = vsel %vm5378, %v5356, 0
        %v5389 = vsel %vm5378, %v5357, 0
        %v5392 = vsel %vm5378, %v5358, 0
        %v5395 = vsel %vm5378, %v5359, 0
        %v5398 = vsel %vm5378, %v5360, 0
        %v5401 = vsel %vm5378, %v5361, 0
        %v5404 = vsel %vm5378, %v5362, 0
        %v5407 = vsel %vm5378, %v5363, 0
        %v5410 = vsel %vm5378, %v5364, 0
        %v5413 = vsel %vm5378, %v5365, 0
        %v5416 = vsel %vm5378, %v5366, 0
        %v5419 = vsel %vm5378, %v5367, 0
        %v5422 = vsel %vm5378, %v5368, 0
        %v5425 = vsel %vm5378, %v5369, 0
        %vm5427 = vcmask 1041408
        %v5429 = vsel %vm5427, %v5370, 0
        %5431 = vmatprep.subr.bf16.mxu0 0
        %5432 = vmatpush1.bf16.msra.mxu0 %v5429
        %5433 = vmatprep.subr.bf16.mxu0 0
        %5434 = vmatpush1.bf16.msra.mxu0 0
        %5435 = vmatprep.subr.bf16.mxu0 0
        %5436 = vmatpush1.bf16.msra.mxu0 0
        %5437 = vmatprep.subr.bf16.mxu0 0
        %5438 = vmatpush1.bf16.msra.mxu0 0
        %5439 = vmatprep.subr.bf16.mxu0 0
        %5440 = vmatpush1.bf16.msra.mxu0 0
        %5441 = vmatprep.subr.bf16.mxu0 0
        %5442 = vmatpush1.bf16.msra.mxu0 0
        %5443 = vmatprep.subr.bf16.mxu0 0
        %5444 = vmatpush1.bf16.msra.mxu0 0
        %5445 = vmatprep.subr.bf16.mxu0 0
        %5446 = vmatpush1.bf16.msra.mxu0 0
        %5447 = vmatprep.subr.bf16.mxu0 0
        %5448 = vmatpush1.bf16.msra.mxu0 0
        %5449 = vmatprep.subr.bf16.mxu0 0
        %5450 = vmatpush1.bf16.msra.mxu0 0
        %5451 = vmatprep.subr.bf16.mxu0 0
        %5452 = vmatpush1.bf16.msra.mxu0 0
        %5453 = vmatprep.subr.bf16.mxu0 0
        %5454 = vmatpush1.bf16.msra.mxu0 0
        %5455 = vmatprep.subr.bf16.mxu0 0
        %5456 = vmatpush1.bf16.msra.mxu0 0
        %5457 = vmatprep.subr.bf16.mxu0 0
        %5458 = vmatpush1.bf16.msra.mxu0 0
        %5459 = vmatprep.subr.bf16.mxu0 0
        %5460 = vmatpush1.bf16.msra.mxu0 0
        %5461 = vmatprep.subr.bf16.mxu0 0
        %5462 = vmatpush1.bf16.msra.mxu0 0
        %5463 = vmatprep.mubr.bf16.mxu0 0
        %5464 = vmatmul.mubr.bf16.gmra.mrb[0].mxu0 %v5380
        %v5465 = vpop.f32.mrb[0].mxu0
        %v5466 = vadd.f32 %v5376, %v5465
        %v5467 = vpop.f32.mrb[0].mxu0
        %v5468 = vpop.f32.mrb[0].mxu0
        %v5469 = vadd.f32 %v5376, %v5468
        %v5470 = vpop.f32.mrb[0].mxu0
        %5471 = vmatprep.mubr.bf16.mxu0 0
        %5472 = vmatmul.mubr.bf16.gmra.mrb[0].mxu0 %v5383
        %v5473 = vpop.f32.mrb[0].mxu0
        %v5474 = vadd.f32 %v5376, %v5473
        %v5475 = vpop.f32.mrb[0].mxu0
        %v5476 = vpop.f32.mrb[0].mxu0
        %v5477 = vadd.f32 %v5376, %v5476
        %v5478 = vpop.f32.mrb[0].mxu0
        %5479 = vmatprep.mubr.bf16.mxu0 0
        %5480 = vmatmul.mubr.bf16.gmra.mrb[0].mxu0 %v5386
        %v5481 = vpop.f32.mrb[0].mxu0
        %v5482 = vadd.f32 %v5376, %v5481
        %v5483 = vpop.f32.mrb[0].mxu0
        %v5484 = vpop.f32.mrb[0].mxu0
        %v5485 = vadd.f32 %v5376, %v5484
        %v5486 = vpop.f32.mrb[0].mxu0
        %5487 = vmatprep.mubr.bf16.mxu0 0
        %5488 = vmatmul.mubr.bf16.gmra.mrb[0].mxu0 %v5389
        %v5489 = vpop.f32.mrb[0].mxu0
        %v5490 = vadd.f32 %v5376, %v5489
        %v5491 = vpop.f32.mrb[0].mxu0
        %v5492 = vpop.f32.mrb[0].mxu0
        %v5493 = vadd.f32 %v5376, %v5492
        %v5494 = vpop.f32.mrb[0].mxu0
        %5495 = vmatprep.mubr.bf16.mxu0 0
        %5496 = vmatmul.mubr.bf16.gmra.mrb[0].mxu0 %v5392
        %v5497 = vpop.f32.mrb[0].mxu0
        %v5498 = vadd.f32 %v5376, %v5497
        %v5499 = vpop.f32.mrb[0].mxu0
        %v5500 = vpop.f32.mrb[0].mxu0
        %v5501 = vadd.f32 %v5376, %v5500
        %v5502 = vpop.f32.mrb[0].mxu0
        %5503 = vmatprep.mubr.bf16.mxu0 0
        %5504 = vmatmul.mubr.bf16.gmra.mrb[0].mxu0 %v5395
        %v5505 = vpop.f32.mrb[0].mxu0
        %v5506 = vadd.f32 %v5376, %v5505
        %v5507 = vpop.f32.mrb[0].mxu0
        %v5508 = vpop.f32.mrb[0].mxu0
        %v5509 = vadd.f32 %v5376, %v5508
        %v5510 = vpop.f32.mrb[0].mxu0
        %5511 = vmatprep.mubr.bf16.mxu0 0
        %5512 = vmatmul.mubr.bf16.gmra.mrb[0].mxu0 %v5398
        %v5513 = vpop.f32.mrb[0].mxu0
        %v5514 = vadd.f32 %v5376, %v5513
        %v5515 = vpop.f32.mrb[0].mxu0
        %v5516 = vpop.f32.mrb[0].mxu0
        %v5517 = vadd.f32 %v5376, %v5516
        %v5518 = vpop.f32.mrb[0].mxu0
        %5519 = vmatprep.mubr.bf16.mxu0 0
        %5520 = vmatmul.mubr.bf16.gmra.mrb[0].mxu0 %v5401
        %v5521 = vpop.f32.mrb[0].mxu0
        %v5522 = vadd.f32 %v5376, %v5521
        %v5523 = vpop.f32.mrb[0].mxu0
        %v5524 = vpop.f32.mrb[0].mxu0
        %v5525 = vadd.f32 %v5376, %v5524
        %v5526 = vpop.f32.mrb[0].mxu0
        %5527 = vmatprep.mubr.bf16.mxu0 0
        %5528 = vmatmul.mubr.bf16.gmra.mrb[0].mxu0 %v5404
        %v5529 = vpop.f32.mrb[0].mxu0
        %v5530 = vadd.f32 %v5376, %v5529
        %v5531 = vpop.f32.mrb[0].mxu0
        %v5532 = vpop.f32.mrb[0].mxu0
        %v5533 = vadd.f32 %v5376, %v5532
        %v5534 = vpop.f32.mrb[0].mxu0
        %5535 = vmatprep.mubr.bf16.mxu0 0
        %5536 = vmatmul.mubr.bf16.gmra.mrb[0].mxu0 %v5407
        %v5537 = vpop.f32.mrb[0].mxu0
        %v5538 = vadd.f32 %v5376, %v5537
        %v5539 = vpop.f32.mrb[0].mxu0
        %v5540 = vpop.f32.mrb[0].mxu0
        %v5541 = vadd.f32 %v5376, %v5540
        %v5542 = vpop.f32.mrb[0].mxu0
        %5543 = vmatprep.mubr.bf16.mxu0 0
        %5544 = vmatmul.mubr.bf16.gmra.mrb[0].mxu0 %v5410
        %v5545 = vpop.f32.mrb[0].mxu0
        %v5546 = vadd.f32 %v5376, %v5545
        %v5547 = vpop.f32.mrb[0].mxu0
        %v5548 = vpop.f32.mrb[0].mxu0
        %v5549 = vadd.f32 %v5376, %v5548
        %v5550 = vpop.f32.mrb[0].mxu0
        %5551 = vmatprep.mubr.bf16.mxu0 0
        %5552 = vmatmul.mubr.bf16.gmra.mrb[0].mxu0 %v5413
        %v5553 = vpop.f32.mrb[0].mxu0
        %v5554 = vadd.f32 %v5376, %v5553
        %v5555 = vpop.f32.mrb[0].mxu0
        %v5556 = vpop.f32.mrb[0].mxu0
        %v5557 = vadd.f32 %v5376, %v5556
        %v5558 = vpop.f32.mrb[0].mxu0
        %5559 = vmatprep.mubr.bf16.mxu0 0
        %5560 = vmatmul.mubr.bf16.gmra.mrb[0].mxu0 %v5416
        %v5561 = vpop.f32.mrb[0].mxu0
        %v5562 = vadd.f32 %v5376, %v5561
        %v5563 = vpop.f32.mrb[0].mxu0
        %v5564 = vpop.f32.mrb[0].mxu0
        %v5565 = vadd.f32 %v5376, %v5564
        %v5566 = vpop.f32.mrb[0].mxu0
        %5567 = vmatprep.mubr.bf16.mxu0 0
        %5568 = vmatmul.mubr.bf16.gmra.mrb[0].mxu0 %v5419
        %v5569 = vpop.f32.mrb[0].mxu0
        %v5570 = vadd.f32 %v5376, %v5569
        %v5571 = vpop.f32.mrb[0].mxu0
        %v5572 = vpop.f32.mrb[0].mxu0
        %v5573 = vadd.f32 %v5376, %v5572
        %v5574 = vpop.f32.mrb[0].mxu0
        %5575 = vmatprep.mubr.bf16.mxu0 0
        %5576 = vmatmul.mubr.bf16.gmra.mrb[0].mxu0 %v5422
        %v5577 = vpop.f32.mrb[0].mxu0
        %v5578 = vadd.f32 %v5376, %v5577
        %v5579 = vpop.f32.mrb[0].mxu0
        %v5580 = vpop.f32.mrb[0].mxu0
        %v5581 = vadd.f32 %v5376, %v5580
        %v5582 = vpop.f32.mrb[0].mxu0
        %5583 = vmatprep.mubr.bf16.mxu0 0
        %5584 = vmatmul.mubr.bf16.gmra.mrb[0].mxu0 %v5425
        %v5585 = vpop.f32.mrb[0].mxu0
        %v5586 = vadd.f32 %v5376, %v5585
        %v5587 = vpop.f32.mrb[0].mxu0
        %v5588 = vpop.f32.mrb[0].mxu0
        %v5589 = vadd.f32 %v5376, %v5588
        %v5590 = vpop.f32.mrb[0].mxu0
        %5591 = vdwg.mxu0
        %v5592 = vunpack.c.l.bf16 %v377
        %v5593 = vunpack.c.l.bf16 %v378
        %v5594 = vunpack.c.l.bf16 %v379
        %v5595 = vunpack.c.l.bf16 %v380
        %v5596 = vunpack.c.l.bf16 %v381
        %v5597 = vunpack.c.l.bf16 %v382
        %v5598 = vunpack.c.l.bf16 %v383
        %v5599 = vunpack.c.l.bf16 %v384
        %v5600 = vunpack.c.l.bf16 %v385
        %v5601 = vunpack.c.l.bf16 %v386
        %v5602 = vunpack.c.l.bf16 %v387
        %v5603 = vunpack.c.l.bf16 %v388
        %v5604 = vunpack.c.l.bf16 %v389
        %v5605 = vunpack.c.l.bf16 %v390
        %v5606 = vunpack.c.l.bf16 %v391
        %v5607 = vunpack.c.l.bf16 %v392
        %v5608 = vunpack.c.l.bf16 %v393
        %v5609 = vunpack.c.l.bf16 %v394
        %v5610 = vunpack.c.l.bf16 %v395
        %v5611 = vunpack.c.l.bf16 %v396
        %v5612 = vunpack.c.l.bf16 %v397
        %v5613 = vunpack.c.l.bf16 %v398
        %v5614 = vunpack.c.l.bf16 %v399
        %v5615 = vunpack.c.l.bf16 %v400
        %v5616 = vunpack.c.l.bf16 %v401
        %v5617 = vunpack.c.l.bf16 %v402
        %v5618 = vunpack.c.l.bf16 %v403
        %v5619 = vunpack.c.l.bf16 %v404
        %v5620 = vunpack.c.l.bf16 %v405
        %v5621 = vunpack.c.l.bf16 %v406
        %v5622 = vunpack.c.l.bf16 %v407
        %v5623 = vunpack.c.l.bf16 %v408
        %v5624 = vadd.f32 %v5466, %v5592
        %v5625 = vadd.f32 %v5469, %v5593
        %v5626 = vadd.f32 %v5474, %v5594
        %v5627 = vadd.f32 %v5477, %v5595
        %v5628 = vadd.f32 %v5482, %v5596
        %v5629 = vadd.f32 %v5485, %v5597
        %v5630 = vadd.f32 %v5490, %v5598
        %v5631 = vadd.f32 %v5493, %v5599
        %v5632 = vadd.f32 %v5498, %v5600
        %v5633 = vadd.f32 %v5501, %v5601
        %v5634 = vadd.f32 %v5506, %v5602
        %v5635 = vadd.f32 %v5509, %v5603
        %v5636 = vadd.f32 %v5514, %v5604
        %v5637 = vadd.f32 %v5517, %v5605
        %v5638 = vadd.f32 %v5522, %v5606
        %v5639 = vadd.f32 %v5525, %v5607
        %v5640 = vadd.f32 %v5530, %v5608
        %v5641 = vadd.f32 %v5533, %v5609
        %v5642 = vadd.f32 %v5538, %v5610
        %v5643 = vadd.f32 %v5541, %v5611
        %v5644 = vadd.f32 %v5546, %v5612
        %v5645 = vadd.f32 %v5549, %v5613
        %v5646 = vadd.f32 %v5554, %v5614
        %v5647 = vadd.f32 %v5557, %v5615
        %v5648 = vadd.f32 %v5562, %v5616
        %v5649 = vadd.f32 %v5565, %v5617
        %v5650 = vadd.f32 %v5570, %v5618
        %v5651 = vadd.f32 %v5573, %v5619
        %v5652 = vadd.f32 %v5578, %v5620
        %v5653 = vadd.f32 %v5581, %v5621
        %v5654 = vadd.f32 %v5586, %v5622
        %v5655 = vadd.f32 %v5589, %v5623
        %v5656 = vmax.f32 %v5624, 0.0
        %v5657 = vmax.f32 %v5625, 0.0
        %v5658 = vmax.f32 %v5626, 0.0
        %v5659 = vmax.f32 %v5627, 0.0
        %v5660 = vmax.f32 %v5628, 0.0
        %v5661 = vmax.f32 %v5629, 0.0
        %v5662 = vmax.f32 %v5630, 0.0
        %v5663 = vmax.f32 %v5631, 0.0
        %v5664 = vmax.f32 %v5632, 0.0
        %v5665 = vmax.f32 %v5633, 0.0
        %v5666 = vmax.f32 %v5634, 0.0
        %v5667 = vmax.f32 %v5635, 0.0
        %v5668 = vmax.f32 %v5636, 0.0
        %v5669 = vmax.f32 %v5637, 0.0
        %v5670 = vmax.f32 %v5638, 0.0
        %v5671 = vmax.f32 %v5639, 0.0
        %v5672 = vmax.f32 %v5640, 0.0
        %v5673 = vmax.f32 %v5641, 0.0
        %v5674 = vmax.f32 %v5642, 0.0
        %v5675 = vmax.f32 %v5643, 0.0
        %v5676 = vmax.f32 %v5644, 0.0
        %v5677 = vmax.f32 %v5645, 0.0
        %v5678 = vmax.f32 %v5646, 0.0
        %v5679 = vmax.f32 %v5647, 0.0
        %v5680 = vmax.f32 %v5648, 0.0
        %v5681 = vmax.f32 %v5649, 0.0
        %v5682 = vmax.f32 %v5650, 0.0
        %v5683 = vmax.f32 %v5651, 0.0
        %v5684 = vmax.f32 %v5652, 0.0
        %v5685 = vmax.f32 %v5653, 0.0
        %v5686 = vmax.f32 %v5654, 0.0
        %v5687 = vmax.f32 %v5655, 0.0
        %v5688 = vpack.c.bf16 %v5657, %v5656
        %v5689 = vpack.c.bf16 %v5659, %v5658
        %v5690 = vpack.c.bf16 %v5661, %v5660
        %v5691 = vpack.c.bf16 %v5663, %v5662
        %v5692 = vpack.c.bf16 %v5665, %v5664
        %v5693 = vpack.c.bf16 %v5667, %v5666
        %v5694 = vpack.c.bf16 %v5669, %v5668
        %v5695 = vpack.c.bf16 %v5671, %v5670
        %v5696 = vpack.c.bf16 %v5673, %v5672
        %v5697 = vpack.c.bf16 %v5675, %v5674
        %v5698 = vpack.c.bf16 %v5677, %v5676
        %v5699 = vpack.c.bf16 %v5679, %v5678
        %v5700 = vpack.c.bf16 %v5681, %v5680
        %v5701 = vpack.c.bf16 %v5683, %v5682
        %v5702 = vpack.c.bf16 %v5685, %v5684
        %v5703 = vpack.c.bf16 %v5687, %v5686
        %v5720 = vunpack.c.l.b16 %v5688
        %v5721 = vunpack.c.h.b16 %v5688
        %v5722 = vunpack.c.l.b16 %v5689
        %v5723 = vunpack.c.h.b16 %v5689
        %v5724 = vunpack.c.l.b16 %v5690
        %v5725 = vunpack.c.h.b16 %v5690
        %v5726 = vunpack.c.l.b16 %v5691
        %v5727 = vunpack.c.h.b16 %v5691
        %v5728 = vunpack.c.l.b16 %v5692
        %v5729 = vunpack.c.h.b16 %v5692
        %v5730 = vunpack.c.l.b16 %v5693
        %v5731 = vunpack.c.h.b16 %v5693
        %v5732 = vunpack.c.l.b16 %v5694
        %v5733 = vunpack.c.h.b16 %v5694
        %v5734 = vunpack.c.l.b16 %v5695
        %v5735 = vunpack.c.h.b16 %v5695
        %v5736 = vunpack.c.l.b16 %v5696
        %v5737 = vunpack.c.h.b16 %v5696
        %v5738 = vunpack.c.l.b16 %v5697
        %v5739 = vunpack.c.h.b16 %v5697
        %v5740 = vunpack.c.l.b16 %v5698
        %v5741 = vunpack.c.h.b16 %v5698
        %v5742 = vunpack.c.l.b16 %v5699
        %v5743 = vunpack.c.h.b16 %v5699
        %v5744 = vunpack.c.l.b16 %v5700
        %v5745 = vunpack.c.h.b16 %v5700
        %v5746 = vunpack.c.l.b16 %v5701
        %v5747 = vunpack.c.h.b16 %v5701
        %v5748 = vunpack.c.l.b16 %v5702
        %v5749 = vunpack.c.h.b16 %v5702
        %v5750 = vunpack.c.l.b16 %v5703
        %v5751 = vunpack.c.h.b16 %v5703
        %v5752 = vpack.c.b16 %v5720, %v5720
        %v5753 = vpack.c.b16 %v5721, %v5721
        %v5754 = vpack.c.b16 %v5722, %v5722
        %v5755 = vpack.c.b16 %v5723, %v5723
        %v5756 = vpack.c.b16 %v5724, %v5724
        %v5757 = vpack.c.b16 %v5725, %v5725
        %v5758 = vpack.c.b16 %v5726, %v5726
        %v5759 = vpack.c.b16 %v5727, %v5727
        %v5760 = vpack.c.b16 %v5728, %v5728
        %v5761 = vpack.c.b16 %v5729, %v5729
        %v5762 = vpack.c.b16 %v5730, %v5730
        %v5763 = vpack.c.b16 %v5731, %v5731
        %v5764 = vpack.c.b16 %v5732, %v5732
        %v5765 = vpack.c.b16 %v5733, %v5733
        %v5766 = vpack.c.b16 %v5734, %v5734
        %v5767 = vpack.c.b16 %v5735, %v5735
        %v5768 = vpack.c.b16 %v5736, %v5736
        %v5769 = vpack.c.b16 %v5737, %v5737
        %v5770 = vpack.c.b16 %v5738, %v5738
        %v5771 = vpack.c.b16 %v5739, %v5739
        %v5772 = vpack.c.b16 %v5740, %v5740
        %v5773 = vpack.c.b16 %v5741, %v5741
        %v5774 = vpack.c.b16 %v5742, %v5742
        %v5775 = vpack.c.b16 %v5743, %v5743
        %v5776 = vpack.c.b16 %v5744, %v5744
        %v5777 = vpack.c.b16 %v5745, %v5745
        %v5778 = vpack.c.b16 %v5746, %v5746
        %v5779 = vpack.c.b16 %v5747, %v5747
        %v5780 = vpack.c.b16 %v5748, %v5748
        %v5781 = vpack.c.b16 %v5749, %v5749
        %v5782 = vpack.c.b16 %v5750, %v5750
        %v5783 = vpack.c.b16 %v5751, %v5751
        %vm5816 = vcmask 125952
        %5817 = vst.msk [vmem:[%s375] sm:$0xf] %vm5816, %v5752
        %5818 = vst.msk [vmem:[%s375 + $0x4] sm:$0xf] %vm5816, %v5753
        %5819 = vst.msk [vmem:[%s375 + $0x8] sm:$0xf] %vm5816, %v5754
        %5820 = vst.msk [vmem:[%s375 + $0xc] sm:$0xf] %vm5816, %v5755
        %5821 = vst.msk [vmem:[%s375 + $0x10] sm:$0xf] %vm5816, %v5756
        %5822 = vst.msk [vmem:[%s375 + $0x14] sm:$0xf] %vm5816, %v5757
        %5823 = vst.msk [vmem:[%s375 + $0x18] sm:$0xf] %vm5816, %v5758
        %5824 = vst.msk [vmem:[%s375 + $0x1c] sm:$0xf] %vm5816, %v5759
        %5825 = vst.msk [vmem:[%s375 + $0x20] sm:$0xf] %vm5816, %v5760
        %5826 = vst.msk [vmem:[%s375 + $0x24] sm:$0xf] %vm5816, %v5761
        %5827 = vst.msk [vmem:[%s375 + $0x28] sm:$0xf] %vm5816, %v5762
        %5828 = vst.msk [vmem:[%s375 + $0x2c] sm:$0xf] %vm5816, %v5763
        %5829 = vst.msk [vmem:[%s375 + $0x30] sm:$0xf] %vm5816, %v5764
        %5830 = vst.msk [vmem:[%s375 + $0x34] sm:$0xf] %vm5816, %v5765
        %5831 = vst.msk [vmem:[%s375 + $0x38] sm:$0xf] %vm5816, %v5766
        %5832 = vst.msk [vmem:[%s375 + $0x3c] sm:$0xf] %vm5816, %v5767
        %5833 = vst.msk [vmem:[%s375 + $0x40] sm:$0xf] %vm5816, %v5768
        %5834 = vst.msk [vmem:[%s375 + $0x44] sm:$0xf] %vm5816, %v5769
        %5835 = vst.msk [vmem:[%s375 + $0x48] sm:$0xf] %vm5816, %v5770
        %5836 = vst.msk [vmem:[%s375 + $0x4c] sm:$0xf] %vm5816, %v5771
        %5837 = vst.msk [vmem:[%s375 + $0x50] sm:$0xf] %vm5816, %v5772
        %5838 = vst.msk [vmem:[%s375 + $0x54] sm:$0xf] %vm5816, %v5773
        %5839 = vst.msk [vmem:[%s375 + $0x58] sm:$0xf] %vm5816, %v5774
        %5840 = vst.msk [vmem:[%s375 + $0x5c] sm:$0xf] %vm5816, %v5775
        %5841 = vst.msk [vmem:[%s375 + $0x60] sm:$0xf] %vm5816, %v5776
        %5842 = vst.msk [vmem:[%s375 + $0x64] sm:$0xf] %vm5816, %v5777
        %5843 = vst.msk [vmem:[%s375 + $0x68] sm:$0xf] %vm5816, %v5778
        %5844 = vst.msk [vmem:[%s375 + $0x6c] sm:$0xf] %vm5816, %v5779
        %5845 = vst.msk [vmem:[%s375 + $0x70] sm:$0xf] %vm5816, %v5780
        %5846 = vst.msk [vmem:[%s375 + $0x74] sm:$0xf] %vm5816, %v5781
        %5847 = vst.msk [vmem:[%s375 + $0x78] sm:$0xf] %vm5816, %v5782
        %5848 = vst.msk [vmem:[%s375 + $0x7c] sm:$0xf] %vm5816, %v5783
        %s5849 = sand.u32 %s187, 1
        %s5850 = scalar_lea.sflag [#allocation6], %s5849
        %s5851 = sand.u32 %s187, 1
        %s5852 = smul.addr %s5851, 128
        %s5853 = scalar_lea.vmem [#allocation16], %s5852
        // Predicated region
        $region77: #{tpu_custom_call.1} parent=47 // pred_check
          %p5854 = pneg %p197
        $region78: #{tpu_custom_call.1} parent=47 // pred_check_branch
          %5856 = sbr.rel (%p5854) target = $region80
        $region79: #{tpu_custom_call.1} parent=47 // pred_region
          %s5858 = ssub.s32 2048, 2048
          %5859 = vsyncadd %s5850, %s5858
          %s5860 = smul.addr %s27, 32
          %s5861 = smul.addr %s5860, 64
          %s5862 = scalar_lea.hbm %s7, %s5861
          %s5863 = sshll.u32 %s5853, 4
          %s5864 = int_to_ptr.vmem [resolvable:$true] %s5863
          %5869 = dma.vmem_to_hbm [thread:$0]  %s5864, 2048, %s5862, %s5850, 64, 64, 4
        $region80: #{tpu_custom_call.1} parent=47 // pred_fallthru
          _
      $region48: #{tpu_custom_call.1} parent=5 // pred_fallthru
        _
      %p5870 = scmp.le.s32.totalorder 2, %s22
      // Predicated region
      $region81: #{tpu_custom_call.1} parent=5 // pred_check
        %p5871 = pneg %p5870
      $region82: #{tpu_custom_call.1} parent=5 // pred_check_branch
        %5873 = sbr.rel (%p5871) target = $region84
      $region83: #{tpu_custom_call.1} parent=5 // pred_region
        %s5874 = ssub.s32 %s22, 2
        // Predicated region
        $region85: #{tpu_custom_call.1} parent=83 // pred_check
          %p5875 = pneg %p203
        $region86: #{tpu_custom_call.1} parent=83 // pred_check_branch
          %5877 = sbr.rel (%p5875) target = $region88
        $region87: #{tpu_custom_call.1} parent=83 // pred_region
          %s5878 = sand.u32 %s188, 1
          %s5879 = scalar_lea.sflag [#allocation6], %s5878
          %s5880 = sand.u32 %s188, 1
          %s5881 = smul.addr %s5880, 128
          %s5882 = scalar_lea.vmem [#allocation16], %s5881
          %5883 = dma.done %s5879, 2048
        $region88: #{tpu_custom_call.1} parent=83 // pred_fallthru
          _
      $region84: #{tpu_custom_call.1} parent=5 // pred_fallthru
        _
    $region6: #{tpu_custom_call.1} parent=1 // loop_footer
      %s26 = sadd.s32 1, %s22
    $region7: #{tpu_custom_call.1} parent=1 // loop_footer_branch
      %21 = sbr.rel target = $region3
    $region8: #{tpu_custom_call.1} parent=1 // loop_exit
      _
    %5884 = vsyncpa [#allocation5], 1
    %s5885 = scalar_lea.sflag [#allocation5], 1
    %5886 = vsyncpa %s5885, 1
    %5887 = vsyncpa [#allocation8], 1
    %5888 = vsyncpa [#allocation11], 1
    %5889 = vsyncpa [#allocation14], 1
    %5890 = vsyncpa [#allocation6], 1
    %s5891 = scalar_lea.sflag [#allocation6], 1
    %5892 = vsyncpa %s5891, 1

</llo_original>
